<compile_context>
chip_gen: v7x
topology: tpu7x:2x2x1
jax: 0.10.0
libtpu: 0.0.40
codegen_flags: <defaults>
</compile_context>

<pallas_src>
import functools

import jax
import jax.numpy as jnp
from jax import lax
from jax.experimental import pallas as pl
from jax.experimental.pallas import tpu as pltpu


# Large finite negative instead of -inf: avoids exp(-inf - -inf) = NaN if this
# kernel is ever reused with padded / fully-masked rows.
_MASK_VALUE = -0.7 * float(jnp.finfo(jnp.float32).max)


def _pick_tile(dim, preferred, align):
    """Largest tile <= preferred that divides `dim` and is a multiple of `align`.

    Falls back to the full dim (always a legal block size)."""
    preferred = min(preferred, dim)
    for t in range(preferred, 0, -1):
        if dim % t == 0 and t % align == 0:
            return t
    return dim


# --------------------------- tiled linear: x @ W + b -------------------------

def _linear_kernel(x_ref, w_ref, b_ref, o_ref, acc_ref):
    k = pl.program_id(2)

    @pl.when(k == 0)
    def _init():
        acc_ref[...] = jnp.zeros(acc_ref.shape, dtype=acc_ref.dtype)

    acc_ref[...] += jnp.dot(x_ref[...], w_ref[...],
                            preferred_element_type=jnp.float32)

    @pl.when(k == pl.num_programs(2) - 1)
    def _finalize():
        o_ref[...] = (acc_ref[...] + b_ref[...].astype(jnp.float32)
                      ).astype(o_ref.dtype)


def linear(x2d, w, b, *, out_dtype=None, tile_m=512, tile_n=512, tile_k=512):
    """(M, K) @ (K, N) + (N,), software-pipelined over an (M/tm, N/tn, K/tk) grid."""
    M, K = x2d.shape
    K2, N = w.shape
    assert K == K2, "contracting dims must match"
    out_dtype = out_dtype or x2d.dtype

    tm = _pick_tile(M, tile_m, 8)
    tn = _pick_tile(N, tile_n, 128)
    tk = _pick_tile(K, tile_k, 128)

    b2d = b.reshape(1, N)
    return pl.pallas_call(
        _linear_kernel,
        out_shape=jax.ShapeDtypeStruct((M, N), out_dtype),
        grid_spec=pltpu.PrefetchScalarGridSpec(
            num_scalar_prefetch=0,
            grid=(M // tm, N // tn, K // tk),          # K (reduction) last
            in_specs=[
                pl.BlockSpec((tm, tk), lambda i, j, k: (i, k)),
                pl.BlockSpec((tk, tn), lambda i, j, k: (k, j)),
                pl.BlockSpec((1, tn), lambda i, j, k: (0, j)),
            ],
            out_specs=pl.BlockSpec((tm, tn), lambda i, j, k: (i, j)),
            scratch_shapes=[pltpu.VMEM((tm, tn), jnp.float32)],
        ),
        compiler_params=pltpu.CompilerParams(
            dimension_semantics=("parallel", "parallel", "arbitrary")),
    )(x2d, w, b2d)


# ----------------------- flash-style causal attention ------------------------

def _flash_attn_kernel(q_ref, k_ref, v_ref, o_ref, m_ref, l_ref, acc_ref,
                       *, scale, block_q, block_k):
    # Squeezed leading dims -> all refs are (block, D).
    qi = pl.program_id(2)
    kv = pl.program_id(3)

    @pl.when(kv == 0)
    def _init():
        m_ref[...] = jnp.full(m_ref.shape, _MASK_VALUE, dtype=m_ref.dtype)
        l_ref[...] = jnp.zeros(l_ref.shape, dtype=l_ref.dtype)
        acc_ref[...] = jnp.zeros(acc_ref.shape, dtype=acc_ref.dtype)

    # Causal block skipping: KV blocks strictly above the diagonal contribute
    # nothing (their K/V DMAs are also elided via the clamped index_map below).
    @pl.when(kv <= qi)
    def _compute():
        q = q_ref[...] * scale                        # (tq, D) scale folded into q
        k = k_ref[...]                                # (tk, D)
        v = v_ref[...]                                # (tk, D)

        # s = q @ k^T (contract on D), fp32 accumulation on the MXU.
        s = lax.dot_general(q, k, (((1,), (1,)), ((), ())),
                            preferred_element_type=jnp.float32)  # (tq, tk)

        # Global-index causal mask: only the diagonal block (kv == qi) actually
        # masks anything; strictly-lower blocks pass through unmasked.
        row = qi * block_q + lax.broadcasted_iota(jnp.int32, s.shape, 0)
        col = kv * block_k + lax.broadcasted_iota(jnp.int32, s.shape, 1)
        s = jnp.where(col <= row, s, _MASK_VALUE)

        # Online softmax update (all statistics in fp32).
        m_prev = m_ref[...]
        m_new = jnp.maximum(m_prev, jnp.max(s, axis=-1, keepdims=True))
        alpha = jnp.exp(m_prev - m_new)
        p = jnp.exp(s - m_new)
        l_ref[...] = alpha * l_ref[...] + jnp.sum(p, axis=-1, keepdims=True)
        acc_ref[...] = alpha * acc_ref[...] + jnp.dot(
            p.astype(v.dtype), v, preferred_element_type=jnp.float32)
        m_ref[...] = m_new

    # The diagonal block is the LAST contributing KV block for this q block
    # (block_q == block_k): normalize once on the (tq, D) accumulator.
    @pl.when(kv == qi)
    def _finalize():
        inv_l = pl.reciprocal(l_ref[...], approx=True)
        o_ref[...] = (acc_ref[...] * inv_l).astype(o_ref.dtype)


def _flash_call(inputs, in_specs, out_spec, out_shape, grid, block, head_dim, scale):
    kernel = functools.partial(_flash_attn_kernel, scale=scale,
                               block_q=block, block_k=block)
    return pl.pallas_call(
        kernel,
        out_shape=out_shape,
        grid_spec=pltpu.PrefetchScalarGridSpec(
            num_scalar_prefetch=0,
            grid=grid,                                 # (B, H, nq, nkv) — KV last
            in_specs=list(in_specs),
            out_specs=out_spec,
            scratch_shapes=[
                pltpu.VMEM((block, 1), jnp.float32),         # running max   m
                pltpu.VMEM((block, 1), jnp.float32),         # running sum   l
                pltpu.VMEM((block, head_dim), jnp.float32),  # output accumulator
            ],
        ),
        compiler_params=pltpu.CompilerParams(
            dimension_semantics=("parallel", "parallel", "parallel", "arbitrary")),
    )(*inputs)


def causal_attention_from_qkv(qkv, *, n_head, head_dim, block_size=128):
    """Flash attention directly on the fused (B, T, 3*C) QKV projection output.

    Head split happens inside the BlockSpec index_maps (zero-copy): each
    (block, D) tile is taken from the right channel slice (q: block h,
    k: n_head + h, v: 2*n_head + h), and the context is written straight back
    in (B, T, C) layout — no XLA transposes.  Requires head_dim % 128 == 0."""
    B, T, _ = qkv.shape
    H, D = n_head, head_dim
    block = _pick_tile(T, block_size, 8)   # block_q == block_k (needed for skipping)
    nblk = T // block
    scale = 1.0 / (D ** 0.5)

    q_spec = pl.BlockSpec((None, block, D), lambda b, h, qi, kv: (b, qi, h))
    # Clamp K/V fetches to the diagonal for skipped (upper-triangular) steps so
    # no fresh DMA is issued for blocks whose compute is skipped.
    k_spec = pl.BlockSpec((None, block, D),
                          lambda b, h, qi, kv: (b, jnp.minimum(kv, qi), H + h))
    v_spec = pl.BlockSpec((None, block, D),
                          lambda b, h, qi, kv: (b, jnp.minimum(kv, qi), 2 * H + h))
    o_spec = pl.BlockSpec((None, block, D), lambda b, h, qi, kv: (b, qi, h))

    out_shape = jax.ShapeDtypeStruct((B, T, H * D), qkv.dtype)
    return _flash_call((qkv, qkv, qkv), (q_spec, k_spec, v_spec), o_spec,
                       out_shape, (B, H, nblk, nblk), block, D, scale)


def causal_attention_bhtd(q, k, v, *, block_size=128):
    """Fallback flash attention on head-split (B, H, T, D) tensors (used when
    head_dim is not a multiple of 128)."""
    B, H, T, D = q.shape
    block = _pick_tile(T, block_size, 8)
    nblk = T // block
    scale = 1.0 / (D ** 0.5)

    q_spec = pl.BlockSpec((None, None, block, D),
                          lambda b, h, qi, kv: (b, h, qi, 0))
    kv_spec = pl.BlockSpec((None, None, block, D),
                           lambda b, h, qi, kv: (b, h, jnp.minimum(kv, qi), 0))
    o_spec = pl.BlockSpec((None, None, block, D),
                          lambda b, h, qi, kv: (b, h, qi, 0))

    out_shape = jax.ShapeDtypeStruct((B, H, T, D), q.dtype)
    return _flash_call((q, k, v), (q_spec, kv_spec, kv_spec), o_spec,
                       out_shape, (B, H, nblk, nblk), block, D, scale)


# ------------------------------ module wrapper -------------------------------

def causal_self_attention(x, params, n_head, *, mxu_dtype=None, block_size=128):
    """Forward pass equivalent to CausalSelfAttention.forward (dropout p=0.0).

    mxu_dtype=jnp.bfloat16 feeds the MXU bf16 operands (v6e/v7x fast path, also
    halves HBM/VMEM traffic) while keeping accumulation / softmax in fp32.
    """
    B, T, C = x.shape
    assert C % n_head == 0, "n_embed must be divisible by n_head"
    D = C // n_head
    out_dtype = x.dtype
    cd = mxu_dtype or x.dtype

    # QKV projection (tiled Pallas matmul + bias).
    x2d = x.reshape(B * T, C).astype(cd)
    qkv = linear(x2d, params["w_qkv"].astype(cd), params["b_qkv"],
                 out_dtype=cd)                                   # (B*T, 3C)

    if D % 128 == 0:
        # Fast path: head split / merge folded into BlockSpec index_maps.
        # reshape (B*T, 3C) -> (B, T, 3C) and (B, T, C) -> (B*T, C) are free
        # (no data movement), so no XLA transpose ever touches HBM.
        ctx2d = causal_attention_from_qkv(
            qkv.reshape(B, T, 3 * C), n_head=n_head, head_dim=D,
            block_size=block_size).reshape(B * T, C)
    else:
        # Fallback: explicit head transposes in XLA, attention on (B, H, T, D)
        # (block last dim equals the full array dim, so any head_dim is legal).
        qkv5 = qkv.reshape(B, T, 3, n_head, D).transpose(2, 0, 3, 1, 4)
        ctx = causal_attention_bhtd(qkv5[0], qkv5[1], qkv5[2],
                                    block_size=block_size)
        ctx2d = ctx.transpose(0, 2, 1, 3).reshape(B * T, C)

    # Output projection (tiled Pallas matmul + bias).
    y = linear(ctx2d.astype(cd), params["w_out"].astype(cd), params["b_out"],
               out_dtype=out_dtype)
    return y.reshape(B, T, C)


def init_params(key, n_embed):
    """nn.Linear-style init; weights stored pre-transposed as (in, out)."""
    k1, k2, k3, k4 = jax.random.split(key, 4)
    s = 1.0 / (n_embed ** 0.5)
    return {
        "w_qkv": jax.random.uniform(k1, (n_embed, 3 * n_embed), jnp.float32, -s, s),
        "b_qkv": jax.random.uniform(k2, (3 * n_embed,), jnp.float32, -s, s),
        "w_out": jax.random.uniform(k3, (n_embed, n_embed), jnp.float32, -s, s),
        "b_out": jax.random.uniform(k4, (n_embed,), jnp.float32, -s, s),
    }


# Pure-JAX reference (no Pallas) for correctness checking.
def _reference(x, params, n_head):
    B, T, C = x.shape
    D = C // n_head
    qkv = x @ params["w_qkv"] + params["b_qkv"]
    q, k, v = jnp.split(qkv, 3, axis=-1)
    q = q.reshape(B, T, n_head, D).transpose(0, 2, 1, 3)
    k = k.reshape(B, T, n_head, D).transpose(0, 2, 1, 3)
    v = v.reshape(B, T, n_head, D).transpose(0, 2, 1, 3)
    s = jnp.einsum("bhqd,bhkd->bhqk", q, k) / (D ** 0.5)
    mask = jnp.tril(jnp.ones((T, T), dtype=bool))
    s = jnp.where(mask, s, -jnp.inf)
    p = jax.nn.softmax(s, axis=-1)
    out = jnp.einsum("bhqk,bhkd->bhqd", p, v)
    out = out.transpose(0, 2, 1, 3).reshape(B, T, C)
    return out @ params["w_out"] + params["b_out"]


if __name__ == "__main__":
    key = jax.random.PRNGKey(0)
    kx1, kp1, kx2, kp2 = jax.random.split(key, 4)

    # Case 1: head_dim = 128 -> fused-layout fast path (no XLA transposes);
    # 2x2 q/kv blocks exercise online softmax + causal block skipping.
    B, T, C, H = 2, 256, 256, 2
    x = jax.random.normal(kx1, (B, T, C), dtype=jnp.float32)
    params = init_params(kp1, C)
    fwd = jax.jit(functools.partial(causal_self_attention, n_head=H))
    out = jax.block_until_ready(fwd(x, params))
    ref = _reference(x, params, H)
    assert out.shape == (B, T, C)
    assert jnp.allclose(out, ref, atol=5e-3, rtol=5e-3), "fp32 fused-path mismatch"

    # bf16 MXU-operand fast path (v6e/v7x); accumulation stays fp32.
    fwd_bf16 = jax.jit(functools.partial(causal_self_attention, n_head=H,
                                         mxu_dtype=jnp.bfloat16))
    out_bf16 = jax.block_until_ready(fwd_bf16(x, params))
    assert out_bf16.shape == (B, T, C)
    assert jnp.allclose(out_bf16, ref, atol=1e-1, rtol=1e-1), "bf16 mismatch"

    # Case 2: head_dim = 64 -> (B, H, T, D) fallback path.
    B2, T2, C2, H2 = 2, 256, 256, 4
    x2 = jax.random.normal(kx2, (B2, T2, C2), dtype=jnp.float32)
    params2 = init_params(kp2, C2)
    fwd2 = jax.jit(functools.partial(causal_self_attention, n_head=H2))
    out2 = jax.block_until_ready(fwd2(x2, params2))
    ref2 = _reference(x2, params2, H2)
    assert out2.shape == (B2, T2, C2)
    assert jnp.allclose(out2, ref2, atol=5e-3, rtol=5e-3), "fp32 fallback-path mismatch"

    print("KERNEL_OK")
</pallas_src>

<mosaic_0001>
module attributes {stable_mosaic.version = 11 : i64} {
  func.func @_flash_attn_kernel(%arg0: i32, %arg1: i32, %arg2: i32, %arg3: i32, %arg4: memref<1x128x128xf32, #tpu.memory_space<vmem>>, %arg5: memref<1x128x128xf32, #tpu.memory_space<vmem>>, %arg6: memref<1x128x128xf32, #tpu.memory_space<vmem>>, %arg7: memref<1x128x128xf32, #tpu.memory_space<vmem>>, %arg8: memref<128x1xf32, #tpu.memory_space<vmem>>, %arg9: memref<128x1xf32, #tpu.memory_space<vmem>>, %arg10: memref<128x128xf32, #tpu.memory_space<vmem>>) attributes {dimension_semantics = [#tpu.dimension_semantics<parallel>, #tpu.dimension_semantics<parallel>, #tpu.dimension_semantics<parallel>, #tpu.dimension_semantics<arbitrary>], iteration_bounds = array<i64: 2, 2, 2, 2>, scalar_prefetch = 0 : i64, scratch_operands = 3 : i64, tpu.core_type = #tpu.core_type<tc>, window_params = [{transform_indices = @transform_0, window_bounds = array<i64: 1, 128, 128>}, {transform_indices = @transform_1, window_bounds = array<i64: 1, 128, 128>}, {transform_indices = @transform_2, window_bounds = array<i64: 1, 128, 128>}, {transform_indices = @transform_3, window_bounds = array<i64: 1, 128, 128>}]} {
    %c0_i32 = arith.constant 0 : i32
    %0 = arith.cmpi eq, %arg3, %c0_i32 : i32
    %1 = arith.extui %0 : i1 to i32
    %c0_i32_0 = arith.constant 0 : i32
    %2 = arith.cmpi ne, %1, %c0_i32_0 : i32
    scf.if %2 {
      %cst = arith.constant -2.38197633E+38 : f32
      %9 = vector.broadcast %cst : f32 to vector<128x1xf32>
      %c0 = arith.constant 0 : index
      %c0_3 = arith.constant 0 : index
      %10 = vector.load %arg8[%c0, %c0_3] : memref<128x1xf32, #tpu.memory_space<vmem>>, vector<128x1xf32>
      tpu.vector_store %arg8[%c0, %c0_3], %9 {strides = array<i32>} : memref<128x1xf32, #tpu.memory_space<vmem>>, vector<128x1xf32>,
      %cst_4 = arith.constant 0.000000e+00 : f32
      %11 = vector.broadcast %cst_4 : f32 to vector<128x1xf32>
      %c0_5 = arith.constant 0 : index
      %c0_6 = arith.constant 0 : index
      %12 = vector.load %arg9[%c0_5, %c0_6] : memref<128x1xf32, #tpu.memory_space<vmem>>, vector<128x1xf32>
      tpu.vector_store %arg9[%c0_5, %c0_6], %11 {strides = array<i32>} : memref<128x1xf32, #tpu.memory_space<vmem>>, vector<128x1xf32>,
      %cst_7 = arith.constant 0.000000e+00 : f32
      %13 = vector.broadcast %cst_7 : f32 to vector<128x128xf32>
      %c0_8 = arith.constant 0 : index
      %c0_9 = arith.constant 0 : index
      %14 = vector.load %arg10[%c0_8, %c0_9] : memref<128x128xf32, #tpu.memory_space<vmem>>, vector<128x128xf32>
      tpu.vector_store %arg10[%c0_8, %c0_9], %13 {strides = array<i32>} : memref<128x128xf32, #tpu.memory_space<vmem>>, vector<128x128xf32>,
    } else {
    }
    %3 = arith.cmpi sle, %arg3, %arg2 : i32
    %4 = arith.extui %3 : i1 to i32
    %c0_i32_1 = arith.constant 0 : i32
    %5 = arith.cmpi ne, %4, %c0_i32_1 : i32
    scf.if %5 {
      %c0 = arith.constant 0 : index
      %c0_3 = arith.constant 0 : index
      %c0_4 = arith.constant 0 : index
      %9 = vector.load %arg4[%c0, %c0_3, %c0_4] : memref<1x128x128xf32, #tpu.memory_space<vmem>>, vector<1x128x128xf32>
      %10 = vector.shape_cast %9 : vector<1x128x128xf32> to vector<128x128xf32>
      %cst = arith.constant 0.0883883461 : f32
      %11 = vector.broadcast %cst : f32 to vector<128x128xf32>
      %12 = arith.mulf %10, %11 : vector<128x128xf32>
      %c0_5 = arith.constant 0 : index
      %c0_6 = arith.constant 0 : index
      %c0_7 = arith.constant 0 : index
      %13 = vector.load %arg5[%c0_5, %c0_6, %c0_7] : memref<1x128x128xf32, #tpu.memory_space<vmem>>, vector<1x128x128xf32>
      %14 = vector.shape_cast %13 : vector<1x128x128xf32> to vector<128x128xf32>
      %c0_8 = arith.constant 0 : index
      %c0_9 = arith.constant 0 : index
      %c0_10 = arith.constant 0 : index
      %15 = vector.load %arg6[%c0_8, %c0_9, %c0_10] : memref<1x128x128xf32, #tpu.memory_space<vmem>>, vector<1x128x128xf32>
      %16 = vector.shape_cast %15 : vector<1x128x128xf32> to vector<128x128xf32>
      %cst_11 = arith.constant dense<0.000000e+00> : vector<128x128xf32>
      %17 = tpu.matmul %12, %14, %cst_11 {dimension_numbers = #tpu.dot_dimension_numbers<[1], [1], [0], [0], [0, 0, 1, 0], [], []>} : vector<128x128xf32>, vector<128x128xf32>, vector<128x128xf32> -> vector<128x128xf32>
      %c128_i32 = arith.constant 128 : i32
      %18 = arith.muli %arg2, %c128_i32 : i32
      %19 = tpu.iota {dimensions = array<i32: 0>} : vector<128x128xi32>
      %20 = vector.broadcast %18 : i32 to vector<128x128xi32>
      %21 = arith.addi %20, %19 : vector<128x128xi32>
      %c128_i32_12 = arith.constant 128 : i32
      %22 = arith.muli %arg3, %c128_i32_12 : i32
      %23 = tpu.iota {dimensions = array<i32: 1>} : vector<128x128xi32>
      %24 = vector.broadcast %22 : i32 to vector<128x128xi32>
      %25 = arith.addi %24, %23 : vector<128x128xi32>
      %26 = arith.cmpi sle, %25, %21 : vector<128x128xi32>
      %cst_13 = arith.constant -2.38197633E+38 : f32
      %27 = vector.broadcast %cst_13 : f32 to vector<128x128xf32>
      %28 = arith.select %26, %17, %27 : vector<128x128xi1>, vector<128x128xf32>
      %c0_14 = arith.constant 0 : index
      %c0_15 = arith.constant 0 : index
      %29 = vector.load %arg8[%c0_14, %c0_15] : memref<128x1xf32, #tpu.memory_space<vmem>>, vector<128x1xf32>
      %cst_16 = arith.constant dense<0xFF800000> : vector<128xf32>
      %30 = vector.multi_reduction <maximumf>, %28, %cst_16 [1] : vector<128x128xf32> to vector<128xf32>
      %31 = vector.shape_cast %30 : vector<128xf32> to vector<128x1xf32>
      %32 = arith.maximumf %29, %31 : vector<128x1xf32>
      %33 = arith.subf %29, %32 : vector<128x1xf32>
      %34 = math.exp %33 : vector<128x1xf32>
      %35 = vector.broadcast %32 : vector<128x1xf32> to vector<128x128xf32>
      %36 = arith.subf %28, %35 : vector<128x128xf32>
      %37 = math.exp %36 : vector<128x128xf32>
      %c0_17 = arith.constant 0 : index
      %c0_18 = arith.constant 0 : index
      %38 = vector.load %arg9[%c0_17, %c0_18] : memref<128x1xf32, #tpu.memory_space<vmem>>, vector<128x1xf32>
      %39 = arith.mulf %34, %38 : vector<128x1xf32>
      %cst_19 = arith.constant dense<0.000000e+00> : vector<128xf32>
      %40 = vector.multi_reduction <add>, %37, %cst_19 [1] : vector<128x128xf32> to vector<128xf32>
      %41 = vector.shape_cast %40 : vector<128xf32> to vector<128x1xf32>
      %42 = arith.addf %39, %41 : vector<128x1xf32>
      %c0_20 = arith.constant 0 : index
      %c0_21 = arith.constant 0 : index
      %43 = vector.load %arg9[%c0_20, %c0_21] : memref<128x1xf32, #tpu.memory_space<vmem>>, vector<128x1xf32>
      tpu.vector_store %arg9[%c0_20, %c0_21], %42 {strides = array<i32>} : memref<128x1xf32, #tpu.memory_space<vmem>>, vector<128x1xf32>,
      %c0_22 = arith.constant 0 : index
      %c0_23 = arith.constant 0 : index
      %44 = vector.load %arg10[%c0_22, %c0_23] : memref<128x128xf32, #tpu.memory_space<vmem>>, vector<128x128xf32>
      %45 = vector.broadcast %34 : vector<128x1xf32> to vector<128x128xf32>
      %46 = arith.mulf %45, %44 : vector<128x128xf32>
      %cst_24 = arith.constant dense<0.000000e+00> : vector<128x128xf32>
      %47 = tpu.matmul %37, %16, %cst_24 {dimension_numbers = #tpu.dot_dimension_numbers<[1], [0], [0], [1], [0, 0, 1, 1], [], []>} : vector<128x128xf32>, vector<128x128xf32>, vector<128x128xf32> -> vector<128x128xf32>
      %48 = arith.addf %46, %47 : vector<128x128xf32>
      %c0_25 = arith.constant 0 : index
      %c0_26 = arith.constant 0 : index
      %49 = vector.load %arg10[%c0_25, %c0_26] : memref<128x128xf32, #tpu.memory_space<vmem>>, vector<128x128xf32>
      tpu.vector_store %arg10[%c0_25, %c0_26], %48 {strides = array<i32>} : memref<128x128xf32, #tpu.memory_space<vmem>>, vector<128x128xf32>,
      %c0_27 = arith.constant 0 : index
      %c0_28 = arith.constant 0 : index
      %50 = vector.load %arg8[%c0_27, %c0_28] : memref<128x1xf32, #tpu.memory_space<vmem>>, vector<128x1xf32>
      tpu.vector_store %arg8[%c0_27, %c0_28], %32 {strides = array<i32>} : memref<128x1xf32, #tpu.memory_space<vmem>>, vector<128x1xf32>,
    } else {
    }
    %6 = arith.cmpi eq, %arg3, %arg2 : i32
    %7 = arith.extui %6 : i1 to i32
    %c0_i32_2 = arith.constant 0 : i32
    %8 = arith.cmpi ne, %7, %c0_i32_2 : i32
    scf.if %8 {
      %c0 = arith.constant 0 : index
      %c0_3 = arith.constant 0 : index
      %9 = vector.load %arg9[%c0, %c0_3] : memref<128x1xf32, #tpu.memory_space<vmem>>, vector<128x1xf32>
      %10 = tpu.reciprocal %9 {approx = true} : vector<128x1xf32> -> vector<128x1xf32>
      %c0_4 = arith.constant 0 : index
      %c0_5 = arith.constant 0 : index
      %11 = vector.load %arg10[%c0_4, %c0_5] : memref<128x128xf32, #tpu.memory_space<vmem>>, vector<128x128xf32>
      %12 = vector.broadcast %10 : vector<128x1xf32> to vector<128x128xf32>
      %13 = arith.mulf %11, %12 : vector<128x128xf32>
      %c0_6 = arith.constant 0 : index
      %c0_7 = arith.constant 0 : index
      %c0_8 = arith.constant 0 : index
      %14 = vector.load %arg7[%c0_6, %c0_7, %c0_8] : memref<1x128x128xf32, #tpu.memory_space<vmem>>, vector<1x128x128xf32>
      %15 = vector.shape_cast %14 : vector<1x128x128xf32> to vector<128x128xf32>
      %16 = vector.shape_cast %13 : vector<128x128xf32> to vector<1x128x128xf32>
      tpu.vector_store %arg7[%c0_6, %c0_7, %c0_8], %16 {strides = array<i32>} : memref<1x128x128xf32, #tpu.memory_space<vmem>>, vector<1x128x128xf32>,
    } else {
    }
    return
  }
  func.func @transform_0(%arg0: i32, %arg1: i32, %arg2: i32, %arg3: i32) -> (i32, i32, i32) {
    %c0_i32 = arith.constant 0 : i32
    return %arg0, %arg2, %arg1 : i32, i32, i32
  }
  func.func @transform_1(%arg0: i32, %arg1: i32, %arg2: i32, %arg3: i32) -> (i32, i32, i32) {
    %0 = arith.minsi %arg3, %arg2 : i32
    %c2_i32 = arith.constant 2 : i32
    %1 = arith.addi %c2_i32, %arg1 : i32
    %c0_i32 = arith.constant 0 : i32
    return %arg0, %0, %1 : i32, i32, i32
  }
  func.func @transform_2(%arg0: i32, %arg1: i32, %arg2: i32, %arg3: i32) -> (i32, i32, i32) {
    %0 = arith.minsi %arg3, %arg2 : i32
    %c4_i32 = arith.constant 4 : i32
    %1 = arith.addi %c4_i32, %arg1 : i32
    %c0_i32 = arith.constant 0 : i32
    return %arg0, %0, %1 : i32, i32, i32
  }
  func.func @transform_3(%arg0: i32, %arg1: i32, %arg2: i32, %arg3: i32) -> (i32, i32, i32) {
    %c0_i32 = arith.constant 0 : i32
    return %arg0, %arg2, %arg1 : i32, i32, i32
  }
}

module attributes {stable_mosaic.version = 11 : i64} {
  func.func @_linear_kernel(%arg0: i32, %arg1: i32, %arg2: i32, %arg3: memref<512x256xf32, #tpu.memory_space<vmem>>, %arg4: memref<256x256xf32, #tpu.memory_space<vmem>>, %arg5: memref<1x256xf32, #tpu.memory_space<vmem>>, %arg6: memref<512x256xf32, #tpu.memory_space<vmem>>, %arg7: memref<512x256xf32, #tpu.memory_space<vmem>>) attributes {dimension_semantics = [#tpu.dimension_semantics<parallel>, #tpu.dimension_semantics<parallel>, #tpu.dimension_semantics<arbitrary>], iteration_bounds = array<i64: 1, 1, 1>, scalar_prefetch = 0 : i64, scratch_operands = 1 : i64, tpu.core_type = #tpu.core_type<tc>, window_params = [{transform_indices = @transform_0, window_bounds = array<i64: 512, 256>}, {transform_indices = @transform_1, window_bounds = array<i64: 256, 256>}, {transform_indices = @transform_2, window_bounds = array<i64: 1, 256>}, {transform_indices = @transform_3, window_bounds = array<i64: 512, 256>}]} {
    %c0_i32 = arith.constant 0 : i32
    %0 = arith.cmpi eq, %arg2, %c0_i32 : i32
    %1 = arith.extui %0 : i1 to i32
    %c0_i32_0 = arith.constant 0 : i32
    %2 = arith.cmpi ne, %1, %c0_i32_0 : i32
    scf.if %2 {
      %cst_10 = arith.constant 0.000000e+00 : f32
      %12 = vector.broadcast %cst_10 : f32 to vector<512x256xf32>
      %c0_11 = arith.constant 0 : index
      %c0_12 = arith.constant 0 : index
      %13 = vector.load %arg7[%c0_11, %c0_12] : memref<512x256xf32, #tpu.memory_space<vmem>>, vector<512x256xf32>
      tpu.vector_store %arg7[%c0_11, %c0_12], %12 {strides = array<i32>} : memref<512x256xf32, #tpu.memory_space<vmem>>, vector<512x256xf32>,
    } else {
    }
    %c0 = arith.constant 0 : index
    %c0_1 = arith.constant 0 : index
    %3 = vector.load %arg7[%c0, %c0_1] : memref<512x256xf32, #tpu.memory_space<vmem>>, vector<512x256xf32>
    %c0_2 = arith.constant 0 : index
    %c0_3 = arith.constant 0 : index
    %4 = vector.load %arg3[%c0_2, %c0_3] : memref<512x256xf32, #tpu.memory_space<vmem>>, vector<512x256xf32>
    %c0_4 = arith.constant 0 : index
    %c0_5 = arith.constant 0 : index
    %5 = vector.load %arg4[%c0_4, %c0_5] : memref<256x256xf32, #tpu.memory_space<vmem>>, vector<256x256xf32>
    %cst = arith.constant dense<0.000000e+00> : vector<512x256xf32>
    %6 = tpu.matmul %4, %5, %cst {dimension_numbers = #tpu.dot_dimension_numbers<[1], [0], [0], [1], [0, 0, 1, 1], [], []>} : vector<512x256xf32>, vector<256x256xf32>, vector<512x256xf32> -> vector<512x256xf32>
    %7 = arith.addf %3, %6 : vector<512x256xf32>
    %c0_6 = arith.constant 0 : index
    %c0_7 = arith.constant 0 : index
    %8 = vector.load %arg7[%c0_6, %c0_7] : memref<512x256xf32, #tpu.memory_space<vmem>>, vector<512x256xf32>
    tpu.vector_store %arg7[%c0_6, %c0_7], %7 {strides = array<i32>} : memref<512x256xf32, #tpu.memory_space<vmem>>, vector<512x256xf32>,
    %c0_i32_8 = arith.constant 0 : i32
    %9 = arith.cmpi eq, %arg2, %c0_i32_8 : i32
    %10 = arith.extui %9 : i1 to i32
    %c0_i32_9 = arith.constant 0 : i32
    %11 = arith.cmpi ne, %10, %c0_i32_9 : i32
    scf.if %11 {
      %c0_10 = arith.constant 0 : index
      %c0_11 = arith.constant 0 : index
      %12 = vector.load %arg7[%c0_10, %c0_11] : memref<512x256xf32, #tpu.memory_space<vmem>>, vector<512x256xf32>
      %c0_12 = arith.constant 0 : index
      %c0_13 = arith.constant 0 : index
      %13 = vector.load %arg5[%c0_12, %c0_13] : memref<1x256xf32, #tpu.memory_space<vmem>>, vector<1x256xf32>
      %14 = vector.broadcast %13 : vector<1x256xf32> to vector<512x256xf32>
      %15 = arith.addf %12, %14 : vector<512x256xf32>
      %c0_14 = arith.constant 0 : index
      %c0_15 = arith.constant 0 : index
      %16 = vector.load %arg6[%c0_14, %c0_15] : memref<512x256xf32, #tpu.memory_space<vmem>>, vector<512x256xf32>
      tpu.vector_store %arg6[%c0_14, %c0_15], %15 {strides = array<i32>} : memref<512x256xf32, #tpu.memory_space<vmem>>, vector<512x256xf32>,
    } else {
    }
    return
  }
  func.func @transform_0(%arg0: i32, %arg1: i32, %arg2: i32) -> (i32, i32) {
    %c0_i32 = arith.constant 0 : i32
    return %arg0, %arg2 : i32, i32
  }
  func.func @transform_1(%arg0: i32, %arg1: i32, %arg2: i32) -> (i32, i32) {
    %c0_i32 = arith.constant 0 : i32
    return %arg2, %arg1 : i32, i32
  }
  func.func @transform_2(%arg0: i32, %arg1: i32, %arg2: i32) -> (i32, i32) {
    %c0_i32 = arith.constant 0 : i32
    %c0_i32_0 = arith.constant 0 : i32
    return %c0_i32, %arg1 : i32, i32
  }
  func.func @transform_3(%arg0: i32, %arg1: i32, %arg2: i32) -> (i32, i32) {
    %c0_i32 = arith.constant 0 : i32
    return %arg0, %arg1 : i32, i32
  }
}

module attributes {stable_mosaic.version = 11 : i64} {
  func.func @_linear_kernel(%arg0: i32, %arg1: i32, %arg2: i32, %arg3: memref<512x256xf32, #tpu.memory_space<vmem>>, %arg4: memref<256x384xf32, #tpu.memory_space<vmem>>, %arg5: memref<1x384xf32, #tpu.memory_space<vmem>>, %arg6: memref<512x384xf32, #tpu.memory_space<vmem>>, %arg7: memref<512x384xf32, #tpu.memory_space<vmem>>) attributes {dimension_semantics = [#tpu.dimension_semantics<parallel>, #tpu.dimension_semantics<parallel>, #tpu.dimension_semantics<arbitrary>], iteration_bounds = array<i64: 1, 2, 1>, scalar_prefetch = 0 : i64, scratch_operands = 1 : i64, tpu.core_type = #tpu.core_type<tc>, window_params = [{transform_indices = @transform_0, window_bounds = array<i64: 512, 256>}, {transform_indices = @transform_1, window_bounds = array<i64: 256, 384>}, {transform_indices = @transform_2, window_bounds = array<i64: 1, 384>}, {transform_indices = @transform_3, window_bounds = array<i64: 512, 384>}]} {
    %c0_i32 = arith.constant 0 : i32
    %0 = arith.cmpi eq, %arg2, %c0_i32 : i32
    %1 = arith.extui %0 : i1 to i32
    %c0_i32_0 = arith.constant 0 : i32
    %2 = arith.cmpi ne, %1, %c0_i32_0 : i32
    scf.if %2 {
      %cst_10 = arith.constant 0.000000e+00 : f32
      %12 = vector.broadcast %cst_10 : f32 to vector<512x384xf32>
      %c0_11 = arith.constant 0 : index
      %c0_12 = arith.constant 0 : index
      %13 = vector.load %arg7[%c0_11, %c0_12] : memref<512x384xf32, #tpu.memory_space<vmem>>, vector<512x384xf32>
      tpu.vector_store %arg7[%c0_11, %c0_12], %12 {strides = array<i32>} : memref<512x384xf32, #tpu.memory_space<vmem>>, vector<512x384xf32>,
    } else {
    }
    %c0 = arith.constant 0 : index
    %c0_1 = arith.constant 0 : index
    %3 = vector.load %arg7[%c0, %c0_1] : memref<512x384xf32, #tpu.memory_space<vmem>>, vector<512x384xf32>
    %c0_2 = arith.constant 0 : index
    %c0_3 = arith.constant 0 : index
    %4 = vector.load %arg3[%c0_2, %c0_3] : memref<512x256xf32, #tpu.memory_space<vmem>>, vector<512x256xf32>
    %c0_4 = arith.constant 0 : index
    %c0_5 = arith.constant 0 : index
    %5 = vector.load %arg4[%c0_4, %c0_5] : memref<256x384xf32, #tpu.memory_space<vmem>>, vector<256x384xf32>
    %cst = arith.constant dense<0.000000e+00> : vector<512x384xf32>
    %6 = tpu.matmul %4, %5, %cst {dimension_numbers = #tpu.dot_dimension_numbers<[1], [0], [0], [1], [0, 0, 1, 1], [], []>} : vector<512x256xf32>, vector<256x384xf32>, vector<512x384xf32> -> vector<512x384xf32>
    %7 = arith.addf %3, %6 : vector<512x384xf32>
    %c0_6 = arith.constant 0 : index
    %c0_7 = arith.constant 0 : index
    %8 = vector.load %arg7[%c0_6, %c0_7] : memref<512x384xf32, #tpu.memory_space<vmem>>, vector<512x384xf32>
    tpu.vector_store %arg7[%c0_6, %c0_7], %7 {strides = array<i32>} : memref<512x384xf32, #tpu.memory_space<vmem>>, vector<512x384xf32>,
    %c0_i32_8 = arith.constant 0 : i32
    %9 = arith.cmpi eq, %arg2, %c0_i32_8 : i32
    %10 = arith.extui %9 : i1 to i32
    %c0_i32_9 = arith.constant 0 : i32
    %11 = arith.cmpi ne, %10, %c0_i32_9 : i32
    scf.if %11 {
      %c0_10 = arith.constant 0 : index
      %c0_11 = arith.constant 0 : index
      %12 = vector.load %arg7[%c0_10, %c0_11] : memref<512x384xf32, #tpu.memory_space<vmem>>, vector<512x384xf32>
      %c0_12 = arith.constant 0 : index
      %c0_13 = arith.constant 0 : index
      %13 = vector.load %arg5[%c0_12, %c0_13] : memref<1x384xf32, #tpu.memory_space<vmem>>, vector<1x384xf32>
      %14 = vector.broadcast %13 : vector<1x384xf32> to vector<512x384xf32>
      %15 = arith.addf %12, %14 : vector<512x384xf32>
      %c0_14 = arith.constant 0 : index
      %c0_15 = arith.constant 0 : index
      %16 = vector.load %arg6[%c0_14, %c0_15] : memref<512x384xf32, #tpu.memory_space<vmem>>, vector<512x384xf32>
      tpu.vector_store %arg6[%c0_14, %c0_15], %15 {strides = array<i32>} : memref<512x384xf32, #tpu.memory_space<vmem>>, vector<512x384xf32>,
    } else {
    }
    return
  }
  func.func @transform_0(%arg0: i32, %arg1: i32, %arg2: i32) -> (i32, i32) {
    %c0_i32 = arith.constant 0 : i32
    return %arg0, %arg2 : i32, i32
  }
  func.func @transform_1(%arg0: i32, %arg1: i32, %arg2: i32) -> (i32, i32) {
    %c0_i32 = arith.constant 0 : i32
    return %arg2, %arg1 : i32, i32
  }
  func.func @transform_2(%arg0: i32, %arg1: i32, %arg2: i32) -> (i32, i32) {
    %c0_i32 = arith.constant 0 : i32
    %c0_i32_0 = arith.constant 0 : i32
    return %c0_i32, %arg1 : i32, i32
  }
  func.func @transform_3(%arg0: i32, %arg1: i32, %arg2: i32) -> (i32, i32) {
    %c0_i32 = arith.constant 0 : i32
    return %arg0, %arg1 : i32, i32
  }
}

</mosaic_0001>

<llo_original>
// kernel: causal_self_attention.4
$region0: #{causal_self_attention.4}
  #allocation0 [shape = 'u32[]', space=smem, size = 0x4, offset = 0x4, fixed_abs, tag = 'smem constant byte address 0x4 - core index']
  #allocation1 [shape = 'u32[144,128]{1,0:T(1,128)}', space=vmem, size = 0x12000, scoped, tag = 'internal scratch']
  #allocation2 [shape = 'f32[128,1]{1,0:T(8,128)}', space=vmem, size = 0x10000, scoped, tag = 'scratch operand']
  #allocation3 [shape = 'f32[128,1]{1,0:T(8,128)}', space=vmem, size = 0x10000, scoped, tag = 'scratch operand']
  #allocation4 [shape = 'f32[128,128]{1,0:T(8,128)}', space=vmem, size = 0x10000, scoped, tag = 'scratch operand']
  %s0 = inlined_call_operand.vmem [shape: f32[2,256,768], index: 0, kind: input, shape index: {}, may-alias: {0,1,2}]
  %s1 = inlined_call_operand.vmem [shape: f32[2,256,768], index: 1, kind: input, shape index: {}, may-alias: {0,1,2}]
  %s2 = inlined_call_operand.vmem [shape: f32[2,256,768], index: 2, kind: input, shape index: {}, may-alias: {0,1,2}]
  %s3 = inlined_call_operand.vmem [shape: f32[2,256,256], index: 3, kind: output, shape index: {}]
  %s4 = sld [smem:[#allocation0]]
  $region205: #{causal_self_attention.4} parent=0
    _
  %s6 = ssub.s32 1, %s4
  %s7 = scalar_select 0, %s6, %s4
  $region1: #{causal_self_attention.4} parent=0
    #allocation5 [shape = 'u8[131072]{0}', space=vmem, size = 0x20000, scoped, tag = 'input window, operand 0']
    #allocation6 [shape = 'u8[131072]{0}', space=vmem, size = 0x20000, scoped, tag = 'input window, operand 1']
    #allocation7 [shape = 'u8[131072]{0}', space=vmem, size = 0x20000, scoped, tag = 'input window, operand 2']
    #allocation8 [shape = 'u8[131072]{0}', space=vmem, size = 0x20000, scoped, tag = 'output window, operand 0']
    loop: start=0, step=1, limit=18
    $region2: #{causal_self_attention.4} parent=1 // loop_pre_header
      _
    $region3: #{causal_self_attention.4} parent=1 // loop_header
      %s9 = sphi 0, %s13
      %p10 = scmp.ge.s32.totalorder %s9, 18
      %s16 = sphi 0, %s42
      %s17 = sphi 0, %s38
      %s18 = sphi 0, %s34
      %s19 = sphi 0, %s30
      %s20 = sphi 0, %s16
      %s21 = sphi 0, %s17
      %s22 = sphi 0, %s18
      %s23 = sphi 0, %s19
      %s24 = sphi 0, %s20
      %s25 = sphi 0, %s21
      %s26 = sphi 0, %s22
      %s27 = sphi 0, %s23
      %s49 = sphi 0, %s51
      %s52 = sphi 0, %s49
      %s53 = sphi 0, %s52
      %s69 = sphi 0, %s53
      %s85 = sphi 0, %s87
      %s88 = sphi 0, %s85
      %s89 = sphi 0, %s88
      %s105 = sphi 0, %s89
      %s121 = sphi 0, %s123
      %s124 = sphi 0, %s121
      %s125 = sphi 0, %s124
      %s141 = sphi 0, %s125
      %s151 = sphi 0, %s153
      %s154 = sphi 0, %s151
      %s155 = sphi 0, %s154
      %s171 = sphi 0, %s155
    $region4: #{causal_self_attention.4} parent=1 // loop_header_branch
      %12 = sbr.rel (%p10) target = $region8
    $region5: #{causal_self_attention.4} parent=1 // loop_body
      %s14 = ssub.s32 %s9, 1
      %s15 = ssub.s32 %s9, 2
      %s28 = sadd.s32 1, %s19
      %p29 = scmp.ge.s32.totalorder %s28, 2
      %s30 = scalar_select %p29, 0, %s28
      %s31 = sadd.s32 1, %s18
      %s32 = scalar_select %p29, %s31, %s18
      %p33 = scmp.ge.s32.totalorder %s32, 2
      %s34 = scalar_select %p33, 0, %s32
      %s35 = sadd.s32 1, %s17
      %s36 = scalar_select %p33, %s35, %s17
      %p37 = scmp.ge.s32.totalorder %s36, 2
      %s38 = scalar_select %p37, 0, %s36
      %s39 = sadd.s32 1, %s16
      %s40 = scalar_select %p37, %s39, %s16
      %p41 = scmp.ge.s32.totalorder %s40, 2
      %s42 = scalar_select %p41, 0, %s40
      %s43 = ssub.s32 %s16, %s42
      %s44 = ssub.s32 %s18, %s34
      %s45 = sor.u32 %s43, %s44
      %s46 = ssub.s32 %s17, %s38
      %s47 = sor.u32 %s45, %s46
      %p48 = scmp.eq.s32.totalorder %s47, 0
      %s50 = sadd.s32 %s49, 1
      %s51 = scalar_select %p48, %s49, %s50
      %p54 = pneg %p48
      %p55 = scmp.eq.s32.totalorder %s9, 15
      %p56 = por %p54, %p55
      %p57 = scmp.ne.s32.totalorder %s49, %s52
      %p58 = scmp.eq.s32.totalorder %s9, 0
      %p59 = por %p57, %p58
      %p60 = scmp.ne.s32.totalorder %s49, %s52
      %p61 = scmp.eq.s32.totalorder %s14, 15
      %p62 = por %p60, %p61
      %p63 = scmp.ne.s32.totalorder %s52, %s53
      %p64 = scmp.eq.s32.totalorder %s14, 0
      %p65 = por %p63, %p64
      %p66 = scmp.ne.s32.totalorder %s52, %s53
      %p67 = scmp.eq.s32.totalorder %s15, 15
      %p68 = por %p66, %p67
      %p70 = scmp.ne.s32.totalorder %s53, %s69
      %p71 = scmp.eq.s32.totalorder %s15, 0
      %p72 = por %p70, %p71
      %p73 = scmp.lt.s32.totalorder %s19, %s18
      %s74 = scalar_select %p73, %s19, %s18
      %s75 = sadd.s32 %s17, 2
      %p76 = scmp.lt.s32.totalorder %s30, %s34
      %s77 = scalar_select %p76, %s30, %s34
      %s78 = sadd.s32 %s38, 2
      %s79 = ssub.s32 %s16, %s42
      %s80 = ssub.s32 %s74, %s77
      %s81 = sor.u32 %s79, %s80
      %s82 = ssub.s32 %s75, %s78
      %s83 = sor.u32 %s81, %s82
      %p84 = scmp.eq.s32.totalorder %s83, 0
      %s86 = sadd.s32 %s85, 1
      %s87 = scalar_select %p84, %s85, %s86
      %p90 = pneg %p84
      %p91 = scmp.eq.s32.totalorder %s9, 15
      %p92 = por %p90, %p91
      %p93 = scmp.ne.s32.totalorder %s85, %s88
      %p94 = scmp.eq.s32.totalorder %s9, 0
      %p95 = por %p93, %p94
      %p96 = scmp.ne.s32.totalorder %s85, %s88
      %p97 = scmp.eq.s32.totalorder %s14, 15
      %p98 = por %p96, %p97
      %p99 = scmp.ne.s32.totalorder %s88, %s89
      %p100 = scmp.eq.s32.totalorder %s14, 0
      %p101 = por %p99, %p100
      %p102 = scmp.ne.s32.totalorder %s88, %s89
      %p103 = scmp.eq.s32.totalorder %s15, 15
      %p104 = por %p102, %p103
      %p106 = scmp.ne.s32.totalorder %s89, %s105
      %p107 = scmp.eq.s32.totalorder %s15, 0
      %p108 = por %p106, %p107
      %p109 = scmp.lt.s32.totalorder %s19, %s18
      %s110 = scalar_select %p109, %s19, %s18
      %s111 = sadd.s32 %s17, 4
      %p112 = scmp.lt.s32.totalorder %s30, %s34
      %s113 = scalar_select %p112, %s30, %s34
      %s114 = sadd.s32 %s38, 4
      %s115 = ssub.s32 %s16, %s42
      %s116 = ssub.s32 %s110, %s113
      %s117 = sor.u32 %s115, %s116
      %s118 = ssub.s32 %s111, %s114
      %s119 = sor.u32 %s117, %s118
      %p120 = scmp.eq.s32.totalorder %s119, 0
      %s122 = sadd.s32 %s121, 1
      %s123 = scalar_select %p120, %s121, %s122
      %p126 = pneg %p120
      %p127 = scmp.eq.s32.totalorder %s9, 15
      %p128 = por %p126, %p127
      %p129 = scmp.ne.s32.totalorder %s121, %s124
      %p130 = scmp.eq.s32.totalorder %s9, 0
      %p131 = por %p129, %p130
      %p132 = scmp.ne.s32.totalorder %s121, %s124
      %p133 = scmp.eq.s32.totalorder %s14, 15
      %p134 = por %p132, %p133
      %p135 = scmp.ne.s32.totalorder %s124, %s125
      %p136 = scmp.eq.s32.totalorder %s14, 0
      %p137 = por %p135, %p136
      %p138 = scmp.ne.s32.totalorder %s124, %s125
      %p139 = scmp.eq.s32.totalorder %s15, 15
      %p140 = por %p138, %p139
      %p142 = scmp.ne.s32.totalorder %s125, %s141
      %p143 = scmp.eq.s32.totalorder %s15, 0
      %p144 = por %p142, %p143
      %s145 = ssub.s32 %s16, %s42
      %s146 = ssub.s32 %s18, %s34
      %s147 = sor.u32 %s145, %s146
      %s148 = ssub.s32 %s17, %s38
      %s149 = sor.u32 %s147, %s148
      %p150 = scmp.eq.s32.totalorder %s149, 0
      %s152 = sadd.s32 %s151, 1
      %s153 = scalar_select %p150, %s151, %s152
      %p156 = pneg %p150
      %p157 = scmp.eq.s32.totalorder %s9, 15
      %p158 = por %p156, %p157
      %p159 = scmp.ne.s32.totalorder %s151, %s154
      %p160 = scmp.eq.s32.totalorder %s9, 0
      %p161 = por %p159, %p160
      %p162 = scmp.ne.s32.totalorder %s151, %s154
      %p163 = scmp.eq.s32.totalorder %s14, 15
      %p164 = por %p162, %p163
      %p165 = scmp.ne.s32.totalorder %s154, %s155
      %p166 = scmp.eq.s32.totalorder %s14, 0
      %p167 = por %p165, %p166
      %p168 = scmp.ne.s32.totalorder %s154, %s155
      %p169 = scmp.eq.s32.totalorder %s15, 15
      %p170 = por %p168, %p169
      %p172 = scmp.ne.s32.totalorder %s155, %s171
      %p173 = scmp.eq.s32.totalorder %s15, 0
      %p174 = por %p172, %p173
      %p175 = scmp.le.s32.totalorder 1, %s9
      %p176 = scmp.lt.s32.totalorder %s9, 17
      %p177 = pnand %p175, %p176
      %p178 = pneg %p177
      // Predicated region
      $region9: #{causal_self_attention.4} parent=5 // pred_check
        _
      $region10: #{causal_self_attention.4} parent=5 // pred_check_branch
        %180 = sbr.rel (%p177) target = $region12
      $region11: #{causal_self_attention.4} parent=5 // pred_region
        %s181 = ssub.s32 %s9, 1
      $region12: #{causal_self_attention.4} parent=5 // pred_fallthru
        _
      %p182 = scmp.lt.s32.totalorder %s9, 16
      // Predicated region
      $region13: #{causal_self_attention.4} parent=5 // pred_check
        %p183 = pneg %p182
      $region14: #{causal_self_attention.4} parent=5 // pred_check_branch
        %185 = sbr.rel (%p183) target = $region16
      $region15: #{causal_self_attention.4} parent=5 // pred_region
        // Predicated region
        $region17: #{causal_self_attention.4} parent=15 // pred_check
          %p186 = pneg %p59
        $region18: #{causal_self_attention.4} parent=15 // pred_check_branch
          %188 = sbr.rel (%p186) target = $region20
        $region19: #{causal_self_attention.4} parent=15 // pred_region
          %s189 = sand.u32 %s49, 1
          %s190 = sand.u32 %s49, 1
          %s191 = smul.addr %s190, 128
          %s192 = scalar_lea.vmem [#allocation5], %s191
          %s193 = smul.u32 16, %s18
          %s194 = smul.addr %s193, 6
          %s195 = sadd.s32 %s17, %s194
          %s196 = smul.addr %s16, 192
          %s197 = sadd.s32 %s195, %s196
          %s198 = smul.addr %s197, 8
          %s199 = scalar_lea.vmem %s0, %s198
          // Predicated region
          $region21: #{causal_self_attention.4} parent=19 // pred_check
            _
          $region22: #{causal_self_attention.4} parent=19 // pred_check_branch
            %201 = sbr.rel (0) target = $region24
          $region23: #{causal_self_attention.4} parent=19 // pred_region
            // Predicated region
            $region25: #{causal_self_attention.4} parent=23 // pred_check
              _
            $region26: #{causal_self_attention.4} parent=23 // pred_check_branch
              %203 = sbr.rel (0) target = $region28
            $region27: #{causal_self_attention.4} parent=23 // pred_region
              // Predicated region
              $region40: #{causal_self_attention.4} parent=27 // pred_check
                _
              $region41: #{causal_self_attention.4} parent=27 // pred_check_branch
                %248 = sbr.rel (0) target = $region43
              $region42: #{causal_self_attention.4} parent=27 // pred_region
                loop: start=0, step=1, limit=1
                $region44: #{causal_self_attention.4} parent=42 // loop_pre_header
                  _
                $region45: #{causal_self_attention.4} parent=42 // loop_header
                  %s250 = sphi 0, %s254
                  %p251 = scmp.ge.s32.totalorder %s250, 1
                  %s255 = sphi %s199, %s199
                  %s256 = sphi %s192, %s192
                $region46: #{causal_self_attention.4} parent=42 // loop_header_branch
                  %253 = sbr.rel (%p251) target = $region50
                $region47: #{causal_self_attention.4} parent=42 // loop_body
                  %v257 = vld [vmem:[%s255] sm:$0xff]
                  %258 = vst [vmem:[%s256] sm:$0xff] %v257
                  %v259 = vld [vmem:[%s255 + $0x30] sm:$0xff]
                  %260 = vst [vmem:[%s256 + $0x8] sm:$0xff] %v259
                  %v261 = vld [vmem:[%s255 + $0x60] sm:$0xff]
                  %262 = vst [vmem:[%s256 + $0x10] sm:$0xff] %v261
                  %v263 = vld [vmem:[%s255 + $0x90] sm:$0xff]
                  %264 = vst [vmem:[%s256 + $0x18] sm:$0xff] %v263
                  %v265 = vld [vmem:[%s255 + $0xc0] sm:$0xff]
                  %266 = vst [vmem:[%s256 + $0x20] sm:$0xff] %v265
                  %v267 = vld [vmem:[%s255 + $0xf0] sm:$0xff]
                  %268 = vst [vmem:[%s256 + $0x28] sm:$0xff] %v267
                  %v269 = vld [vmem:[%s255 + $0x120] sm:$0xff]
                  %270 = vst [vmem:[%s256 + $0x30] sm:$0xff] %v269
                  %v271 = vld [vmem:[%s255 + $0x150] sm:$0xff]
                  %272 = vst [vmem:[%s256 + $0x38] sm:$0xff] %v271
                  %v273 = vld [vmem:[%s255 + $0x180] sm:$0xff]
                  %274 = vst [vmem:[%s256 + $0x40] sm:$0xff] %v273
                  %v275 = vld [vmem:[%s255 + $0x1b0] sm:$0xff]
                  %276 = vst [vmem:[%s256 + $0x48] sm:$0xff] %v275
                  %v277 = vld [vmem:[%s255 + $0x1e0] sm:$0xff]
                  %278 = vst [vmem:[%s256 + $0x50] sm:$0xff] %v277
                  %v279 = vld [vmem:[%s255 + $0x210] sm:$0xff]
                  %280 = vst [vmem:[%s256 + $0x58] sm:$0xff] %v279
                  %v281 = vld [vmem:[%s255 + $0x240] sm:$0xff]
                  %282 = vst [vmem:[%s256 + $0x60] sm:$0xff] %v281
                  %v283 = vld [vmem:[%s255 + $0x270] sm:$0xff]
                  %284 = vst [vmem:[%s256 + $0x68] sm:$0xff] %v283
                  %v285 = vld [vmem:[%s255 + $0x2a0] sm:$0xff]
                  %286 = vst [vmem:[%s256 + $0x70] sm:$0xff] %v285
                  %v287 = vld [vmem:[%s255 + $0x2d0] sm:$0xff]
                  %288 = vst [vmem:[%s256 + $0x78] sm:$0xff] %v287
                $region48: #{causal_self_attention.4} parent=42 // loop_footer
                  %s254 = sadd.s32 1, %s250
                $region49: #{causal_self_attention.4} parent=42 // loop_footer_branch
                  %249 = sbr.rel target = $region45
                $region50: #{causal_self_attention.4} parent=42 // loop_exit
                  _
              $region43: #{causal_self_attention.4} parent=27 // pred_fallthru
                _
              // Predicated region
              $region51: #{causal_self_attention.4} parent=27 // pred_check
                _
              $region52: #{causal_self_attention.4} parent=27 // pred_check_branch
                %290 = sbr.rel target = $region54
              $region53: #{causal_self_attention.4} parent=27 // pred_region
                _
              $region54: #{causal_self_attention.4} parent=27 // pred_fallthru
                _
            $region28: #{causal_self_attention.4} parent=23 // pred_fallthru
              _
            // Predicated region
            $region29: #{causal_self_attention.4} parent=23 // pred_check
              _
            $region30: #{causal_self_attention.4} parent=23 // pred_check_branch
              %205 = sbr.rel target = $region32
            $region31: #{causal_self_attention.4} parent=23 // pred_region
              loop: start=0, step=1, limit=1
              $region33: #{causal_self_attention.4} parent=31 // loop_pre_header
                _
              $region34: #{causal_self_attention.4} parent=31 // loop_header
                %s208 = sphi 0, %s212
                %p209 = scmp.ge.s32.totalorder %s208, 1
                %s213 = sphi %s199, %s199
                %s214 = sphi %s192, %s192
              $region35: #{causal_self_attention.4} parent=31 // loop_header_branch
                %211 = sbr.rel (%p209) target = $region39
              $region36: #{causal_self_attention.4} parent=31 // loop_body
                %v215 = vld [vmem:[%s213] sm:$0xff]
                %216 = vst [vmem:[%s214] sm:$0xff] %v215
                %v217 = vld [vmem:[%s213 + $0x30] sm:$0xff]
                %218 = vst [vmem:[%s214 + $0x8] sm:$0xff] %v217
                %v219 = vld [vmem:[%s213 + $0x60] sm:$0xff]
                %220 = vst [vmem:[%s214 + $0x10] sm:$0xff] %v219
                %v221 = vld [vmem:[%s213 + $0x90] sm:$0xff]
                %222 = vst [vmem:[%s214 + $0x18] sm:$0xff] %v221
                %v223 = vld [vmem:[%s213 + $0xc0] sm:$0xff]
                %224 = vst [vmem:[%s214 + $0x20] sm:$0xff] %v223
                %v225 = vld [vmem:[%s213 + $0xf0] sm:$0xff]
                %226 = vst [vmem:[%s214 + $0x28] sm:$0xff] %v225
                %v227 = vld [vmem:[%s213 + $0x120] sm:$0xff]
                %228 = vst [vmem:[%s214 + $0x30] sm:$0xff] %v227
                %v229 = vld [vmem:[%s213 + $0x150] sm:$0xff]
                %230 = vst [vmem:[%s214 + $0x38] sm:$0xff] %v229
                %v231 = vld [vmem:[%s213 + $0x180] sm:$0xff]
                %232 = vst [vmem:[%s214 + $0x40] sm:$0xff] %v231
                %v233 = vld [vmem:[%s213 + $0x1b0] sm:$0xff]
                %234 = vst [vmem:[%s214 + $0x48] sm:$0xff] %v233
                %v235 = vld [vmem:[%s213 + $0x1e0] sm:$0xff]
                %236 = vst [vmem:[%s214 + $0x50] sm:$0xff] %v235
                %v237 = vld [vmem:[%s213 + $0x210] sm:$0xff]
                %238 = vst [vmem:[%s214 + $0x58] sm:$0xff] %v237
                %v239 = vld [vmem:[%s213 + $0x240] sm:$0xff]
                %240 = vst [vmem:[%s214 + $0x60] sm:$0xff] %v239
                %v241 = vld [vmem:[%s213 + $0x270] sm:$0xff]
                %242 = vst [vmem:[%s214 + $0x68] sm:$0xff] %v241
                %v243 = vld [vmem:[%s213 + $0x2a0] sm:$0xff]
                %244 = vst [vmem:[%s214 + $0x70] sm:$0xff] %v243
                %v245 = vld [vmem:[%s213 + $0x2d0] sm:$0xff]
                %246 = vst [vmem:[%s214 + $0x78] sm:$0xff] %v245
              $region37: #{causal_self_attention.4} parent=31 // loop_footer
                %s212 = sadd.s32 1, %s208
              $region38: #{causal_self_attention.4} parent=31 // loop_footer_branch
                %207 = sbr.rel target = $region34
              $region39: #{causal_self_attention.4} parent=31 // loop_exit
                _
            $region32: #{causal_self_attention.4} parent=23 // pred_fallthru
              _
          $region24: #{causal_self_attention.4} parent=19 // pred_fallthru
            _
          %291 = vnop
        $region20: #{causal_self_attention.4} parent=15 // pred_fallthru
          _
        // Predicated region
        $region55: #{causal_self_attention.4} parent=15 // pred_check
          %p292 = pneg %p95
        $region56: #{causal_self_attention.4} parent=15 // pred_check_branch
          %294 = sbr.rel (%p292) target = $region58
        $region57: #{causal_self_attention.4} parent=15 // pred_region
          %s295 = sand.u32 %s85, 1
          %s296 = sand.u32 %s85, 1
          %s297 = smul.addr %s296, 128
          %s298 = scalar_lea.vmem [#allocation6], %s297
          %p299 = scmp.lt.s32.totalorder %s19, %s18
          %s300 = scalar_select %p299, %s19, %s18
          %s301 = sadd.s32 %s17, 2
          %s302 = smul.u32 16, %s300
          %s303 = smul.addr %s302, 6
          %s304 = sadd.s32 %s301, %s303
          %s305 = smul.addr %s16, 192
          %s306 = sadd.s32 %s304, %s305
          %s307 = smul.addr %s306, 8
          %s308 = scalar_lea.vmem %s1, %s307
          // Predicated region
          $region59: #{causal_self_attention.4} parent=57 // pred_check
            _
          $region60: #{causal_self_attention.4} parent=57 // pred_check_branch
            %310 = sbr.rel (0) target = $region62
          $region61: #{causal_self_attention.4} parent=57 // pred_region
            // Predicated region
            $region63: #{causal_self_attention.4} parent=61 // pred_check
              _
            $region64: #{causal_self_attention.4} parent=61 // pred_check_branch
              %312 = sbr.rel (0) target = $region66
            $region65: #{causal_self_attention.4} parent=61 // pred_region
              // Predicated region
              $region78: #{causal_self_attention.4} parent=65 // pred_check
                _
              $region79: #{causal_self_attention.4} parent=65 // pred_check_branch
                %357 = sbr.rel (0) target = $region81
              $region80: #{causal_self_attention.4} parent=65 // pred_region
                loop: start=0, step=1, limit=1
                $region82: #{causal_self_attention.4} parent=80 // loop_pre_header
                  _
                $region83: #{causal_self_attention.4} parent=80 // loop_header
                  %s359 = sphi 0, %s363
                  %p360 = scmp.ge.s32.totalorder %s359, 1
                  %s364 = sphi %s308, %s308
                  %s365 = sphi %s298, %s298
                $region84: #{causal_self_attention.4} parent=80 // loop_header_branch
                  %362 = sbr.rel (%p360) target = $region88
                $region85: #{causal_self_attention.4} parent=80 // loop_body
                  %v366 = vld [vmem:[%s364] sm:$0xff]
                  %367 = vst [vmem:[%s365] sm:$0xff] %v366
                  %v368 = vld [vmem:[%s364 + $0x30] sm:$0xff]
                  %369 = vst [vmem:[%s365 + $0x8] sm:$0xff] %v368
                  %v370 = vld [vmem:[%s364 + $0x60] sm:$0xff]
                  %371 = vst [vmem:[%s365 + $0x10] sm:$0xff] %v370
                  %v372 = vld [vmem:[%s364 + $0x90] sm:$0xff]
                  %373 = vst [vmem:[%s365 + $0x18] sm:$0xff] %v372
                  %v374 = vld [vmem:[%s364 + $0xc0] sm:$0xff]
                  %375 = vst [vmem:[%s365 + $0x20] sm:$0xff] %v374
                  %v376 = vld [vmem:[%s364 + $0xf0] sm:$0xff]
                  %377 = vst [vmem:[%s365 + $0x28] sm:$0xff] %v376
                  %v378 = vld [vmem:[%s364 + $0x120] sm:$0xff]
                  %379 = vst [vmem:[%s365 + $0x30] sm:$0xff] %v378
                  %v380 = vld [vmem:[%s364 + $0x150] sm:$0xff]
                  %381 = vst [vmem:[%s365 + $0x38] sm:$0xff] %v380
                  %v382 = vld [vmem:[%s364 + $0x180] sm:$0xff]
                  %383 = vst [vmem:[%s365 + $0x40] sm:$0xff] %v382
                  %v384 = vld [vmem:[%s364 + $0x1b0] sm:$0xff]
                  %385 = vst [vmem:[%s365 + $0x48] sm:$0xff] %v384
                  %v386 = vld [vmem:[%s364 + $0x1e0] sm:$0xff]
                  %387 = vst [vmem:[%s365 + $0x50] sm:$0xff] %v386
                  %v388 = vld [vmem:[%s364 + $0x210] sm:$0xff]
                  %389 = vst [vmem:[%s365 + $0x58] sm:$0xff] %v388
                  %v390 = vld [vmem:[%s364 + $0x240] sm:$0xff]
                  %391 = vst [vmem:[%s365 + $0x60] sm:$0xff] %v390
                  %v392 = vld [vmem:[%s364 + $0x270] sm:$0xff]
                  %393 = vst [vmem:[%s365 + $0x68] sm:$0xff] %v392
                  %v394 = vld [vmem:[%s364 + $0x2a0] sm:$0xff]
                  %395 = vst [vmem:[%s365 + $0x70] sm:$0xff] %v394
                  %v396 = vld [vmem:[%s364 + $0x2d0] sm:$0xff]
                  %397 = vst [vmem:[%s365 + $0x78] sm:$0xff] %v396
                $region86: #{causal_self_attention.4} parent=80 // loop_footer
                  %s363 = sadd.s32 1, %s359
                $region87: #{causal_self_attention.4} parent=80 // loop_footer_branch
                  %358 = sbr.rel target = $region83
                $region88: #{causal_self_attention.4} parent=80 // loop_exit
                  _
              $region81: #{causal_self_attention.4} parent=65 // pred_fallthru
                _
              // Predicated region
              $region89: #{causal_self_attention.4} parent=65 // pred_check
                _
              $region90: #{causal_self_attention.4} parent=65 // pred_check_branch
                %399 = sbr.rel target = $region92
              $region91: #{causal_self_attention.4} parent=65 // pred_region
                _
              $region92: #{causal_self_attention.4} parent=65 // pred_fallthru
                _
            $region66: #{causal_self_attention.4} parent=61 // pred_fallthru
              _
            // Predicated region
            $region67: #{causal_self_attention.4} parent=61 // pred_check
              _
            $region68: #{causal_self_attention.4} parent=61 // pred_check_branch
              %314 = sbr.rel target = $region70
            $region69: #{causal_self_attention.4} parent=61 // pred_region
              loop: start=0, step=1, limit=1
              $region71: #{causal_self_attention.4} parent=69 // loop_pre_header
                _
              $region72: #{causal_self_attention.4} parent=69 // loop_header
                %s317 = sphi 0, %s321
                %p318 = scmp.ge.s32.totalorder %s317, 1
                %s322 = sphi %s308, %s308
                %s323 = sphi %s298, %s298
              $region73: #{causal_self_attention.4} parent=69 // loop_header_branch
                %320 = sbr.rel (%p318) target = $region77
              $region74: #{causal_self_attention.4} parent=69 // loop_body
                %v324 = vld [vmem:[%s322] sm:$0xff]
                %325 = vst [vmem:[%s323] sm:$0xff] %v324
                %v326 = vld [vmem:[%s322 + $0x30] sm:$0xff]
                %327 = vst [vmem:[%s323 + $0x8] sm:$0xff] %v326
                %v328 = vld [vmem:[%s322 + $0x60] sm:$0xff]
                %329 = vst [vmem:[%s323 + $0x10] sm:$0xff] %v328
                %v330 = vld [vmem:[%s322 + $0x90] sm:$0xff]
                %331 = vst [vmem:[%s323 + $0x18] sm:$0xff] %v330
                %v332 = vld [vmem:[%s322 + $0xc0] sm:$0xff]
                %333 = vst [vmem:[%s323 + $0x20] sm:$0xff] %v332
                %v334 = vld [vmem:[%s322 + $0xf0] sm:$0xff]
                %335 = vst [vmem:[%s323 + $0x28] sm:$0xff] %v334
                %v336 = vld [vmem:[%s322 + $0x120] sm:$0xff]
                %337 = vst [vmem:[%s323 + $0x30] sm:$0xff] %v336
                %v338 = vld [vmem:[%s322 + $0x150] sm:$0xff]
                %339 = vst [vmem:[%s323 + $0x38] sm:$0xff] %v338
                %v340 = vld [vmem:[%s322 + $0x180] sm:$0xff]
                %341 = vst [vmem:[%s323 + $0x40] sm:$0xff] %v340
                %v342 = vld [vmem:[%s322 + $0x1b0] sm:$0xff]
                %343 = vst [vmem:[%s323 + $0x48] sm:$0xff] %v342
                %v344 = vld [vmem:[%s322 + $0x1e0] sm:$0xff]
                %345 = vst [vmem:[%s323 + $0x50] sm:$0xff] %v344
                %v346 = vld [vmem:[%s322 + $0x210] sm:$0xff]
                %347 = vst [vmem:[%s323 + $0x58] sm:$0xff] %v346
                %v348 = vld [vmem:[%s322 + $0x240] sm:$0xff]
                %349 = vst [vmem:[%s323 + $0x60] sm:$0xff] %v348
                %v350 = vld [vmem:[%s322 + $0x270] sm:$0xff]
                %351 = vst [vmem:[%s323 + $0x68] sm:$0xff] %v350
                %v352 = vld [vmem:[%s322 + $0x2a0] sm:$0xff]
                %353 = vst [vmem:[%s323 + $0x70] sm:$0xff] %v352
                %v354 = vld [vmem:[%s322 + $0x2d0] sm:$0xff]
                %355 = vst [vmem:[%s323 + $0x78] sm:$0xff] %v354
              $region75: #{causal_self_attention.4} parent=69 // loop_footer
                %s321 = sadd.s32 1, %s317
              $region76: #{causal_self_attention.4} parent=69 // loop_footer_branch
                %316 = sbr.rel target = $region72
              $region77: #{causal_self_attention.4} parent=69 // loop_exit
                _
            $region70: #{causal_self_attention.4} parent=61 // pred_fallthru
              _
          $region62: #{causal_self_attention.4} parent=57 // pred_fallthru
            _
          %400 = vnop
        $region58: #{causal_self_attention.4} parent=15 // pred_fallthru
          _
        // Predicated region
        $region93: #{causal_self_attention.4} parent=15 // pred_check
          %p401 = pneg %p131
        $region94: #{causal_self_attention.4} parent=15 // pred_check_branch
          %403 = sbr.rel (%p401) target = $region96
        $region95: #{causal_self_attention.4} parent=15 // pred_region
          %s404 = sand.u32 %s121, 1
          %s405 = sand.u32 %s121, 1
          %s406 = smul.addr %s405, 128
          %s407 = scalar_lea.vmem [#allocation7], %s406
          %p408 = scmp.lt.s32.totalorder %s19, %s18
          %s409 = scalar_select %p408, %s19, %s18
          %s410 = sadd.s32 %s17, 4
          %s411 = smul.u32 16, %s409
          %s412 = smul.addr %s411, 6
          %s413 = sadd.s32 %s410, %s412
          %s414 = smul.addr %s16, 192
          %s415 = sadd.s32 %s413, %s414
          %s416 = smul.addr %s415, 8
          %s417 = scalar_lea.vmem %s2, %s416
          // Predicated region
          $region97: #{causal_self_attention.4} parent=95 // pred_check
            _
          $region98: #{causal_self_attention.4} parent=95 // pred_check_branch
            %419 = sbr.rel (0) target = $region100
          $region99: #{causal_self_attention.4} parent=95 // pred_region
            // Predicated region
            $region101: #{causal_self_attention.4} parent=99 // pred_check
              _
            $region102: #{causal_self_attention.4} parent=99 // pred_check_branch
              %421 = sbr.rel (0) target = $region104
            $region103: #{causal_self_attention.4} parent=99 // pred_region
              // Predicated region
              $region116: #{causal_self_attention.4} parent=103 // pred_check
                _
              $region117: #{causal_self_attention.4} parent=103 // pred_check_branch
                %466 = sbr.rel (0) target = $region119
              $region118: #{causal_self_attention.4} parent=103 // pred_region
                loop: start=0, step=1, limit=1
                $region120: #{causal_self_attention.4} parent=118 // loop_pre_header
                  _
                $region121: #{causal_self_attention.4} parent=118 // loop_header
                  %s468 = sphi 0, %s472
                  %p469 = scmp.ge.s32.totalorder %s468, 1
                  %s473 = sphi %s417, %s417
                  %s474 = sphi %s407, %s407
                $region122: #{causal_self_attention.4} parent=118 // loop_header_branch
                  %471 = sbr.rel (%p469) target = $region126
                $region123: #{causal_self_attention.4} parent=118 // loop_body
                  %v475 = vld [vmem:[%s473] sm:$0xff]
                  %476 = vst [vmem:[%s474] sm:$0xff] %v475
                  %v477 = vld [vmem:[%s473 + $0x30] sm:$0xff]
                  %478 = vst [vmem:[%s474 + $0x8] sm:$0xff] %v477
                  %v479 = vld [vmem:[%s473 + $0x60] sm:$0xff]
                  %480 = vst [vmem:[%s474 + $0x10] sm:$0xff] %v479
                  %v481 = vld [vmem:[%s473 + $0x90] sm:$0xff]
                  %482 = vst [vmem:[%s474 + $0x18] sm:$0xff] %v481
                  %v483 = vld [vmem:[%s473 + $0xc0] sm:$0xff]
                  %484 = vst [vmem:[%s474 + $0x20] sm:$0xff] %v483
                  %v485 = vld [vmem:[%s473 + $0xf0] sm:$0xff]
                  %486 = vst [vmem:[%s474 + $0x28] sm:$0xff] %v485
                  %v487 = vld [vmem:[%s473 + $0x120] sm:$0xff]
                  %488 = vst [vmem:[%s474 + $0x30] sm:$0xff] %v487
                  %v489 = vld [vmem:[%s473 + $0x150] sm:$0xff]
                  %490 = vst [vmem:[%s474 + $0x38] sm:$0xff] %v489
                  %v491 = vld [vmem:[%s473 + $0x180] sm:$0xff]
                  %492 = vst [vmem:[%s474 + $0x40] sm:$0xff] %v491
                  %v493 = vld [vmem:[%s473 + $0x1b0] sm:$0xff]
                  %494 = vst [vmem:[%s474 + $0x48] sm:$0xff] %v493
                  %v495 = vld [vmem:[%s473 + $0x1e0] sm:$0xff]
                  %496 = vst [vmem:[%s474 + $0x50] sm:$0xff] %v495
                  %v497 = vld [vmem:[%s473 + $0x210] sm:$0xff]
                  %498 = vst [vmem:[%s474 + $0x58] sm:$0xff] %v497
                  %v499 = vld [vmem:[%s473 + $0x240] sm:$0xff]
                  %500 = vst [vmem:[%s474 + $0x60] sm:$0xff] %v499
                  %v501 = vld [vmem:[%s473 + $0x270] sm:$0xff]
                  %502 = vst [vmem:[%s474 + $0x68] sm:$0xff] %v501
                  %v503 = vld [vmem:[%s473 + $0x2a0] sm:$0xff]
                  %504 = vst [vmem:[%s474 + $0x70] sm:$0xff] %v503
                  %v505 = vld [vmem:[%s473 + $0x2d0] sm:$0xff]
                  %506 = vst [vmem:[%s474 + $0x78] sm:$0xff] %v505
                $region124: #{causal_self_attention.4} parent=118 // loop_footer
                  %s472 = sadd.s32 1, %s468
                $region125: #{causal_self_attention.4} parent=118 // loop_footer_branch
                  %467 = sbr.rel target = $region121
                $region126: #{causal_self_attention.4} parent=118 // loop_exit
                  _
              $region119: #{causal_self_attention.4} parent=103 // pred_fallthru
                _
              // Predicated region
              $region127: #{causal_self_attention.4} parent=103 // pred_check
                _
              $region128: #{causal_self_attention.4} parent=103 // pred_check_branch
                %508 = sbr.rel target = $region130
              $region129: #{causal_self_attention.4} parent=103 // pred_region
                _
              $region130: #{causal_self_attention.4} parent=103 // pred_fallthru
                _
            $region104: #{causal_self_attention.4} parent=99 // pred_fallthru
              _
            // Predicated region
            $region105: #{causal_self_attention.4} parent=99 // pred_check
              _
            $region106: #{causal_self_attention.4} parent=99 // pred_check_branch
              %423 = sbr.rel target = $region108
            $region107: #{causal_self_attention.4} parent=99 // pred_region
              loop: start=0, step=1, limit=1
              $region109: #{causal_self_attention.4} parent=107 // loop_pre_header
                _
              $region110: #{causal_self_attention.4} parent=107 // loop_header
                %s426 = sphi 0, %s430
                %p427 = scmp.ge.s32.totalorder %s426, 1
                %s431 = sphi %s417, %s417
                %s432 = sphi %s407, %s407
              $region111: #{causal_self_attention.4} parent=107 // loop_header_branch
                %429 = sbr.rel (%p427) target = $region115
              $region112: #{causal_self_attention.4} parent=107 // loop_body
                %v433 = vld [vmem:[%s431] sm:$0xff]
                %434 = vst [vmem:[%s432] sm:$0xff] %v433
                %v435 = vld [vmem:[%s431 + $0x30] sm:$0xff]
                %436 = vst [vmem:[%s432 + $0x8] sm:$0xff] %v435
                %v437 = vld [vmem:[%s431 + $0x60] sm:$0xff]
                %438 = vst [vmem:[%s432 + $0x10] sm:$0xff] %v437
                %v439 = vld [vmem:[%s431 + $0x90] sm:$0xff]
                %440 = vst [vmem:[%s432 + $0x18] sm:$0xff] %v439
                %v441 = vld [vmem:[%s431 + $0xc0] sm:$0xff]
                %442 = vst [vmem:[%s432 + $0x20] sm:$0xff] %v441
                %v443 = vld [vmem:[%s431 + $0xf0] sm:$0xff]
                %444 = vst [vmem:[%s432 + $0x28] sm:$0xff] %v443
                %v445 = vld [vmem:[%s431 + $0x120] sm:$0xff]
                %446 = vst [vmem:[%s432 + $0x30] sm:$0xff] %v445
                %v447 = vld [vmem:[%s431 + $0x150] sm:$0xff]
                %448 = vst [vmem:[%s432 + $0x38] sm:$0xff] %v447
                %v449 = vld [vmem:[%s431 + $0x180] sm:$0xff]
                %450 = vst [vmem:[%s432 + $0x40] sm:$0xff] %v449
                %v451 = vld [vmem:[%s431 + $0x1b0] sm:$0xff]
                %452 = vst [vmem:[%s432 + $0x48] sm:$0xff] %v451
                %v453 = vld [vmem:[%s431 + $0x1e0] sm:$0xff]
                %454 = vst [vmem:[%s432 + $0x50] sm:$0xff] %v453
                %v455 = vld [vmem:[%s431 + $0x210] sm:$0xff]
                %456 = vst [vmem:[%s432 + $0x58] sm:$0xff] %v455
                %v457 = vld [vmem:[%s431 + $0x240] sm:$0xff]
                %458 = vst [vmem:[%s432 + $0x60] sm:$0xff] %v457
                %v459 = vld [vmem:[%s431 + $0x270] sm:$0xff]
                %460 = vst [vmem:[%s432 + $0x68] sm:$0xff] %v459
                %v461 = vld [vmem:[%s431 + $0x2a0] sm:$0xff]
                %462 = vst [vmem:[%s432 + $0x70] sm:$0xff] %v461
                %v463 = vld [vmem:[%s431 + $0x2d0] sm:$0xff]
                %464 = vst [vmem:[%s432 + $0x78] sm:$0xff] %v463
              $region113: #{causal_self_attention.4} parent=107 // loop_footer
                %s430 = sadd.s32 1, %s426
              $region114: #{causal_self_attention.4} parent=107 // loop_footer_branch
                %425 = sbr.rel target = $region110
              $region115: #{causal_self_attention.4} parent=107 // loop_exit
                _
            $region108: #{causal_self_attention.4} parent=99 // pred_fallthru
              _
          $region100: #{causal_self_attention.4} parent=95 // pred_fallthru
            _
          %509 = vnop
        $region96: #{causal_self_attention.4} parent=15 // pred_fallthru
          _
      $region16: #{causal_self_attention.4} parent=5 // pred_fallthru
        _
      %p510 = scmp.le.s32.totalorder 1, %s9
      %p511 = scmp.lt.s32.totalorder %s9, 17
      %p512 = pnand %p510, %p511
      %p513 = pneg %p512
      // Predicated region
      $region131: #{causal_self_attention.4} parent=5 // pred_check
        _
      $region132: #{causal_self_attention.4} parent=5 // pred_check_branch
        %515 = sbr.rel (%p512) target = $region134
      $region133: #{causal_self_attention.4} parent=5 // pred_region
        %s516 = ssub.s32 %s9, 1
        %s517 = sand.u32 %s52, 1
        %s518 = sand.u32 %s52, 1
        %s519 = smul.addr %s518, 128
        %s520 = scalar_lea.vmem [#allocation5], %s519
        // Predicated region
        $region135: #{causal_self_attention.4} parent=133 // pred_check
          %p521 = pneg %p65
        $region136: #{causal_self_attention.4} parent=133 // pred_check_branch
          %523 = sbr.rel (%p521) target = $region138
        $region137: #{causal_self_attention.4} parent=133 // pred_region
          _
        $region138: #{causal_self_attention.4} parent=133 // pred_fallthru
          _
        %s524 = sand.u32 %s88, 1
        %s525 = sand.u32 %s88, 1
        %s526 = smul.addr %s525, 128
        %s527 = scalar_lea.vmem [#allocation6], %s526
        // Predicated region
        $region139: #{causal_self_attention.4} parent=133 // pred_check
          %p528 = pneg %p101
        $region140: #{causal_self_attention.4} parent=133 // pred_check_branch
          %530 = sbr.rel (%p528) target = $region142
        $region141: #{causal_self_attention.4} parent=133 // pred_region
          _
        $region142: #{causal_self_attention.4} parent=133 // pred_fallthru
          _
        %s531 = sand.u32 %s124, 1
        %s532 = sand.u32 %s124, 1
        %s533 = smul.addr %s532, 128
        %s534 = scalar_lea.vmem [#allocation7], %s533
        // Predicated region
        $region143: #{causal_self_attention.4} parent=133 // pred_check
          %p535 = pneg %p137
        $region144: #{causal_self_attention.4} parent=133 // pred_check_branch
          %537 = sbr.rel (%p535) target = $region146
        $region145: #{causal_self_attention.4} parent=133 // pred_region
          _
        $region146: #{causal_self_attention.4} parent=133 // pred_fallthru
          _
        %s538 = sand.u32 %s52, 1
        %s539 = sand.u32 %s52, 1
        %s540 = smul.addr %s539, 128
        %s541 = scalar_lea.vmem [#allocation5], %s540
        %p542 = pneg %p65
        %p543 = pneg %p62
        %s544 = sand.u32 %s88, 1
        %s545 = sand.u32 %s88, 1
        %s546 = smul.addr %s545, 128
        %s547 = scalar_lea.vmem [#allocation6], %s546
        %p548 = pneg %p101
        %p549 = pneg %p98
        %s550 = sand.u32 %s124, 1
        %s551 = sand.u32 %s124, 1
        %s552 = smul.addr %s551, 128
        %s553 = scalar_lea.vmem [#allocation7], %s552
        %p554 = pneg %p137
        %p555 = pneg %p134
        %p556 = pneg %p167
        %p557 = pneg %p164
        %s558 = sand.u32 %s154, 1
        %s559 = sand.u32 %s154, 1
        %s560 = smul.addr %s559, 128
        %s561 = scalar_lea.vmem [#allocation8], %s560
        %s562 = smul.u32 16, %s22
        %p563 = scmp.lt.s32.totalorder %s23, %s22
        %s564 = scalar_select %p563, %s23, %s22
        %s565 = sadd.s32 %s21, 2
        %s566 = smul.u32 16, %s564
        %p567 = scmp.lt.s32.totalorder %s23, %s22
        %s568 = scalar_select %p567, %s23, %s22
        %s569 = sadd.s32 %s21, 4
        %s570 = smul.u32 16, %s568
        %s571 = smul.u32 16, %s22
        %p572 = scmp.eq.s32.totalorder %s23, 0
        // Predicated region
        $region147: #{causal_self_attention.4} parent=133 // pred_check
          %p573 = pneg %p572
        $region148: #{causal_self_attention.4} parent=133 // pred_check_branch
          %575 = sbr.rel (%p573) target = $region150
        $region149: #{causal_self_attention.4} parent=133 // pred_region
          %vm576 = vcmask 7168
          %577 = vst.msk [vmem:[#allocation2] sm:$0xff] %vm576, -2.3819763e+38
          %578 = vst.msk [vmem:[#allocation2 + $0x8] sm:$0xff] %vm576, -2.3819763e+38
          %579 = vst.msk [vmem:[#allocation2 + $0x10] sm:$0xff] %vm576, -2.3819763e+38
          %580 = vst.msk [vmem:[#allocation2 + $0x18] sm:$0xff] %vm576, -2.3819763e+38
          %581 = vst.msk [vmem:[#allocation2 + $0x20] sm:$0xff] %vm576, -2.3819763e+38
          %582 = vst.msk [vmem:[#allocation2 + $0x28] sm:$0xff] %vm576, -2.3819763e+38
          %583 = vst.msk [vmem:[#allocation2 + $0x30] sm:$0xff] %vm576, -2.3819763e+38
          %584 = vst.msk [vmem:[#allocation2 + $0x38] sm:$0xff] %vm576, -2.3819763e+38
          %585 = vst.msk [vmem:[#allocation2 + $0x40] sm:$0xff] %vm576, -2.3819763e+38
          %586 = vst.msk [vmem:[#allocation2 + $0x48] sm:$0xff] %vm576, -2.3819763e+38
          %587 = vst.msk [vmem:[#allocation2 + $0x50] sm:$0xff] %vm576, -2.3819763e+38
          %588 = vst.msk [vmem:[#allocation2 + $0x58] sm:$0xff] %vm576, -2.3819763e+38
          %589 = vst.msk [vmem:[#allocation2 + $0x60] sm:$0xff] %vm576, -2.3819763e+38
          %590 = vst.msk [vmem:[#allocation2 + $0x68] sm:$0xff] %vm576, -2.3819763e+38
          %591 = vst.msk [vmem:[#allocation2 + $0x70] sm:$0xff] %vm576, -2.3819763e+38
          %592 = vst.msk [vmem:[#allocation2 + $0x78] sm:$0xff] %vm576, -2.3819763e+38
          %593 = vst.msk [vmem:[#allocation3] sm:$0xff] %vm576, 0.0
          %594 = vst.msk [vmem:[#allocation3 + $0x8] sm:$0xff] %vm576, 0.0
          %595 = vst.msk [vmem:[#allocation3 + $0x10] sm:$0xff] %vm576, 0.0
          %596 = vst.msk [vmem:[#allocation3 + $0x18] sm:$0xff] %vm576, 0.0
          %597 = vst.msk [vmem:[#allocation3 + $0x20] sm:$0xff] %vm576, 0.0
          %598 = vst.msk [vmem:[#allocation3 + $0x28] sm:$0xff] %vm576, 0.0
          %599 = vst.msk [vmem:[#allocation3 + $0x30] sm:$0xff] %vm576, 0.0
          %600 = vst.msk [vmem:[#allocation3 + $0x38] sm:$0xff] %vm576, 0.0
          %601 = vst.msk [vmem:[#allocation3 + $0x40] sm:$0xff] %vm576, 0.0
          %602 = vst.msk [vmem:[#allocation3 + $0x48] sm:$0xff] %vm576, 0.0
          %603 = vst.msk [vmem:[#allocation3 + $0x50] sm:$0xff] %vm576, 0.0
          %604 = vst.msk [vmem:[#allocation3 + $0x58] sm:$0xff] %vm576, 0.0
          %605 = vst.msk [vmem:[#allocation3 + $0x60] sm:$0xff] %vm576, 0.0
          %606 = vst.msk [vmem:[#allocation3 + $0x68] sm:$0xff] %vm576, 0.0
          %607 = vst.msk [vmem:[#allocation3 + $0x70] sm:$0xff] %vm576, 0.0
          %608 = vst.msk [vmem:[#allocation3 + $0x78] sm:$0xff] %vm576, 0.0
          %609 = vst [vmem:[#allocation4] sm:$0xff] 0.0
          %610 = vst [vmem:[#allocation4 + $0x8] sm:$0xff] 0.0
          %611 = vst [vmem:[#allocation4 + $0x10] sm:$0xff] 0.0
          %612 = vst [vmem:[#allocation4 + $0x18] sm:$0xff] 0.0
          %613 = vst [vmem:[#allocation4 + $0x20] sm:$0xff] 0.0
          %614 = vst [vmem:[#allocation4 + $0x28] sm:$0xff] 0.0
          %615 = vst [vmem:[#allocation4 + $0x30] sm:$0xff] 0.0
          %616 = vst [vmem:[#allocation4 + $0x38] sm:$0xff] 0.0
          %617 = vst [vmem:[#allocation4 + $0x40] sm:$0xff] 0.0
          %618 = vst [vmem:[#allocation4 + $0x48] sm:$0xff] 0.0
          %619 = vst [vmem:[#allocation4 + $0x50] sm:$0xff] 0.0
          %620 = vst [vmem:[#allocation4 + $0x58] sm:$0xff] 0.0
          %621 = vst [vmem:[#allocation4 + $0x60] sm:$0xff] 0.0
          %622 = vst [vmem:[#allocation4 + $0x68] sm:$0xff] 0.0
          %623 = vst [vmem:[#allocation4 + $0x70] sm:$0xff] 0.0
          %624 = vst [vmem:[#allocation4 + $0x78] sm:$0xff] 0.0
        $region150: #{causal_self_attention.4} parent=133 // pred_fallthru
          _
        %p625 = scmp.le.s32.totalorder %s23, %s22
        // Predicated region
        $region151: #{causal_self_attention.4} parent=133 // pred_check
          %p626 = pneg %p625
        $region152: #{causal_self_attention.4} parent=133 // pred_check_branch
          %628 = sbr.rel (%p626) target = $region154
        $region153: #{causal_self_attention.4} parent=133 // pred_region
          %v629 = vld [vmem:[%s520] sm:$0xff]
          %v630 = vld [vmem:[%s520 + $0x8] sm:$0xff]
          %v631 = vld [vmem:[%s520 + $0x10] sm:$0xff]
          %v632 = vld [vmem:[%s520 + $0x18] sm:$0xff]
          %v633 = vld [vmem:[%s520 + $0x20] sm:$0xff]
          %v634 = vld [vmem:[%s520 + $0x28] sm:$0xff]
          %v635 = vld [vmem:[%s520 + $0x30] sm:$0xff]
          %v636 = vld [vmem:[%s520 + $0x38] sm:$0xff]
          %v637 = vld [vmem:[%s520 + $0x40] sm:$0xff]
          %v638 = vld [vmem:[%s520 + $0x48] sm:$0xff]
          %v639 = vld [vmem:[%s520 + $0x50] sm:$0xff]
          %v640 = vld [vmem:[%s520 + $0x58] sm:$0xff]
          %v641 = vld [vmem:[%s520 + $0x60] sm:$0xff]
          %v642 = vld [vmem:[%s520 + $0x68] sm:$0xff]
          %v643 = vld [vmem:[%s520 + $0x70] sm:$0xff]
          %v644 = vld [vmem:[%s520 + $0x78] sm:$0xff]
          %v645 = vmul.f32 %v629, 0.088388346
          %v646 = vmul.f32 %v630, 0.088388346
          %v647 = vmul.f32 %v631, 0.088388346
          %v648 = vmul.f32 %v632, 0.088388346
          %v649 = vmul.f32 %v633, 0.088388346
          %v650 = vmul.f32 %v634, 0.088388346
          %v651 = vmul.f32 %v635, 0.088388346
          %v652 = vmul.f32 %v636, 0.088388346
          %v653 = vmul.f32 %v637, 0.088388346
          %v654 = vmul.f32 %v638, 0.088388346
          %v655 = vmul.f32 %v639, 0.088388346
          %v656 = vmul.f32 %v640, 0.088388346
          %v657 = vmul.f32 %v641, 0.088388346
          %v658 = vmul.f32 %v642, 0.088388346
          %v659 = vmul.f32 %v643, 0.088388346
          %v660 = vmul.f32 %v644, 0.088388346
          %v661 = vld [vmem:[%s527] sm:$0xff]
          %v662 = vld [vmem:[%s527 + $0x8] sm:$0xff]
          %v663 = vld [vmem:[%s527 + $0x10] sm:$0xff]
          %v664 = vld [vmem:[%s527 + $0x18] sm:$0xff]
          %v665 = vld [vmem:[%s527 + $0x20] sm:$0xff]
          %v666 = vld [vmem:[%s527 + $0x28] sm:$0xff]
          %v667 = vld [vmem:[%s527 + $0x30] sm:$0xff]
          %v668 = vld [vmem:[%s527 + $0x38] sm:$0xff]
          %v669 = vld [vmem:[%s527 + $0x40] sm:$0xff]
          %v670 = vld [vmem:[%s527 + $0x48] sm:$0xff]
          %v671 = vld [vmem:[%s527 + $0x50] sm:$0xff]
          %v672 = vld [vmem:[%s527 + $0x58] sm:$0xff]
          %v673 = vld [vmem:[%s527 + $0x60] sm:$0xff]
          %v674 = vld [vmem:[%s527 + $0x68] sm:$0xff]
          %v675 = vld [vmem:[%s527 + $0x70] sm:$0xff]
          %v676 = vld [vmem:[%s527 + $0x78] sm:$0xff]
          %v677 = vld [vmem:[%s534] sm:$0xff]
          %v678 = vld [vmem:[%s534 + $0x8] sm:$0xff]
          %v679 = vld [vmem:[%s534 + $0x10] sm:$0xff]
          %v680 = vld [vmem:[%s534 + $0x18] sm:$0xff]
          %v681 = vld [vmem:[%s534 + $0x20] sm:$0xff]
          %v682 = vld [vmem:[%s534 + $0x28] sm:$0xff]
          %v683 = vld [vmem:[%s534 + $0x30] sm:$0xff]
          %v684 = vld [vmem:[%s534 + $0x38] sm:$0xff]
          %v685 = vld [vmem:[%s534 + $0x40] sm:$0xff]
          %v686 = vld [vmem:[%s534 + $0x48] sm:$0xff]
          %v687 = vld [vmem:[%s534 + $0x50] sm:$0xff]
          %v688 = vld [vmem:[%s534 + $0x58] sm:$0xff]
          %v689 = vld [vmem:[%s534 + $0x60] sm:$0xff]
          %v690 = vld [vmem:[%s534 + $0x68] sm:$0xff]
          %v691 = vld [vmem:[%s534 + $0x70] sm:$0xff]
          %v692 = vld [vmem:[%s534 + $0x78] sm:$0xff]
          %693 = vmatprep.subr.mxu0 0.0
          %694 = vmatpush1.xpose.msra.mxu0 %v661
          %695 = vmatprep.subr.mxu0 0.0
          %696 = vmatpush1.xpose.msra.mxu0 %v662
          %697 = vmatprep.subr.mxu0 0.0
          %698 = vmatpush1.xpose.msra.mxu0 %v663
          %699 = vmatprep.subr.mxu0 0.0
          %700 = vmatpush1.xpose.msra.mxu0 %v664
          %701 = vmatprep.subr.mxu0 0.0
          %702 = vmatpush1.xpose.msra.mxu0 %v665
          %703 = vmatprep.subr.mxu0 0.0
          %704 = vmatpush1.xpose.msra.mxu0 %v666
          %705 = vmatprep.subr.mxu0 0.0
          %706 = vmatpush1.xpose.msra.mxu0 %v667
          %707 = vmatprep.subr.mxu0 0.0
          %708 = vmatpush1.xpose.msra.mxu0 %v668
          %709 = vmatprep.subr.mxu0 0.0
          %710 = vmatpush1.xpose.msra.mxu0 %v669
          %711 = vmatprep.subr.mxu0 0.0
          %712 = vmatpush1.xpose.msra.mxu0 %v670
          %713 = vmatprep.subr.mxu0 0.0
          %714 = vmatpush1.xpose.msra.mxu0 %v671
          %715 = vmatprep.subr.mxu0 0.0
          %716 = vmatpush1.xpose.msra.mxu0 %v672
          %717 = vmatprep.subr.mxu0 0.0
          %718 = vmatpush1.xpose.msra.mxu0 %v673
          %719 = vmatprep.subr.mxu0 0.0
          %720 = vmatpush1.xpose.msra.mxu0 %v674
          %721 = vmatprep.subr.mxu0 0.0
          %722 = vmatpush1.xpose.msra.mxu0 %v675
          %723 = vmatprep.subr.mxu0 0.0
          %724 = vmatpush1.xpose.msra.mxu0 %v676
          %725 = vmatprep.subr.mxu0 0.0
          %726 = vmatpush1.xpose.msra.mxu0 0.0
          %727 = vmatprep.subr.mxu0 0.0
          %728 = vmatpush1.xpose.msra.mxu0 0.0
          %729 = vmatprep.subr.mxu0 0.0
          %730 = vmatpush1.xpose.msra.mxu0 0.0
          %731 = vmatprep.subr.mxu0 0.0
          %732 = vmatpush1.xpose.msra.mxu0 0.0
          %733 = vmatprep.subr.mxu0 0.0
          %734 = vmatpush1.xpose.msra.mxu0 0.0
          %735 = vmatprep.subr.mxu0 0.0
          %736 = vmatpush1.xpose.msra.mxu0 0.0
          %737 = vmatprep.subr.mxu0 0.0
          %738 = vmatpush1.xpose.msra.mxu0 0.0
          %739 = vmatprep.subr.mxu0 0.0
          %740 = vmatpush1.xpose.msra.mxu0 0.0
          %741 = vmatprep.subr.mxu0 0.0
          %742 = vmatpush1.xpose.msra.mxu0 0.0
          %743 = vmatprep.subr.mxu0 0.0
          %744 = vmatpush1.xpose.msra.mxu0 0.0
          %745 = vmatprep.subr.mxu0 0.0
          %746 = vmatpush1.xpose.msra.mxu0 0.0
          %747 = vmatprep.subr.mxu0 0.0
          %748 = vmatpush1.xpose.msra.mxu0 0.0
          %749 = vmatprep.subr.mxu0 0.0
          %750 = vmatpush1.xpose.msra.mxu0 0.0
          %751 = vmatprep.subr.mxu0 0.0
          %752 = vmatpush1.xpose.msra.mxu0 0.0
          %753 = vmatprep.subr.mxu0 0.0
          %754 = vmatpush1.xpose.msra.mxu0 0.0
          %755 = vmatprep.subr.mxu0 0.0
          %756 = vmatpush1.xpose.msra.mxu0 0.0
          %757 = vmatprep.mubr.f32.mxu0 0.0
          %758 = vmatmul.mubr.f32.gmra.mrb[0].mxu0 %v645
          %v759 = vpop.f32.mrb[0].mxu0
          %v760 = vadd.f32 0.0, %v759
          %v761 = vpop.f32.mrb[0].mxu0
          %762 = vmatprep.mubr.f32.mxu0 0.0
          %763 = vmatmul.mubr.f32.gmra.mrb[0].mxu0 %v646
          %v764 = vpop.f32.mrb[0].mxu0
          %v765 = vadd.f32 0.0, %v764
          %v766 = vpop.f32.mrb[0].mxu0
          %767 = vmatprep.mubr.f32.mxu0 0.0
          %768 = vmatmul.mubr.f32.gmra.mrb[0].mxu0 %v647
          %v769 = vpop.f32.mrb[0].mxu0
          %v770 = vadd.f32 0.0, %v769
          %v771 = vpop.f32.mrb[0].mxu0
          %772 = vmatprep.mubr.f32.mxu0 0.0
          %773 = vmatmul.mubr.f32.gmra.mrb[0].mxu0 %v648
          %v774 = vpop.f32.mrb[0].mxu0
          %v775 = vadd.f32 0.0, %v774
          %v776 = vpop.f32.mrb[0].mxu0
          %777 = vmatprep.mubr.f32.mxu0 0.0
          %778 = vmatmul.mubr.f32.gmra.mrb[0].mxu0 %v649
          %v779 = vpop.f32.mrb[0].mxu0
          %v780 = vadd.f32 0.0, %v779
          %v781 = vpop.f32.mrb[0].mxu0
          %782 = vmatprep.mubr.f32.mxu0 0.0
          %783 = vmatmul.mubr.f32.gmra.mrb[0].mxu0 %v650
          %v784 = vpop.f32.mrb[0].mxu0
          %v785 = vadd.f32 0.0, %v784
          %v786 = vpop.f32.mrb[0].mxu0
          %787 = vmatprep.mubr.f32.mxu0 0.0
          %788 = vmatmul.mubr.f32.gmra.mrb[0].mxu0 %v651
          %v789 = vpop.f32.mrb[0].mxu0
          %v790 = vadd.f32 0.0, %v789
          %v791 = vpop.f32.mrb[0].mxu0
          %792 = vmatprep.mubr.f32.mxu0 0.0
          %793 = vmatmul.mubr.f32.gmra.mrb[0].mxu0 %v652
          %v794 = vpop.f32.mrb[0].mxu0
          %v795 = vadd.f32 0.0, %v794
          %v796 = vpop.f32.mrb[0].mxu0
          %797 = vmatprep.mubr.f32.mxu0 0.0
          %798 = vmatmul.mubr.f32.gmra.mrb[0].mxu0 %v653
          %v799 = vpop.f32.mrb[0].mxu0
          %v800 = vadd.f32 0.0, %v799
          %v801 = vpop.f32.mrb[0].mxu0
          %802 = vmatprep.mubr.f32.mxu0 0.0
          %803 = vmatmul.mubr.f32.gmra.mrb[0].mxu0 %v654
          %v804 = vpop.f32.mrb[0].mxu0
          %v805 = vadd.f32 0.0, %v804
          %v806 = vpop.f32.mrb[0].mxu0
          %807 = vmatprep.mubr.f32.mxu0 0.0
          %808 = vmatmul.mubr.f32.gmra.mrb[0].mxu0 %v655
          %v809 = vpop.f32.mrb[0].mxu0
          %v810 = vadd.f32 0.0, %v809
          %v811 = vpop.f32.mrb[0].mxu0
          %812 = vmatprep.mubr.f32.mxu0 0.0
          %813 = vmatmul.mubr.f32.gmra.mrb[0].mxu0 %v656
          %v814 = vpop.f32.mrb[0].mxu0
          %v815 = vadd.f32 0.0, %v814
          %v816 = vpop.f32.mrb[0].mxu0
          %817 = vmatprep.mubr.f32.mxu0 0.0
          %818 = vmatmul.mubr.f32.gmra.mrb[0].mxu0 %v657
          %v819 = vpop.f32.mrb[0].mxu0
          %v820 = vadd.f32 0.0, %v819
          %v821 = vpop.f32.mrb[0].mxu0
          %822 = vmatprep.mubr.f32.mxu0 0.0
          %823 = vmatmul.mubr.f32.gmra.mrb[0].mxu0 %v658
          %v824 = vpop.f32.mrb[0].mxu0
          %v825 = vadd.f32 0.0, %v824
          %v826 = vpop.f32.mrb[0].mxu0
          %827 = vmatprep.mubr.f32.mxu0 0.0
          %828 = vmatmul.mubr.f32.gmra.mrb[0].mxu0 %v659
          %v829 = vpop.f32.mrb[0].mxu0
          %v830 = vadd.f32 0.0, %v829
          %v831 = vpop.f32.mrb[0].mxu0
          %832 = vmatprep.mubr.f32.mxu0 0.0
          %833 = vmatmul.mubr.f32.gmra.mrb[0].mxu0 %v660
          %v834 = vpop.f32.mrb[0].mxu0
          %v835 = vadd.f32 0.0, %v834
          %v836 = vpop.f32.mrb[0].mxu0
          %837 = vdwg.mxu0
          %s838 = smul.u32 %s22, 128
          %v839 = vlaneseq
          %v840 = vshrl.u32 %v839, 7
          %v841 = vadd.s32 %v840, 8
          %v842 = vadd.s32 %v840, 16
          %v843 = vadd.s32 %v840, 24
          %v844 = vadd.s32 %v840, 32
          %v845 = vadd.s32 %v840, 40
          %v846 = vadd.s32 %v840, 48
          %v847 = vadd.s32 %v840, 56
          %v848 = vadd.s32 %v840, 64
          %v849 = vadd.s32 %v840, 72
          %v850 = vadd.s32 %v840, 80
          %v851 = vadd.s32 %v840, 88
          %v852 = vadd.s32 %v840, 96
          %v853 = vadd.s32 %v840, 104
          %v854 = vadd.s32 %v840, 112
          %v855 = vadd.s32 %v840, 120
          %v856 = vstv %s838
          %v857 = vadd.s32 %v856, %v840
          %v858 = vadd.s32 %v856, %v841
          %v859 = vadd.s32 %v856, %v842
          %v860 = vadd.s32 %v856, %v843
          %v861 = vadd.s32 %v856, %v844
          %v862 = vadd.s32 %v856, %v845
          %v863 = vadd.s32 %v856, %v846
          %v864 = vadd.s32 %v856, %v847
          %v865 = vadd.s32 %v856, %v848
          %v866 = vadd.s32 %v856, %v849
          %v867 = vadd.s32 %v856, %v850
          %v868 = vadd.s32 %v856, %v851
          %v869 = vadd.s32 %v856, %v852
          %v870 = vadd.s32 %v856, %v853
          %v871 = vadd.s32 %v856, %v854
          %v872 = vadd.s32 %v856, %v855
          %s873 = smul.u32 %s23, 128
          %v874 = vlaneseq
          %v875 = vand.u32 %v874, 127
          %v876 = vstv %s873
          %v877 = vadd.s32 %v876, %v875
          %vm878 = vcmp.le.s32.totalorder %v877, %v857
          %vm879 = vcmp.le.s32.totalorder %v877, %v858
          %vm880 = vcmp.le.s32.totalorder %v877, %v859
          %vm881 = vcmp.le.s32.totalorder %v877, %v860
          %vm882 = vcmp.le.s32.totalorder %v877, %v861
          %vm883 = vcmp.le.s32.totalorder %v877, %v862
          %vm884 = vcmp.le.s32.totalorder %v877, %v863
          %vm885 = vcmp.le.s32.totalorder %v877, %v864
          %vm886 = vcmp.le.s32.totalorder %v877, %v865
          %vm887 = vcmp.le.s32.totalorder %v877, %v866
          %vm888 = vcmp.le.s32.totalorder %v877, %v867
          %vm889 = vcmp.le.s32.totalorder %v877, %v868
          %vm890 = vcmp.le.s32.totalorder %v877, %v869
          %vm891 = vcmp.le.s32.totalorder %v877, %v870
          %vm892 = vcmp.le.s32.totalorder %v877, %v871
          %vm893 = vcmp.le.s32.totalorder %v877, %v872
          %v894 = vsel %vm878, %v760, -2.3819763e+38
          %v895 = vsel %vm879, %v765, -2.3819763e+38
          %v896 = vsel %vm880, %v770, -2.3819763e+38
          %v897 = vsel %vm881, %v775, -2.3819763e+38
          %v898 = vsel %vm882, %v780, -2.3819763e+38
          %v899 = vsel %vm883, %v785, -2.3819763e+38
          %v900 = vsel %vm884, %v790, -2.3819763e+38
          %v901 = vsel %vm885, %v795, -2.3819763e+38
          %v902 = vsel %vm886, %v800, -2.3819763e+38
          %v903 = vsel %vm887, %v805, -2.3819763e+38
          %v904 = vsel %vm888, %v810, -2.3819763e+38
          %v905 = vsel %vm889, %v815, -2.3819763e+38
          %v906 = vsel %vm890, %v820, -2.3819763e+38
          %v907 = vsel %vm891, %v825, -2.3819763e+38
          %v908 = vsel %vm892, %v830, -2.3819763e+38
          %v909 = vsel %vm893, %v835, -2.3819763e+38
          %v910 = vld [vmem:[#allocation2] sm:$0xff]
          %v911 = vld [vmem:[#allocation2 + $0x8] sm:$0xff]
          %v912 = vld [vmem:[#allocation2 + $0x10] sm:$0xff]
          %v913 = vld [vmem:[#allocation2 + $0x18] sm:$0xff]
          %v914 = vld [vmem:[#allocation2 + $0x20] sm:$0xff]
          %v915 = vld [vmem:[#allocation2 + $0x28] sm:$0xff]
          %v916 = vld [vmem:[#allocation2 + $0x30] sm:$0xff]
          %v917 = vld [vmem:[#allocation2 + $0x38] sm:$0xff]
          %v918 = vld [vmem:[#allocation2 + $0x40] sm:$0xff]
          %v919 = vld [vmem:[#allocation2 + $0x48] sm:$0xff]
          %v920 = vld [vmem:[#allocation2 + $0x50] sm:$0xff]
          %v921 = vld [vmem:[#allocation2 + $0x58] sm:$0xff]
          %v922 = vld [vmem:[#allocation2 + $0x60] sm:$0xff]
          %v923 = vld [vmem:[#allocation2 + $0x68] sm:$0xff]
          %v924 = vld [vmem:[#allocation2 + $0x70] sm:$0xff]
          %v925 = vld [vmem:[#allocation2 + $0x78] sm:$0xff]
          %926 = vmax.xlane.f32.xlu0 %v894
          %v927 = vpop.xlane.xlu0 %926
          %928 = vmax.xlane.f32.xlu0 %v895
          %v929 = vpop.xlane.xlu0 %928
          %930 = vmax.xlane.f32.xlu0 %v896
          %v931 = vpop.xlane.xlu0 %930
          %932 = vmax.xlane.f32.xlu0 %v897
          %v933 = vpop.xlane.xlu0 %932
          %934 = vmax.xlane.f32.xlu0 %v898
          %v935 = vpop.xlane.xlu0 %934
          %936 = vmax.xlane.f32.xlu0 %v899
          %v937 = vpop.xlane.xlu0 %936
          %938 = vmax.xlane.f32.xlu0 %v900
          %v939 = vpop.xlane.xlu0 %938
          %940 = vmax.xlane.f32.xlu0 %v901
          %v941 = vpop.xlane.xlu0 %940
          %942 = vmax.xlane.f32.xlu0 %v902
          %v943 = vpop.xlane.xlu0 %942
          %944 = vmax.xlane.f32.xlu0 %v903
          %v945 = vpop.xlane.xlu0 %944
          %946 = vmax.xlane.f32.xlu0 %v904
          %v947 = vpop.xlane.xlu0 %946
          %948 = vmax.xlane.f32.xlu0 %v905
          %v949 = vpop.xlane.xlu0 %948
          %950 = vmax.xlane.f32.xlu0 %v906
          %v951 = vpop.xlane.xlu0 %950
          %952 = vmax.xlane.f32.xlu0 %v907
          %v953 = vpop.xlane.xlu0 %952
          %954 = vmax.xlane.f32.xlu0 %v908
          %v955 = vpop.xlane.xlu0 %954
          %956 = vmax.xlane.f32.xlu0 %v909
          %v957 = vpop.xlane.xlu0 %956
          %v958 = vmax.f32 %v910, %v927
          %v959 = vmax.f32 %v911, %v929
          %v960 = vmax.f32 %v912, %v931
          %v961 = vmax.f32 %v913, %v933
          %v962 = vmax.f32 %v914, %v935
          %v963 = vmax.f32 %v915, %v937
          %v964 = vmax.f32 %v916, %v939
          %v965 = vmax.f32 %v917, %v941
          %v966 = vmax.f32 %v918, %v943
          %v967 = vmax.f32 %v919, %v945
          %v968 = vmax.f32 %v920, %v947
          %v969 = vmax.f32 %v921, %v949
          %v970 = vmax.f32 %v922, %v951
          %v971 = vmax.f32 %v923, %v953
          %v972 = vmax.f32 %v924, %v955
          %v973 = vmax.f32 %v925, %v957
          %v974 = vsub.f32 %v910, %v958
          %v975 = vsub.f32 %v911, %v959
          %v976 = vsub.f32 %v912, %v960
          %v977 = vsub.f32 %v913, %v961
          %v978 = vsub.f32 %v914, %v962
          %v979 = vsub.f32 %v915, %v963
          %v980 = vsub.f32 %v916, %v964
          %v981 = vsub.f32 %v917, %v965
          %v982 = vsub.f32 %v918, %v966
          %v983 = vsub.f32 %v919, %v967
          %v984 = vsub.f32 %v920, %v968
          %v985 = vsub.f32 %v921, %v969
          %v986 = vsub.f32 %v922, %v970
          %v987 = vsub.f32 %v923, %v971
          %v988 = vsub.f32 %v924, %v972
          %v989 = vsub.f32 %v925, %v973
          %v990 = vmul.f32 %v974, 1.442695
          %v991 = vpow.pop %v990
          %v992 = vmul.f32 %v975, 1.442695
          %v993 = vpow.pop %v992
          %v994 = vmul.f32 %v976, 1.442695
          %v995 = vpow.pop %v994
          %v996 = vmul.f32 %v977, 1.442695
          %v997 = vpow.pop %v996
          %v998 = vmul.f32 %v978, 1.442695
          %v999 = vpow.pop %v998
          %v1000 = vmul.f32 %v979, 1.442695
          %v1001 = vpow.pop %v1000
          %v1002 = vmul.f32 %v980, 1.442695
          %v1003 = vpow.pop %v1002
          %v1004 = vmul.f32 %v981, 1.442695
          %v1005 = vpow.pop %v1004
          %v1006 = vmul.f32 %v982, 1.442695
          %v1007 = vpow.pop %v1006
          %v1008 = vmul.f32 %v983, 1.442695
          %v1009 = vpow.pop %v1008
          %v1010 = vmul.f32 %v984, 1.442695
          %v1011 = vpow.pop %v1010
          %v1012 = vmul.f32 %v985, 1.442695
          %v1013 = vpow.pop %v1012
          %v1014 = vmul.f32 %v986, 1.442695
          %v1015 = vpow.pop %v1014
          %v1016 = vmul.f32 %v987, 1.442695
          %v1017 = vpow.pop %v1016
          %v1018 = vmul.f32 %v988, 1.442695
          %v1019 = vpow.pop %v1018
          %v1020 = vmul.f32 %v989, 1.442695
          %v1021 = vpow.pop %v1020
          %1023 = vset.pattern.permute.xlu0 0
          %1024 = vperm.xlu0 %1023, %v958
          %v1025 = vpop.permute.xlu0 %1024
          %1028 = vset.pattern.permute.xlu0 0
          %1029 = vperm.xlu0 %1028, %v959
          %v1030 = vpop.permute.xlu0 %1029
          %1033 = vset.pattern.permute.xlu0 0
          %1034 = vperm.xlu0 %1033, %v960
          %v1035 = vpop.permute.xlu0 %1034
          %1038 = vset.pattern.permute.xlu0 0
          %1039 = vperm.xlu0 %1038, %v961
          %v1040 = vpop.permute.xlu0 %1039
          %1043 = vset.pattern.permute.xlu0 0
          %1044 = vperm.xlu0 %1043, %v962
          %v1045 = vpop.permute.xlu0 %1044
          %1048 = vset.pattern.permute.xlu0 0
          %1049 = vperm.xlu0 %1048, %v963
          %v1050 = vpop.permute.xlu0 %1049
          %1053 = vset.pattern.permute.xlu0 0
          %1054 = vperm.xlu0 %1053, %v964
          %v1055 = vpop.permute.xlu0 %1054
          %1058 = vset.pattern.permute.xlu0 0
          %1059 = vperm.xlu0 %1058, %v965
          %v1060 = vpop.permute.xlu0 %1059
          %1063 = vset.pattern.permute.xlu0 0
          %1064 = vperm.xlu0 %1063, %v966
          %v1065 = vpop.permute.xlu0 %1064
          %1068 = vset.pattern.permute.xlu0 0
          %1069 = vperm.xlu0 %1068, %v967
          %v1070 = vpop.permute.xlu0 %1069
          %1073 = vset.pattern.permute.xlu0 0
          %1074 = vperm.xlu0 %1073, %v968
          %v1075 = vpop.permute.xlu0 %1074
          %1078 = vset.pattern.permute.xlu0 0
          %1079 = vperm.xlu0 %1078, %v969
          %v1080 = vpop.permute.xlu0 %1079
          %1083 = vset.pattern.permute.xlu0 0
          %1084 = vperm.xlu0 %1083, %v970
          %v1085 = vpop.permute.xlu0 %1084
          %1088 = vset.pattern.permute.xlu0 0
          %1089 = vperm.xlu0 %1088, %v971
          %v1090 = vpop.permute.xlu0 %1089
          %1093 = vset.pattern.permute.xlu0 0
          %1094 = vperm.xlu0 %1093, %v972
          %v1095 = vpop.permute.xlu0 %1094
          %1098 = vset.pattern.permute.xlu0 0
          %1099 = vperm.xlu0 %1098, %v973
          %v1100 = vpop.permute.xlu0 %1099
          %v1102 = vsub.f32 %v894, %v1025
          %v1103 = vsub.f32 %v895, %v1030
          %v1104 = vsub.f32 %v896, %v1035
          %v1105 = vsub.f32 %v897, %v1040
          %v1106 = vsub.f32 %v898, %v1045
          %v1107 = vsub.f32 %v899, %v1050
          %v1108 = vsub.f32 %v900, %v1055
          %v1109 = vsub.f32 %v901, %v1060
          %v1110 = vsub.f32 %v902, %v1065
          %v1111 = vsub.f32 %v903, %v1070
          %v1112 = vsub.f32 %v904, %v1075
          %v1113 = vsub.f32 %v905, %v1080
          %v1114 = vsub.f32 %v906, %v1085
          %v1115 = vsub.f32 %v907, %v1090
          %v1116 = vsub.f32 %v908, %v1095
          %v1117 = vsub.f32 %v909, %v1100
          %v1118 = vmul.f32 %v1102, 1.442695
          %v1119 = vpow.pop %v1118
          %v1120 = vmul.f32 %v1103, 1.442695
          %v1121 = vpow.pop %v1120
          %v1122 = vmul.f32 %v1104, 1.442695
          %v1123 = vpow.pop %v1122
          %v1124 = vmul.f32 %v1105, 1.442695
          %v1125 = vpow.pop %v1124
          %v1126 = vmul.f32 %v1106, 1.442695
          %v1127 = vpow.pop %v1126
          %v1128 = vmul.f32 %v1107, 1.442695
          %v1129 = vpow.pop %v1128
          %v1130 = vmul.f32 %v1108, 1.442695
          %v1131 = vpow.pop %v1130
          %v1132 = vmul.f32 %v1109, 1.442695
          %v1133 = vpow.pop %v1132
          %v1134 = vmul.f32 %v1110, 1.442695
          %v1135 = vpow.pop %v1134
          %v1136 = vmul.f32 %v1111, 1.442695
          %v1137 = vpow.pop %v1136
          %v1138 = vmul.f32 %v1112, 1.442695
          %v1139 = vpow.pop %v1138
          %v1140 = vmul.f32 %v1113, 1.442695
          %v1141 = vpow.pop %v1140
          %v1142 = vmul.f32 %v1114, 1.442695
          %v1143 = vpow.pop %v1142
          %v1144 = vmul.f32 %v1115, 1.442695
          %v1145 = vpow.pop %v1144
          %v1146 = vmul.f32 %v1116, 1.442695
          %v1147 = vpow.pop %v1146
          %v1148 = vmul.f32 %v1117, 1.442695
          %v1149 = vpow.pop %v1148
          %v1150 = vld [vmem:[#allocation3] sm:$0xff]
          %v1151 = vld [vmem:[#allocation3 + $0x8] sm:$0xff]
          %v1152 = vld [vmem:[#allocation3 + $0x10] sm:$0xff]
          %v1153 = vld [vmem:[#allocation3 + $0x18] sm:$0xff]
          %v1154 = vld [vmem:[#allocation3 + $0x20] sm:$0xff]
          %v1155 = vld [vmem:[#allocation3 + $0x28] sm:$0xff]
          %v1156 = vld [vmem:[#allocation3 + $0x30] sm:$0xff]
          %v1157 = vld [vmem:[#allocation3 + $0x38] sm:$0xff]
          %v1158 = vld [vmem:[#allocation3 + $0x40] sm:$0xff]
          %v1159 = vld [vmem:[#allocation3 + $0x48] sm:$0xff]
          %v1160 = vld [vmem:[#allocation3 + $0x50] sm:$0xff]
          %v1161 = vld [vmem:[#allocation3 + $0x58] sm:$0xff]
          %v1162 = vld [vmem:[#allocation3 + $0x60] sm:$0xff]
          %v1163 = vld [vmem:[#allocation3 + $0x68] sm:$0xff]
          %v1164 = vld [vmem:[#allocation3 + $0x70] sm:$0xff]
          %v1165 = vld [vmem:[#allocation3 + $0x78] sm:$0xff]
          %v1166 = vmul.f32 %v991, %v1150
          %v1167 = vmul.f32 %v993, %v1151
          %v1168 = vmul.f32 %v995, %v1152
          %v1169 = vmul.f32 %v997, %v1153
          %v1170 = vmul.f32 %v999, %v1154
          %v1171 = vmul.f32 %v1001, %v1155
          %v1172 = vmul.f32 %v1003, %v1156
          %v1173 = vmul.f32 %v1005, %v1157
          %v1174 = vmul.f32 %v1007, %v1158
          %v1175 = vmul.f32 %v1009, %v1159
          %v1176 = vmul.f32 %v1011, %v1160
          %v1177 = vmul.f32 %v1013, %v1161
          %v1178 = vmul.f32 %v1015, %v1162
          %v1179 = vmul.f32 %v1017, %v1163
          %v1180 = vmul.f32 %v1019, %v1164
          %v1181 = vmul.f32 %v1021, %v1165
          %1182 = vadd.xlane.f32.xlu0 %v1119
          %v1183 = vpop.xlane.xlu0 %1182
          %1184 = vadd.xlane.f32.xlu0 %v1121
          %v1185 = vpop.xlane.xlu0 %1184
          %1186 = vadd.xlane.f32.xlu0 %v1123
          %v1187 = vpop.xlane.xlu0 %1186
          %1188 = vadd.xlane.f32.xlu0 %v1125
          %v1189 = vpop.xlane.xlu0 %1188
          %1190 = vadd.xlane.f32.xlu0 %v1127
          %v1191 = vpop.xlane.xlu0 %1190
          %1192 = vadd.xlane.f32.xlu0 %v1129
          %v1193 = vpop.xlane.xlu0 %1192
          %1194 = vadd.xlane.f32.xlu0 %v1131
          %v1195 = vpop.xlane.xlu0 %1194
          %1196 = vadd.xlane.f32.xlu0 %v1133
          %v1197 = vpop.xlane.xlu0 %1196
          %1198 = vadd.xlane.f32.xlu0 %v1135
          %v1199 = vpop.xlane.xlu0 %1198
          %1200 = vadd.xlane.f32.xlu0 %v1137
          %v1201 = vpop.xlane.xlu0 %1200
          %1202 = vadd.xlane.f32.xlu0 %v1139
          %v1203 = vpop.xlane.xlu0 %1202
          %1204 = vadd.xlane.f32.xlu0 %v1141
          %v1205 = vpop.xlane.xlu0 %1204
          %1206 = vadd.xlane.f32.xlu0 %v1143
          %v1207 = vpop.xlane.xlu0 %1206
          %1208 = vadd.xlane.f32.xlu0 %v1145
          %v1209 = vpop.xlane.xlu0 %1208
          %1210 = vadd.xlane.f32.xlu0 %v1147
          %v1211 = vpop.xlane.xlu0 %1210
          %1212 = vadd.xlane.f32.xlu0 %v1149
          %v1213 = vpop.xlane.xlu0 %1212
          %v1214 = vadd.f32 %v1166, %v1183
          %v1215 = vadd.f32 %v1167, %v1185
          %v1216 = vadd.f32 %v1168, %v1187
          %v1217 = vadd.f32 %v1169, %v1189
          %v1218 = vadd.f32 %v1170, %v1191
          %v1219 = vadd.f32 %v1171, %v1193
          %v1220 = vadd.f32 %v1172, %v1195
          %v1221 = vadd.f32 %v1173, %v1197
          %v1222 = vadd.f32 %v1174, %v1199
          %v1223 = vadd.f32 %v1175, %v1201
          %v1224 = vadd.f32 %v1176, %v1203
          %v1225 = vadd.f32 %v1177, %v1205
          %v1226 = vadd.f32 %v1178, %v1207
          %v1227 = vadd.f32 %v1179, %v1209
          %v1228 = vadd.f32 %v1180, %v1211
          %v1229 = vadd.f32 %v1181, %v1213
          %vm1230 = vcmask 7168
          %1231 = vst.msk [vmem:[#allocation3] sm:$0xff] %vm1230, %v1214
          %1232 = vst.msk [vmem:[#allocation3 + $0x8] sm:$0xff] %vm1230, %v1215
          %1233 = vst.msk [vmem:[#allocation3 + $0x10] sm:$0xff] %vm1230, %v1216
          %1234 = vst.msk [vmem:[#allocation3 + $0x18] sm:$0xff] %vm1230, %v1217
          %1235 = vst.msk [vmem:[#allocation3 + $0x20] sm:$0xff] %vm1230, %v1218
          %1236 = vst.msk [vmem:[#allocation3 + $0x28] sm:$0xff] %vm1230, %v1219
          %1237 = vst.msk [vmem:[#allocation3 + $0x30] sm:$0xff] %vm1230, %v1220
          %1238 = vst.msk [vmem:[#allocation3 + $0x38] sm:$0xff] %vm1230, %v1221
          %1239 = vst.msk [vmem:[#allocation3 + $0x40] sm:$0xff] %vm1230, %v1222
          %1240 = vst.msk [vmem:[#allocation3 + $0x48] sm:$0xff] %vm1230, %v1223
          %1241 = vst.msk [vmem:[#allocation3 + $0x50] sm:$0xff] %vm1230, %v1224
          %1242 = vst.msk [vmem:[#allocation3 + $0x58] sm:$0xff] %vm1230, %v1225
          %1243 = vst.msk [vmem:[#allocation3 + $0x60] sm:$0xff] %vm1230, %v1226
          %1244 = vst.msk [vmem:[#allocation3 + $0x68] sm:$0xff] %vm1230, %v1227
          %1245 = vst.msk [vmem:[#allocation3 + $0x70] sm:$0xff] %vm1230, %v1228
          %1246 = vst.msk [vmem:[#allocation3 + $0x78] sm:$0xff] %vm1230, %v1229
          %v1247 = vld [vmem:[#allocation4] sm:$0xff]
          %v1248 = vld [vmem:[#allocation4 + $0x8] sm:$0xff]
          %v1249 = vld [vmem:[#allocation4 + $0x10] sm:$0xff]
          %v1250 = vld [vmem:[#allocation4 + $0x18] sm:$0xff]
          %v1251 = vld [vmem:[#allocation4 + $0x20] sm:$0xff]
          %v1252 = vld [vmem:[#allocation4 + $0x28] sm:$0xff]
          %v1253 = vld [vmem:[#allocation4 + $0x30] sm:$0xff]
          %v1254 = vld [vmem:[#allocation4 + $0x38] sm:$0xff]
          %v1255 = vld [vmem:[#allocation4 + $0x40] sm:$0xff]
          %v1256 = vld [vmem:[#allocation4 + $0x48] sm:$0xff]
          %v1257 = vld [vmem:[#allocation4 + $0x50] sm:$0xff]
          %v1258 = vld [vmem:[#allocation4 + $0x58] sm:$0xff]
          %v1259 = vld [vmem:[#allocation4 + $0x60] sm:$0xff]
          %v1260 = vld [vmem:[#allocation4 + $0x68] sm:$0xff]
          %v1261 = vld [vmem:[#allocation4 + $0x70] sm:$0xff]
          %v1262 = vld [vmem:[#allocation4 + $0x78] sm:$0xff]
          %1264 = vset.pattern.permute.xlu0 0
          %1265 = vperm.xlu0 %1264, %v991
          %v1266 = vpop.permute.xlu0 %1265
          %1269 = vset.pattern.permute.xlu0 0
          %1270 = vperm.xlu0 %1269, %v993
          %v1271 = vpop.permute.xlu0 %1270
          %1274 = vset.pattern.permute.xlu0 0
          %1275 = vperm.xlu0 %1274, %v995
          %v1276 = vpop.permute.xlu0 %1275
          %1279 = vset.pattern.permute.xlu0 0
          %1280 = vperm.xlu0 %1279, %v997
          %v1281 = vpop.permute.xlu0 %1280
          %1284 = vset.pattern.permute.xlu0 0
          %1285 = vperm.xlu0 %1284, %v999
          %v1286 = vpop.permute.xlu0 %1285
          %1289 = vset.pattern.permute.xlu0 0
          %1290 = vperm.xlu0 %1289, %v1001
          %v1291 = vpop.permute.xlu0 %1290
          %1294 = vset.pattern.permute.xlu0 0
          %1295 = vperm.xlu0 %1294, %v1003
          %v1296 = vpop.permute.xlu0 %1295
          %1299 = vset.pattern.permute.xlu0 0
          %1300 = vperm.xlu0 %1299, %v1005
          %v1301 = vpop.permute.xlu0 %1300
          %1304 = vset.pattern.permute.xlu0 0
          %1305 = vperm.xlu0 %1304, %v1007
          %v1306 = vpop.permute.xlu0 %1305
          %1309 = vset.pattern.permute.xlu0 0
          %1310 = vperm.xlu0 %1309, %v1009
          %v1311 = vpop.permute.xlu0 %1310
          %1314 = vset.pattern.permute.xlu0 0
          %1315 = vperm.xlu0 %1314, %v1011
          %v1316 = vpop.permute.xlu0 %1315
          %1319 = vset.pattern.permute.xlu0 0
          %1320 = vperm.xlu0 %1319, %v1013
          %v1321 = vpop.permute.xlu0 %1320
          %1324 = vset.pattern.permute.xlu0 0
          %1325 = vperm.xlu0 %1324, %v1015
          %v1326 = vpop.permute.xlu0 %1325
          %1329 = vset.pattern.permute.xlu0 0
          %1330 = vperm.xlu0 %1329, %v1017
          %v1331 = vpop.permute.xlu0 %1330
          %1334 = vset.pattern.permute.xlu0 0
          %1335 = vperm.xlu0 %1334, %v1019
          %v1336 = vpop.permute.xlu0 %1335
          %1339 = vset.pattern.permute.xlu0 0
          %1340 = vperm.xlu0 %1339, %v1021
          %v1341 = vpop.permute.xlu0 %1340
          %v1343 = vmul.f32 %v1266, %v1247
          %v1344 = vmul.f32 %v1271, %v1248
          %v1345 = vmul.f32 %v1276, %v1249
          %v1346 = vmul.f32 %v1281, %v1250
          %v1347 = vmul.f32 %v1286, %v1251
          %v1348 = vmul.f32 %v1291, %v1252
          %v1349 = vmul.f32 %v1296, %v1253
          %v1350 = vmul.f32 %v1301, %v1254
          %v1351 = vmul.f32 %v1306, %v1255
          %v1352 = vmul.f32 %v1311, %v1256
          %v1353 = vmul.f32 %v1316, %v1257
          %v1354 = vmul.f32 %v1321, %v1258
          %v1355 = vmul.f32 %v1326, %v1259
          %v1356 = vmul.f32 %v1331, %v1260
          %v1357 = vmul.f32 %v1336, %v1261
          %v1358 = vmul.f32 %v1341, %v1262
          %1359 = vmatprep.subr.mxu0 0.0
          %1360 = vmatpush1.msra.mxu0 %v677
          %1361 = vmatprep.subr.mxu0 0.0
          %1362 = vmatpush1.msra.mxu0 %v678
          %1363 = vmatprep.subr.mxu0 0.0
          %1364 = vmatpush1.msra.mxu0 %v679
          %1365 = vmatprep.subr.mxu0 0.0
          %1366 = vmatpush1.msra.mxu0 %v680
          %1367 = vmatprep.subr.mxu0 0.0
          %1368 = vmatpush1.msra.mxu0 %v681
          %1369 = vmatprep.subr.mxu0 0.0
          %1370 = vmatpush1.msra.mxu0 %v682
          %1371 = vmatprep.subr.mxu0 0.0
          %1372 = vmatpush1.msra.mxu0 %v683
          %1373 = vmatprep.subr.mxu0 0.0
          %1374 = vmatpush1.msra.mxu0 %v684
          %1375 = vmatprep.subr.mxu0 0.0
          %1376 = vmatpush1.msra.mxu0 %v685
          %1377 = vmatprep.subr.mxu0 0.0
          %1378 = vmatpush1.msra.mxu0 %v686
          %1379 = vmatprep.subr.mxu0 0.0
          %1380 = vmatpush1.msra.mxu0 %v687
          %1381 = vmatprep.subr.mxu0 0.0
          %1382 = vmatpush1.msra.mxu0 %v688
          %1383 = vmatprep.subr.mxu0 0.0
          %1384 = vmatpush1.msra.mxu0 %v689
          %1385 = vmatprep.subr.mxu0 0.0
          %1386 = vmatpush1.msra.mxu0 %v690
          %1387 = vmatprep.subr.mxu0 0.0
          %1388 = vmatpush1.msra.mxu0 %v691
          %1389 = vmatprep.subr.mxu0 0.0
          %1390 = vmatpush1.msra.mxu0 %v692
          %1391 = vmatprep.subr.mxu0 0.0
          %1392 = vmatpush1.msra.mxu0 0.0
          %1393 = vmatprep.subr.mxu0 0.0
          %1394 = vmatpush1.msra.mxu0 0.0
          %1395 = vmatprep.subr.mxu0 0.0
          %1396 = vmatpush1.msra.mxu0 0.0
          %1397 = vmatprep.subr.mxu0 0.0
          %1398 = vmatpush1.msra.mxu0 0.0
          %1399 = vmatprep.subr.mxu0 0.0
          %1400 = vmatpush1.msra.mxu0 0.0
          %1401 = vmatprep.subr.mxu0 0.0
          %1402 = vmatpush1.msra.mxu0 0.0
          %1403 = vmatprep.subr.mxu0 0.0
          %1404 = vmatpush1.msra.mxu0 0.0
          %1405 = vmatprep.subr.mxu0 0.0
          %1406 = vmatpush1.msra.mxu0 0.0
          %1407 = vmatprep.subr.mxu0 0.0
          %1408 = vmatpush1.msra.mxu0 0.0
          %1409 = vmatprep.subr.mxu0 0.0
          %1410 = vmatpush1.msra.mxu0 0.0
          %1411 = vmatprep.subr.mxu0 0.0
          %1412 = vmatpush1.msra.mxu0 0.0
          %1413 = vmatprep.subr.mxu0 0.0
          %1414 = vmatpush1.msra.mxu0 0.0
          %1415 = vmatprep.subr.mxu0 0.0
          %1416 = vmatpush1.msra.mxu0 0.0
          %1417 = vmatprep.subr.mxu0 0.0
          %1418 = vmatpush1.msra.mxu0 0.0
          %1419 = vmatprep.subr.mxu0 0.0
          %1420 = vmatpush1.msra.mxu0 0.0
          %1421 = vmatprep.subr.mxu0 0.0
          %1422 = vmatpush1.msra.mxu0 0.0
          %1423 = vmatprep.mubr.f32.mxu0 0.0
          %1424 = vmatmul.mubr.f32.gmra.mrb[0].mxu0 %v1119
          %v1425 = vpop.f32.mrb[0].mxu0
          %v1426 = vadd.f32 0.0, %v1425
          %v1427 = vpop.f32.mrb[0].mxu0
          %1428 = vmatprep.mubr.f32.mxu0 0.0
          %1429 = vmatmul.mubr.f32.gmra.mrb[0].mxu0 %v1121
          %v1430 = vpop.f32.mrb[0].mxu0
          %v1431 = vadd.f32 0.0, %v1430
          %v1432 = vpop.f32.mrb[0].mxu0
          %1433 = vmatprep.mubr.f32.mxu0 0.0
          %1434 = vmatmul.mubr.f32.gmra.mrb[0].mxu0 %v1123
          %v1435 = vpop.f32.mrb[0].mxu0
          %v1436 = vadd.f32 0.0, %v1435
          %v1437 = vpop.f32.mrb[0].mxu0
          %1438 = vmatprep.mubr.f32.mxu0 0.0
          %1439 = vmatmul.mubr.f32.gmra.mrb[0].mxu0 %v1125
          %v1440 = vpop.f32.mrb[0].mxu0
          %v1441 = vadd.f32 0.0, %v1440
          %v1442 = vpop.f32.mrb[0].mxu0
          %1443 = vmatprep.mubr.f32.mxu0 0.0
          %1444 = vmatmul.mubr.f32.gmra.mrb[0].mxu0 %v1127
          %v1445 = vpop.f32.mrb[0].mxu0
          %v1446 = vadd.f32 0.0, %v1445
          %v1447 = vpop.f32.mrb[0].mxu0
          %1448 = vmatprep.mubr.f32.mxu0 0.0
          %1449 = vmatmul.mubr.f32.gmra.mrb[0].mxu0 %v1129
          %v1450 = vpop.f32.mrb[0].mxu0
          %v1451 = vadd.f32 0.0, %v1450
          %v1452 = vpop.f32.mrb[0].mxu0
          %1453 = vmatprep.mubr.f32.mxu0 0.0
          %1454 = vmatmul.mubr.f32.gmra.mrb[0].mxu0 %v1131
          %v1455 = vpop.f32.mrb[0].mxu0
          %v1456 = vadd.f32 0.0, %v1455
          %v1457 = vpop.f32.mrb[0].mxu0
          %1458 = vmatprep.mubr.f32.mxu0 0.0
          %1459 = vmatmul.mubr.f32.gmra.mrb[0].mxu0 %v1133
          %v1460 = vpop.f32.mrb[0].mxu0
          %v1461 = vadd.f32 0.0, %v1460
          %v1462 = vpop.f32.mrb[0].mxu0
          %1463 = vmatprep.mubr.f32.mxu0 0.0
          %1464 = vmatmul.mubr.f32.gmra.mrb[0].mxu0 %v1135
          %v1465 = vpop.f32.mrb[0].mxu0
          %v1466 = vadd.f32 0.0, %v1465
          %v1467 = vpop.f32.mrb[0].mxu0
          %1468 = vmatprep.mubr.f32.mxu0 0.0
          %1469 = vmatmul.mubr.f32.gmra.mrb[0].mxu0 %v1137
          %v1470 = vpop.f32.mrb[0].mxu0
          %v1471 = vadd.f32 0.0, %v1470
          %v1472 = vpop.f32.mrb[0].mxu0
          %1473 = vmatprep.mubr.f32.mxu0 0.0
          %1474 = vmatmul.mubr.f32.gmra.mrb[0].mxu0 %v1139
          %v1475 = vpop.f32.mrb[0].mxu0
          %v1476 = vadd.f32 0.0, %v1475
          %v1477 = vpop.f32.mrb[0].mxu0
          %1478 = vmatprep.mubr.f32.mxu0 0.0
          %1479 = vmatmul.mubr.f32.gmra.mrb[0].mxu0 %v1141
          %v1480 = vpop.f32.mrb[0].mxu0
          %v1481 = vadd.f32 0.0, %v1480
          %v1482 = vpop.f32.mrb[0].mxu0
          %1483 = vmatprep.mubr.f32.mxu0 0.0
          %1484 = vmatmul.mubr.f32.gmra.mrb[0].mxu0 %v1143
          %v1485 = vpop.f32.mrb[0].mxu0
          %v1486 = vadd.f32 0.0, %v1485
          %v1487 = vpop.f32.mrb[0].mxu0
          %1488 = vmatprep.mubr.f32.mxu0 0.0
          %1489 = vmatmul.mubr.f32.gmra.mrb[0].mxu0 %v1145
          %v1490 = vpop.f32.mrb[0].mxu0
          %v1491 = vadd.f32 0.0, %v1490
          %v1492 = vpop.f32.mrb[0].mxu0
          %1493 = vmatprep.mubr.f32.mxu0 0.0
          %1494 = vmatmul.mubr.f32.gmra.mrb[0].mxu0 %v1147
          %v1495 = vpop.f32.mrb[0].mxu0
          %v1496 = vadd.f32 0.0, %v1495
          %v1497 = vpop.f32.mrb[0].mxu0
          %1498 = vmatprep.mubr.f32.mxu0 0.0
          %1499 = vmatmul.mubr.f32.gmra.mrb[0].mxu0 %v1149
          %v1500 = vpop.f32.mrb[0].mxu0
          %v1501 = vadd.f32 0.0, %v1500
          %v1502 = vpop.f32.mrb[0].mxu0
          %1503 = vdwg.mxu0
          %v1504 = vadd.f32 %v1343, %v1426
          %v1505 = vadd.f32 %v1344, %v1431
          %v1506 = vadd.f32 %v1345, %v1436
          %v1507 = vadd.f32 %v1346, %v1441
          %v1508 = vadd.f32 %v1347, %v1446
          %v1509 = vadd.f32 %v1348, %v1451
          %v1510 = vadd.f32 %v1349, %v1456
          %v1511 = vadd.f32 %v1350, %v1461
          %v1512 = vadd.f32 %v1351, %v1466
          %v1513 = vadd.f32 %v1352, %v1471
          %v1514 = vadd.f32 %v1353, %v1476
          %v1515 = vadd.f32 %v1354, %v1481
          %v1516 = vadd.f32 %v1355, %v1486
          %v1517 = vadd.f32 %v1356, %v1491
          %v1518 = vadd.f32 %v1357, %v1496
          %v1519 = vadd.f32 %v1358, %v1501
          %1520 = vst [vmem:[#allocation4] sm:$0xff] %v1504
          %1521 = vst [vmem:[#allocation4 + $0x8] sm:$0xff] %v1505
          %1522 = vst [vmem:[#allocation4 + $0x10] sm:$0xff] %v1506
          %1523 = vst [vmem:[#allocation4 + $0x18] sm:$0xff] %v1507
          %1524 = vst [vmem:[#allocation4 + $0x20] sm:$0xff] %v1508
          %1525 = vst [vmem:[#allocation4 + $0x28] sm:$0xff] %v1509
          %1526 = vst [vmem:[#allocation4 + $0x30] sm:$0xff] %v1510
          %1527 = vst [vmem:[#allocation4 + $0x38] sm:$0xff] %v1511
          %1528 = vst [vmem:[#allocation4 + $0x40] sm:$0xff] %v1512
          %1529 = vst [vmem:[#allocation4 + $0x48] sm:$0xff] %v1513
          %1530 = vst [vmem:[#allocation4 + $0x50] sm:$0xff] %v1514
          %1531 = vst [vmem:[#allocation4 + $0x58] sm:$0xff] %v1515
          %1532 = vst [vmem:[#allocation4 + $0x60] sm:$0xff] %v1516
          %1533 = vst [vmem:[#allocation4 + $0x68] sm:$0xff] %v1517
          %1534 = vst [vmem:[#allocation4 + $0x70] sm:$0xff] %v1518
          %1535 = vst [vmem:[#allocation4 + $0x78] sm:$0xff] %v1519
          %1536 = vst.msk [vmem:[#allocation2] sm:$0xff] %vm1230, %v958
          %1537 = vst.msk [vmem:[#allocation2 + $0x8] sm:$0xff] %vm1230, %v959
          %1538 = vst.msk [vmem:[#allocation2 + $0x10] sm:$0xff] %vm1230, %v960
          %1539 = vst.msk [vmem:[#allocation2 + $0x18] sm:$0xff] %vm1230, %v961
          %1540 = vst.msk [vmem:[#allocation2 + $0x20] sm:$0xff] %vm1230, %v962
          %1541 = vst.msk [vmem:[#allocation2 + $0x28] sm:$0xff] %vm1230, %v963
          %1542 = vst.msk [vmem:[#allocation2 + $0x30] sm:$0xff] %vm1230, %v964
          %1543 = vst.msk [vmem:[#allocation2 + $0x38] sm:$0xff] %vm1230, %v965
          %1544 = vst.msk [vmem:[#allocation2 + $0x40] sm:$0xff] %vm1230, %v966
          %1545 = vst.msk [vmem:[#allocation2 + $0x48] sm:$0xff] %vm1230, %v967
          %1546 = vst.msk [vmem:[#allocation2 + $0x50] sm:$0xff] %vm1230, %v968
          %1547 = vst.msk [vmem:[#allocation2 + $0x58] sm:$0xff] %vm1230, %v969
          %1548 = vst.msk [vmem:[#allocation2 + $0x60] sm:$0xff] %vm1230, %v970
          %1549 = vst.msk [vmem:[#allocation2 + $0x68] sm:$0xff] %vm1230, %v971
          %1550 = vst.msk [vmem:[#allocation2 + $0x70] sm:$0xff] %vm1230, %v972
          %1551 = vst.msk [vmem:[#allocation2 + $0x78] sm:$0xff] %vm1230, %v973
        $region154: #{causal_self_attention.4} parent=133 // pred_fallthru
          _
        %p1552 = scmp.eq.s32.totalorder %s23, %s22
        // Predicated region
        $region155: #{causal_self_attention.4} parent=133 // pred_check
          %p1553 = pneg %p1552
        $region156: #{causal_self_attention.4} parent=133 // pred_check_branch
          %1555 = sbr.rel (%p1553) target = $region158
        $region157: #{causal_self_attention.4} parent=133 // pred_region
          %v1556 = vld [vmem:[#allocation3] sm:$0xff]
          %v1557 = vld [vmem:[#allocation3 + $0x8] sm:$0xff]
          %v1558 = vld [vmem:[#allocation3 + $0x10] sm:$0xff]
          %v1559 = vld [vmem:[#allocation3 + $0x18] sm:$0xff]
          %v1560 = vld [vmem:[#allocation3 + $0x20] sm:$0xff]
          %v1561 = vld [vmem:[#allocation3 + $0x28] sm:$0xff]
          %v1562 = vld [vmem:[#allocation3 + $0x30] sm:$0xff]
          %v1563 = vld [vmem:[#allocation3 + $0x38] sm:$0xff]
          %v1564 = vld [vmem:[#allocation3 + $0x40] sm:$0xff]
          %v1565 = vld [vmem:[#allocation3 + $0x48] sm:$0xff]
          %v1566 = vld [vmem:[#allocation3 + $0x50] sm:$0xff]
          %v1567 = vld [vmem:[#allocation3 + $0x58] sm:$0xff]
          %v1568 = vld [vmem:[#allocation3 + $0x60] sm:$0xff]
          %v1569 = vld [vmem:[#allocation3 + $0x68] sm:$0xff]
          %v1570 = vld [vmem:[#allocation3 + $0x70] sm:$0xff]
          %v1571 = vld [vmem:[#allocation3 + $0x78] sm:$0xff]
          %v1572 = vrcp.pop %v1556
          %v1573 = vrcp.pop %v1557
          %v1574 = vrcp.pop %v1558
          %v1575 = vrcp.pop %v1559
          %v1576 = vrcp.pop %v1560
          %v1577 = vrcp.pop %v1561
          %v1578 = vrcp.pop %v1562
          %v1579 = vrcp.pop %v1563
          %v1580 = vrcp.pop %v1564
          %v1581 = vrcp.pop %v1565
          %v1582 = vrcp.pop %v1566
          %v1583 = vrcp.pop %v1567
          %v1584 = vrcp.pop %v1568
          %v1585 = vrcp.pop %v1569
          %v1586 = vrcp.pop %v1570
          %v1587 = vrcp.pop %v1571
          %v1588 = vld [vmem:[#allocation4] sm:$0xff]
          %v1589 = vld [vmem:[#allocation4 + $0x8] sm:$0xff]
          %v1590 = vld [vmem:[#allocation4 + $0x10] sm:$0xff]
          %v1591 = vld [vmem:[#allocation4 + $0x18] sm:$0xff]
          %v1592 = vld [vmem:[#allocation4 + $0x20] sm:$0xff]
          %v1593 = vld [vmem:[#allocation4 + $0x28] sm:$0xff]
          %v1594 = vld [vmem:[#allocation4 + $0x30] sm:$0xff]
          %v1595 = vld [vmem:[#allocation4 + $0x38] sm:$0xff]
          %v1596 = vld [vmem:[#allocation4 + $0x40] sm:$0xff]
          %v1597 = vld [vmem:[#allocation4 + $0x48] sm:$0xff]
          %v1598 = vld [vmem:[#allocation4 + $0x50] sm:$0xff]
          %v1599 = vld [vmem:[#allocation4 + $0x58] sm:$0xff]
          %v1600 = vld [vmem:[#allocation4 + $0x60] sm:$0xff]
          %v1601 = vld [vmem:[#allocation4 + $0x68] sm:$0xff]
          %v1602 = vld [vmem:[#allocation4 + $0x70] sm:$0xff]
          %v1603 = vld [vmem:[#allocation4 + $0x78] sm:$0xff]
          %1605 = vset.pattern.permute.xlu0 0
          %1606 = vperm.xlu0 %1605, %v1572
          %v1607 = vpop.permute.xlu0 %1606
          %1610 = vset.pattern.permute.xlu0 0
          %1611 = vperm.xlu0 %1610, %v1573
          %v1612 = vpop.permute.xlu0 %1611
          %1615 = vset.pattern.permute.xlu0 0
          %1616 = vperm.xlu0 %1615, %v1574
          %v1617 = vpop.permute.xlu0 %1616
          %1620 = vset.pattern.permute.xlu0 0
          %1621 = vperm.xlu0 %1620, %v1575
          %v1622 = vpop.permute.xlu0 %1621
          %1625 = vset.pattern.permute.xlu0 0
          %1626 = vperm.xlu0 %1625, %v1576
          %v1627 = vpop.permute.xlu0 %1626
          %1630 = vset.pattern.permute.xlu0 0
          %1631 = vperm.xlu0 %1630, %v1577
          %v1632 = vpop.permute.xlu0 %1631
          %1635 = vset.pattern.permute.xlu0 0
          %1636 = vperm.xlu0 %1635, %v1578
          %v1637 = vpop.permute.xlu0 %1636
          %1640 = vset.pattern.permute.xlu0 0
          %1641 = vperm.xlu0 %1640, %v1579
          %v1642 = vpop.permute.xlu0 %1641
          %1645 = vset.pattern.permute.xlu0 0
          %1646 = vperm.xlu0 %1645, %v1580
          %v1647 = vpop.permute.xlu0 %1646
          %1650 = vset.pattern.permute.xlu0 0
          %1651 = vperm.xlu0 %1650, %v1581
          %v1652 = vpop.permute.xlu0 %1651
          %1655 = vset.pattern.permute.xlu0 0
          %1656 = vperm.xlu0 %1655, %v1582
          %v1657 = vpop.permute.xlu0 %1656
          %1660 = vset.pattern.permute.xlu0 0
          %1661 = vperm.xlu0 %1660, %v1583
          %v1662 = vpop.permute.xlu0 %1661
          %1665 = vset.pattern.permute.xlu0 0
          %1666 = vperm.xlu0 %1665, %v1584
          %v1667 = vpop.permute.xlu0 %1666
          %1670 = vset.pattern.permute.xlu0 0
          %1671 = vperm.xlu0 %1670, %v1585
          %v1672 = vpop.permute.xlu0 %1671
          %1675 = vset.pattern.permute.xlu0 0
          %1676 = vperm.xlu0 %1675, %v1586
          %v1677 = vpop.permute.xlu0 %1676
          %1680 = vset.pattern.permute.xlu0 0
          %1681 = vperm.xlu0 %1680, %v1587
          %v1682 = vpop.permute.xlu0 %1681
          %v1684 = vmul.f32 %v1588, %v1607
          %v1685 = vmul.f32 %v1589, %v1612
          %v1686 = vmul.f32 %v1590, %v1617
          %v1687 = vmul.f32 %v1591, %v1622
          %v1688 = vmul.f32 %v1592, %v1627
          %v1689 = vmul.f32 %v1593, %v1632
          %v1690 = vmul.f32 %v1594, %v1637
          %v1691 = vmul.f32 %v1595, %v1642
          %v1692 = vmul.f32 %v1596, %v1647
          %v1693 = vmul.f32 %v1597, %v1652
          %v1694 = vmul.f32 %v1598, %v1657
          %v1695 = vmul.f32 %v1599, %v1662
          %v1696 = vmul.f32 %v1600, %v1667
          %v1697 = vmul.f32 %v1601, %v1672
          %v1698 = vmul.f32 %v1602, %v1677
          %v1699 = vmul.f32 %v1603, %v1682
          %1700 = vst [vmem:[%s561] sm:$0xff] %v1684
          %1701 = vst [vmem:[%s561 + $0x8] sm:$0xff] %v1685
          %1702 = vst [vmem:[%s561 + $0x10] sm:$0xff] %v1686
          %1703 = vst [vmem:[%s561 + $0x18] sm:$0xff] %v1687
          %1704 = vst [vmem:[%s561 + $0x20] sm:$0xff] %v1688
          %1705 = vst [vmem:[%s561 + $0x28] sm:$0xff] %v1689
          %1706 = vst [vmem:[%s561 + $0x30] sm:$0xff] %v1690
          %1707 = vst [vmem:[%s561 + $0x38] sm:$0xff] %v1691
          %1708 = vst [vmem:[%s561 + $0x40] sm:$0xff] %v1692
          %1709 = vst [vmem:[%s561 + $0x48] sm:$0xff] %v1693
          %1710 = vst [vmem:[%s561 + $0x50] sm:$0xff] %v1694
          %1711 = vst [vmem:[%s561 + $0x58] sm:$0xff] %v1695
          %1712 = vst [vmem:[%s561 + $0x60] sm:$0xff] %v1696
          %1713 = vst [vmem:[%s561 + $0x68] sm:$0xff] %v1697
          %1714 = vst [vmem:[%s561 + $0x70] sm:$0xff] %v1698
          %1715 = vst [vmem:[%s561 + $0x78] sm:$0xff] %v1699
        $region158: #{causal_self_attention.4} parent=133 // pred_fallthru
          _
        %s1716 = sand.u32 %s154, 1
        %s1717 = sand.u32 %s154, 1
        %s1718 = smul.addr %s1717, 128
        %s1719 = scalar_lea.vmem [#allocation8], %s1718
        // Predicated region
        $region159: #{causal_self_attention.4} parent=133 // pred_check
          %p1720 = pneg %p164
        $region160: #{causal_self_attention.4} parent=133 // pred_check_branch
          %1722 = sbr.rel (%p1720) target = $region162
        $region161: #{causal_self_attention.4} parent=133 // pred_region
          %s1723 = smul.u32 16, %s22
          %s1724 = smul.addr %s1723, 2
          %s1725 = sadd.s32 %s21, %s1724
          %s1726 = smul.addr %s20, 64
          %s1727 = sadd.s32 %s1725, %s1726
          %s1728 = smul.addr %s1727, 8
          %s1729 = scalar_lea.vmem %s3, %s1728
          // Predicated region
          $region163: #{causal_self_attention.4} parent=161 // pred_check
            _
          $region164: #{causal_self_attention.4} parent=161 // pred_check_branch
            %1731 = sbr.rel (0) target = $region166
          $region165: #{causal_self_attention.4} parent=161 // pred_region
            // Predicated region
            $region167: #{causal_self_attention.4} parent=165 // pred_check
              _
            $region168: #{causal_self_attention.4} parent=165 // pred_check_branch
              %1733 = sbr.rel (0) target = $region170
            $region169: #{causal_self_attention.4} parent=165 // pred_region
              // Predicated region
              $region182: #{causal_self_attention.4} parent=169 // pred_check
                _
              $region183: #{causal_self_attention.4} parent=169 // pred_check_branch
                %1778 = sbr.rel (0) target = $region185
              $region184: #{causal_self_attention.4} parent=169 // pred_region
                loop: start=0, step=1, limit=1
                $region186: #{causal_self_attention.4} parent=184 // loop_pre_header
                  _
                $region187: #{causal_self_attention.4} parent=184 // loop_header
                  %s1780 = sphi 0, %s1784
                  %p1781 = scmp.ge.s32.totalorder %s1780, 1
                  %s1785 = sphi %s1719, %s1719
                  %s1786 = sphi %s1729, %s1729
                $region188: #{causal_self_attention.4} parent=184 // loop_header_branch
                  %1783 = sbr.rel (%p1781) target = $region192
                $region189: #{causal_self_attention.4} parent=184 // loop_body
                  %v1787 = vld [vmem:[%s1785] sm:$0xff]
                  %1788 = vst [vmem:[%s1786] sm:$0xff] %v1787
                  %v1789 = vld [vmem:[%s1785 + $0x8] sm:$0xff]
                  %1790 = vst [vmem:[%s1786 + $0x10] sm:$0xff] %v1789
                  %v1791 = vld [vmem:[%s1785 + $0x10] sm:$0xff]
                  %1792 = vst [vmem:[%s1786 + $0x20] sm:$0xff] %v1791
                  %v1793 = vld [vmem:[%s1785 + $0x18] sm:$0xff]
                  %1794 = vst [vmem:[%s1786 + $0x30] sm:$0xff] %v1793
                  %v1795 = vld [vmem:[%s1785 + $0x20] sm:$0xff]
                  %1796 = vst [vmem:[%s1786 + $0x40] sm:$0xff] %v1795
                  %v1797 = vld [vmem:[%s1785 + $0x28] sm:$0xff]
                  %1798 = vst [vmem:[%s1786 + $0x50] sm:$0xff] %v1797
                  %v1799 = vld [vmem:[%s1785 + $0x30] sm:$0xff]
                  %1800 = vst [vmem:[%s1786 + $0x60] sm:$0xff] %v1799
                  %v1801 = vld [vmem:[%s1785 + $0x38] sm:$0xff]
                  %1802 = vst [vmem:[%s1786 + $0x70] sm:$0xff] %v1801
                  %v1803 = vld [vmem:[%s1785 + $0x40] sm:$0xff]
                  %1804 = vst [vmem:[%s1786 + $0x80] sm:$0xff] %v1803
                  %v1805 = vld [vmem:[%s1785 + $0x48] sm:$0xff]
                  %1806 = vst [vmem:[%s1786 + $0x90] sm:$0xff] %v1805
                  %v1807 = vld [vmem:[%s1785 + $0x50] sm:$0xff]
                  %1808 = vst [vmem:[%s1786 + $0xa0] sm:$0xff] %v1807
                  %v1809 = vld [vmem:[%s1785 + $0x58] sm:$0xff]
                  %1810 = vst [vmem:[%s1786 + $0xb0] sm:$0xff] %v1809
                  %v1811 = vld [vmem:[%s1785 + $0x60] sm:$0xff]
                  %1812 = vst [vmem:[%s1786 + $0xc0] sm:$0xff] %v1811
                  %v1813 = vld [vmem:[%s1785 + $0x68] sm:$0xff]
                  %1814 = vst [vmem:[%s1786 + $0xd0] sm:$0xff] %v1813
                  %v1815 = vld [vmem:[%s1785 + $0x70] sm:$0xff]
                  %1816 = vst [vmem:[%s1786 + $0xe0] sm:$0xff] %v1815
                  %v1817 = vld [vmem:[%s1785 + $0x78] sm:$0xff]
                  %1818 = vst [vmem:[%s1786 + $0xf0] sm:$0xff] %v1817
                $region190: #{causal_self_attention.4} parent=184 // loop_footer
                  %s1784 = sadd.s32 1, %s1780
                $region191: #{causal_self_attention.4} parent=184 // loop_footer_branch
                  %1779 = sbr.rel target = $region187
                $region192: #{causal_self_attention.4} parent=184 // loop_exit
                  _
              $region185: #{causal_self_attention.4} parent=169 // pred_fallthru
                _
              // Predicated region
              $region193: #{causal_self_attention.4} parent=169 // pred_check
                _
              $region194: #{causal_self_attention.4} parent=169 // pred_check_branch
                %1820 = sbr.rel target = $region196
              $region195: #{causal_self_attention.4} parent=169 // pred_region
                _
              $region196: #{causal_self_attention.4} parent=169 // pred_fallthru
                _
            $region170: #{causal_self_attention.4} parent=165 // pred_fallthru
              _
            // Predicated region
            $region171: #{causal_self_attention.4} parent=165 // pred_check
              _
            $region172: #{causal_self_attention.4} parent=165 // pred_check_branch
              %1735 = sbr.rel target = $region174
            $region173: #{causal_self_attention.4} parent=165 // pred_region
              loop: start=0, step=1, limit=1
              $region175: #{causal_self_attention.4} parent=173 // loop_pre_header
                _
              $region176: #{causal_self_attention.4} parent=173 // loop_header
                %s1738 = sphi 0, %s1742
                %p1739 = scmp.ge.s32.totalorder %s1738, 1
                %s1743 = sphi %s1719, %s1719
                %s1744 = sphi %s1729, %s1729
              $region177: #{causal_self_attention.4} parent=173 // loop_header_branch
                %1741 = sbr.rel (%p1739) target = $region181
              $region178: #{causal_self_attention.4} parent=173 // loop_body
                %v1745 = vld [vmem:[%s1743] sm:$0xff]
                %1746 = vst [vmem:[%s1744] sm:$0xff] %v1745
                %v1747 = vld [vmem:[%s1743 + $0x8] sm:$0xff]
                %1748 = vst [vmem:[%s1744 + $0x10] sm:$0xff] %v1747
                %v1749 = vld [vmem:[%s1743 + $0x10] sm:$0xff]
                %1750 = vst [vmem:[%s1744 + $0x20] sm:$0xff] %v1749
                %v1751 = vld [vmem:[%s1743 + $0x18] sm:$0xff]
                %1752 = vst [vmem:[%s1744 + $0x30] sm:$0xff] %v1751
                %v1753 = vld [vmem:[%s1743 + $0x20] sm:$0xff]
                %1754 = vst [vmem:[%s1744 + $0x40] sm:$0xff] %v1753
                %v1755 = vld [vmem:[%s1743 + $0x28] sm:$0xff]
                %1756 = vst [vmem:[%s1744 + $0x50] sm:$0xff] %v1755
                %v1757 = vld [vmem:[%s1743 + $0x30] sm:$0xff]
                %1758 = vst [vmem:[%s1744 + $0x60] sm:$0xff] %v1757
                %v1759 = vld [vmem:[%s1743 + $0x38] sm:$0xff]
                %1760 = vst [vmem:[%s1744 + $0x70] sm:$0xff] %v1759
                %v1761 = vld [vmem:[%s1743 + $0x40] sm:$0xff]
                %1762 = vst [vmem:[%s1744 + $0x80] sm:$0xff] %v1761
                %v1763 = vld [vmem:[%s1743 + $0x48] sm:$0xff]
                %1764 = vst [vmem:[%s1744 + $0x90] sm:$0xff] %v1763
                %v1765 = vld [vmem:[%s1743 + $0x50] sm:$0xff]
                %1766 = vst [vmem:[%s1744 + $0xa0] sm:$0xff] %v1765
                %v1767 = vld [vmem:[%s1743 + $0x58] sm:$0xff]
                %1768 = vst [vmem:[%s1744 + $0xb0] sm:$0xff] %v1767
                %v1769 = vld [vmem:[%s1743 + $0x60] sm:$0xff]
                %1770 = vst [vmem:[%s1744 + $0xc0] sm:$0xff] %v1769
                %v1771 = vld [vmem:[%s1743 + $0x68] sm:$0xff]
                %1772 = vst [vmem:[%s1744 + $0xd0] sm:$0xff] %v1771
                %v1773 = vld [vmem:[%s1743 + $0x70] sm:$0xff]
                %1774 = vst [vmem:[%s1744 + $0xe0] sm:$0xff] %v1773
                %v1775 = vld [vmem:[%s1743 + $0x78] sm:$0xff]
                %1776 = vst [vmem:[%s1744 + $0xf0] sm:$0xff] %v1775
              $region179: #{causal_self_attention.4} parent=173 // loop_footer
                %s1742 = sadd.s32 1, %s1738
              $region180: #{causal_self_attention.4} parent=173 // loop_footer_branch
                %1737 = sbr.rel target = $region176
              $region181: #{causal_self_attention.4} parent=173 // loop_exit
                _
            $region174: #{causal_self_attention.4} parent=165 // pred_fallthru
              _
          $region166: #{causal_self_attention.4} parent=161 // pred_fallthru
            _
          %1821 = vnop
        $region162: #{causal_self_attention.4} parent=133 // pred_fallthru
          _
      $region134: #{causal_self_attention.4} parent=5 // pred_fallthru
        _
      %p1822 = scmp.le.s32.totalorder 2, %s9
      // Predicated region
      $region197: #{causal_self_attention.4} parent=5 // pred_check
        %p1823 = pneg %p1822
      $region198: #{causal_self_attention.4} parent=5 // pred_check_branch
        %1825 = sbr.rel (%p1823) target = $region200
      $region199: #{causal_self_attention.4} parent=5 // pred_region
        %s1826 = ssub.s32 %s9, 2
        // Predicated region
        $region201: #{causal_self_attention.4} parent=199 // pred_check
          %p1827 = pneg %p170
        $region202: #{causal_self_attention.4} parent=199 // pred_check_branch
          %1829 = sbr.rel (%p1827) target = $region204
        $region203: #{causal_self_attention.4} parent=199 // pred_region
          %s1830 = sand.u32 %s155, 1
          %s1831 = sand.u32 %s155, 1
          %s1832 = smul.addr %s1831, 128
          %s1833 = scalar_lea.vmem [#allocation8], %s1832
        $region204: #{causal_self_attention.4} parent=199 // pred_fallthru
          _
      $region200: #{causal_self_attention.4} parent=5 // pred_fallthru
        _
    $region6: #{causal_self_attention.4} parent=1 // loop_footer
      %s13 = sadd.s32 1, %s9
    $region7: #{causal_self_attention.4} parent=1 // loop_footer_branch
      %8 = sbr.rel target = $region3
    $region8: #{causal_self_attention.4} parent=1 // loop_exit
      _

// kernel: causal_self_attention.5
$region0: #{causal_self_attention.5}
  #allocation0 [shape = 'u32[]', space=smem, size = 0x4, offset = 0x4, fixed_abs, tag = 'smem constant byte address 0x4 - core index']
  #allocation1 [shape = 'u32[144,128]{1,0:T(1,128)}', space=vmem, size = 0x12000, scoped, tag = 'internal scratch']
  #allocation2 [shape = 'f32[512,256]{1,0:T(8,128)}', space=vmem, size = 0x80000, scoped, tag = 'scratch operand']
  %s0 = inlined_call_operand.vmem [shape: f32[512,256], index: 0, kind: input, shape index: {}]
  %s1 = inlined_call_operand.vmem [shape: f32[256,256], index: 1, kind: input, shape index: {}]
  %s2 = inlined_call_operand.vmem [shape: f32[1,256], index: 2, kind: input, shape index: {}]
  %s3 = inlined_call_operand.hbm [shape: f32[512,256], index: 3, kind: output, shape index: {}]
  %s4 = sld [smem:[#allocation0]]
  $region30: #{causal_self_attention.5} parent=0
    _
  %s6 = ssub.s32 1, %s4
  %s7 = scalar_select 0, %s6, %s4
  $region1: #{causal_self_attention.5} parent=0
    #allocation3 [shape = 'u8[524288]{0}', space=vmem, size = 0x80000, scoped, tag = 'output window, operand 0, single buffered']
    #allocation4 [shape = 's32[1]{0}', space=sflag, size = 0x4, scoped, tag = 'scoped memory for causal_self_attention.5']
    %8 = vsyncpa [#allocation4], 0
    // Predicated region
    $region2: #{causal_self_attention.5} parent=1 // pred_check
      _
    $region3: #{causal_self_attention.5} parent=1 // pred_check_branch
      %10 = sbr.rel (0) target = $region5
    $region4: #{causal_self_attention.5} parent=1 // pred_region
      _
    $region5: #{causal_self_attention.5} parent=1 // pred_fallthru
      _
    // Predicated region
    $region6: #{causal_self_attention.5} parent=1 // pred_check
      _
    $region7: #{causal_self_attention.5} parent=1 // pred_check_branch
      %12 = sbr.rel (0) target = $region9
    $region8: #{causal_self_attention.5} parent=1 // pred_region
      _
    $region9: #{causal_self_attention.5} parent=1 // pred_fallthru
      _
    // Predicated region
    $region10: #{causal_self_attention.5} parent=1 // pred_check
      _
    $region11: #{causal_self_attention.5} parent=1 // pred_check_branch
      %14 = sbr.rel (0) target = $region13
    $region12: #{causal_self_attention.5} parent=1 // pred_region
      _
    $region13: #{causal_self_attention.5} parent=1 // pred_fallthru
      _
    %p15 = scmp.eq.s32.totalorder 0, 0
    // Predicated region
    $region14: #{causal_self_attention.5} parent=1 // pred_check
      %p16 = pneg %p15
    $region15: #{causal_self_attention.5} parent=1 // pred_check_branch
      %18 = sbr.rel (%p16) target = $region17
    $region16: #{causal_self_attention.5} parent=1 // pred_region
      %19 = vst [vmem:[#allocation2] sm:$0xff] 0.0
      %20 = vst [vmem:[#allocation2 + $0x8] sm:$0xff] 0.0
      %21 = vst [vmem:[#allocation2 + $0x10] sm:$0xff] 0.0
      %22 = vst [vmem:[#allocation2 + $0x18] sm:$0xff] 0.0
      %23 = vst [vmem:[#allocation2 + $0x20] sm:$0xff] 0.0
      %24 = vst [vmem:[#allocation2 + $0x28] sm:$0xff] 0.0
      %25 = vst [vmem:[#allocation2 + $0x30] sm:$0xff] 0.0
      %26 = vst [vmem:[#allocation2 + $0x38] sm:$0xff] 0.0
      %27 = vst [vmem:[#allocation2 + $0x40] sm:$0xff] 0.0
      %28 = vst [vmem:[#allocation2 + $0x48] sm:$0xff] 0.0
      %29 = vst [vmem:[#allocation2 + $0x50] sm:$0xff] 0.0
      %30 = vst [vmem:[#allocation2 + $0x58] sm:$0xff] 0.0
      %31 = vst [vmem:[#allocation2 + $0x60] sm:$0xff] 0.0
      %32 = vst [vmem:[#allocation2 + $0x68] sm:$0xff] 0.0
      %33 = vst [vmem:[#allocation2 + $0x70] sm:$0xff] 0.0
      %34 = vst [vmem:[#allocation2 + $0x78] sm:$0xff] 0.0
      %35 = vst [vmem:[#allocation2 + $0x80] sm:$0xff] 0.0
      %36 = vst [vmem:[#allocation2 + $0x88] sm:$0xff] 0.0
      %37 = vst [vmem:[#allocation2 + $0x90] sm:$0xff] 0.0
      %38 = vst [vmem:[#allocation2 + $0x98] sm:$0xff] 0.0
      %39 = vst [vmem:[#allocation2 + $0xa0] sm:$0xff] 0.0
      %40 = vst [vmem:[#allocation2 + $0xa8] sm:$0xff] 0.0
      %41 = vst [vmem:[#allocation2 + $0xb0] sm:$0xff] 0.0
      %42 = vst [vmem:[#allocation2 + $0xb8] sm:$0xff] 0.0
      %43 = vst [vmem:[#allocation2 + $0xc0] sm:$0xff] 0.0
      %44 = vst [vmem:[#allocation2 + $0xc8] sm:$0xff] 0.0
      %45 = vst [vmem:[#allocation2 + $0xd0] sm:$0xff] 0.0
      %46 = vst [vmem:[#allocation2 + $0xd8] sm:$0xff] 0.0
      %47 = vst [vmem:[#allocation2 + $0xe0] sm:$0xff] 0.0
      %48 = vst [vmem:[#allocation2 + $0xe8] sm:$0xff] 0.0
      %49 = vst [vmem:[#allocation2 + $0xf0] sm:$0xff] 0.0
      %50 = vst [vmem:[#allocation2 + $0xf8] sm:$0xff] 0.0
      %51 = vst [vmem:[#allocation2 + $0x100] sm:$0xff] 0.0
      %52 = vst [vmem:[#allocation2 + $0x108] sm:$0xff] 0.0
      %53 = vst [vmem:[#allocation2 + $0x110] sm:$0xff] 0.0
      %54 = vst [vmem:[#allocation2 + $0x118] sm:$0xff] 0.0
      %55 = vst [vmem:[#allocation2 + $0x120] sm:$0xff] 0.0
      %56 = vst [vmem:[#allocation2 + $0x128] sm:$0xff] 0.0
      %57 = vst [vmem:[#allocation2 + $0x130] sm:$0xff] 0.0
      %58 = vst [vmem:[#allocation2 + $0x138] sm:$0xff] 0.0
      %59 = vst [vmem:[#allocation2 + $0x140] sm:$0xff] 0.0
      %60 = vst [vmem:[#allocation2 + $0x148] sm:$0xff] 0.0
      %61 = vst [vmem:[#allocation2 + $0x150] sm:$0xff] 0.0
      %62 = vst [vmem:[#allocation2 + $0x158] sm:$0xff] 0.0
      %63 = vst [vmem:[#allocation2 + $0x160] sm:$0xff] 0.0
      %64 = vst [vmem:[#allocation2 + $0x168] sm:$0xff] 0.0
      %65 = vst [vmem:[#allocation2 + $0x170] sm:$0xff] 0.0
      %66 = vst [vmem:[#allocation2 + $0x178] sm:$0xff] 0.0
      %67 = vst [vmem:[#allocation2 + $0x180] sm:$0xff] 0.0
      %68 = vst [vmem:[#allocation2 + $0x188] sm:$0xff] 0.0
      %69 = vst [vmem:[#allocation2 + $0x190] sm:$0xff] 0.0
      %70 = vst [vmem:[#allocation2 + $0x198] sm:$0xff] 0.0
      %71 = vst [vmem:[#allocation2 + $0x1a0] sm:$0xff] 0.0
      %72 = vst [vmem:[#allocation2 + $0x1a8] sm:$0xff] 0.0
      %73 = vst [vmem:[#allocation2 + $0x1b0] sm:$0xff] 0.0
      %74 = vst [vmem:[#allocation2 + $0x1b8] sm:$0xff] 0.0
      %75 = vst [vmem:[#allocation2 + $0x1c0] sm:$0xff] 0.0
      %76 = vst [vmem:[#allocation2 + $0x1c8] sm:$0xff] 0.0
      %77 = vst [vmem:[#allocation2 + $0x1d0] sm:$0xff] 0.0
      %78 = vst [vmem:[#allocation2 + $0x1d8] sm:$0xff] 0.0
      %79 = vst [vmem:[#allocation2 + $0x1e0] sm:$0xff] 0.0
      %80 = vst [vmem:[#allocation2 + $0x1e8] sm:$0xff] 0.0
      %81 = vst [vmem:[#allocation2 + $0x1f0] sm:$0xff] 0.0
      %82 = vst [vmem:[#allocation2 + $0x1f8] sm:$0xff] 0.0
      %83 = vst [vmem:[#allocation2 + $0x200] sm:$0xff] 0.0
      %84 = vst [vmem:[#allocation2 + $0x208] sm:$0xff] 0.0
      %85 = vst [vmem:[#allocation2 + $0x210] sm:$0xff] 0.0
      %86 = vst [vmem:[#allocation2 + $0x218] sm:$0xff] 0.0
      %87 = vst [vmem:[#allocation2 + $0x220] sm:$0xff] 0.0
      %88 = vst [vmem:[#allocation2 + $0x228] sm:$0xff] 0.0
      %89 = vst [vmem:[#allocation2 + $0x230] sm:$0xff] 0.0
      %90 = vst [vmem:[#allocation2 + $0x238] sm:$0xff] 0.0
      %91 = vst [vmem:[#allocation2 + $0x240] sm:$0xff] 0.0
      %92 = vst [vmem:[#allocation2 + $0x248] sm:$0xff] 0.0
      %93 = vst [vmem:[#allocation2 + $0x250] sm:$0xff] 0.0
      %94 = vst [vmem:[#allocation2 + $0x258] sm:$0xff] 0.0
      %95 = vst [vmem:[#allocation2 + $0x260] sm:$0xff] 0.0
      %96 = vst [vmem:[#allocation2 + $0x268] sm:$0xff] 0.0
      %97 = vst [vmem:[#allocation2 + $0x270] sm:$0xff] 0.0
      %98 = vst [vmem:[#allocation2 + $0x278] sm:$0xff] 0.0
      %99 = vst [vmem:[#allocation2 + $0x280] sm:$0xff] 0.0
      %100 = vst [vmem:[#allocation2 + $0x288] sm:$0xff] 0.0
      %101 = vst [vmem:[#allocation2 + $0x290] sm:$0xff] 0.0
      %102 = vst [vmem:[#allocation2 + $0x298] sm:$0xff] 0.0
      %103 = vst [vmem:[#allocation2 + $0x2a0] sm:$0xff] 0.0
      %104 = vst [vmem:[#allocation2 + $0x2a8] sm:$0xff] 0.0
      %105 = vst [vmem:[#allocation2 + $0x2b0] sm:$0xff] 0.0
      %106 = vst [vmem:[#allocation2 + $0x2b8] sm:$0xff] 0.0
      %107 = vst [vmem:[#allocation2 + $0x2c0] sm:$0xff] 0.0
      %108 = vst [vmem:[#allocation2 + $0x2c8] sm:$0xff] 0.0
      %109 = vst [vmem:[#allocation2 + $0x2d0] sm:$0xff] 0.0
      %110 = vst [vmem:[#allocation2 + $0x2d8] sm:$0xff] 0.0
      %111 = vst [vmem:[#allocation2 + $0x2e0] sm:$0xff] 0.0
      %112 = vst [vmem:[#allocation2 + $0x2e8] sm:$0xff] 0.0
      %113 = vst [vmem:[#allocation2 + $0x2f0] sm:$0xff] 0.0
      %114 = vst [vmem:[#allocation2 + $0x2f8] sm:$0xff] 0.0
      %115 = vst [vmem:[#allocation2 + $0x300] sm:$0xff] 0.0
      %116 = vst [vmem:[#allocation2 + $0x308] sm:$0xff] 0.0
      %117 = vst [vmem:[#allocation2 + $0x310] sm:$0xff] 0.0
      %118 = vst [vmem:[#allocation2 + $0x318] sm:$0xff] 0.0
      %119 = vst [vmem:[#allocation2 + $0x320] sm:$0xff] 0.0
      %120 = vst [vmem:[#allocation2 + $0x328] sm:$0xff] 0.0
      %121 = vst [vmem:[#allocation2 + $0x330] sm:$0xff] 0.0
      %122 = vst [vmem:[#allocation2 + $0x338] sm:$0xff] 0.0
      %123 = vst [vmem:[#allocation2 + $0x340] sm:$0xff] 0.0
      %124 = vst [vmem:[#allocation2 + $0x348] sm:$0xff] 0.0
      %125 = vst [vmem:[#allocation2 + $0x350] sm:$0xff] 0.0
      %126 = vst [vmem:[#allocation2 + $0x358] sm:$0xff] 0.0
      %127 = vst [vmem:[#allocation2 + $0x360] sm:$0xff] 0.0
      %128 = vst [vmem:[#allocation2 + $0x368] sm:$0xff] 0.0
      %129 = vst [vmem:[#allocation2 + $0x370] sm:$0xff] 0.0
      %130 = vst [vmem:[#allocation2 + $0x378] sm:$0xff] 0.0
      %131 = vst [vmem:[#allocation2 + $0x380] sm:$0xff] 0.0
      %132 = vst [vmem:[#allocation2 + $0x388] sm:$0xff] 0.0
      %133 = vst [vmem:[#allocation2 + $0x390] sm:$0xff] 0.0
      %134 = vst [vmem:[#allocation2 + $0x398] sm:$0xff] 0.0
      %135 = vst [vmem:[#allocation2 + $0x3a0] sm:$0xff] 0.0
      %136 = vst [vmem:[#allocation2 + $0x3a8] sm:$0xff] 0.0
      %137 = vst [vmem:[#allocation2 + $0x3b0] sm:$0xff] 0.0
      %138 = vst [vmem:[#allocation2 + $0x3b8] sm:$0xff] 0.0
      %139 = vst [vmem:[#allocation2 + $0x3c0] sm:$0xff] 0.0
      %140 = vst [vmem:[#allocation2 + $0x3c8] sm:$0xff] 0.0
      %141 = vst [vmem:[#allocation2 + $0x3d0] sm:$0xff] 0.0
      %142 = vst [vmem:[#allocation2 + $0x3d8] sm:$0xff] 0.0
      %143 = vst [vmem:[#allocation2 + $0x3e0] sm:$0xff] 0.0
      %144 = vst [vmem:[#allocation2 + $0x3e8] sm:$0xff] 0.0
      %145 = vst [vmem:[#allocation2 + $0x3f0] sm:$0xff] 0.0
      %146 = vst [vmem:[#allocation2 + $0x3f8] sm:$0xff] 0.0
    $region17: #{causal_self_attention.5} parent=1 // pred_fallthru
      _
    %v147 = vld [vmem:[#allocation2] sm:$0xff]
    %v148 = vld [vmem:[#allocation2 + $0x8] sm:$0xff]
    %v149 = vld [vmem:[#allocation2 + $0x10] sm:$0xff]
    %v150 = vld [vmem:[#allocation2 + $0x18] sm:$0xff]
    %v151 = vld [vmem:[#allocation2 + $0x20] sm:$0xff]
    %v152 = vld [vmem:[#allocation2 + $0x28] sm:$0xff]
    %v153 = vld [vmem:[#allocation2 + $0x30] sm:$0xff]
    %v154 = vld [vmem:[#allocation2 + $0x38] sm:$0xff]
    %v155 = vld [vmem:[#allocation2 + $0x40] sm:$0xff]
    %v156 = vld [vmem:[#allocation2 + $0x48] sm:$0xff]
    %v157 = vld [vmem:[#allocation2 + $0x50] sm:$0xff]
    %v158 = vld [vmem:[#allocation2 + $0x58] sm:$0xff]
    %v159 = vld [vmem:[#allocation2 + $0x60] sm:$0xff]
    %v160 = vld [vmem:[#allocation2 + $0x68] sm:$0xff]
    %v161 = vld [vmem:[#allocation2 + $0x70] sm:$0xff]
    %v162 = vld [vmem:[#allocation2 + $0x78] sm:$0xff]
    %v163 = vld [vmem:[#allocation2 + $0x80] sm:$0xff]
    %v164 = vld [vmem:[#allocation2 + $0x88] sm:$0xff]
    %v165 = vld [vmem:[#allocation2 + $0x90] sm:$0xff]
    %v166 = vld [vmem:[#allocation2 + $0x98] sm:$0xff]
    %v167 = vld [vmem:[#allocation2 + $0xa0] sm:$0xff]
    %v168 = vld [vmem:[#allocation2 + $0xa8] sm:$0xff]
    %v169 = vld [vmem:[#allocation2 + $0xb0] sm:$0xff]
    %v170 = vld [vmem:[#allocation2 + $0xb8] sm:$0xff]
    %v171 = vld [vmem:[#allocation2 + $0xc0] sm:$0xff]
    %v172 = vld [vmem:[#allocation2 + $0xc8] sm:$0xff]
    %v173 = vld [vmem:[#allocation2 + $0xd0] sm:$0xff]
    %v174 = vld [vmem:[#allocation2 + $0xd8] sm:$0xff]
    %v175 = vld [vmem:[#allocation2 + $0xe0] sm:$0xff]
    %v176 = vld [vmem:[#allocation2 + $0xe8] sm:$0xff]
    %v177 = vld [vmem:[#allocation2 + $0xf0] sm:$0xff]
    %v178 = vld [vmem:[#allocation2 + $0xf8] sm:$0xff]
    %v179 = vld [vmem:[#allocation2 + $0x100] sm:$0xff]
    %v180 = vld [vmem:[#allocation2 + $0x108] sm:$0xff]
    %v181 = vld [vmem:[#allocation2 + $0x110] sm:$0xff]
    %v182 = vld [vmem:[#allocation2 + $0x118] sm:$0xff]
    %v183 = vld [vmem:[#allocation2 + $0x120] sm:$0xff]
    %v184 = vld [vmem:[#allocation2 + $0x128] sm:$0xff]
    %v185 = vld [vmem:[#allocation2 + $0x130] sm:$0xff]
    %v186 = vld [vmem:[#allocation2 + $0x138] sm:$0xff]
    %v187 = vld [vmem:[#allocation2 + $0x140] sm:$0xff]
    %v188 = vld [vmem:[#allocation2 + $0x148] sm:$0xff]
    %v189 = vld [vmem:[#allocation2 + $0x150] sm:$0xff]
    %v190 = vld [vmem:[#allocation2 + $0x158] sm:$0xff]
    %v191 = vld [vmem:[#allocation2 + $0x160] sm:$0xff]
    %v192 = vld [vmem:[#allocation2 + $0x168] sm:$0xff]
    %v193 = vld [vmem:[#allocation2 + $0x170] sm:$0xff]
    %v194 = vld [vmem:[#allocation2 + $0x178] sm:$0xff]
    %v195 = vld [vmem:[#allocation2 + $0x180] sm:$0xff]
    %v196 = vld [vmem:[#allocation2 + $0x188] sm:$0xff]
    %v197 = vld [vmem:[#allocation2 + $0x190] sm:$0xff]
    %v198 = vld [vmem:[#allocation2 + $0x198] sm:$0xff]
    %v199 = vld [vmem:[#allocation2 + $0x1a0] sm:$0xff]
    %v200 = vld [vmem:[#allocation2 + $0x1a8] sm:$0xff]
    %v201 = vld [vmem:[#allocation2 + $0x1b0] sm:$0xff]
    %v202 = vld [vmem:[#allocation2 + $0x1b8] sm:$0xff]
    %v203 = vld [vmem:[#allocation2 + $0x1c0] sm:$0xff]
    %v204 = vld [vmem:[#allocation2 + $0x1c8] sm:$0xff]
    %v205 = vld [vmem:[#allocation2 + $0x1d0] sm:$0xff]
    %v206 = vld [vmem:[#allocation2 + $0x1d8] sm:$0xff]
    %v207 = vld [vmem:[#allocation2 + $0x1e0] sm:$0xff]
    %v208 = vld [vmem:[#allocation2 + $0x1e8] sm:$0xff]
    %v209 = vld [vmem:[#allocation2 + $0x1f0] sm:$0xff]
    %v210 = vld [vmem:[#allocation2 + $0x1f8] sm:$0xff]
    %v211 = vld [vmem:[#allocation2 + $0x200] sm:$0xff]
    %v212 = vld [vmem:[#allocation2 + $0x208] sm:$0xff]
    %v213 = vld [vmem:[#allocation2 + $0x210] sm:$0xff]
    %v214 = vld [vmem:[#allocation2 + $0x218] sm:$0xff]
    %v215 = vld [vmem:[#allocation2 + $0x220] sm:$0xff]
    %v216 = vld [vmem:[#allocation2 + $0x228] sm:$0xff]
    %v217 = vld [vmem:[#allocation2 + $0x230] sm:$0xff]
    %v218 = vld [vmem:[#allocation2 + $0x238] sm:$0xff]
    %v219 = vld [vmem:[#allocation2 + $0x240] sm:$0xff]
    %v220 = vld [vmem:[#allocation2 + $0x248] sm:$0xff]
    %v221 = vld [vmem:[#allocation2 + $0x250] sm:$0xff]
    %v222 = vld [vmem:[#allocation2 + $0x258] sm:$0xff]
    %v223 = vld [vmem:[#allocation2 + $0x260] sm:$0xff]
    %v224 = vld [vmem:[#allocation2 + $0x268] sm:$0xff]
    %v225 = vld [vmem:[#allocation2 + $0x270] sm:$0xff]
    %v226 = vld [vmem:[#allocation2 + $0x278] sm:$0xff]
    %v227 = vld [vmem:[#allocation2 + $0x280] sm:$0xff]
    %v228 = vld [vmem:[#allocation2 + $0x288] sm:$0xff]
    %v229 = vld [vmem:[#allocation2 + $0x290] sm:$0xff]
    %v230 = vld [vmem:[#allocation2 + $0x298] sm:$0xff]
    %v231 = vld [vmem:[#allocation2 + $0x2a0] sm:$0xff]
    %v232 = vld [vmem:[#allocation2 + $0x2a8] sm:$0xff]
    %v233 = vld [vmem:[#allocation2 + $0x2b0] sm:$0xff]
    %v234 = vld [vmem:[#allocation2 + $0x2b8] sm:$0xff]
    %v235 = vld [vmem:[#allocation2 + $0x2c0] sm:$0xff]
    %v236 = vld [vmem:[#allocation2 + $0x2c8] sm:$0xff]
    %v237 = vld [vmem:[#allocation2 + $0x2d0] sm:$0xff]
    %v238 = vld [vmem:[#allocation2 + $0x2d8] sm:$0xff]
    %v239 = vld [vmem:[#allocation2 + $0x2e0] sm:$0xff]
    %v240 = vld [vmem:[#allocation2 + $0x2e8] sm:$0xff]
    %v241 = vld [vmem:[#allocation2 + $0x2f0] sm:$0xff]
    %v242 = vld [vmem:[#allocation2 + $0x2f8] sm:$0xff]
    %v243 = vld [vmem:[#allocation2 + $0x300] sm:$0xff]
    %v244 = vld [vmem:[#allocation2 + $0x308] sm:$0xff]
    %v245 = vld [vmem:[#allocation2 + $0x310] sm:$0xff]
    %v246 = vld [vmem:[#allocation2 + $0x318] sm:$0xff]
    %v247 = vld [vmem:[#allocation2 + $0x320] sm:$0xff]
    %v248 = vld [vmem:[#allocation2 + $0x328] sm:$0xff]
    %v249 = vld [vmem:[#allocation2 + $0x330] sm:$0xff]
    %v250 = vld [vmem:[#allocation2 + $0x338] sm:$0xff]
    %v251 = vld [vmem:[#allocation2 + $0x340] sm:$0xff]
    %v252 = vld [vmem:[#allocation2 + $0x348] sm:$0xff]
    %v253 = vld [vmem:[#allocation2 + $0x350] sm:$0xff]
    %v254 = vld [vmem:[#allocation2 + $0x358] sm:$0xff]
    %v255 = vld [vmem:[#allocation2 + $0x360] sm:$0xff]
    %v256 = vld [vmem:[#allocation2 + $0x368] sm:$0xff]
    %v257 = vld [vmem:[#allocation2 + $0x370] sm:$0xff]
    %v258 = vld [vmem:[#allocation2 + $0x378] sm:$0xff]
    %v259 = vld [vmem:[#allocation2 + $0x380] sm:$0xff]
    %v260 = vld [vmem:[#allocation2 + $0x388] sm:$0xff]
    %v261 = vld [vmem:[#allocation2 + $0x390] sm:$0xff]
    %v262 = vld [vmem:[#allocation2 + $0x398] sm:$0xff]
    %v263 = vld [vmem:[#allocation2 + $0x3a0] sm:$0xff]
    %v264 = vld [vmem:[#allocation2 + $0x3a8] sm:$0xff]
    %v265 = vld [vmem:[#allocation2 + $0x3b0] sm:$0xff]
    %v266 = vld [vmem:[#allocation2 + $0x3b8] sm:$0xff]
    %v267 = vld [vmem:[#allocation2 + $0x3c0] sm:$0xff]
    %v268 = vld [vmem:[#allocation2 + $0x3c8] sm:$0xff]
    %v269 = vld [vmem:[#allocation2 + $0x3d0] sm:$0xff]
    %v270 = vld [vmem:[#allocation2 + $0x3d8] sm:$0xff]
    %v271 = vld [vmem:[#allocation2 + $0x3e0] sm:$0xff]
    %v272 = vld [vmem:[#allocation2 + $0x3e8] sm:$0xff]
    %v273 = vld [vmem:[#allocation2 + $0x3f0] sm:$0xff]
    %v274 = vld [vmem:[#allocation2 + $0x3f8] sm:$0xff]
    %v275 = vld [vmem:[%s0] sm:$0xff]
    %v276 = vld [vmem:[%s0 + $0x8] sm:$0xff]
    %v277 = vld [vmem:[%s0 + $0x10] sm:$0xff]
    %v278 = vld [vmem:[%s0 + $0x18] sm:$0xff]
    %v279 = vld [vmem:[%s0 + $0x20] sm:$0xff]
    %v280 = vld [vmem:[%s0 + $0x28] sm:$0xff]
    %v281 = vld [vmem:[%s0 + $0x30] sm:$0xff]
    %v282 = vld [vmem:[%s0 + $0x38] sm:$0xff]
    %v283 = vld [vmem:[%s0 + $0x40] sm:$0xff]
    %v284 = vld [vmem:[%s0 + $0x48] sm:$0xff]
    %v285 = vld [vmem:[%s0 + $0x50] sm:$0xff]
    %v286 = vld [vmem:[%s0 + $0x58] sm:$0xff]
    %v287 = vld [vmem:[%s0 + $0x60] sm:$0xff]
    %v288 = vld [vmem:[%s0 + $0x68] sm:$0xff]
    %v289 = vld [vmem:[%s0 + $0x70] sm:$0xff]
    %v290 = vld [vmem:[%s0 + $0x78] sm:$0xff]
    %v291 = vld [vmem:[%s0 + $0x80] sm:$0xff]
    %v292 = vld [vmem:[%s0 + $0x88] sm:$0xff]
    %v293 = vld [vmem:[%s0 + $0x90] sm:$0xff]
    %v294 = vld [vmem:[%s0 + $0x98] sm:$0xff]
    %v295 = vld [vmem:[%s0 + $0xa0] sm:$0xff]
    %v296 = vld [vmem:[%s0 + $0xa8] sm:$0xff]
    %v297 = vld [vmem:[%s0 + $0xb0] sm:$0xff]
    %v298 = vld [vmem:[%s0 + $0xb8] sm:$0xff]
    %v299 = vld [vmem:[%s0 + $0xc0] sm:$0xff]
    %v300 = vld [vmem:[%s0 + $0xc8] sm:$0xff]
    %v301 = vld [vmem:[%s0 + $0xd0] sm:$0xff]
    %v302 = vld [vmem:[%s0 + $0xd8] sm:$0xff]
    %v303 = vld [vmem:[%s0 + $0xe0] sm:$0xff]
    %v304 = vld [vmem:[%s0 + $0xe8] sm:$0xff]
    %v305 = vld [vmem:[%s0 + $0xf0] sm:$0xff]
    %v306 = vld [vmem:[%s0 + $0xf8] sm:$0xff]
    %v307 = vld [vmem:[%s0 + $0x100] sm:$0xff]
    %v308 = vld [vmem:[%s0 + $0x108] sm:$0xff]
    %v309 = vld [vmem:[%s0 + $0x110] sm:$0xff]
    %v310 = vld [vmem:[%s0 + $0x118] sm:$0xff]
    %v311 = vld [vmem:[%s0 + $0x120] sm:$0xff]
    %v312 = vld [vmem:[%s0 + $0x128] sm:$0xff]
    %v313 = vld [vmem:[%s0 + $0x130] sm:$0xff]
    %v314 = vld [vmem:[%s0 + $0x138] sm:$0xff]
    %v315 = vld [vmem:[%s0 + $0x140] sm:$0xff]
    %v316 = vld [vmem:[%s0 + $0x148] sm:$0xff]
    %v317 = vld [vmem:[%s0 + $0x150] sm:$0xff]
    %v318 = vld [vmem:[%s0 + $0x158] sm:$0xff]
    %v319 = vld [vmem:[%s0 + $0x160] sm:$0xff]
    %v320 = vld [vmem:[%s0 + $0x168] sm:$0xff]
    %v321 = vld [vmem:[%s0 + $0x170] sm:$0xff]
    %v322 = vld [vmem:[%s0 + $0x178] sm:$0xff]
    %v323 = vld [vmem:[%s0 + $0x180] sm:$0xff]
    %v324 = vld [vmem:[%s0 + $0x188] sm:$0xff]
    %v325 = vld [vmem:[%s0 + $0x190] sm:$0xff]
    %v326 = vld [vmem:[%s0 + $0x198] sm:$0xff]
    %v327 = vld [vmem:[%s0 + $0x1a0] sm:$0xff]
    %v328 = vld [vmem:[%s0 + $0x1a8] sm:$0xff]
    %v329 = vld [vmem:[%s0 + $0x1b0] sm:$0xff]
    %v330 = vld [vmem:[%s0 + $0x1b8] sm:$0xff]
    %v331 = vld [vmem:[%s0 + $0x1c0] sm:$0xff]
    %v332 = vld [vmem:[%s0 + $0x1c8] sm:$0xff]
    %v333 = vld [vmem:[%s0 + $0x1d0] sm:$0xff]
    %v334 = vld [vmem:[%s0 + $0x1d8] sm:$0xff]
    %v335 = vld [vmem:[%s0 + $0x1e0] sm:$0xff]
    %v336 = vld [vmem:[%s0 + $0x1e8] sm:$0xff]
    %v337 = vld [vmem:[%s0 + $0x1f0] sm:$0xff]
    %v338 = vld [vmem:[%s0 + $0x1f8] sm:$0xff]
    %v339 = vld [vmem:[%s0 + $0x200] sm:$0xff]
    %v340 = vld [vmem:[%s0 + $0x208] sm:$0xff]
    %v341 = vld [vmem:[%s0 + $0x210] sm:$0xff]
    %v342 = vld [vmem:[%s0 + $0x218] sm:$0xff]
    %v343 = vld [vmem:[%s0 + $0x220] sm:$0xff]
    %v344 = vld [vmem:[%s0 + $0x228] sm:$0xff]
    %v345 = vld [vmem:[%s0 + $0x230] sm:$0xff]
    %v346 = vld [vmem:[%s0 + $0x238] sm:$0xff]
    %v347 = vld [vmem:[%s0 + $0x240] sm:$0xff]
    %v348 = vld [vmem:[%s0 + $0x248] sm:$0xff]
    %v349 = vld [vmem:[%s0 + $0x250] sm:$0xff]
    %v350 = vld [vmem:[%s0 + $0x258] sm:$0xff]
    %v351 = vld [vmem:[%s0 + $0x260] sm:$0xff]
    %v352 = vld [vmem:[%s0 + $0x268] sm:$0xff]
    %v353 = vld [vmem:[%s0 + $0x270] sm:$0xff]
    %v354 = vld [vmem:[%s0 + $0x278] sm:$0xff]
    %v355 = vld [vmem:[%s0 + $0x280] sm:$0xff]
    %v356 = vld [vmem:[%s0 + $0x288] sm:$0xff]
    %v357 = vld [vmem:[%s0 + $0x290] sm:$0xff]
    %v358 = vld [vmem:[%s0 + $0x298] sm:$0xff]
    %v359 = vld [vmem:[%s0 + $0x2a0] sm:$0xff]
    %v360 = vld [vmem:[%s0 + $0x2a8] sm:$0xff]
    %v361 = vld [vmem:[%s0 + $0x2b0] sm:$0xff]
    %v362 = vld [vmem:[%s0 + $0x2b8] sm:$0xff]
    %v363 = vld [vmem:[%s0 + $0x2c0] sm:$0xff]
    %v364 = vld [vmem:[%s0 + $0x2c8] sm:$0xff]
    %v365 = vld [vmem:[%s0 + $0x2d0] sm:$0xff]
    %v366 = vld [vmem:[%s0 + $0x2d8] sm:$0xff]
    %v367 = vld [vmem:[%s0 + $0x2e0] sm:$0xff]
    %v368 = vld [vmem:[%s0 + $0x2e8] sm:$0xff]
    %v369 = vld [vmem:[%s0 + $0x2f0] sm:$0xff]
    %v370 = vld [vmem:[%s0 + $0x2f8] sm:$0xff]
    %v371 = vld [vmem:[%s0 + $0x300] sm:$0xff]
    %v372 = vld [vmem:[%s0 + $0x308] sm:$0xff]
    %v373 = vld [vmem:[%s0 + $0x310] sm:$0xff]
    %v374 = vld [vmem:[%s0 + $0x318] sm:$0xff]
    %v375 = vld [vmem:[%s0 + $0x320] sm:$0xff]
    %v376 = vld [vmem:[%s0 + $0x328] sm:$0xff]
    %v377 = vld [vmem:[%s0 + $0x330] sm:$0xff]
    %v378 = vld [vmem:[%s0 + $0x338] sm:$0xff]
    %v379 = vld [vmem:[%s0 + $0x340] sm:$0xff]
    %v380 = vld [vmem:[%s0 + $0x348] sm:$0xff]
    %v381 = vld [vmem:[%s0 + $0x350] sm:$0xff]
    %v382 = vld [vmem:[%s0 + $0x358] sm:$0xff]
    %v383 = vld [vmem:[%s0 + $0x360] sm:$0xff]
    %v384 = vld [vmem:[%s0 + $0x368] sm:$0xff]
    %v385 = vld [vmem:[%s0 + $0x370] sm:$0xff]
    %v386 = vld [vmem:[%s0 + $0x378] sm:$0xff]
    %v387 = vld [vmem:[%s0 + $0x380] sm:$0xff]
    %v388 = vld [vmem:[%s0 + $0x388] sm:$0xff]
    %v389 = vld [vmem:[%s0 + $0x390] sm:$0xff]
    %v390 = vld [vmem:[%s0 + $0x398] sm:$0xff]
    %v391 = vld [vmem:[%s0 + $0x3a0] sm:$0xff]
    %v392 = vld [vmem:[%s0 + $0x3a8] sm:$0xff]
    %v393 = vld [vmem:[%s0 + $0x3b0] sm:$0xff]
    %v394 = vld [vmem:[%s0 + $0x3b8] sm:$0xff]
    %v395 = vld [vmem:[%s0 + $0x3c0] sm:$0xff]
    %v396 = vld [vmem:[%s0 + $0x3c8] sm:$0xff]
    %v397 = vld [vmem:[%s0 + $0x3d0] sm:$0xff]
    %v398 = vld [vmem:[%s0 + $0x3d8] sm:$0xff]
    %v399 = vld [vmem:[%s0 + $0x3e0] sm:$0xff]
    %v400 = vld [vmem:[%s0 + $0x3e8] sm:$0xff]
    %v401 = vld [vmem:[%s0 + $0x3f0] sm:$0xff]
    %v402 = vld [vmem:[%s0 + $0x3f8] sm:$0xff]
    %v403 = vld [vmem:[%s1] sm:$0xff]
    %v404 = vld [vmem:[%s1 + $0x8] sm:$0xff]
    %v405 = vld [vmem:[%s1 + $0x10] sm:$0xff]
    %v406 = vld [vmem:[%s1 + $0x18] sm:$0xff]
    %v407 = vld [vmem:[%s1 + $0x20] sm:$0xff]
    %v408 = vld [vmem:[%s1 + $0x28] sm:$0xff]
    %v409 = vld [vmem:[%s1 + $0x30] sm:$0xff]
    %v410 = vld [vmem:[%s1 + $0x38] sm:$0xff]
    %v411 = vld [vmem:[%s1 + $0x40] sm:$0xff]
    %v412 = vld [vmem:[%s1 + $0x48] sm:$0xff]
    %v413 = vld [vmem:[%s1 + $0x50] sm:$0xff]
    %v414 = vld [vmem:[%s1 + $0x58] sm:$0xff]
    %v415 = vld [vmem:[%s1 + $0x60] sm:$0xff]
    %v416 = vld [vmem:[%s1 + $0x68] sm:$0xff]
    %v417 = vld [vmem:[%s1 + $0x70] sm:$0xff]
    %v418 = vld [vmem:[%s1 + $0x78] sm:$0xff]
    %v419 = vld [vmem:[%s1 + $0x80] sm:$0xff]
    %v420 = vld [vmem:[%s1 + $0x88] sm:$0xff]
    %v421 = vld [vmem:[%s1 + $0x90] sm:$0xff]
    %v422 = vld [vmem:[%s1 + $0x98] sm:$0xff]
    %v423 = vld [vmem:[%s1 + $0xa0] sm:$0xff]
    %v424 = vld [vmem:[%s1 + $0xa8] sm:$0xff]
    %v425 = vld [vmem:[%s1 + $0xb0] sm:$0xff]
    %v426 = vld [vmem:[%s1 + $0xb8] sm:$0xff]
    %v427 = vld [vmem:[%s1 + $0xc0] sm:$0xff]
    %v428 = vld [vmem:[%s1 + $0xc8] sm:$0xff]
    %v429 = vld [vmem:[%s1 + $0xd0] sm:$0xff]
    %v430 = vld [vmem:[%s1 + $0xd8] sm:$0xff]
    %v431 = vld [vmem:[%s1 + $0xe0] sm:$0xff]
    %v432 = vld [vmem:[%s1 + $0xe8] sm:$0xff]
    %v433 = vld [vmem:[%s1 + $0xf0] sm:$0xff]
    %v434 = vld [vmem:[%s1 + $0xf8] sm:$0xff]
    %v435 = vld [vmem:[%s1 + $0x100] sm:$0xff]
    %v436 = vld [vmem:[%s1 + $0x108] sm:$0xff]
    %v437 = vld [vmem:[%s1 + $0x110] sm:$0xff]
    %v438 = vld [vmem:[%s1 + $0x118] sm:$0xff]
    %v439 = vld [vmem:[%s1 + $0x120] sm:$0xff]
    %v440 = vld [vmem:[%s1 + $0x128] sm:$0xff]
    %v441 = vld [vmem:[%s1 + $0x130] sm:$0xff]
    %v442 = vld [vmem:[%s1 + $0x138] sm:$0xff]
    %v443 = vld [vmem:[%s1 + $0x140] sm:$0xff]
    %v444 = vld [vmem:[%s1 + $0x148] sm:$0xff]
    %v445 = vld [vmem:[%s1 + $0x150] sm:$0xff]
    %v446 = vld [vmem:[%s1 + $0x158] sm:$0xff]
    %v447 = vld [vmem:[%s1 + $0x160] sm:$0xff]
    %v448 = vld [vmem:[%s1 + $0x168] sm:$0xff]
    %v449 = vld [vmem:[%s1 + $0x170] sm:$0xff]
    %v450 = vld [vmem:[%s1 + $0x178] sm:$0xff]
    %v451 = vld [vmem:[%s1 + $0x180] sm:$0xff]
    %v452 = vld [vmem:[%s1 + $0x188] sm:$0xff]
    %v453 = vld [vmem:[%s1 + $0x190] sm:$0xff]
    %v454 = vld [vmem:[%s1 + $0x198] sm:$0xff]
    %v455 = vld [vmem:[%s1 + $0x1a0] sm:$0xff]
    %v456 = vld [vmem:[%s1 + $0x1a8] sm:$0xff]
    %v457 = vld [vmem:[%s1 + $0x1b0] sm:$0xff]
    %v458 = vld [vmem:[%s1 + $0x1b8] sm:$0xff]
    %v459 = vld [vmem:[%s1 + $0x1c0] sm:$0xff]
    %v460 = vld [vmem:[%s1 + $0x1c8] sm:$0xff]
    %v461 = vld [vmem:[%s1 + $0x1d0] sm:$0xff]
    %v462 = vld [vmem:[%s1 + $0x1d8] sm:$0xff]
    %v463 = vld [vmem:[%s1 + $0x1e0] sm:$0xff]
    %v464 = vld [vmem:[%s1 + $0x1e8] sm:$0xff]
    %v465 = vld [vmem:[%s1 + $0x1f0] sm:$0xff]
    %v466 = vld [vmem:[%s1 + $0x1f8] sm:$0xff]
    %467 = vmatprep.subr.mxu0 %v404
    %468 = vmatpush1.msra.mxu0 %v403
    %469 = vmatprep.subr.mxu0 %v406
    %470 = vmatpush1.msra.mxu0 %v405
    %471 = vmatprep.subr.mxu0 %v408
    %472 = vmatpush1.msra.mxu0 %v407
    %473 = vmatprep.subr.mxu0 %v410
    %474 = vmatpush1.msra.mxu0 %v409
    %475 = vmatprep.subr.mxu0 %v412
    %476 = vmatpush1.msra.mxu0 %v411
    %477 = vmatprep.subr.mxu0 %v414
    %478 = vmatpush1.msra.mxu0 %v413
    %479 = vmatprep.subr.mxu0 %v416
    %480 = vmatpush1.msra.mxu0 %v415
    %481 = vmatprep.subr.mxu0 %v418
    %482 = vmatpush1.msra.mxu0 %v417
    %483 = vmatprep.subr.mxu0 %v420
    %484 = vmatpush1.msra.mxu0 %v419
    %485 = vmatprep.subr.mxu0 %v422
    %486 = vmatpush1.msra.mxu0 %v421
    %487 = vmatprep.subr.mxu0 %v424
    %488 = vmatpush1.msra.mxu0 %v423
    %489 = vmatprep.subr.mxu0 %v426
    %490 = vmatpush1.msra.mxu0 %v425
    %491 = vmatprep.subr.mxu0 %v428
    %492 = vmatpush1.msra.mxu0 %v427
    %493 = vmatprep.subr.mxu0 %v430
    %494 = vmatpush1.msra.mxu0 %v429
    %495 = vmatprep.subr.mxu0 %v432
    %496 = vmatpush1.msra.mxu0 %v431
    %497 = vmatprep.subr.mxu0 %v434
    %498 = vmatpush1.msra.mxu0 %v433
    %499 = vmatprep.subr.mxu0 %v436
    %500 = vmatpush1.msra.mxu0 %v435
    %501 = vmatprep.subr.mxu0 %v438
    %502 = vmatpush1.msra.mxu0 %v437
    %503 = vmatprep.subr.mxu0 %v440
    %504 = vmatpush1.msra.mxu0 %v439
    %505 = vmatprep.subr.mxu0 %v442
    %506 = vmatpush1.msra.mxu0 %v441
    %507 = vmatprep.subr.mxu0 %v444
    %508 = vmatpush1.msra.mxu0 %v443
    %509 = vmatprep.subr.mxu0 %v446
    %510 = vmatpush1.msra.mxu0 %v445
    %511 = vmatprep.subr.mxu0 %v448
    %512 = vmatpush1.msra.mxu0 %v447
    %513 = vmatprep.subr.mxu0 %v450
    %514 = vmatpush1.msra.mxu0 %v449
    %515 = vmatprep.subr.mxu0 %v452
    %516 = vmatpush1.msra.mxu0 %v451
    %517 = vmatprep.subr.mxu0 %v454
    %518 = vmatpush1.msra.mxu0 %v453
    %519 = vmatprep.subr.mxu0 %v456
    %520 = vmatpush1.msra.mxu0 %v455
    %521 = vmatprep.subr.mxu0 %v458
    %522 = vmatpush1.msra.mxu0 %v457
    %523 = vmatprep.subr.mxu0 %v460
    %524 = vmatpush1.msra.mxu0 %v459
    %525 = vmatprep.subr.mxu0 %v462
    %526 = vmatpush1.msra.mxu0 %v461
    %527 = vmatprep.subr.mxu0 %v464
    %528 = vmatpush1.msra.mxu0 %v463
    %529 = vmatprep.subr.mxu0 %v466
    %530 = vmatpush1.msra.mxu0 %v465
    %531 = vmatprep.mubr.f32.mxu0 %v276
    %532 = vmatmul.mubr.f32.gmra.mrb[0].mxu0 %v275
    %v533 = vpop.f32.mrb[0].mxu0
    %v534 = vadd.f32 0.0, %v533
    %v535 = vpop.f32.mrb[0].mxu0
    %v536 = vadd.f32 0.0, %v535
    %537 = vmatprep.mubr.f32.mxu0 %v278
    %538 = vmatmul.mubr.f32.gmra.mrb[0].mxu0 %v277
    %v539 = vpop.f32.mrb[0].mxu0
    %v540 = vadd.f32 0.0, %v539
    %v541 = vpop.f32.mrb[0].mxu0
    %v542 = vadd.f32 0.0, %v541
    %543 = vmatprep.mubr.f32.mxu0 %v280
    %544 = vmatmul.mubr.f32.gmra.mrb[0].mxu0 %v279
    %v545 = vpop.f32.mrb[0].mxu0
    %v546 = vadd.f32 0.0, %v545
    %v547 = vpop.f32.mrb[0].mxu0
    %v548 = vadd.f32 0.0, %v547
    %549 = vmatprep.mubr.f32.mxu0 %v282
    %550 = vmatmul.mubr.f32.gmra.mrb[0].mxu0 %v281
    %v551 = vpop.f32.mrb[0].mxu0
    %v552 = vadd.f32 0.0, %v551
    %v553 = vpop.f32.mrb[0].mxu0
    %v554 = vadd.f32 0.0, %v553
    %555 = vmatprep.mubr.f32.mxu0 %v284
    %556 = vmatmul.mubr.f32.gmra.mrb[0].mxu0 %v283
    %v557 = vpop.f32.mrb[0].mxu0
    %v558 = vadd.f32 0.0, %v557
    %v559 = vpop.f32.mrb[0].mxu0
    %v560 = vadd.f32 0.0, %v559
    %561 = vmatprep.mubr.f32.mxu0 %v286
    %562 = vmatmul.mubr.f32.gmra.mrb[0].mxu0 %v285
    %v563 = vpop.f32.mrb[0].mxu0
    %v564 = vadd.f32 0.0, %v563
    %v565 = vpop.f32.mrb[0].mxu0
    %v566 = vadd.f32 0.0, %v565
    %567 = vmatprep.mubr.f32.mxu0 %v288
    %568 = vmatmul.mubr.f32.gmra.mrb[0].mxu0 %v287
    %v569 = vpop.f32.mrb[0].mxu0
    %v570 = vadd.f32 0.0, %v569
    %v571 = vpop.f32.mrb[0].mxu0
    %v572 = vadd.f32 0.0, %v571
    %573 = vmatprep.mubr.f32.mxu0 %v290
    %574 = vmatmul.mubr.f32.gmra.mrb[0].mxu0 %v289
    %v575 = vpop.f32.mrb[0].mxu0
    %v576 = vadd.f32 0.0, %v575
    %v577 = vpop.f32.mrb[0].mxu0
    %v578 = vadd.f32 0.0, %v577
    %579 = vmatprep.mubr.f32.mxu0 %v292
    %580 = vmatmul.mubr.f32.gmra.mrb[0].mxu0 %v291
    %v581 = vpop.f32.mrb[0].mxu0
    %v582 = vadd.f32 0.0, %v581
    %v583 = vpop.f32.mrb[0].mxu0
    %v584 = vadd.f32 0.0, %v583
    %585 = vmatprep.mubr.f32.mxu0 %v294
    %586 = vmatmul.mubr.f32.gmra.mrb[0].mxu0 %v293
    %v587 = vpop.f32.mrb[0].mxu0
    %v588 = vadd.f32 0.0, %v587
    %v589 = vpop.f32.mrb[0].mxu0
    %v590 = vadd.f32 0.0, %v589
    %591 = vmatprep.mubr.f32.mxu0 %v296
    %592 = vmatmul.mubr.f32.gmra.mrb[0].mxu0 %v295
    %v593 = vpop.f32.mrb[0].mxu0
    %v594 = vadd.f32 0.0, %v593
    %v595 = vpop.f32.mrb[0].mxu0
    %v596 = vadd.f32 0.0, %v595
    %597 = vmatprep.mubr.f32.mxu0 %v298
    %598 = vmatmul.mubr.f32.gmra.mrb[0].mxu0 %v297
    %v599 = vpop.f32.mrb[0].mxu0
    %v600 = vadd.f32 0.0, %v599
    %v601 = vpop.f32.mrb[0].mxu0
    %v602 = vadd.f32 0.0, %v601
    %603 = vmatprep.mubr.f32.mxu0 %v300
    %604 = vmatmul.mubr.f32.gmra.mrb[0].mxu0 %v299
    %v605 = vpop.f32.mrb[0].mxu0
    %v606 = vadd.f32 0.0, %v605
    %v607 = vpop.f32.mrb[0].mxu0
    %v608 = vadd.f32 0.0, %v607
    %609 = vmatprep.mubr.f32.mxu0 %v302
    %610 = vmatmul.mubr.f32.gmra.mrb[0].mxu0 %v301
    %v611 = vpop.f32.mrb[0].mxu0
    %v612 = vadd.f32 0.0, %v611
    %v613 = vpop.f32.mrb[0].mxu0
    %v614 = vadd.f32 0.0, %v613
    %615 = vmatprep.mubr.f32.mxu0 %v304
    %616 = vmatmul.mubr.f32.gmra.mrb[0].mxu0 %v303
    %v617 = vpop.f32.mrb[0].mxu0
    %v618 = vadd.f32 0.0, %v617
    %v619 = vpop.f32.mrb[0].mxu0
    %v620 = vadd.f32 0.0, %v619
    %621 = vmatprep.mubr.f32.mxu0 %v306
    %622 = vmatmul.mubr.f32.gmra.mrb[0].mxu0 %v305
    %v623 = vpop.f32.mrb[0].mxu0
    %v624 = vadd.f32 0.0, %v623
    %v625 = vpop.f32.mrb[0].mxu0
    %v626 = vadd.f32 0.0, %v625
    %627 = vmatprep.mubr.f32.mxu0 %v308
    %628 = vmatmul.mubr.f32.gmra.mrb[0].mxu0 %v307
    %v629 = vpop.f32.mrb[0].mxu0
    %v630 = vadd.f32 0.0, %v629
    %v631 = vpop.f32.mrb[0].mxu0
    %v632 = vadd.f32 0.0, %v631
    %633 = vmatprep.mubr.f32.mxu0 %v310
    %634 = vmatmul.mubr.f32.gmra.mrb[0].mxu0 %v309
    %v635 = vpop.f32.mrb[0].mxu0
    %v636 = vadd.f32 0.0, %v635
    %v637 = vpop.f32.mrb[0].mxu0
    %v638 = vadd.f32 0.0, %v637
    %639 = vmatprep.mubr.f32.mxu0 %v312
    %640 = vmatmul.mubr.f32.gmra.mrb[0].mxu0 %v311
    %v641 = vpop.f32.mrb[0].mxu0
    %v642 = vadd.f32 0.0, %v641
    %v643 = vpop.f32.mrb[0].mxu0
    %v644 = vadd.f32 0.0, %v643
    %645 = vmatprep.mubr.f32.mxu0 %v314
    %646 = vmatmul.mubr.f32.gmra.mrb[0].mxu0 %v313
    %v647 = vpop.f32.mrb[0].mxu0
    %v648 = vadd.f32 0.0, %v647
    %v649 = vpop.f32.mrb[0].mxu0
    %v650 = vadd.f32 0.0, %v649
    %651 = vmatprep.mubr.f32.mxu0 %v316
    %652 = vmatmul.mubr.f32.gmra.mrb[0].mxu0 %v315
    %v653 = vpop.f32.mrb[0].mxu0
    %v654 = vadd.f32 0.0, %v653
    %v655 = vpop.f32.mrb[0].mxu0
    %v656 = vadd.f32 0.0, %v655
    %657 = vmatprep.mubr.f32.mxu0 %v318
    %658 = vmatmul.mubr.f32.gmra.mrb[0].mxu0 %v317
    %v659 = vpop.f32.mrb[0].mxu0
    %v660 = vadd.f32 0.0, %v659
    %v661 = vpop.f32.mrb[0].mxu0
    %v662 = vadd.f32 0.0, %v661
    %663 = vmatprep.mubr.f32.mxu0 %v320
    %664 = vmatmul.mubr.f32.gmra.mrb[0].mxu0 %v319
    %v665 = vpop.f32.mrb[0].mxu0
    %v666 = vadd.f32 0.0, %v665
    %v667 = vpop.f32.mrb[0].mxu0
    %v668 = vadd.f32 0.0, %v667
    %669 = vmatprep.mubr.f32.mxu0 %v322
    %670 = vmatmul.mubr.f32.gmra.mrb[0].mxu0 %v321
    %v671 = vpop.f32.mrb[0].mxu0
    %v672 = vadd.f32 0.0, %v671
    %v673 = vpop.f32.mrb[0].mxu0
    %v674 = vadd.f32 0.0, %v673
    %675 = vmatprep.mubr.f32.mxu0 %v324
    %676 = vmatmul.mubr.f32.gmra.mrb[0].mxu0 %v323
    %v677 = vpop.f32.mrb[0].mxu0
    %v678 = vadd.f32 0.0, %v677
    %v679 = vpop.f32.mrb[0].mxu0
    %v680 = vadd.f32 0.0, %v679
    %681 = vmatprep.mubr.f32.mxu0 %v326
    %682 = vmatmul.mubr.f32.gmra.mrb[0].mxu0 %v325
    %v683 = vpop.f32.mrb[0].mxu0
    %v684 = vadd.f32 0.0, %v683
    %v685 = vpop.f32.mrb[0].mxu0
    %v686 = vadd.f32 0.0, %v685
    %687 = vmatprep.mubr.f32.mxu0 %v328
    %688 = vmatmul.mubr.f32.gmra.mrb[0].mxu0 %v327
    %v689 = vpop.f32.mrb[0].mxu0
    %v690 = vadd.f32 0.0, %v689
    %v691 = vpop.f32.mrb[0].mxu0
    %v692 = vadd.f32 0.0, %v691
    %693 = vmatprep.mubr.f32.mxu0 %v330
    %694 = vmatmul.mubr.f32.gmra.mrb[0].mxu0 %v329
    %v695 = vpop.f32.mrb[0].mxu0
    %v696 = vadd.f32 0.0, %v695
    %v697 = vpop.f32.mrb[0].mxu0
    %v698 = vadd.f32 0.0, %v697
    %699 = vmatprep.mubr.f32.mxu0 %v332
    %700 = vmatmul.mubr.f32.gmra.mrb[0].mxu0 %v331
    %v701 = vpop.f32.mrb[0].mxu0
    %v702 = vadd.f32 0.0, %v701
    %v703 = vpop.f32.mrb[0].mxu0
    %v704 = vadd.f32 0.0, %v703
    %705 = vmatprep.mubr.f32.mxu0 %v334
    %706 = vmatmul.mubr.f32.gmra.mrb[0].mxu0 %v333
    %v707 = vpop.f32.mrb[0].mxu0
    %v708 = vadd.f32 0.0, %v707
    %v709 = vpop.f32.mrb[0].mxu0
    %v710 = vadd.f32 0.0, %v709
    %711 = vmatprep.mubr.f32.mxu0 %v336
    %712 = vmatmul.mubr.f32.gmra.mrb[0].mxu0 %v335
    %v713 = vpop.f32.mrb[0].mxu0
    %v714 = vadd.f32 0.0, %v713
    %v715 = vpop.f32.mrb[0].mxu0
    %v716 = vadd.f32 0.0, %v715
    %717 = vmatprep.mubr.f32.mxu0 %v338
    %718 = vmatmul.mubr.f32.gmra.mrb[0].mxu0 %v337
    %v719 = vpop.f32.mrb[0].mxu0
    %v720 = vadd.f32 0.0, %v719
    %v721 = vpop.f32.mrb[0].mxu0
    %v722 = vadd.f32 0.0, %v721
    %723 = vmatprep.mubr.f32.mxu0 %v340
    %724 = vmatmul.mubr.f32.gmra.mrb[0].mxu0 %v339
    %v725 = vpop.f32.mrb[0].mxu0
    %v726 = vadd.f32 0.0, %v725
    %v727 = vpop.f32.mrb[0].mxu0
    %v728 = vadd.f32 0.0, %v727
    %729 = vmatprep.mubr.f32.mxu0 %v342
    %730 = vmatmul.mubr.f32.gmra.mrb[0].mxu0 %v341
    %v731 = vpop.f32.mrb[0].mxu0
    %v732 = vadd.f32 0.0, %v731
    %v733 = vpop.f32.mrb[0].mxu0
    %v734 = vadd.f32 0.0, %v733
    %735 = vmatprep.mubr.f32.mxu0 %v344
    %736 = vmatmul.mubr.f32.gmra.mrb[0].mxu0 %v343
    %v737 = vpop.f32.mrb[0].mxu0
    %v738 = vadd.f32 0.0, %v737
    %v739 = vpop.f32.mrb[0].mxu0
    %v740 = vadd.f32 0.0, %v739
    %741 = vmatprep.mubr.f32.mxu0 %v346
    %742 = vmatmul.mubr.f32.gmra.mrb[0].mxu0 %v345
    %v743 = vpop.f32.mrb[0].mxu0
    %v744 = vadd.f32 0.0, %v743
    %v745 = vpop.f32.mrb[0].mxu0
    %v746 = vadd.f32 0.0, %v745
    %747 = vmatprep.mubr.f32.mxu0 %v348
    %748 = vmatmul.mubr.f32.gmra.mrb[0].mxu0 %v347
    %v749 = vpop.f32.mrb[0].mxu0
    %v750 = vadd.f32 0.0, %v749
    %v751 = vpop.f32.mrb[0].mxu0
    %v752 = vadd.f32 0.0, %v751
    %753 = vmatprep.mubr.f32.mxu0 %v350
    %754 = vmatmul.mubr.f32.gmra.mrb[0].mxu0 %v349
    %v755 = vpop.f32.mrb[0].mxu0
    %v756 = vadd.f32 0.0, %v755
    %v757 = vpop.f32.mrb[0].mxu0
    %v758 = vadd.f32 0.0, %v757
    %759 = vmatprep.mubr.f32.mxu0 %v352
    %760 = vmatmul.mubr.f32.gmra.mrb[0].mxu0 %v351
    %v761 = vpop.f32.mrb[0].mxu0
    %v762 = vadd.f32 0.0, %v761
    %v763 = vpop.f32.mrb[0].mxu0
    %v764 = vadd.f32 0.0, %v763
    %765 = vmatprep.mubr.f32.mxu0 %v354
    %766 = vmatmul.mubr.f32.gmra.mrb[0].mxu0 %v353
    %v767 = vpop.f32.mrb[0].mxu0
    %v768 = vadd.f32 0.0, %v767
    %v769 = vpop.f32.mrb[0].mxu0
    %v770 = vadd.f32 0.0, %v769
    %771 = vmatprep.mubr.f32.mxu0 %v356
    %772 = vmatmul.mubr.f32.gmra.mrb[0].mxu0 %v355
    %v773 = vpop.f32.mrb[0].mxu0
    %v774 = vadd.f32 0.0, %v773
    %v775 = vpop.f32.mrb[0].mxu0
    %v776 = vadd.f32 0.0, %v775
    %777 = vmatprep.mubr.f32.mxu0 %v358
    %778 = vmatmul.mubr.f32.gmra.mrb[0].mxu0 %v357
    %v779 = vpop.f32.mrb[0].mxu0
    %v780 = vadd.f32 0.0, %v779
    %v781 = vpop.f32.mrb[0].mxu0
    %v782 = vadd.f32 0.0, %v781
    %783 = vmatprep.mubr.f32.mxu0 %v360
    %784 = vmatmul.mubr.f32.gmra.mrb[0].mxu0 %v359
    %v785 = vpop.f32.mrb[0].mxu0
    %v786 = vadd.f32 0.0, %v785
    %v787 = vpop.f32.mrb[0].mxu0
    %v788 = vadd.f32 0.0, %v787
    %789 = vmatprep.mubr.f32.mxu0 %v362
    %790 = vmatmul.mubr.f32.gmra.mrb[0].mxu0 %v361
    %v791 = vpop.f32.mrb[0].mxu0
    %v792 = vadd.f32 0.0, %v791
    %v793 = vpop.f32.mrb[0].mxu0
    %v794 = vadd.f32 0.0, %v793
    %795 = vmatprep.mubr.f32.mxu0 %v364
    %796 = vmatmul.mubr.f32.gmra.mrb[0].mxu0 %v363
    %v797 = vpop.f32.mrb[0].mxu0
    %v798 = vadd.f32 0.0, %v797
    %v799 = vpop.f32.mrb[0].mxu0
    %v800 = vadd.f32 0.0, %v799
    %801 = vmatprep.mubr.f32.mxu0 %v366
    %802 = vmatmul.mubr.f32.gmra.mrb[0].mxu0 %v365
    %v803 = vpop.f32.mrb[0].mxu0
    %v804 = vadd.f32 0.0, %v803
    %v805 = vpop.f32.mrb[0].mxu0
    %v806 = vadd.f32 0.0, %v805
    %807 = vmatprep.mubr.f32.mxu0 %v368
    %808 = vmatmul.mubr.f32.gmra.mrb[0].mxu0 %v367
    %v809 = vpop.f32.mrb[0].mxu0
    %v810 = vadd.f32 0.0, %v809
    %v811 = vpop.f32.mrb[0].mxu0
    %v812 = vadd.f32 0.0, %v811
    %813 = vmatprep.mubr.f32.mxu0 %v370
    %814 = vmatmul.mubr.f32.gmra.mrb[0].mxu0 %v369
    %v815 = vpop.f32.mrb[0].mxu0
    %v816 = vadd.f32 0.0, %v815
    %v817 = vpop.f32.mrb[0].mxu0
    %v818 = vadd.f32 0.0, %v817
    %819 = vmatprep.mubr.f32.mxu0 %v372
    %820 = vmatmul.mubr.f32.gmra.mrb[0].mxu0 %v371
    %v821 = vpop.f32.mrb[0].mxu0
    %v822 = vadd.f32 0.0, %v821
    %v823 = vpop.f32.mrb[0].mxu0
    %v824 = vadd.f32 0.0, %v823
    %825 = vmatprep.mubr.f32.mxu0 %v374
    %826 = vmatmul.mubr.f32.gmra.mrb[0].mxu0 %v373
    %v827 = vpop.f32.mrb[0].mxu0
    %v828 = vadd.f32 0.0, %v827
    %v829 = vpop.f32.mrb[0].mxu0
    %v830 = vadd.f32 0.0, %v829
    %831 = vmatprep.mubr.f32.mxu0 %v376
    %832 = vmatmul.mubr.f32.gmra.mrb[0].mxu0 %v375
    %v833 = vpop.f32.mrb[0].mxu0
    %v834 = vadd.f32 0.0, %v833
    %v835 = vpop.f32.mrb[0].mxu0
    %v836 = vadd.f32 0.0, %v835
    %837 = vmatprep.mubr.f32.mxu0 %v378
    %838 = vmatmul.mubr.f32.gmra.mrb[0].mxu0 %v377
    %v839 = vpop.f32.mrb[0].mxu0
    %v840 = vadd.f32 0.0, %v839
    %v841 = vpop.f32.mrb[0].mxu0
    %v842 = vadd.f32 0.0, %v841
    %843 = vmatprep.mubr.f32.mxu0 %v380
    %844 = vmatmul.mubr.f32.gmra.mrb[0].mxu0 %v379
    %v845 = vpop.f32.mrb[0].mxu0
    %v846 = vadd.f32 0.0, %v845
    %v847 = vpop.f32.mrb[0].mxu0
    %v848 = vadd.f32 0.0, %v847
    %849 = vmatprep.mubr.f32.mxu0 %v382
    %850 = vmatmul.mubr.f32.gmra.mrb[0].mxu0 %v381
    %v851 = vpop.f32.mrb[0].mxu0
    %v852 = vadd.f32 0.0, %v851
    %v853 = vpop.f32.mrb[0].mxu0
    %v854 = vadd.f32 0.0, %v853
    %855 = vmatprep.mubr.f32.mxu0 %v384
    %856 = vmatmul.mubr.f32.gmra.mrb[0].mxu0 %v383
    %v857 = vpop.f32.mrb[0].mxu0
    %v858 = vadd.f32 0.0, %v857
    %v859 = vpop.f32.mrb[0].mxu0
    %v860 = vadd.f32 0.0, %v859
    %861 = vmatprep.mubr.f32.mxu0 %v386
    %862 = vmatmul.mubr.f32.gmra.mrb[0].mxu0 %v385
    %v863 = vpop.f32.mrb[0].mxu0
    %v864 = vadd.f32 0.0, %v863
    %v865 = vpop.f32.mrb[0].mxu0
    %v866 = vadd.f32 0.0, %v865
    %867 = vmatprep.mubr.f32.mxu0 %v388
    %868 = vmatmul.mubr.f32.gmra.mrb[0].mxu0 %v387
    %v869 = vpop.f32.mrb[0].mxu0
    %v870 = vadd.f32 0.0, %v869
    %v871 = vpop.f32.mrb[0].mxu0
    %v872 = vadd.f32 0.0, %v871
    %873 = vmatprep.mubr.f32.mxu0 %v390
    %874 = vmatmul.mubr.f32.gmra.mrb[0].mxu0 %v389
    %v875 = vpop.f32.mrb[0].mxu0
    %v876 = vadd.f32 0.0, %v875
    %v877 = vpop.f32.mrb[0].mxu0
    %v878 = vadd.f32 0.0, %v877
    %879 = vmatprep.mubr.f32.mxu0 %v392
    %880 = vmatmul.mubr.f32.gmra.mrb[0].mxu0 %v391
    %v881 = vpop.f32.mrb[0].mxu0
    %v882 = vadd.f32 0.0, %v881
    %v883 = vpop.f32.mrb[0].mxu0
    %v884 = vadd.f32 0.0, %v883
    %885 = vmatprep.mubr.f32.mxu0 %v394
    %886 = vmatmul.mubr.f32.gmra.mrb[0].mxu0 %v393
    %v887 = vpop.f32.mrb[0].mxu0
    %v888 = vadd.f32 0.0, %v887
    %v889 = vpop.f32.mrb[0].mxu0
    %v890 = vadd.f32 0.0, %v889
    %891 = vmatprep.mubr.f32.mxu0 %v396
    %892 = vmatmul.mubr.f32.gmra.mrb[0].mxu0 %v395
    %v893 = vpop.f32.mrb[0].mxu0
    %v894 = vadd.f32 0.0, %v893
    %v895 = vpop.f32.mrb[0].mxu0
    %v896 = vadd.f32 0.0, %v895
    %897 = vmatprep.mubr.f32.mxu0 %v398
    %898 = vmatmul.mubr.f32.gmra.mrb[0].mxu0 %v397
    %v899 = vpop.f32.mrb[0].mxu0
    %v900 = vadd.f32 0.0, %v899
    %v901 = vpop.f32.mrb[0].mxu0
    %v902 = vadd.f32 0.0, %v901
    %903 = vmatprep.mubr.f32.mxu0 %v400
    %904 = vmatmul.mubr.f32.gmra.mrb[0].mxu0 %v399
    %v905 = vpop.f32.mrb[0].mxu0
    %v906 = vadd.f32 0.0, %v905
    %v907 = vpop.f32.mrb[0].mxu0
    %v908 = vadd.f32 0.0, %v907
    %909 = vmatprep.mubr.f32.mxu0 %v402
    %910 = vmatmul.mubr.f32.gmra.mrb[0].mxu0 %v401
    %v911 = vpop.f32.mrb[0].mxu0
    %v912 = vadd.f32 0.0, %v911
    %v913 = vpop.f32.mrb[0].mxu0
    %v914 = vadd.f32 0.0, %v913
    %915 = vdwg.mxu0
    %v916 = vadd.f32 %v147, %v534
    %v917 = vadd.f32 %v148, %v536
    %v918 = vadd.f32 %v149, %v540
    %v919 = vadd.f32 %v150, %v542
    %v920 = vadd.f32 %v151, %v546
    %v921 = vadd.f32 %v152, %v548
    %v922 = vadd.f32 %v153, %v552
    %v923 = vadd.f32 %v154, %v554
    %v924 = vadd.f32 %v155, %v558
    %v925 = vadd.f32 %v156, %v560
    %v926 = vadd.f32 %v157, %v564
    %v927 = vadd.f32 %v158, %v566
    %v928 = vadd.f32 %v159, %v570
    %v929 = vadd.f32 %v160, %v572
    %v930 = vadd.f32 %v161, %v576
    %v931 = vadd.f32 %v162, %v578
    %v932 = vadd.f32 %v163, %v582
    %v933 = vadd.f32 %v164, %v584
    %v934 = vadd.f32 %v165, %v588
    %v935 = vadd.f32 %v166, %v590
    %v936 = vadd.f32 %v167, %v594
    %v937 = vadd.f32 %v168, %v596
    %v938 = vadd.f32 %v169, %v600
    %v939 = vadd.f32 %v170, %v602
    %v940 = vadd.f32 %v171, %v606
    %v941 = vadd.f32 %v172, %v608
    %v942 = vadd.f32 %v173, %v612
    %v943 = vadd.f32 %v174, %v614
    %v944 = vadd.f32 %v175, %v618
    %v945 = vadd.f32 %v176, %v620
    %v946 = vadd.f32 %v177, %v624
    %v947 = vadd.f32 %v178, %v626
    %v948 = vadd.f32 %v179, %v630
    %v949 = vadd.f32 %v180, %v632
    %v950 = vadd.f32 %v181, %v636
    %v951 = vadd.f32 %v182, %v638
    %v952 = vadd.f32 %v183, %v642
    %v953 = vadd.f32 %v184, %v644
    %v954 = vadd.f32 %v185, %v648
    %v955 = vadd.f32 %v186, %v650
    %v956 = vadd.f32 %v187, %v654
    %v957 = vadd.f32 %v188, %v656
    %v958 = vadd.f32 %v189, %v660
    %v959 = vadd.f32 %v190, %v662
    %v960 = vadd.f32 %v191, %v666
    %v961 = vadd.f32 %v192, %v668
    %v962 = vadd.f32 %v193, %v672
    %v963 = vadd.f32 %v194, %v674
    %v964 = vadd.f32 %v195, %v678
    %v965 = vadd.f32 %v196, %v680
    %v966 = vadd.f32 %v197, %v684
    %v967 = vadd.f32 %v198, %v686
    %v968 = vadd.f32 %v199, %v690
    %v969 = vadd.f32 %v200, %v692
    %v970 = vadd.f32 %v201, %v696
    %v971 = vadd.f32 %v202, %v698
    %v972 = vadd.f32 %v203, %v702
    %v973 = vadd.f32 %v204, %v704
    %v974 = vadd.f32 %v205, %v708
    %v975 = vadd.f32 %v206, %v710
    %v976 = vadd.f32 %v207, %v714
    %v977 = vadd.f32 %v208, %v716
    %v978 = vadd.f32 %v209, %v720
    %v979 = vadd.f32 %v210, %v722
    %v980 = vadd.f32 %v211, %v726
    %v981 = vadd.f32 %v212, %v728
    %v982 = vadd.f32 %v213, %v732
    %v983 = vadd.f32 %v214, %v734
    %v984 = vadd.f32 %v215, %v738
    %v985 = vadd.f32 %v216, %v740
    %v986 = vadd.f32 %v217, %v744
    %v987 = vadd.f32 %v218, %v746
    %v988 = vadd.f32 %v219, %v750
    %v989 = vadd.f32 %v220, %v752
    %v990 = vadd.f32 %v221, %v756
    %v991 = vadd.f32 %v222, %v758
    %v992 = vadd.f32 %v223, %v762
    %v993 = vadd.f32 %v224, %v764
    %v994 = vadd.f32 %v225, %v768
    %v995 = vadd.f32 %v226, %v770
    %v996 = vadd.f32 %v227, %v774
    %v997 = vadd.f32 %v228, %v776
    %v998 = vadd.f32 %v229, %v780
    %v999 = vadd.f32 %v230, %v782
    %v1000 = vadd.f32 %v231, %v786
    %v1001 = vadd.f32 %v232, %v788
    %v1002 = vadd.f32 %v233, %v792
    %v1003 = vadd.f32 %v234, %v794
    %v1004 = vadd.f32 %v235, %v798
    %v1005 = vadd.f32 %v236, %v800
    %v1006 = vadd.f32 %v237, %v804
    %v1007 = vadd.f32 %v238, %v806
    %v1008 = vadd.f32 %v239, %v810
    %v1009 = vadd.f32 %v240, %v812
    %v1010 = vadd.f32 %v241, %v816
    %v1011 = vadd.f32 %v242, %v818
    %v1012 = vadd.f32 %v243, %v822
    %v1013 = vadd.f32 %v244, %v824
    %v1014 = vadd.f32 %v245, %v828
    %v1015 = vadd.f32 %v246, %v830
    %v1016 = vadd.f32 %v247, %v834
    %v1017 = vadd.f32 %v248, %v836
    %v1018 = vadd.f32 %v249, %v840
    %v1019 = vadd.f32 %v250, %v842
    %v1020 = vadd.f32 %v251, %v846
    %v1021 = vadd.f32 %v252, %v848
    %v1022 = vadd.f32 %v253, %v852
    %v1023 = vadd.f32 %v254, %v854
    %v1024 = vadd.f32 %v255, %v858
    %v1025 = vadd.f32 %v256, %v860
    %v1026 = vadd.f32 %v257, %v864
    %v1027 = vadd.f32 %v258, %v866
    %v1028 = vadd.f32 %v259, %v870
    %v1029 = vadd.f32 %v260, %v872
    %v1030 = vadd.f32 %v261, %v876
    %v1031 = vadd.f32 %v262, %v878
    %v1032 = vadd.f32 %v263, %v882
    %v1033 = vadd.f32 %v264, %v884
    %v1034 = vadd.f32 %v265, %v888
    %v1035 = vadd.f32 %v266, %v890
    %v1036 = vadd.f32 %v267, %v894
    %v1037 = vadd.f32 %v268, %v896
    %v1038 = vadd.f32 %v269, %v900
    %v1039 = vadd.f32 %v270, %v902
    %v1040 = vadd.f32 %v271, %v906
    %v1041 = vadd.f32 %v272, %v908
    %v1042 = vadd.f32 %v273, %v912
    %v1043 = vadd.f32 %v274, %v914
    %1044 = vst [vmem:[#allocation2] sm:$0xff] %v916
    %1045 = vst [vmem:[#allocation2 + $0x8] sm:$0xff] %v917
    %1046 = vst [vmem:[#allocation2 + $0x10] sm:$0xff] %v918
    %1047 = vst [vmem:[#allocation2 + $0x18] sm:$0xff] %v919
    %1048 = vst [vmem:[#allocation2 + $0x20] sm:$0xff] %v920
    %1049 = vst [vmem:[#allocation2 + $0x28] sm:$0xff] %v921
    %1050 = vst [vmem:[#allocation2 + $0x30] sm:$0xff] %v922
    %1051 = vst [vmem:[#allocation2 + $0x38] sm:$0xff] %v923
    %1052 = vst [vmem:[#allocation2 + $0x40] sm:$0xff] %v924
    %1053 = vst [vmem:[#allocation2 + $0x48] sm:$0xff] %v925
    %1054 = vst [vmem:[#allocation2 + $0x50] sm:$0xff] %v926
    %1055 = vst [vmem:[#allocation2 + $0x58] sm:$0xff] %v927
    %1056 = vst [vmem:[#allocation2 + $0x60] sm:$0xff] %v928
    %1057 = vst [vmem:[#allocation2 + $0x68] sm:$0xff] %v929
    %1058 = vst [vmem:[#allocation2 + $0x70] sm:$0xff] %v930
    %1059 = vst [vmem:[#allocation2 + $0x78] sm:$0xff] %v931
    %1060 = vst [vmem:[#allocation2 + $0x80] sm:$0xff] %v932
    %1061 = vst [vmem:[#allocation2 + $0x88] sm:$0xff] %v933
    %1062 = vst [vmem:[#allocation2 + $0x90] sm:$0xff] %v934
    %1063 = vst [vmem:[#allocation2 + $0x98] sm:$0xff] %v935
    %1064 = vst [vmem:[#allocation2 + $0xa0] sm:$0xff] %v936
    %1065 = vst [vmem:[#allocation2 + $0xa8] sm:$0xff] %v937
    %1066 = vst [vmem:[#allocation2 + $0xb0] sm:$0xff] %v938
    %1067 = vst [vmem:[#allocation2 + $0xb8] sm:$0xff] %v939
    %1068 = vst [vmem:[#allocation2 + $0xc0] sm:$0xff] %v940
    %1069 = vst [vmem:[#allocation2 + $0xc8] sm:$0xff] %v941
    %1070 = vst [vmem:[#allocation2 + $0xd0] sm:$0xff] %v942
    %1071 = vst [vmem:[#allocation2 + $0xd8] sm:$0xff] %v943
    %1072 = vst [vmem:[#allocation2 + $0xe0] sm:$0xff] %v944
    %1073 = vst [vmem:[#allocation2 + $0xe8] sm:$0xff] %v945
    %1074 = vst [vmem:[#allocation2 + $0xf0] sm:$0xff] %v946
    %1075 = vst [vmem:[#allocation2 + $0xf8] sm:$0xff] %v947
    %1076 = vst [vmem:[#allocation2 + $0x100] sm:$0xff] %v948
    %1077 = vst [vmem:[#allocation2 + $0x108] sm:$0xff] %v949
    %1078 = vst [vmem:[#allocation2 + $0x110] sm:$0xff] %v950
    %1079 = vst [vmem:[#allocation2 + $0x118] sm:$0xff] %v951
    %1080 = vst [vmem:[#allocation2 + $0x120] sm:$0xff] %v952
    %1081 = vst [vmem:[#allocation2 + $0x128] sm:$0xff] %v953
    %1082 = vst [vmem:[#allocation2 + $0x130] sm:$0xff] %v954
    %1083 = vst [vmem:[#allocation2 + $0x138] sm:$0xff] %v955
    %1084 = vst [vmem:[#allocation2 + $0x140] sm:$0xff] %v956
    %1085 = vst [vmem:[#allocation2 + $0x148] sm:$0xff] %v957
    %1086 = vst [vmem:[#allocation2 + $0x150] sm:$0xff] %v958
    %1087 = vst [vmem:[#allocation2 + $0x158] sm:$0xff] %v959
    %1088 = vst [vmem:[#allocation2 + $0x160] sm:$0xff] %v960
    %1089 = vst [vmem:[#allocation2 + $0x168] sm:$0xff] %v961
    %1090 = vst [vmem:[#allocation2 + $0x170] sm:$0xff] %v962
    %1091 = vst [vmem:[#allocation2 + $0x178] sm:$0xff] %v963
    %1092 = vst [vmem:[#allocation2 + $0x180] sm:$0xff] %v964
    %1093 = vst [vmem:[#allocation2 + $0x188] sm:$0xff] %v965
    %1094 = vst [vmem:[#allocation2 + $0x190] sm:$0xff] %v966
    %1095 = vst [vmem:[#allocation2 + $0x198] sm:$0xff] %v967
    %1096 = vst [vmem:[#allocation2 + $0x1a0] sm:$0xff] %v968
    %1097 = vst [vmem:[#allocation2 + $0x1a8] sm:$0xff] %v969
    %1098 = vst [vmem:[#allocation2 + $0x1b0] sm:$0xff] %v970
    %1099 = vst [vmem:[#allocation2 + $0x1b8] sm:$0xff] %v971
    %1100 = vst [vmem:[#allocation2 + $0x1c0] sm:$0xff] %v972
    %1101 = vst [vmem:[#allocation2 + $0x1c8] sm:$0xff] %v973
    %1102 = vst [vmem:[#allocation2 + $0x1d0] sm:$0xff] %v974
    %1103 = vst [vmem:[#allocation2 + $0x1d8] sm:$0xff] %v975
    %1104 = vst [vmem:[#allocation2 + $0x1e0] sm:$0xff] %v976
    %1105 = vst [vmem:[#allocation2 + $0x1e8] sm:$0xff] %v977
    %1106 = vst [vmem:[#allocation2 + $0x1f0] sm:$0xff] %v978
    %1107 = vst [vmem:[#allocation2 + $0x1f8] sm:$0xff] %v979
    %1108 = vst [vmem:[#allocation2 + $0x200] sm:$0xff] %v980
    %1109 = vst [vmem:[#allocation2 + $0x208] sm:$0xff] %v981
    %1110 = vst [vmem:[#allocation2 + $0x210] sm:$0xff] %v982
    %1111 = vst [vmem:[#allocation2 + $0x218] sm:$0xff] %v983
    %1112 = vst [vmem:[#allocation2 + $0x220] sm:$0xff] %v984
    %1113 = vst [vmem:[#allocation2 + $0x228] sm:$0xff] %v985
    %1114 = vst [vmem:[#allocation2 + $0x230] sm:$0xff] %v986
    %1115 = vst [vmem:[#allocation2 + $0x238] sm:$0xff] %v987
    %1116 = vst [vmem:[#allocation2 + $0x240] sm:$0xff] %v988
    %1117 = vst [vmem:[#allocation2 + $0x248] sm:$0xff] %v989
    %1118 = vst [vmem:[#allocation2 + $0x250] sm:$0xff] %v990
    %1119 = vst [vmem:[#allocation2 + $0x258] sm:$0xff] %v991
    %1120 = vst [vmem:[#allocation2 + $0x260] sm:$0xff] %v992
    %1121 = vst [vmem:[#allocation2 + $0x268] sm:$0xff] %v993
    %1122 = vst [vmem:[#allocation2 + $0x270] sm:$0xff] %v994
    %1123 = vst [vmem:[#allocation2 + $0x278] sm:$0xff] %v995
    %1124 = vst [vmem:[#allocation2 + $0x280] sm:$0xff] %v996
    %1125 = vst [vmem:[#allocation2 + $0x288] sm:$0xff] %v997
    %1126 = vst [vmem:[#allocation2 + $0x290] sm:$0xff] %v998
    %1127 = vst [vmem:[#allocation2 + $0x298] sm:$0xff] %v999
    %1128 = vst [vmem:[#allocation2 + $0x2a0] sm:$0xff] %v1000
    %1129 = vst [vmem:[#allocation2 + $0x2a8] sm:$0xff] %v1001
    %1130 = vst [vmem:[#allocation2 + $0x2b0] sm:$0xff] %v1002
    %1131 = vst [vmem:[#allocation2 + $0x2b8] sm:$0xff] %v1003
    %1132 = vst [vmem:[#allocation2 + $0x2c0] sm:$0xff] %v1004
    %1133 = vst [vmem:[#allocation2 + $0x2c8] sm:$0xff] %v1005
    %1134 = vst [vmem:[#allocation2 + $0x2d0] sm:$0xff] %v1006
    %1135 = vst [vmem:[#allocation2 + $0x2d8] sm:$0xff] %v1007
    %1136 = vst [vmem:[#allocation2 + $0x2e0] sm:$0xff] %v1008
    %1137 = vst [vmem:[#allocation2 + $0x2e8] sm:$0xff] %v1009
    %1138 = vst [vmem:[#allocation2 + $0x2f0] sm:$0xff] %v1010
    %1139 = vst [vmem:[#allocation2 + $0x2f8] sm:$0xff] %v1011
    %1140 = vst [vmem:[#allocation2 + $0x300] sm:$0xff] %v1012
    %1141 = vst [vmem:[#allocation2 + $0x308] sm:$0xff] %v1013
    %1142 = vst [vmem:[#allocation2 + $0x310] sm:$0xff] %v1014
    %1143 = vst [vmem:[#allocation2 + $0x318] sm:$0xff] %v1015
    %1144 = vst [vmem:[#allocation2 + $0x320] sm:$0xff] %v1016
    %1145 = vst [vmem:[#allocation2 + $0x328] sm:$0xff] %v1017
    %1146 = vst [vmem:[#allocation2 + $0x330] sm:$0xff] %v1018
    %1147 = vst [vmem:[#allocation2 + $0x338] sm:$0xff] %v1019
    %1148 = vst [vmem:[#allocation2 + $0x340] sm:$0xff] %v1020
    %1149 = vst [vmem:[#allocation2 + $0x348] sm:$0xff] %v1021
    %1150 = vst [vmem:[#allocation2 + $0x350] sm:$0xff] %v1022
    %1151 = vst [vmem:[#allocation2 + $0x358] sm:$0xff] %v1023
    %1152 = vst [vmem:[#allocation2 + $0x360] sm:$0xff] %v1024
    %1153 = vst [vmem:[#allocation2 + $0x368] sm:$0xff] %v1025
    %1154 = vst [vmem:[#allocation2 + $0x370] sm:$0xff] %v1026
    %1155 = vst [vmem:[#allocation2 + $0x378] sm:$0xff] %v1027
    %1156 = vst [vmem:[#allocation2 + $0x380] sm:$0xff] %v1028
    %1157 = vst [vmem:[#allocation2 + $0x388] sm:$0xff] %v1029
    %1158 = vst [vmem:[#allocation2 + $0x390] sm:$0xff] %v1030
    %1159 = vst [vmem:[#allocation2 + $0x398] sm:$0xff] %v1031
    %1160 = vst [vmem:[#allocation2 + $0x3a0] sm:$0xff] %v1032
    %1161 = vst [vmem:[#allocation2 + $0x3a8] sm:$0xff] %v1033
    %1162 = vst [vmem:[#allocation2 + $0x3b0] sm:$0xff] %v1034
    %1163 = vst [vmem:[#allocation2 + $0x3b8] sm:$0xff] %v1035
    %1164 = vst [vmem:[#allocation2 + $0x3c0] sm:$0xff] %v1036
    %1165 = vst [vmem:[#allocation2 + $0x3c8] sm:$0xff] %v1037
    %1166 = vst [vmem:[#allocation2 + $0x3d0] sm:$0xff] %v1038
    %1167 = vst [vmem:[#allocation2 + $0x3d8] sm:$0xff] %v1039
    %1168 = vst [vmem:[#allocation2 + $0x3e0] sm:$0xff] %v1040
    %1169 = vst [vmem:[#allocation2 + $0x3e8] sm:$0xff] %v1041
    %1170 = vst [vmem:[#allocation2 + $0x3f0] sm:$0xff] %v1042
    %1171 = vst [vmem:[#allocation2 + $0x3f8] sm:$0xff] %v1043
    // Predicated region
    $region18: #{causal_self_attention.5} parent=1 // pred_check
      %p1172 = pneg %p15
    $region19: #{causal_self_attention.5} parent=1 // pred_check_branch
      %1174 = sbr.rel (%p1172) target = $region21
    $region20: #{causal_self_attention.5} parent=1 // pred_region
      %v1175 = vld [vmem:[#allocation2] sm:$0xff]
      %v1176 = vld [vmem:[#allocation2 + $0x8] sm:$0xff]
      %v1177 = vld [vmem:[#allocation2 + $0x10] sm:$0xff]
      %v1178 = vld [vmem:[#allocation2 + $0x18] sm:$0xff]
      %v1179 = vld [vmem:[#allocation2 + $0x20] sm:$0xff]
      %v1180 = vld [vmem:[#allocation2 + $0x28] sm:$0xff]
      %v1181 = vld [vmem:[#allocation2 + $0x30] sm:$0xff]
      %v1182 = vld [vmem:[#allocation2 + $0x38] sm:$0xff]
      %v1183 = vld [vmem:[#allocation2 + $0x40] sm:$0xff]
      %v1184 = vld [vmem:[#allocation2 + $0x48] sm:$0xff]
      %v1185 = vld [vmem:[#allocation2 + $0x50] sm:$0xff]
      %v1186 = vld [vmem:[#allocation2 + $0x58] sm:$0xff]
      %v1187 = vld [vmem:[#allocation2 + $0x60] sm:$0xff]
      %v1188 = vld [vmem:[#allocation2 + $0x68] sm:$0xff]
      %v1189 = vld [vmem:[#allocation2 + $0x70] sm:$0xff]
      %v1190 = vld [vmem:[#allocation2 + $0x78] sm:$0xff]
      %v1191 = vld [vmem:[#allocation2 + $0x80] sm:$0xff]
      %v1192 = vld [vmem:[#allocation2 + $0x88] sm:$0xff]
      %v1193 = vld [vmem:[#allocation2 + $0x90] sm:$0xff]
      %v1194 = vld [vmem:[#allocation2 + $0x98] sm:$0xff]
      %v1195 = vld [vmem:[#allocation2 + $0xa0] sm:$0xff]
      %v1196 = vld [vmem:[#allocation2 + $0xa8] sm:$0xff]
      %v1197 = vld [vmem:[#allocation2 + $0xb0] sm:$0xff]
      %v1198 = vld [vmem:[#allocation2 + $0xb8] sm:$0xff]
      %v1199 = vld [vmem:[#allocation2 + $0xc0] sm:$0xff]
      %v1200 = vld [vmem:[#allocation2 + $0xc8] sm:$0xff]
      %v1201 = vld [vmem:[#allocation2 + $0xd0] sm:$0xff]
      %v1202 = vld [vmem:[#allocation2 + $0xd8] sm:$0xff]
      %v1203 = vld [vmem:[#allocation2 + $0xe0] sm:$0xff]
      %v1204 = vld [vmem:[#allocation2 + $0xe8] sm:$0xff]
      %v1205 = vld [vmem:[#allocation2 + $0xf0] sm:$0xff]
      %v1206 = vld [vmem:[#allocation2 + $0xf8] sm:$0xff]
      %v1207 = vld [vmem:[#allocation2 + $0x100] sm:$0xff]
      %v1208 = vld [vmem:[#allocation2 + $0x108] sm:$0xff]
      %v1209 = vld [vmem:[#allocation2 + $0x110] sm:$0xff]
      %v1210 = vld [vmem:[#allocation2 + $0x118] sm:$0xff]
      %v1211 = vld [vmem:[#allocation2 + $0x120] sm:$0xff]
      %v1212 = vld [vmem:[#allocation2 + $0x128] sm:$0xff]
      %v1213 = vld [vmem:[#allocation2 + $0x130] sm:$0xff]
      %v1214 = vld [vmem:[#allocation2 + $0x138] sm:$0xff]
      %v1215 = vld [vmem:[#allocation2 + $0x140] sm:$0xff]
      %v1216 = vld [vmem:[#allocation2 + $0x148] sm:$0xff]
      %v1217 = vld [vmem:[#allocation2 + $0x150] sm:$0xff]
      %v1218 = vld [vmem:[#allocation2 + $0x158] sm:$0xff]
      %v1219 = vld [vmem:[#allocation2 + $0x160] sm:$0xff]
      %v1220 = vld [vmem:[#allocation2 + $0x168] sm:$0xff]
      %v1221 = vld [vmem:[#allocation2 + $0x170] sm:$0xff]
      %v1222 = vld [vmem:[#allocation2 + $0x178] sm:$0xff]
      %v1223 = vld [vmem:[#allocation2 + $0x180] sm:$0xff]
      %v1224 = vld [vmem:[#allocation2 + $0x188] sm:$0xff]
      %v1225 = vld [vmem:[#allocation2 + $0x190] sm:$0xff]
      %v1226 = vld [vmem:[#allocation2 + $0x198] sm:$0xff]
      %v1227 = vld [vmem:[#allocation2 + $0x1a0] sm:$0xff]
      %v1228 = vld [vmem:[#allocation2 + $0x1a8] sm:$0xff]
      %v1229 = vld [vmem:[#allocation2 + $0x1b0] sm:$0xff]
      %v1230 = vld [vmem:[#allocation2 + $0x1b8] sm:$0xff]
      %v1231 = vld [vmem:[#allocation2 + $0x1c0] sm:$0xff]
      %v1232 = vld [vmem:[#allocation2 + $0x1c8] sm:$0xff]
      %v1233 = vld [vmem:[#allocation2 + $0x1d0] sm:$0xff]
      %v1234 = vld [vmem:[#allocation2 + $0x1d8] sm:$0xff]
      %v1235 = vld [vmem:[#allocation2 + $0x1e0] sm:$0xff]
      %v1236 = vld [vmem:[#allocation2 + $0x1e8] sm:$0xff]
      %v1237 = vld [vmem:[#allocation2 + $0x1f0] sm:$0xff]
      %v1238 = vld [vmem:[#allocation2 + $0x1f8] sm:$0xff]
      %v1239 = vld [vmem:[#allocation2 + $0x200] sm:$0xff]
      %v1240 = vld [vmem:[#allocation2 + $0x208] sm:$0xff]
      %v1241 = vld [vmem:[#allocation2 + $0x210] sm:$0xff]
      %v1242 = vld [vmem:[#allocation2 + $0x218] sm:$0xff]
      %v1243 = vld [vmem:[#allocation2 + $0x220] sm:$0xff]
      %v1244 = vld [vmem:[#allocation2 + $0x228] sm:$0xff]
      %v1245 = vld [vmem:[#allocation2 + $0x230] sm:$0xff]
      %v1246 = vld [vmem:[#allocation2 + $0x238] sm:$0xff]
      %v1247 = vld [vmem:[#allocation2 + $0x240] sm:$0xff]
      %v1248 = vld [vmem:[#allocation2 + $0x248] sm:$0xff]
      %v1249 = vld [vmem:[#allocation2 + $0x250] sm:$0xff]
      %v1250 = vld [vmem:[#allocation2 + $0x258] sm:$0xff]
      %v1251 = vld [vmem:[#allocation2 + $0x260] sm:$0xff]
      %v1252 = vld [vmem:[#allocation2 + $0x268] sm:$0xff]
      %v1253 = vld [vmem:[#allocation2 + $0x270] sm:$0xff]
      %v1254 = vld [vmem:[#allocation2 + $0x278] sm:$0xff]
      %v1255 = vld [vmem:[#allocation2 + $0x280] sm:$0xff]
      %v1256 = vld [vmem:[#allocation2 + $0x288] sm:$0xff]
      %v1257 = vld [vmem:[#allocation2 + $0x290] sm:$0xff]
      %v1258 = vld [vmem:[#allocation2 + $0x298] sm:$0xff]
      %v1259 = vld [vmem:[#allocation2 + $0x2a0] sm:$0xff]
      %v1260 = vld [vmem:[#allocation2 + $0x2a8] sm:$0xff]
      %v1261 = vld [vmem:[#allocation2 + $0x2b0] sm:$0xff]
      %v1262 = vld [vmem:[#allocation2 + $0x2b8] sm:$0xff]
      %v1263 = vld [vmem:[#allocation2 + $0x2c0] sm:$0xff]
      %v1264 = vld [vmem:[#allocation2 + $0x2c8] sm:$0xff]
      %v1265 = vld [vmem:[#allocation2 + $0x2d0] sm:$0xff]
      %v1266 = vld [vmem:[#allocation2 + $0x2d8] sm:$0xff]
      %v1267 = vld [vmem:[#allocation2 + $0x2e0] sm:$0xff]
      %v1268 = vld [vmem:[#allocation2 + $0x2e8] sm:$0xff]
      %v1269 = vld [vmem:[#allocation2 + $0x2f0] sm:$0xff]
      %v1270 = vld [vmem:[#allocation2 + $0x2f8] sm:$0xff]
      %v1271 = vld [vmem:[#allocation2 + $0x300] sm:$0xff]
      %v1272 = vld [vmem:[#allocation2 + $0x308] sm:$0xff]
      %v1273 = vld [vmem:[#allocation2 + $0x310] sm:$0xff]
      %v1274 = vld [vmem:[#allocation2 + $0x318] sm:$0xff]
      %v1275 = vld [vmem:[#allocation2 + $0x320] sm:$0xff]
      %v1276 = vld [vmem:[#allocation2 + $0x328] sm:$0xff]
      %v1277 = vld [vmem:[#allocation2 + $0x330] sm:$0xff]
      %v1278 = vld [vmem:[#allocation2 + $0x338] sm:$0xff]
      %v1279 = vld [vmem:[#allocation2 + $0x340] sm:$0xff]
      %v1280 = vld [vmem:[#allocation2 + $0x348] sm:$0xff]
      %v1281 = vld [vmem:[#allocation2 + $0x350] sm:$0xff]
      %v1282 = vld [vmem:[#allocation2 + $0x358] sm:$0xff]
      %v1283 = vld [vmem:[#allocation2 + $0x360] sm:$0xff]
      %v1284 = vld [vmem:[#allocation2 + $0x368] sm:$0xff]
      %v1285 = vld [vmem:[#allocation2 + $0x370] sm:$0xff]
      %v1286 = vld [vmem:[#allocation2 + $0x378] sm:$0xff]
      %v1287 = vld [vmem:[#allocation2 + $0x380] sm:$0xff]
      %v1288 = vld [vmem:[#allocation2 + $0x388] sm:$0xff]
      %v1289 = vld [vmem:[#allocation2 + $0x390] sm:$0xff]
      %v1290 = vld [vmem:[#allocation2 + $0x398] sm:$0xff]
      %v1291 = vld [vmem:[#allocation2 + $0x3a0] sm:$0xff]
      %v1292 = vld [vmem:[#allocation2 + $0x3a8] sm:$0xff]
      %v1293 = vld [vmem:[#allocation2 + $0x3b0] sm:$0xff]
      %v1294 = vld [vmem:[#allocation2 + $0x3b8] sm:$0xff]
      %v1295 = vld [vmem:[#allocation2 + $0x3c0] sm:$0xff]
      %v1296 = vld [vmem:[#allocation2 + $0x3c8] sm:$0xff]
      %v1297 = vld [vmem:[#allocation2 + $0x3d0] sm:$0xff]
      %v1298 = vld [vmem:[#allocation2 + $0x3d8] sm:$0xff]
      %v1299 = vld [vmem:[#allocation2 + $0x3e0] sm:$0xff]
      %v1300 = vld [vmem:[#allocation2 + $0x3e8] sm:$0xff]
      %v1301 = vld [vmem:[#allocation2 + $0x3f0] sm:$0xff]
      %v1302 = vld [vmem:[#allocation2 + $0x3f8] sm:$0xff]
      %v1303 = vld [vmem:[%s2] sm:$0x3]
      %v1305 = vlaneseq
      %v1306 = vshrl.u32 %v1305, 7
      %v1307 = vsub.s32 0, %v1306
      %v1308 = vrot.slane %v1303, %v1307
      %v1309 = vlaneseq
      %v1310 = vshrl.u32 %v1309, 7
      %v1311 = vsub.s32 1, %v1310
      %v1312 = vrot.slane %v1303, %v1311
      %v1315 = vadd.f32 %v1175, %v1308
      %v1316 = vadd.f32 %v1176, %v1312
      %v1317 = vadd.f32 %v1177, %v1308
      %v1318 = vadd.f32 %v1178, %v1312
      %v1319 = vadd.f32 %v1179, %v1308
      %v1320 = vadd.f32 %v1180, %v1312
      %v1321 = vadd.f32 %v1181, %v1308
      %v1322 = vadd.f32 %v1182, %v1312
      %v1323 = vadd.f32 %v1183, %v1308
      %v1324 = vadd.f32 %v1184, %v1312
      %v1325 = vadd.f32 %v1185, %v1308
      %v1326 = vadd.f32 %v1186, %v1312
      %v1327 = vadd.f32 %v1187, %v1308
      %v1328 = vadd.f32 %v1188, %v1312
      %v1329 = vadd.f32 %v1189, %v1308
      %v1330 = vadd.f32 %v1190, %v1312
      %v1331 = vadd.f32 %v1191, %v1308
      %v1332 = vadd.f32 %v1192, %v1312
      %v1333 = vadd.f32 %v1193, %v1308
      %v1334 = vadd.f32 %v1194, %v1312
      %v1335 = vadd.f32 %v1195, %v1308
      %v1336 = vadd.f32 %v1196, %v1312
      %v1337 = vadd.f32 %v1197, %v1308
      %v1338 = vadd.f32 %v1198, %v1312
      %v1339 = vadd.f32 %v1199, %v1308
      %v1340 = vadd.f32 %v1200, %v1312
      %v1341 = vadd.f32 %v1201, %v1308
      %v1342 = vadd.f32 %v1202, %v1312
      %v1343 = vadd.f32 %v1203, %v1308
      %v1344 = vadd.f32 %v1204, %v1312
      %v1345 = vadd.f32 %v1205, %v1308
      %v1346 = vadd.f32 %v1206, %v1312
      %v1347 = vadd.f32 %v1207, %v1308
      %v1348 = vadd.f32 %v1208, %v1312
      %v1349 = vadd.f32 %v1209, %v1308
      %v1350 = vadd.f32 %v1210, %v1312
      %v1351 = vadd.f32 %v1211, %v1308
      %v1352 = vadd.f32 %v1212, %v1312
      %v1353 = vadd.f32 %v1213, %v1308
      %v1354 = vadd.f32 %v1214, %v1312
      %v1355 = vadd.f32 %v1215, %v1308
      %v1356 = vadd.f32 %v1216, %v1312
      %v1357 = vadd.f32 %v1217, %v1308
      %v1358 = vadd.f32 %v1218, %v1312
      %v1359 = vadd.f32 %v1219, %v1308
      %v1360 = vadd.f32 %v1220, %v1312
      %v1361 = vadd.f32 %v1221, %v1308
      %v1362 = vadd.f32 %v1222, %v1312
      %v1363 = vadd.f32 %v1223, %v1308
      %v1364 = vadd.f32 %v1224, %v1312
      %v1365 = vadd.f32 %v1225, %v1308
      %v1366 = vadd.f32 %v1226, %v1312
      %v1367 = vadd.f32 %v1227, %v1308
      %v1368 = vadd.f32 %v1228, %v1312
      %v1369 = vadd.f32 %v1229, %v1308
      %v1370 = vadd.f32 %v1230, %v1312
      %v1371 = vadd.f32 %v1231, %v1308
      %v1372 = vadd.f32 %v1232, %v1312
      %v1373 = vadd.f32 %v1233, %v1308
      %v1374 = vadd.f32 %v1234, %v1312
      %v1375 = vadd.f32 %v1235, %v1308
      %v1376 = vadd.f32 %v1236, %v1312
      %v1377 = vadd.f32 %v1237, %v1308
      %v1378 = vadd.f32 %v1238, %v1312
      %v1379 = vadd.f32 %v1239, %v1308
      %v1380 = vadd.f32 %v1240, %v1312
      %v1381 = vadd.f32 %v1241, %v1308
      %v1382 = vadd.f32 %v1242, %v1312
      %v1383 = vadd.f32 %v1243, %v1308
      %v1384 = vadd.f32 %v1244, %v1312
      %v1385 = vadd.f32 %v1245, %v1308
      %v1386 = vadd.f32 %v1246, %v1312
      %v1387 = vadd.f32 %v1247, %v1308
      %v1388 = vadd.f32 %v1248, %v1312
      %v1389 = vadd.f32 %v1249, %v1308
      %v1390 = vadd.f32 %v1250, %v1312
      %v1391 = vadd.f32 %v1251, %v1308
      %v1392 = vadd.f32 %v1252, %v1312
      %v1393 = vadd.f32 %v1253, %v1308
      %v1394 = vadd.f32 %v1254, %v1312
      %v1395 = vadd.f32 %v1255, %v1308
      %v1396 = vadd.f32 %v1256, %v1312
      %v1397 = vadd.f32 %v1257, %v1308
      %v1398 = vadd.f32 %v1258, %v1312
      %v1399 = vadd.f32 %v1259, %v1308
      %v1400 = vadd.f32 %v1260, %v1312
      %v1401 = vadd.f32 %v1261, %v1308
      %v1402 = vadd.f32 %v1262, %v1312
      %v1403 = vadd.f32 %v1263, %v1308
      %v1404 = vadd.f32 %v1264, %v1312
      %v1405 = vadd.f32 %v1265, %v1308
      %v1406 = vadd.f32 %v1266, %v1312
      %v1407 = vadd.f32 %v1267, %v1308
      %v1408 = vadd.f32 %v1268, %v1312
      %v1409 = vadd.f32 %v1269, %v1308
      %v1410 = vadd.f32 %v1270, %v1312
      %v1411 = vadd.f32 %v1271, %v1308
      %v1412 = vadd.f32 %v1272, %v1312
      %v1413 = vadd.f32 %v1273, %v1308
      %v1414 = vadd.f32 %v1274, %v1312
      %v1415 = vadd.f32 %v1275, %v1308
      %v1416 = vadd.f32 %v1276, %v1312
      %v1417 = vadd.f32 %v1277, %v1308
      %v1418 = vadd.f32 %v1278, %v1312
      %v1419 = vadd.f32 %v1279, %v1308
      %v1420 = vadd.f32 %v1280, %v1312
      %v1421 = vadd.f32 %v1281, %v1308
      %v1422 = vadd.f32 %v1282, %v1312
      %v1423 = vadd.f32 %v1283, %v1308
      %v1424 = vadd.f32 %v1284, %v1312
      %v1425 = vadd.f32 %v1285, %v1308
      %v1426 = vadd.f32 %v1286, %v1312
      %v1427 = vadd.f32 %v1287, %v1308
      %v1428 = vadd.f32 %v1288, %v1312
      %v1429 = vadd.f32 %v1289, %v1308
      %v1430 = vadd.f32 %v1290, %v1312
      %v1431 = vadd.f32 %v1291, %v1308
      %v1432 = vadd.f32 %v1292, %v1312
      %v1433 = vadd.f32 %v1293, %v1308
      %v1434 = vadd.f32 %v1294, %v1312
      %v1435 = vadd.f32 %v1295, %v1308
      %v1436 = vadd.f32 %v1296, %v1312
      %v1437 = vadd.f32 %v1297, %v1308
      %v1438 = vadd.f32 %v1298, %v1312
      %v1439 = vadd.f32 %v1299, %v1308
      %v1440 = vadd.f32 %v1300, %v1312
      %v1441 = vadd.f32 %v1301, %v1308
      %v1442 = vadd.f32 %v1302, %v1312
      %1443 = vst [vmem:[#allocation3] sm:$0xff] %v1315
      %1444 = vst [vmem:[#allocation3 + $0x8] sm:$0xff] %v1316
      %1445 = vst [vmem:[#allocation3 + $0x10] sm:$0xff] %v1317
      %1446 = vst [vmem:[#allocation3 + $0x18] sm:$0xff] %v1318
      %1447 = vst [vmem:[#allocation3 + $0x20] sm:$0xff] %v1319
      %1448 = vst [vmem:[#allocation3 + $0x28] sm:$0xff] %v1320
      %1449 = vst [vmem:[#allocation3 + $0x30] sm:$0xff] %v1321
      %1450 = vst [vmem:[#allocation3 + $0x38] sm:$0xff] %v1322
      %1451 = vst [vmem:[#allocation3 + $0x40] sm:$0xff] %v1323
      %1452 = vst [vmem:[#allocation3 + $0x48] sm:$0xff] %v1324
      %1453 = vst [vmem:[#allocation3 + $0x50] sm:$0xff] %v1325
      %1454 = vst [vmem:[#allocation3 + $0x58] sm:$0xff] %v1326
      %1455 = vst [vmem:[#allocation3 + $0x60] sm:$0xff] %v1327
      %1456 = vst [vmem:[#allocation3 + $0x68] sm:$0xff] %v1328
      %1457 = vst [vmem:[#allocation3 + $0x70] sm:$0xff] %v1329
      %1458 = vst [vmem:[#allocation3 + $0x78] sm:$0xff] %v1330
      %1459 = vst [vmem:[#allocation3 + $0x80] sm:$0xff] %v1331
      %1460 = vst [vmem:[#allocation3 + $0x88] sm:$0xff] %v1332
      %1461 = vst [vmem:[#allocation3 + $0x90] sm:$0xff] %v1333
      %1462 = vst [vmem:[#allocation3 + $0x98] sm:$0xff] %v1334
      %1463 = vst [vmem:[#allocation3 + $0xa0] sm:$0xff] %v1335
      %1464 = vst [vmem:[#allocation3 + $0xa8] sm:$0xff] %v1336
      %1465 = vst [vmem:[#allocation3 + $0xb0] sm:$0xff] %v1337
      %1466 = vst [vmem:[#allocation3 + $0xb8] sm:$0xff] %v1338
      %1467 = vst [vmem:[#allocation3 + $0xc0] sm:$0xff] %v1339
      %1468 = vst [vmem:[#allocation3 + $0xc8] sm:$0xff] %v1340
      %1469 = vst [vmem:[#allocation3 + $0xd0] sm:$0xff] %v1341
      %1470 = vst [vmem:[#allocation3 + $0xd8] sm:$0xff] %v1342
      %1471 = vst [vmem:[#allocation3 + $0xe0] sm:$0xff] %v1343
      %1472 = vst [vmem:[#allocation3 + $0xe8] sm:$0xff] %v1344
      %1473 = vst [vmem:[#allocation3 + $0xf0] sm:$0xff] %v1345
      %1474 = vst [vmem:[#allocation3 + $0xf8] sm:$0xff] %v1346
      %1475 = vst [vmem:[#allocation3 + $0x100] sm:$0xff] %v1347
      %1476 = vst [vmem:[#allocation3 + $0x108] sm:$0xff] %v1348
      %1477 = vst [vmem:[#allocation3 + $0x110] sm:$0xff] %v1349
      %1478 = vst [vmem:[#allocation3 + $0x118] sm:$0xff] %v1350
      %1479 = vst [vmem:[#allocation3 + $0x120] sm:$0xff] %v1351
      %1480 = vst [vmem:[#allocation3 + $0x128] sm:$0xff] %v1352
      %1481 = vst [vmem:[#allocation3 + $0x130] sm:$0xff] %v1353
      %1482 = vst [vmem:[#allocation3 + $0x138] sm:$0xff] %v1354
      %1483 = vst [vmem:[#allocation3 + $0x140] sm:$0xff] %v1355
      %1484 = vst [vmem:[#allocation3 + $0x148] sm:$0xff] %v1356
      %1485 = vst [vmem:[#allocation3 + $0x150] sm:$0xff] %v1357
      %1486 = vst [vmem:[#allocation3 + $0x158] sm:$0xff] %v1358
      %1487 = vst [vmem:[#allocation3 + $0x160] sm:$0xff] %v1359
      %1488 = vst [vmem:[#allocation3 + $0x168] sm:$0xff] %v1360
      %1489 = vst [vmem:[#allocation3 + $0x170] sm:$0xff] %v1361
      %1490 = vst [vmem:[#allocation3 + $0x178] sm:$0xff] %v1362
      %1491 = vst [vmem:[#allocation3 + $0x180] sm:$0xff] %v1363
      %1492 = vst [vmem:[#allocation3 + $0x188] sm:$0xff] %v1364
      %1493 = vst [vmem:[#allocation3 + $0x190] sm:$0xff] %v1365
      %1494 = vst [vmem:[#allocation3 + $0x198] sm:$0xff] %v1366
      %1495 = vst [vmem:[#allocation3 + $0x1a0] sm:$0xff] %v1367
      %1496 = vst [vmem:[#allocation3 + $0x1a8] sm:$0xff] %v1368
      %1497 = vst [vmem:[#allocation3 + $0x1b0] sm:$0xff] %v1369
      %1498 = vst [vmem:[#allocation3 + $0x1b8] sm:$0xff] %v1370
      %1499 = vst [vmem:[#allocation3 + $0x1c0] sm:$0xff] %v1371
      %1500 = vst [vmem:[#allocation3 + $0x1c8] sm:$0xff] %v1372
      %1501 = vst [vmem:[#allocation3 + $0x1d0] sm:$0xff] %v1373
      %1502 = vst [vmem:[#allocation3 + $0x1d8] sm:$0xff] %v1374
      %1503 = vst [vmem:[#allocation3 + $0x1e0] sm:$0xff] %v1375
      %1504 = vst [vmem:[#allocation3 + $0x1e8] sm:$0xff] %v1376
      %1505 = vst [vmem:[#allocation3 + $0x1f0] sm:$0xff] %v1377
      %1506 = vst [vmem:[#allocation3 + $0x1f8] sm:$0xff] %v1378
      %1507 = vst [vmem:[#allocation3 + $0x200] sm:$0xff] %v1379
      %1508 = vst [vmem:[#allocation3 + $0x208] sm:$0xff] %v1380
      %1509 = vst [vmem:[#allocation3 + $0x210] sm:$0xff] %v1381
      %1510 = vst [vmem:[#allocation3 + $0x218] sm:$0xff] %v1382
      %1511 = vst [vmem:[#allocation3 + $0x220] sm:$0xff] %v1383
      %1512 = vst [vmem:[#allocation3 + $0x228] sm:$0xff] %v1384
      %1513 = vst [vmem:[#allocation3 + $0x230] sm:$0xff] %v1385
      %1514 = vst [vmem:[#allocation3 + $0x238] sm:$0xff] %v1386
      %1515 = vst [vmem:[#allocation3 + $0x240] sm:$0xff] %v1387
      %1516 = vst [vmem:[#allocation3 + $0x248] sm:$0xff] %v1388
      %1517 = vst [vmem:[#allocation3 + $0x250] sm:$0xff] %v1389
      %1518 = vst [vmem:[#allocation3 + $0x258] sm:$0xff] %v1390
      %1519 = vst [vmem:[#allocation3 + $0x260] sm:$0xff] %v1391
      %1520 = vst [vmem:[#allocation3 + $0x268] sm:$0xff] %v1392
      %1521 = vst [vmem:[#allocation3 + $0x270] sm:$0xff] %v1393
      %1522 = vst [vmem:[#allocation3 + $0x278] sm:$0xff] %v1394
      %1523 = vst [vmem:[#allocation3 + $0x280] sm:$0xff] %v1395
      %1524 = vst [vmem:[#allocation3 + $0x288] sm:$0xff] %v1396
      %1525 = vst [vmem:[#allocation3 + $0x290] sm:$0xff] %v1397
      %1526 = vst [vmem:[#allocation3 + $0x298] sm:$0xff] %v1398
      %1527 = vst [vmem:[#allocation3 + $0x2a0] sm:$0xff] %v1399
      %1528 = vst [vmem:[#allocation3 + $0x2a8] sm:$0xff] %v1400
      %1529 = vst [vmem:[#allocation3 + $0x2b0] sm:$0xff] %v1401
      %1530 = vst [vmem:[#allocation3 + $0x2b8] sm:$0xff] %v1402
      %1531 = vst [vmem:[#allocation3 + $0x2c0] sm:$0xff] %v1403
      %1532 = vst [vmem:[#allocation3 + $0x2c8] sm:$0xff] %v1404
      %1533 = vst [vmem:[#allocation3 + $0x2d0] sm:$0xff] %v1405
      %1534 = vst [vmem:[#allocation3 + $0x2d8] sm:$0xff] %v1406
      %1535 = vst [vmem:[#allocation3 + $0x2e0] sm:$0xff] %v1407
      %1536 = vst [vmem:[#allocation3 + $0x2e8] sm:$0xff] %v1408
      %1537 = vst [vmem:[#allocation3 + $0x2f0] sm:$0xff] %v1409
      %1538 = vst [vmem:[#allocation3 + $0x2f8] sm:$0xff] %v1410
      %1539 = vst [vmem:[#allocation3 + $0x300] sm:$0xff] %v1411
      %1540 = vst [vmem:[#allocation3 + $0x308] sm:$0xff] %v1412
      %1541 = vst [vmem:[#allocation3 + $0x310] sm:$0xff] %v1413
      %1542 = vst [vmem:[#allocation3 + $0x318] sm:$0xff] %v1414
      %1543 = vst [vmem:[#allocation3 + $0x320] sm:$0xff] %v1415
      %1544 = vst [vmem:[#allocation3 + $0x328] sm:$0xff] %v1416
      %1545 = vst [vmem:[#allocation3 + $0x330] sm:$0xff] %v1417
      %1546 = vst [vmem:[#allocation3 + $0x338] sm:$0xff] %v1418
      %1547 = vst [vmem:[#allocation3 + $0x340] sm:$0xff] %v1419
      %1548 = vst [vmem:[#allocation3 + $0x348] sm:$0xff] %v1420
      %1549 = vst [vmem:[#allocation3 + $0x350] sm:$0xff] %v1421
      %1550 = vst [vmem:[#allocation3 + $0x358] sm:$0xff] %v1422
      %1551 = vst [vmem:[#allocation3 + $0x360] sm:$0xff] %v1423
      %1552 = vst [vmem:[#allocation3 + $0x368] sm:$0xff] %v1424
      %1553 = vst [vmem:[#allocation3 + $0x370] sm:$0xff] %v1425
      %1554 = vst [vmem:[#allocation3 + $0x378] sm:$0xff] %v1426
      %1555 = vst [vmem:[#allocation3 + $0x380] sm:$0xff] %v1427
      %1556 = vst [vmem:[#allocation3 + $0x388] sm:$0xff] %v1428
      %1557 = vst [vmem:[#allocation3 + $0x390] sm:$0xff] %v1429
      %1558 = vst [vmem:[#allocation3 + $0x398] sm:$0xff] %v1430
      %1559 = vst [vmem:[#allocation3 + $0x3a0] sm:$0xff] %v1431
      %1560 = vst [vmem:[#allocation3 + $0x3a8] sm:$0xff] %v1432
      %1561 = vst [vmem:[#allocation3 + $0x3b0] sm:$0xff] %v1433
      %1562 = vst [vmem:[#allocation3 + $0x3b8] sm:$0xff] %v1434
      %1563 = vst [vmem:[#allocation3 + $0x3c0] sm:$0xff] %v1435
      %1564 = vst [vmem:[#allocation3 + $0x3c8] sm:$0xff] %v1436
      %1565 = vst [vmem:[#allocation3 + $0x3d0] sm:$0xff] %v1437
      %1566 = vst [vmem:[#allocation3 + $0x3d8] sm:$0xff] %v1438
      %1567 = vst [vmem:[#allocation3 + $0x3e0] sm:$0xff] %v1439
      %1568 = vst [vmem:[#allocation3 + $0x3e8] sm:$0xff] %v1440
      %1569 = vst [vmem:[#allocation3 + $0x3f0] sm:$0xff] %v1441
      %1570 = vst [vmem:[#allocation3 + $0x3f8] sm:$0xff] %v1442
    $region21: #{causal_self_attention.5} parent=1 // pred_fallthru
      _
    // Predicated region
    $region22: #{causal_self_attention.5} parent=1 // pred_check
      _
    $region23: #{causal_self_attention.5} parent=1 // pred_check_branch
      %1572 = sbr.rel (0) target = $region25
    $region24: #{causal_self_attention.5} parent=1 // pred_region
      %s1574 = ssub.s32 16384, 16384
      %1575 = vsyncadd [#allocation4], %s1574
      %s1576 = sshll.u32 [#allocation3], 4
      %s1577 = int_to_ptr.vmem [resolvable:$true] %s1576
      %1582 = dma.vmem_to_hbm [thread:$0]  %s1577, 16384, %s3, [#allocation4], 256, 256, 16
    $region25: #{causal_self_attention.5} parent=1 // pred_fallthru
      _
    // Predicated region
    $region26: #{causal_self_attention.5} parent=1 // pred_check
      _
    $region27: #{causal_self_attention.5} parent=1 // pred_check_branch
      %1584 = sbr.rel (0) target = $region29
    $region28: #{causal_self_attention.5} parent=1 // pred_region
      %1585 = dma.done [#allocation4], 16384
    $region29: #{causal_self_attention.5} parent=1 // pred_fallthru
      _
    %1586 = vsyncpa [#allocation4], 1

// kernel: causal_self_attention.3
$region0: #{causal_self_attention.3}
  #allocation0 [shape = 'u32[]', space=smem, size = 0x4, offset = 0x4, fixed_abs, tag = 'smem constant byte address 0x4 - core index']
  #allocation1 [shape = 'u32[144,128]{1,0:T(1,128)}', space=vmem, size = 0x12000, scoped, tag = 'internal scratch']
  #allocation2 [shape = 'f32[512,384]{1,0:T(8,128)}', space=vmem, size = 0xc0000, scoped, tag = 'scratch operand']
  %s0 = inlined_call_operand.hbm [shape: f32[512,256], index: 0, kind: input, shape index: {}]
  %s1 = inlined_call_operand.hbm [shape: f32[256,768], index: 1, kind: input, shape index: {}]
  %s2 = inlined_call_operand.vmem [shape: f32[1,768], index: 2, kind: input, shape index: {}]
  %s3 = inlined_call_operand.vmem [shape: f32[512,768], index: 3, kind: output, shape index: {}]
  %s4 = sld [smem:[#allocation0]]
  $region80: #{causal_self_attention.3} parent=0
    _
  %s6 = ssub.s32 1, %s4
  %s7 = scalar_select 0, %s6, %s4
  $region1: #{causal_self_attention.3} parent=0
    #allocation3 [shape = 'u8[524288]{0}', space=vmem, size = 0x80000, scoped, tag = 'input window, operand 0, single buffered']
    #allocation4 [shape = 's32[2]{0}', space=sflag, size = 0x8, scoped, tag = 'scoped memory for causal_self_attention.3']
    #allocation5 [shape = 'u8[786432]{0}', space=vmem, size = 0xc0000, scoped, tag = 'input window, operand 1']
    #allocation6 [shape = 's32[2]{0}', space=sflag, size = 0x8, scoped, tag = 'scoped memory for causal_self_attention.3']
    #allocation7 [shape = 'u8[1572864]{0}', space=vmem, size = 0x180000, scoped, tag = 'output window, operand 0']
    %8 = vsyncpa [#allocation4], 0
    %9 = vsyncpa [#allocation6], 0
    %s10 = scalar_lea.sflag [#allocation6], 1
    %11 = vsyncpa %s10, 0
    loop: start=0, step=1, limit=4
    $region2: #{causal_self_attention.3} parent=1 // loop_pre_header
      _
    $region3: #{causal_self_attention.3} parent=1 // loop_header
      %s13 = sphi 0, %s17
      %p14 = scmp.ge.s32.totalorder %s13, 4
      %s20 = sphi 0, %s39
      %s21 = sphi 0, %s35
      %s22 = sphi 0, %s31
      %s23 = sphi 0, %s20
      %s24 = sphi 0, %s21
      %s25 = sphi 0, %s22
      %s26 = sphi 0, %s23
      %s27 = sphi 0, %s24
      %s28 = sphi 0, %s25
      %s44 = sphi 0, %s46
      %s47 = sphi 0, %s44
      %s48 = sphi 0, %s47
      %s64 = sphi 0, %s48
      %s72 = sphi 0, %s74
      %s75 = sphi 0, %s72
      %s76 = sphi 0, %s75
      %s92 = sphi 0, %s76
      %s98 = sphi 0, %s100
      %s101 = sphi 0, %s98
      %s102 = sphi 0, %s101
      %s118 = sphi 0, %s102
      %s126 = sphi 0, %s128
      %s129 = sphi 0, %s126
      %s130 = sphi 0, %s129
      %s146 = sphi 0, %s130
    $region4: #{causal_self_attention.3} parent=1 // loop_header_branch
      %16 = sbr.rel (%p14) target = $region8
    $region5: #{causal_self_attention.3} parent=1 // loop_body
      %s18 = ssub.s32 %s13, 1
      %s19 = ssub.s32 %s13, 2
      %s29 = sadd.s32 1, %s22
      %p30 = scmp.ge.s32.totalorder %s29, 1
      %s31 = scalar_select %p30, 0, %s29
      %s32 = sadd.s32 1, %s21
      %s33 = scalar_select %p30, %s32, %s21
      %p34 = scmp.ge.s32.totalorder %s33, 2
      %s35 = scalar_select %p34, 0, %s33
      %s36 = sadd.s32 1, %s20
      %s37 = scalar_select %p34, %s36, %s20
      %p38 = scmp.ge.s32.totalorder %s37, 1
      %s39 = scalar_select %p38, 0, %s37
      %s40 = ssub.s32 %s20, %s39
      %s41 = ssub.s32 %s22, %s31
      %s42 = sor.u32 %s40, %s41
      %p43 = scmp.eq.s32.totalorder %s42, 0
      %s45 = sadd.s32 %s44, 1
      %s46 = scalar_select %p43, %s44, %s45
      %p49 = pneg %p43
      %p50 = scmp.eq.s32.totalorder %s13, 1
      %p51 = por %p49, %p50
      %p52 = scmp.ne.s32.totalorder %s44, %s47
      %p53 = scmp.eq.s32.totalorder %s13, 0
      %p54 = por %p52, %p53
      %p55 = scmp.ne.s32.totalorder %s44, %s47
      %p56 = scmp.eq.s32.totalorder %s18, 1
      %p57 = por %p55, %p56
      %p58 = scmp.ne.s32.totalorder %s47, %s48
      %p59 = scmp.eq.s32.totalorder %s18, 0
      %p60 = por %p58, %p59
      %p61 = scmp.ne.s32.totalorder %s47, %s48
      %p62 = scmp.eq.s32.totalorder %s19, 1
      %p63 = por %p61, %p62
      %p65 = scmp.ne.s32.totalorder %s48, %s64
      %p66 = scmp.eq.s32.totalorder %s19, 0
      %p67 = por %p65, %p66
      %s68 = ssub.s32 %s22, %s31
      %s69 = ssub.s32 %s21, %s35
      %s70 = sor.u32 %s68, %s69
      %p71 = scmp.eq.s32.totalorder %s70, 0
      %s73 = sadd.s32 %s72, 1
      %s74 = scalar_select %p71, %s72, %s73
      %p77 = pneg %p71
      %p78 = scmp.eq.s32.totalorder %s13, 1
      %p79 = por %p77, %p78
      %p80 = scmp.ne.s32.totalorder %s72, %s75
      %p81 = scmp.eq.s32.totalorder %s13, 0
      %p82 = por %p80, %p81
      %p83 = scmp.ne.s32.totalorder %s72, %s75
      %p84 = scmp.eq.s32.totalorder %s18, 1
      %p85 = por %p83, %p84
      %p86 = scmp.ne.s32.totalorder %s75, %s76
      %p87 = scmp.eq.s32.totalorder %s18, 0
      %p88 = por %p86, %p87
      %p89 = scmp.ne.s32.totalorder %s75, %s76
      %p90 = scmp.eq.s32.totalorder %s19, 1
      %p91 = por %p89, %p90
      %p93 = scmp.ne.s32.totalorder %s76, %s92
      %p94 = scmp.eq.s32.totalorder %s19, 0
      %p95 = por %p93, %p94
      %s96 = ssub.s32 %s21, %s35
      %p97 = scmp.eq.s32.totalorder %s96, 0
      %s99 = sadd.s32 %s98, 1
      %s100 = scalar_select %p97, %s98, %s99
      %p103 = pneg %p97
      %p104 = scmp.eq.s32.totalorder %s13, 1
      %p105 = por %p103, %p104
      %p106 = scmp.ne.s32.totalorder %s98, %s101
      %p107 = scmp.eq.s32.totalorder %s13, 0
      %p108 = por %p106, %p107
      %p109 = scmp.ne.s32.totalorder %s98, %s101
      %p110 = scmp.eq.s32.totalorder %s18, 1
      %p111 = por %p109, %p110
      %p112 = scmp.ne.s32.totalorder %s101, %s102
      %p113 = scmp.eq.s32.totalorder %s18, 0
      %p114 = por %p112, %p113
      %p115 = scmp.ne.s32.totalorder %s101, %s102
      %p116 = scmp.eq.s32.totalorder %s19, 1
      %p117 = por %p115, %p116
      %p119 = scmp.ne.s32.totalorder %s102, %s118
      %p120 = scmp.eq.s32.totalorder %s19, 0
      %p121 = por %p119, %p120
      %s122 = ssub.s32 %s20, %s39
      %s123 = ssub.s32 %s21, %s35
      %s124 = sor.u32 %s122, %s123
      %p125 = scmp.eq.s32.totalorder %s124, 0
      %s127 = sadd.s32 %s126, 1
      %s128 = scalar_select %p125, %s126, %s127
      %p131 = pneg %p125
      %p132 = scmp.eq.s32.totalorder %s13, 1
      %p133 = por %p131, %p132
      %p134 = scmp.ne.s32.totalorder %s126, %s129
      %p135 = scmp.eq.s32.totalorder %s13, 0
      %p136 = por %p134, %p135
      %p137 = scmp.ne.s32.totalorder %s126, %s129
      %p138 = scmp.eq.s32.totalorder %s18, 1
      %p139 = por %p137, %p138
      %p140 = scmp.ne.s32.totalorder %s129, %s130
      %p141 = scmp.eq.s32.totalorder %s18, 0
      %p142 = por %p140, %p141
      %p143 = scmp.ne.s32.totalorder %s129, %s130
      %p144 = scmp.eq.s32.totalorder %s19, 1
      %p145 = por %p143, %p144
      %p147 = scmp.ne.s32.totalorder %s130, %s146
      %p148 = scmp.eq.s32.totalorder %s19, 0
      %p149 = por %p147, %p148
      %p150 = scmp.le.s32.totalorder 1, %s13
      %p151 = scmp.lt.s32.totalorder %s13, 3
      %p152 = pnand %p150, %p151
      %p153 = pneg %p152
      // Predicated region
      $region9: #{causal_self_attention.3} parent=5 // pred_check
        _
      $region10: #{causal_self_attention.3} parent=5 // pred_check_branch
        %155 = sbr.rel (%p152) target = $region12
      $region11: #{causal_self_attention.3} parent=5 // pred_region
        %s156 = ssub.s32 %s13, 1
        // Predicated region
        $region13: #{causal_self_attention.3} parent=11 // pred_check
          %p157 = pneg %p60
        $region14: #{causal_self_attention.3} parent=11 // pred_check_branch
          %159 = sbr.rel (%p157) target = $region16
        $region15: #{causal_self_attention.3} parent=11 // pred_region
          %s160 = smul.u32 64, %s23
          %s161 = smul.u32 2, %s25
          %s163 = ssub.s32 16384, 16384
          %164 = vsyncadd [#allocation4], %s163
          %s165 = smul.addr %s160, 2
          %s166 = sadd.s32 %s161, %s165
          %s167 = smul.addr %s166, 128
          %s168 = scalar_lea.hbm %s0, %s167
          %s169 = sshll.u32 [#allocation3], 4
          %s170 = int_to_ptr.vmem [resolvable:$true] %s169
          %175 = dma.hbm_to_vmem [thread:$0]  %s168, 16384, %s170, [#allocation4], 256, 256, 16
        $region16: #{causal_self_attention.3} parent=11 // pred_fallthru
          _
      $region12: #{causal_self_attention.3} parent=5 // pred_fallthru
        _
      %p176 = scmp.lt.s32.totalorder %s13, 2
      // Predicated region
      $region17: #{causal_self_attention.3} parent=5 // pred_check
        %p177 = pneg %p176
      $region18: #{causal_self_attention.3} parent=5 // pred_check_branch
        %179 = sbr.rel (%p177) target = $region20
      $region19: #{causal_self_attention.3} parent=5 // pred_region
        // Predicated region
        $region21: #{causal_self_attention.3} parent=19 // pred_check
          %p180 = pneg %p82
        $region22: #{causal_self_attention.3} parent=19 // pred_check_branch
          %182 = sbr.rel (%p180) target = $region24
        $region23: #{causal_self_attention.3} parent=19 // pred_region
          %s183 = sand.u32 %s72, 1
          %s184 = scalar_lea.sflag [#allocation6], %s183
          %s185 = sand.u32 %s72, 1
          %s186 = smul.addr %s185, 768
          %s187 = scalar_lea.vmem [#allocation5], %s186
          %s188 = smul.u32 32, %s22
          %s189 = smul.u32 3, %s21
          %s191 = ssub.s32 12288, 12288
          %192 = vsyncadd %s184, %s191
          %s193 = smul.addr %s188, 6
          %s194 = sadd.s32 %s189, %s193
          %s195 = smul.addr %s194, 128
          %s196 = scalar_lea.hbm %s1, %s195
          %s197 = sshll.u32 %s187, 4
          %s198 = int_to_ptr.vmem [resolvable:$true] %s197
          %203 = dma.hbm_to_vmem [thread:$0]  %s196, 12288, %s198, %s184, 768, 384, 24
        $region24: #{causal_self_attention.3} parent=19 // pred_fallthru
          _
        // Predicated region
        $region25: #{causal_self_attention.3} parent=19 // pred_check
          %p204 = pneg %p108
        $region26: #{causal_self_attention.3} parent=19 // pred_check_branch
          %206 = sbr.rel (%p204) target = $region28
        $region27: #{causal_self_attention.3} parent=19 // pred_region
          %s207 = smul.u32 3, %s21
          %p208 = scmp.lt.s32.totalorder %s207, 5
          %s209 = scalar_select %p208, %s207, 5
          %s210 = scalar_lea.vmem %s2, %s209
          %s211 = smul.u32 3, %s21
        $region28: #{causal_self_attention.3} parent=19 // pred_fallthru
          _
      $region20: #{causal_self_attention.3} parent=5 // pred_fallthru
        _
      %p212 = scmp.le.s32.totalorder 1, %s13
      %p213 = scmp.lt.s32.totalorder %s13, 3
      %p214 = pnand %p212, %p213
      %p215 = pneg %p214
      // Predicated region
      $region29: #{causal_self_attention.3} parent=5 // pred_check
        _
      $region30: #{causal_self_attention.3} parent=5 // pred_check_branch
        %217 = sbr.rel (%p214) target = $region32
      $region31: #{causal_self_attention.3} parent=5 // pred_region
        %s218 = ssub.s32 %s13, 1
        // Predicated region
        $region33: #{causal_self_attention.3} parent=31 // pred_check
          %p219 = pneg %p60
        $region34: #{causal_self_attention.3} parent=31 // pred_check_branch
          %221 = sbr.rel (%p219) target = $region36
        $region35: #{causal_self_attention.3} parent=31 // pred_region
          %222 = dma.done [#allocation4], 16384
        $region36: #{causal_self_attention.3} parent=31 // pred_fallthru
          _
        %s223 = sand.u32 %s75, 1
        %s224 = scalar_lea.sflag [#allocation6], %s223
        %s225 = sand.u32 %s75, 1
        %s226 = smul.addr %s225, 768
        %s227 = scalar_lea.vmem [#allocation5], %s226
        // Predicated region
        $region37: #{causal_self_attention.3} parent=31 // pred_check
          %p228 = pneg %p88
        $region38: #{causal_self_attention.3} parent=31 // pred_check_branch
          %230 = sbr.rel (%p228) target = $region40
        $region39: #{causal_self_attention.3} parent=31 // pred_region
          %231 = dma.done %s224, 12288
        $region40: #{causal_self_attention.3} parent=31 // pred_fallthru
          _
        %p232 = pneg %p60
        %p233 = pneg %p57
        %s234 = sand.u32 %s75, 1
        %s235 = scalar_lea.sflag [#allocation6], %s234
        %s236 = sand.u32 %s75, 1
        %s237 = smul.addr %s236, 768
        %s238 = scalar_lea.vmem [#allocation5], %s237
        %p239 = pneg %p88
        %p240 = pneg %p85
        %s241 = smul.u32 3, %s24
        %p242 = scmp.lt.s32.totalorder %s241, 5
        %s243 = scalar_select %p242, %s241, 5
        %s244 = scalar_lea.vmem %s2, %s243
        %p245 = pneg %p114
        %p246 = pneg %p111
        %p247 = pneg %p142
        %p248 = pneg %p139
        %s249 = sand.u32 %s129, 1
        %s250 = sand.u32 %s129, 1
        %s251 = smul.addr %s250, 1536
        %s252 = scalar_lea.vmem [#allocation7], %s251
        %s253 = smul.u32 64, %s23
        %s254 = smul.u32 2, %s25
        %s255 = smul.u32 32, %s25
        %s256 = smul.u32 3, %s24
        %s257 = smul.u32 3, %s24
        %p258 = scmp.lt.s32.totalorder %s257, 5
        %s259 = scalar_select %p258, %s257, 5
        %s260 = scalar_lea.vmem %s2, %s259
        %s261 = smul.u32 3, %s24
        %s262 = smul.u32 64, %s23
        %s263 = smul.u32 3, %s24
        %p264 = scmp.eq.s32.totalorder %s25, 0
        // Predicated region
        $region41: #{causal_self_attention.3} parent=31 // pred_check
          %p265 = pneg %p264
        $region42: #{causal_self_attention.3} parent=31 // pred_check_branch
          %267 = sbr.rel (%p265) target = $region44
        $region43: #{causal_self_attention.3} parent=31 // pred_region
          %268 = vst [vmem:[#allocation2] sm:$0xff] 0.0
          %269 = vst [vmem:[#allocation2 + $0x8] sm:$0xff] 0.0
          %270 = vst [vmem:[#allocation2 + $0x10] sm:$0xff] 0.0
          %271 = vst [vmem:[#allocation2 + $0x18] sm:$0xff] 0.0
          %272 = vst [vmem:[#allocation2 + $0x20] sm:$0xff] 0.0
          %273 = vst [vmem:[#allocation2 + $0x28] sm:$0xff] 0.0
          %274 = vst [vmem:[#allocation2 + $0x30] sm:$0xff] 0.0
          %275 = vst [vmem:[#allocation2 + $0x38] sm:$0xff] 0.0
          %276 = vst [vmem:[#allocation2 + $0x40] sm:$0xff] 0.0
          %277 = vst [vmem:[#allocation2 + $0x48] sm:$0xff] 0.0
          %278 = vst [vmem:[#allocation2 + $0x50] sm:$0xff] 0.0
          %279 = vst [vmem:[#allocation2 + $0x58] sm:$0xff] 0.0
          %280 = vst [vmem:[#allocation2 + $0x60] sm:$0xff] 0.0
          %281 = vst [vmem:[#allocation2 + $0x68] sm:$0xff] 0.0
          %282 = vst [vmem:[#allocation2 + $0x70] sm:$0xff] 0.0
          %283 = vst [vmem:[#allocation2 + $0x78] sm:$0xff] 0.0
          %284 = vst [vmem:[#allocation2 + $0x80] sm:$0xff] 0.0
          %285 = vst [vmem:[#allocation2 + $0x88] sm:$0xff] 0.0
          %286 = vst [vmem:[#allocation2 + $0x90] sm:$0xff] 0.0
          %287 = vst [vmem:[#allocation2 + $0x98] sm:$0xff] 0.0
          %288 = vst [vmem:[#allocation2 + $0xa0] sm:$0xff] 0.0
          %289 = vst [vmem:[#allocation2 + $0xa8] sm:$0xff] 0.0
          %290 = vst [vmem:[#allocation2 + $0xb0] sm:$0xff] 0.0
          %291 = vst [vmem:[#allocation2 + $0xb8] sm:$0xff] 0.0
          %292 = vst [vmem:[#allocation2 + $0xc0] sm:$0xff] 0.0
          %293 = vst [vmem:[#allocation2 + $0xc8] sm:$0xff] 0.0
          %294 = vst [vmem:[#allocation2 + $0xd0] sm:$0xff] 0.0
          %295 = vst [vmem:[#allocation2 + $0xd8] sm:$0xff] 0.0
          %296 = vst [vmem:[#allocation2 + $0xe0] sm:$0xff] 0.0
          %297 = vst [vmem:[#allocation2 + $0xe8] sm:$0xff] 0.0
          %298 = vst [vmem:[#allocation2 + $0xf0] sm:$0xff] 0.0
          %299 = vst [vmem:[#allocation2 + $0xf8] sm:$0xff] 0.0
          %300 = vst [vmem:[#allocation2 + $0x100] sm:$0xff] 0.0
          %301 = vst [vmem:[#allocation2 + $0x108] sm:$0xff] 0.0
          %302 = vst [vmem:[#allocation2 + $0x110] sm:$0xff] 0.0
          %303 = vst [vmem:[#allocation2 + $0x118] sm:$0xff] 0.0
          %304 = vst [vmem:[#allocation2 + $0x120] sm:$0xff] 0.0
          %305 = vst [vmem:[#allocation2 + $0x128] sm:$0xff] 0.0
          %306 = vst [vmem:[#allocation2 + $0x130] sm:$0xff] 0.0
          %307 = vst [vmem:[#allocation2 + $0x138] sm:$0xff] 0.0
          %308 = vst [vmem:[#allocation2 + $0x140] sm:$0xff] 0.0
          %309 = vst [vmem:[#allocation2 + $0x148] sm:$0xff] 0.0
          %310 = vst [vmem:[#allocation2 + $0x150] sm:$0xff] 0.0
          %311 = vst [vmem:[#allocation2 + $0x158] sm:$0xff] 0.0
          %312 = vst [vmem:[#allocation2 + $0x160] sm:$0xff] 0.0
          %313 = vst [vmem:[#allocation2 + $0x168] sm:$0xff] 0.0
          %314 = vst [vmem:[#allocation2 + $0x170] sm:$0xff] 0.0
          %315 = vst [vmem:[#allocation2 + $0x178] sm:$0xff] 0.0
          %316 = vst [vmem:[#allocation2 + $0x180] sm:$0xff] 0.0
          %317 = vst [vmem:[#allocation2 + $0x188] sm:$0xff] 0.0
          %318 = vst [vmem:[#allocation2 + $0x190] sm:$0xff] 0.0
          %319 = vst [vmem:[#allocation2 + $0x198] sm:$0xff] 0.0
          %320 = vst [vmem:[#allocation2 + $0x1a0] sm:$0xff] 0.0
          %321 = vst [vmem:[#allocation2 + $0x1a8] sm:$0xff] 0.0
          %322 = vst [vmem:[#allocation2 + $0x1b0] sm:$0xff] 0.0
          %323 = vst [vmem:[#allocation2 + $0x1b8] sm:$0xff] 0.0
          %324 = vst [vmem:[#allocation2 + $0x1c0] sm:$0xff] 0.0
          %325 = vst [vmem:[#allocation2 + $0x1c8] sm:$0xff] 0.0
          %326 = vst [vmem:[#allocation2 + $0x1d0] sm:$0xff] 0.0
          %327 = vst [vmem:[#allocation2 + $0x1d8] sm:$0xff] 0.0
          %328 = vst [vmem:[#allocation2 + $0x1e0] sm:$0xff] 0.0
          %329 = vst [vmem:[#allocation2 + $0x1e8] sm:$0xff] 0.0
          %330 = vst [vmem:[#allocation2 + $0x1f0] sm:$0xff] 0.0
          %331 = vst [vmem:[#allocation2 + $0x1f8] sm:$0xff] 0.0
          %332 = vst [vmem:[#allocation2 + $0x200] sm:$0xff] 0.0
          %333 = vst [vmem:[#allocation2 + $0x208] sm:$0xff] 0.0
          %334 = vst [vmem:[#allocation2 + $0x210] sm:$0xff] 0.0
          %335 = vst [vmem:[#allocation2 + $0x218] sm:$0xff] 0.0
          %336 = vst [vmem:[#allocation2 + $0x220] sm:$0xff] 0.0
          %337 = vst [vmem:[#allocation2 + $0x228] sm:$0xff] 0.0
          %338 = vst [vmem:[#allocation2 + $0x230] sm:$0xff] 0.0
          %339 = vst [vmem:[#allocation2 + $0x238] sm:$0xff] 0.0
          %340 = vst [vmem:[#allocation2 + $0x240] sm:$0xff] 0.0
          %341 = vst [vmem:[#allocation2 + $0x248] sm:$0xff] 0.0
          %342 = vst [vmem:[#allocation2 + $0x250] sm:$0xff] 0.0
          %343 = vst [vmem:[#allocation2 + $0x258] sm:$0xff] 0.0
          %344 = vst [vmem:[#allocation2 + $0x260] sm:$0xff] 0.0
          %345 = vst [vmem:[#allocation2 + $0x268] sm:$0xff] 0.0
          %346 = vst [vmem:[#allocation2 + $0x270] sm:$0xff] 0.0
          %347 = vst [vmem:[#allocation2 + $0x278] sm:$0xff] 0.0
          %348 = vst [vmem:[#allocation2 + $0x280] sm:$0xff] 0.0
          %349 = vst [vmem:[#allocation2 + $0x288] sm:$0xff] 0.0
          %350 = vst [vmem:[#allocation2 + $0x290] sm:$0xff] 0.0
          %351 = vst [vmem:[#allocation2 + $0x298] sm:$0xff] 0.0
          %352 = vst [vmem:[#allocation2 + $0x2a0] sm:$0xff] 0.0
          %353 = vst [vmem:[#allocation2 + $0x2a8] sm:$0xff] 0.0
          %354 = vst [vmem:[#allocation2 + $0x2b0] sm:$0xff] 0.0
          %355 = vst [vmem:[#allocation2 + $0x2b8] sm:$0xff] 0.0
          %356 = vst [vmem:[#allocation2 + $0x2c0] sm:$0xff] 0.0
          %357 = vst [vmem:[#allocation2 + $0x2c8] sm:$0xff] 0.0
          %358 = vst [vmem:[#allocation2 + $0x2d0] sm:$0xff] 0.0
          %359 = vst [vmem:[#allocation2 + $0x2d8] sm:$0xff] 0.0
          %360 = vst [vmem:[#allocation2 + $0x2e0] sm:$0xff] 0.0
          %361 = vst [vmem:[#allocation2 + $0x2e8] sm:$0xff] 0.0
          %362 = vst [vmem:[#allocation2 + $0x2f0] sm:$0xff] 0.0
          %363 = vst [vmem:[#allocation2 + $0x2f8] sm:$0xff] 0.0
          %364 = vst [vmem:[#allocation2 + $0x300] sm:$0xff] 0.0
          %365 = vst [vmem:[#allocation2 + $0x308] sm:$0xff] 0.0
          %366 = vst [vmem:[#allocation2 + $0x310] sm:$0xff] 0.0
          %367 = vst [vmem:[#allocation2 + $0x318] sm:$0xff] 0.0
          %368 = vst [vmem:[#allocation2 + $0x320] sm:$0xff] 0.0
          %369 = vst [vmem:[#allocation2 + $0x328] sm:$0xff] 0.0
          %370 = vst [vmem:[#allocation2 + $0x330] sm:$0xff] 0.0
          %371 = vst [vmem:[#allocation2 + $0x338] sm:$0xff] 0.0
          %372 = vst [vmem:[#allocation2 + $0x340] sm:$0xff] 0.0
          %373 = vst [vmem:[#allocation2 + $0x348] sm:$0xff] 0.0
          %374 = vst [vmem:[#allocation2 + $0x350] sm:$0xff] 0.0
          %375 = vst [vmem:[#allocation2 + $0x358] sm:$0xff] 0.0
          %376 = vst [vmem:[#allocation2 + $0x360] sm:$0xff] 0.0
          %377 = vst [vmem:[#allocation2 + $0x368] sm:$0xff] 0.0
          %378 = vst [vmem:[#allocation2 + $0x370] sm:$0xff] 0.0
          %379 = vst [vmem:[#allocation2 + $0x378] sm:$0xff] 0.0
          %380 = vst [vmem:[#allocation2 + $0x380] sm:$0xff] 0.0
          %381 = vst [vmem:[#allocation2 + $0x388] sm:$0xff] 0.0
          %382 = vst [vmem:[#allocation2 + $0x390] sm:$0xff] 0.0
          %383 = vst [vmem:[#allocation2 + $0x398] sm:$0xff] 0.0
          %384 = vst [vmem:[#allocation2 + $0x3a0] sm:$0xff] 0.0
          %385 = vst [vmem:[#allocation2 + $0x3a8] sm:$0xff] 0.0
          %386 = vst [vmem:[#allocation2 + $0x3b0] sm:$0xff] 0.0
          %387 = vst [vmem:[#allocation2 + $0x3b8] sm:$0xff] 0.0
          %388 = vst [vmem:[#allocation2 + $0x3c0] sm:$0xff] 0.0
          %389 = vst [vmem:[#allocation2 + $0x3c8] sm:$0xff] 0.0
          %390 = vst [vmem:[#allocation2 + $0x3d0] sm:$0xff] 0.0
          %391 = vst [vmem:[#allocation2 + $0x3d8] sm:$0xff] 0.0
          %392 = vst [vmem:[#allocation2 + $0x3e0] sm:$0xff] 0.0
          %393 = vst [vmem:[#allocation2 + $0x3e8] sm:$0xff] 0.0
          %394 = vst [vmem:[#allocation2 + $0x3f0] sm:$0xff] 0.0
          %395 = vst [vmem:[#allocation2 + $0x3f8] sm:$0xff] 0.0
          %396 = vst [vmem:[#allocation2 + $0x400] sm:$0xff] 0.0
          %397 = vst [vmem:[#allocation2 + $0x408] sm:$0xff] 0.0
          %398 = vst [vmem:[#allocation2 + $0x410] sm:$0xff] 0.0
          %399 = vst [vmem:[#allocation2 + $0x418] sm:$0xff] 0.0
          %400 = vst [vmem:[#allocation2 + $0x420] sm:$0xff] 0.0
          %401 = vst [vmem:[#allocation2 + $0x428] sm:$0xff] 0.0
          %402 = vst [vmem:[#allocation2 + $0x430] sm:$0xff] 0.0
          %403 = vst [vmem:[#allocation2 + $0x438] sm:$0xff] 0.0
          %404 = vst [vmem:[#allocation2 + $0x440] sm:$0xff] 0.0
          %405 = vst [vmem:[#allocation2 + $0x448] sm:$0xff] 0.0
          %406 = vst [vmem:[#allocation2 + $0x450] sm:$0xff] 0.0
          %407 = vst [vmem:[#allocation2 + $0x458] sm:$0xff] 0.0
          %408 = vst [vmem:[#allocation2 + $0x460] sm:$0xff] 0.0
          %409 = vst [vmem:[#allocation2 + $0x468] sm:$0xff] 0.0
          %410 = vst [vmem:[#allocation2 + $0x470] sm:$0xff] 0.0
          %411 = vst [vmem:[#allocation2 + $0x478] sm:$0xff] 0.0
          %412 = vst [vmem:[#allocation2 + $0x480] sm:$0xff] 0.0
          %413 = vst [vmem:[#allocation2 + $0x488] sm:$0xff] 0.0
          %414 = vst [vmem:[#allocation2 + $0x490] sm:$0xff] 0.0
          %415 = vst [vmem:[#allocation2 + $0x498] sm:$0xff] 0.0
          %416 = vst [vmem:[#allocation2 + $0x4a0] sm:$0xff] 0.0
          %417 = vst [vmem:[#allocation2 + $0x4a8] sm:$0xff] 0.0
          %418 = vst [vmem:[#allocation2 + $0x4b0] sm:$0xff] 0.0
          %419 = vst [vmem:[#allocation2 + $0x4b8] sm:$0xff] 0.0
          %420 = vst [vmem:[#allocation2 + $0x4c0] sm:$0xff] 0.0
          %421 = vst [vmem:[#allocation2 + $0x4c8] sm:$0xff] 0.0
          %422 = vst [vmem:[#allocation2 + $0x4d0] sm:$0xff] 0.0
          %423 = vst [vmem:[#allocation2 + $0x4d8] sm:$0xff] 0.0
          %424 = vst [vmem:[#allocation2 + $0x4e0] sm:$0xff] 0.0
          %425 = vst [vmem:[#allocation2 + $0x4e8] sm:$0xff] 0.0
          %426 = vst [vmem:[#allocation2 + $0x4f0] sm:$0xff] 0.0
          %427 = vst [vmem:[#allocation2 + $0x4f8] sm:$0xff] 0.0
          %428 = vst [vmem:[#allocation2 + $0x500] sm:$0xff] 0.0
          %429 = vst [vmem:[#allocation2 + $0x508] sm:$0xff] 0.0
          %430 = vst [vmem:[#allocation2 + $0x510] sm:$0xff] 0.0
          %431 = vst [vmem:[#allocation2 + $0x518] sm:$0xff] 0.0
          %432 = vst [vmem:[#allocation2 + $0x520] sm:$0xff] 0.0
          %433 = vst [vmem:[#allocation2 + $0x528] sm:$0xff] 0.0
          %434 = vst [vmem:[#allocation2 + $0x530] sm:$0xff] 0.0
          %435 = vst [vmem:[#allocation2 + $0x538] sm:$0xff] 0.0
          %436 = vst [vmem:[#allocation2 + $0x540] sm:$0xff] 0.0
          %437 = vst [vmem:[#allocation2 + $0x548] sm:$0xff] 0.0
          %438 = vst [vmem:[#allocation2 + $0x550] sm:$0xff] 0.0
          %439 = vst [vmem:[#allocation2 + $0x558] sm:$0xff] 0.0
          %440 = vst [vmem:[#allocation2 + $0x560] sm:$0xff] 0.0
          %441 = vst [vmem:[#allocation2 + $0x568] sm:$0xff] 0.0
          %442 = vst [vmem:[#allocation2 + $0x570] sm:$0xff] 0.0
          %443 = vst [vmem:[#allocation2 + $0x578] sm:$0xff] 0.0
          %444 = vst [vmem:[#allocation2 + $0x580] sm:$0xff] 0.0
          %445 = vst [vmem:[#allocation2 + $0x588] sm:$0xff] 0.0
          %446 = vst [vmem:[#allocation2 + $0x590] sm:$0xff] 0.0
          %447 = vst [vmem:[#allocation2 + $0x598] sm:$0xff] 0.0
          %448 = vst [vmem:[#allocation2 + $0x5a0] sm:$0xff] 0.0
          %449 = vst [vmem:[#allocation2 + $0x5a8] sm:$0xff] 0.0
          %450 = vst [vmem:[#allocation2 + $0x5b0] sm:$0xff] 0.0
          %451 = vst [vmem:[#allocation2 + $0x5b8] sm:$0xff] 0.0
          %452 = vst [vmem:[#allocation2 + $0x5c0] sm:$0xff] 0.0
          %453 = vst [vmem:[#allocation2 + $0x5c8] sm:$0xff] 0.0
          %454 = vst [vmem:[#allocation2 + $0x5d0] sm:$0xff] 0.0
          %455 = vst [vmem:[#allocation2 + $0x5d8] sm:$0xff] 0.0
          %456 = vst [vmem:[#allocation2 + $0x5e0] sm:$0xff] 0.0
          %457 = vst [vmem:[#allocation2 + $0x5e8] sm:$0xff] 0.0
          %458 = vst [vmem:[#allocation2 + $0x5f0] sm:$0xff] 0.0
          %459 = vst [vmem:[#allocation2 + $0x5f8] sm:$0xff] 0.0
        $region44: #{causal_self_attention.3} parent=31 // pred_fallthru
          _
        %v460 = vld [vmem:[#allocation2] sm:$0xff]
        %v461 = vld [vmem:[#allocation2 + $0x8] sm:$0xff]
        %v462 = vld [vmem:[#allocation2 + $0x10] sm:$0xff]
        %v463 = vld [vmem:[#allocation2 + $0x18] sm:$0xff]
        %v464 = vld [vmem:[#allocation2 + $0x20] sm:$0xff]
        %v465 = vld [vmem:[#allocation2 + $0x28] sm:$0xff]
        %v466 = vld [vmem:[#allocation2 + $0x30] sm:$0xff]
        %v467 = vld [vmem:[#allocation2 + $0x38] sm:$0xff]
        %v468 = vld [vmem:[#allocation2 + $0x40] sm:$0xff]
        %v469 = vld [vmem:[#allocation2 + $0x48] sm:$0xff]
        %v470 = vld [vmem:[#allocation2 + $0x50] sm:$0xff]
        %v471 = vld [vmem:[#allocation2 + $0x58] sm:$0xff]
        %v472 = vld [vmem:[#allocation2 + $0x60] sm:$0xff]
        %v473 = vld [vmem:[#allocation2 + $0x68] sm:$0xff]
        %v474 = vld [vmem:[#allocation2 + $0x70] sm:$0xff]
        %v475 = vld [vmem:[#allocation2 + $0x78] sm:$0xff]
        %v476 = vld [vmem:[#allocation2 + $0x80] sm:$0xff]
        %v477 = vld [vmem:[#allocation2 + $0x88] sm:$0xff]
        %v478 = vld [vmem:[#allocation2 + $0x90] sm:$0xff]
        %v479 = vld [vmem:[#allocation2 + $0x98] sm:$0xff]
        %v480 = vld [vmem:[#allocation2 + $0xa0] sm:$0xff]
        %v481 = vld [vmem:[#allocation2 + $0xa8] sm:$0xff]
        %v482 = vld [vmem:[#allocation2 + $0xb0] sm:$0xff]
        %v483 = vld [vmem:[#allocation2 + $0xb8] sm:$0xff]
        %v484 = vld [vmem:[#allocation2 + $0xc0] sm:$0xff]
        %v485 = vld [vmem:[#allocation2 + $0xc8] sm:$0xff]
        %v486 = vld [vmem:[#allocation2 + $0xd0] sm:$0xff]
        %v487 = vld [vmem:[#allocation2 + $0xd8] sm:$0xff]
        %v488 = vld [vmem:[#allocation2 + $0xe0] sm:$0xff]
        %v489 = vld [vmem:[#allocation2 + $0xe8] sm:$0xff]
        %v490 = vld [vmem:[#allocation2 + $0xf0] sm:$0xff]
        %v491 = vld [vmem:[#allocation2 + $0xf8] sm:$0xff]
        %v492 = vld [vmem:[#allocation2 + $0x100] sm:$0xff]
        %v493 = vld [vmem:[#allocation2 + $0x108] sm:$0xff]
        %v494 = vld [vmem:[#allocation2 + $0x110] sm:$0xff]
        %v495 = vld [vmem:[#allocation2 + $0x118] sm:$0xff]
        %v496 = vld [vmem:[#allocation2 + $0x120] sm:$0xff]
        %v497 = vld [vmem:[#allocation2 + $0x128] sm:$0xff]
        %v498 = vld [vmem:[#allocation2 + $0x130] sm:$0xff]
        %v499 = vld [vmem:[#allocation2 + $0x138] sm:$0xff]
        %v500 = vld [vmem:[#allocation2 + $0x140] sm:$0xff]
        %v501 = vld [vmem:[#allocation2 + $0x148] sm:$0xff]
        %v502 = vld [vmem:[#allocation2 + $0x150] sm:$0xff]
        %v503 = vld [vmem:[#allocation2 + $0x158] sm:$0xff]
        %v504 = vld [vmem:[#allocation2 + $0x160] sm:$0xff]
        %v505 = vld [vmem:[#allocation2 + $0x168] sm:$0xff]
        %v506 = vld [vmem:[#allocation2 + $0x170] sm:$0xff]
        %v507 = vld [vmem:[#allocation2 + $0x178] sm:$0xff]
        %v508 = vld [vmem:[#allocation2 + $0x180] sm:$0xff]
        %v509 = vld [vmem:[#allocation2 + $0x188] sm:$0xff]
        %v510 = vld [vmem:[#allocation2 + $0x190] sm:$0xff]
        %v511 = vld [vmem:[#allocation2 + $0x198] sm:$0xff]
        %v512 = vld [vmem:[#allocation2 + $0x1a0] sm:$0xff]
        %v513 = vld [vmem:[#allocation2 + $0x1a8] sm:$0xff]
        %v514 = vld [vmem:[#allocation2 + $0x1b0] sm:$0xff]
        %v515 = vld [vmem:[#allocation2 + $0x1b8] sm:$0xff]
        %v516 = vld [vmem:[#allocation2 + $0x1c0] sm:$0xff]
        %v517 = vld [vmem:[#allocation2 + $0x1c8] sm:$0xff]
        %v518 = vld [vmem:[#allocation2 + $0x1d0] sm:$0xff]
        %v519 = vld [vmem:[#allocation2 + $0x1d8] sm:$0xff]
        %v520 = vld [vmem:[#allocation2 + $0x1e0] sm:$0xff]
        %v521 = vld [vmem:[#allocation2 + $0x1e8] sm:$0xff]
        %v522 = vld [vmem:[#allocation2 + $0x1f0] sm:$0xff]
        %v523 = vld [vmem:[#allocation2 + $0x1f8] sm:$0xff]
        %v524 = vld [vmem:[#allocation2 + $0x200] sm:$0xff]
        %v525 = vld [vmem:[#allocation2 + $0x208] sm:$0xff]
        %v526 = vld [vmem:[#allocation2 + $0x210] sm:$0xff]
        %v527 = vld [vmem:[#allocation2 + $0x218] sm:$0xff]
        %v528 = vld [vmem:[#allocation2 + $0x220] sm:$0xff]
        %v529 = vld [vmem:[#allocation2 + $0x228] sm:$0xff]
        %v530 = vld [vmem:[#allocation2 + $0x230] sm:$0xff]
        %v531 = vld [vmem:[#allocation2 + $0x238] sm:$0xff]
        %v532 = vld [vmem:[#allocation2 + $0x240] sm:$0xff]
        %v533 = vld [vmem:[#allocation2 + $0x248] sm:$0xff]
        %v534 = vld [vmem:[#allocation2 + $0x250] sm:$0xff]
        %v535 = vld [vmem:[#allocation2 + $0x258] sm:$0xff]
        %v536 = vld [vmem:[#allocation2 + $0x260] sm:$0xff]
        %v537 = vld [vmem:[#allocation2 + $0x268] sm:$0xff]
        %v538 = vld [vmem:[#allocation2 + $0x270] sm:$0xff]
        %v539 = vld [vmem:[#allocation2 + $0x278] sm:$0xff]
        %v540 = vld [vmem:[#allocation2 + $0x280] sm:$0xff]
        %v541 = vld [vmem:[#allocation2 + $0x288] sm:$0xff]
        %v542 = vld [vmem:[#allocation2 + $0x290] sm:$0xff]
        %v543 = vld [vmem:[#allocation2 + $0x298] sm:$0xff]
        %v544 = vld [vmem:[#allocation2 + $0x2a0] sm:$0xff]
        %v545 = vld [vmem:[#allocation2 + $0x2a8] sm:$0xff]
        %v546 = vld [vmem:[#allocation2 + $0x2b0] sm:$0xff]
        %v547 = vld [vmem:[#allocation2 + $0x2b8] sm:$0xff]
        %v548 = vld [vmem:[#allocation2 + $0x2c0] sm:$0xff]
        %v549 = vld [vmem:[#allocation2 + $0x2c8] sm:$0xff]
        %v550 = vld [vmem:[#allocation2 + $0x2d0] sm:$0xff]
        %v551 = vld [vmem:[#allocation2 + $0x2d8] sm:$0xff]
        %v552 = vld [vmem:[#allocation2 + $0x2e0] sm:$0xff]
        %v553 = vld [vmem:[#allocation2 + $0x2e8] sm:$0xff]
        %v554 = vld [vmem:[#allocation2 + $0x2f0] sm:$0xff]
        %v555 = vld [vmem:[#allocation2 + $0x2f8] sm:$0xff]
        %v556 = vld [vmem:[#allocation2 + $0x300] sm:$0xff]
        %v557 = vld [vmem:[#allocation2 + $0x308] sm:$0xff]
        %v558 = vld [vmem:[#allocation2 + $0x310] sm:$0xff]
        %v559 = vld [vmem:[#allocation2 + $0x318] sm:$0xff]
        %v560 = vld [vmem:[#allocation2 + $0x320] sm:$0xff]
        %v561 = vld [vmem:[#allocation2 + $0x328] sm:$0xff]
        %v562 = vld [vmem:[#allocation2 + $0x330] sm:$0xff]
        %v563 = vld [vmem:[#allocation2 + $0x338] sm:$0xff]
        %v564 = vld [vmem:[#allocation2 + $0x340] sm:$0xff]
        %v565 = vld [vmem:[#allocation2 + $0x348] sm:$0xff]
        %v566 = vld [vmem:[#allocation2 + $0x350] sm:$0xff]
        %v567 = vld [vmem:[#allocation2 + $0x358] sm:$0xff]
        %v568 = vld [vmem:[#allocation2 + $0x360] sm:$0xff]
        %v569 = vld [vmem:[#allocation2 + $0x368] sm:$0xff]
        %v570 = vld [vmem:[#allocation2 + $0x370] sm:$0xff]
        %v571 = vld [vmem:[#allocation2 + $0x378] sm:$0xff]
        %v572 = vld [vmem:[#allocation2 + $0x380] sm:$0xff]
        %v573 = vld [vmem:[#allocation2 + $0x388] sm:$0xff]
        %v574 = vld [vmem:[#allocation2 + $0x390] sm:$0xff]
        %v575 = vld [vmem:[#allocation2 + $0x398] sm:$0xff]
        %v576 = vld [vmem:[#allocation2 + $0x3a0] sm:$0xff]
        %v577 = vld [vmem:[#allocation2 + $0x3a8] sm:$0xff]
        %v578 = vld [vmem:[#allocation2 + $0x3b0] sm:$0xff]
        %v579 = vld [vmem:[#allocation2 + $0x3b8] sm:$0xff]
        %v580 = vld [vmem:[#allocation2 + $0x3c0] sm:$0xff]
        %v581 = vld [vmem:[#allocation2 + $0x3c8] sm:$0xff]
        %v582 = vld [vmem:[#allocation2 + $0x3d0] sm:$0xff]
        %v583 = vld [vmem:[#allocation2 + $0x3d8] sm:$0xff]
        %v584 = vld [vmem:[#allocation2 + $0x3e0] sm:$0xff]
        %v585 = vld [vmem:[#allocation2 + $0x3e8] sm:$0xff]
        %v586 = vld [vmem:[#allocation2 + $0x3f0] sm:$0xff]
        %v587 = vld [vmem:[#allocation2 + $0x3f8] sm:$0xff]
        %v588 = vld [vmem:[#allocation2 + $0x400] sm:$0xff]
        %v589 = vld [vmem:[#allocation2 + $0x408] sm:$0xff]
        %v590 = vld [vmem:[#allocation2 + $0x410] sm:$0xff]
        %v591 = vld [vmem:[#allocation2 + $0x418] sm:$0xff]
        %v592 = vld [vmem:[#allocation2 + $0x420] sm:$0xff]
        %v593 = vld [vmem:[#allocation2 + $0x428] sm:$0xff]
        %v594 = vld [vmem:[#allocation2 + $0x430] sm:$0xff]
        %v595 = vld [vmem:[#allocation2 + $0x438] sm:$0xff]
        %v596 = vld [vmem:[#allocation2 + $0x440] sm:$0xff]
        %v597 = vld [vmem:[#allocation2 + $0x448] sm:$0xff]
        %v598 = vld [vmem:[#allocation2 + $0x450] sm:$0xff]
        %v599 = vld [vmem:[#allocation2 + $0x458] sm:$0xff]
        %v600 = vld [vmem:[#allocation2 + $0x460] sm:$0xff]
        %v601 = vld [vmem:[#allocation2 + $0x468] sm:$0xff]
        %v602 = vld [vmem:[#allocation2 + $0x470] sm:$0xff]
        %v603 = vld [vmem:[#allocation2 + $0x478] sm:$0xff]
        %v604 = vld [vmem:[#allocation2 + $0x480] sm:$0xff]
        %v605 = vld [vmem:[#allocation2 + $0x488] sm:$0xff]
        %v606 = vld [vmem:[#allocation2 + $0x490] sm:$0xff]
        %v607 = vld [vmem:[#allocation2 + $0x498] sm:$0xff]
        %v608 = vld [vmem:[#allocation2 + $0x4a0] sm:$0xff]
        %v609 = vld [vmem:[#allocation2 + $0x4a8] sm:$0xff]
        %v610 = vld [vmem:[#allocation2 + $0x4b0] sm:$0xff]
        %v611 = vld [vmem:[#allocation2 + $0x4b8] sm:$0xff]
        %v612 = vld [vmem:[#allocation2 + $0x4c0] sm:$0xff]
        %v613 = vld [vmem:[#allocation2 + $0x4c8] sm:$0xff]
        %v614 = vld [vmem:[#allocation2 + $0x4d0] sm:$0xff]
        %v615 = vld [vmem:[#allocation2 + $0x4d8] sm:$0xff]
        %v616 = vld [vmem:[#allocation2 + $0x4e0] sm:$0xff]
        %v617 = vld [vmem:[#allocation2 + $0x4e8] sm:$0xff]
        %v618 = vld [vmem:[#allocation2 + $0x4f0] sm:$0xff]
        %v619 = vld [vmem:[#allocation2 + $0x4f8] sm:$0xff]
        %v620 = vld [vmem:[#allocation2 + $0x500] sm:$0xff]
        %v621 = vld [vmem:[#allocation2 + $0x508] sm:$0xff]
        %v622 = vld [vmem:[#allocation2 + $0x510] sm:$0xff]
        %v623 = vld [vmem:[#allocation2 + $0x518] sm:$0xff]
        %v624 = vld [vmem:[#allocation2 + $0x520] sm:$0xff]
        %v625 = vld [vmem:[#allocation2 + $0x528] sm:$0xff]
        %v626 = vld [vmem:[#allocation2 + $0x530] sm:$0xff]
        %v627 = vld [vmem:[#allocation2 + $0x538] sm:$0xff]
        %v628 = vld [vmem:[#allocation2 + $0x540] sm:$0xff]
        %v629 = vld [vmem:[#allocation2 + $0x548] sm:$0xff]
        %v630 = vld [vmem:[#allocation2 + $0x550] sm:$0xff]
        %v631 = vld [vmem:[#allocation2 + $0x558] sm:$0xff]
        %v632 = vld [vmem:[#allocation2 + $0x560] sm:$0xff]
        %v633 = vld [vmem:[#allocation2 + $0x568] sm:$0xff]
        %v634 = vld [vmem:[#allocation2 + $0x570] sm:$0xff]
        %v635 = vld [vmem:[#allocation2 + $0x578] sm:$0xff]
        %v636 = vld [vmem:[#allocation2 + $0x580] sm:$0xff]
        %v637 = vld [vmem:[#allocation2 + $0x588] sm:$0xff]
        %v638 = vld [vmem:[#allocation2 + $0x590] sm:$0xff]
        %v639 = vld [vmem:[#allocation2 + $0x598] sm:$0xff]
        %v640 = vld [vmem:[#allocation2 + $0x5a0] sm:$0xff]
        %v641 = vld [vmem:[#allocation2 + $0x5a8] sm:$0xff]
        %v642 = vld [vmem:[#allocation2 + $0x5b0] sm:$0xff]
        %v643 = vld [vmem:[#allocation2 + $0x5b8] sm:$0xff]
        %v644 = vld [vmem:[#allocation2 + $0x5c0] sm:$0xff]
        %v645 = vld [vmem:[#allocation2 + $0x5c8] sm:$0xff]
        %v646 = vld [vmem:[#allocation2 + $0x5d0] sm:$0xff]
        %v647 = vld [vmem:[#allocation2 + $0x5d8] sm:$0xff]
        %v648 = vld [vmem:[#allocation2 + $0x5e0] sm:$0xff]
        %v649 = vld [vmem:[#allocation2 + $0x5e8] sm:$0xff]
        %v650 = vld [vmem:[#allocation2 + $0x5f0] sm:$0xff]
        %v651 = vld [vmem:[#allocation2 + $0x5f8] sm:$0xff]
        %v652 = vld [vmem:[#allocation3] sm:$0xff]
        %v653 = vld [vmem:[#allocation3 + $0x8] sm:$0xff]
        %v654 = vld [vmem:[#allocation3 + $0x10] sm:$0xff]
        %v655 = vld [vmem:[#allocation3 + $0x18] sm:$0xff]
        %v656 = vld [vmem:[#allocation3 + $0x20] sm:$0xff]
        %v657 = vld [vmem:[#allocation3 + $0x28] sm:$0xff]
        %v658 = vld [vmem:[#allocation3 + $0x30] sm:$0xff]
        %v659 = vld [vmem:[#allocation3 + $0x38] sm:$0xff]
        %v660 = vld [vmem:[#allocation3 + $0x40] sm:$0xff]
        %v661 = vld [vmem:[#allocation3 + $0x48] sm:$0xff]
        %v662 = vld [vmem:[#allocation3 + $0x50] sm:$0xff]
        %v663 = vld [vmem:[#allocation3 + $0x58] sm:$0xff]
        %v664 = vld [vmem:[#allocation3 + $0x60] sm:$0xff]
        %v665 = vld [vmem:[#allocation3 + $0x68] sm:$0xff]
        %v666 = vld [vmem:[#allocation3 + $0x70] sm:$0xff]
        %v667 = vld [vmem:[#allocation3 + $0x78] sm:$0xff]
        %v668 = vld [vmem:[#allocation3 + $0x80] sm:$0xff]
        %v669 = vld [vmem:[#allocation3 + $0x88] sm:$0xff]
        %v670 = vld [vmem:[#allocation3 + $0x90] sm:$0xff]
        %v671 = vld [vmem:[#allocation3 + $0x98] sm:$0xff]
        %v672 = vld [vmem:[#allocation3 + $0xa0] sm:$0xff]
        %v673 = vld [vmem:[#allocation3 + $0xa8] sm:$0xff]
        %v674 = vld [vmem:[#allocation3 + $0xb0] sm:$0xff]
        %v675 = vld [vmem:[#allocation3 + $0xb8] sm:$0xff]
        %v676 = vld [vmem:[#allocation3 + $0xc0] sm:$0xff]
        %v677 = vld [vmem:[#allocation3 + $0xc8] sm:$0xff]
        %v678 = vld [vmem:[#allocation3 + $0xd0] sm:$0xff]
        %v679 = vld [vmem:[#allocation3 + $0xd8] sm:$0xff]
        %v680 = vld [vmem:[#allocation3 + $0xe0] sm:$0xff]
        %v681 = vld [vmem:[#allocation3 + $0xe8] sm:$0xff]
        %v682 = vld [vmem:[#allocation3 + $0xf0] sm:$0xff]
        %v683 = vld [vmem:[#allocation3 + $0xf8] sm:$0xff]
        %v684 = vld [vmem:[#allocation3 + $0x100] sm:$0xff]
        %v685 = vld [vmem:[#allocation3 + $0x108] sm:$0xff]
        %v686 = vld [vmem:[#allocation3 + $0x110] sm:$0xff]
        %v687 = vld [vmem:[#allocation3 + $0x118] sm:$0xff]
        %v688 = vld [vmem:[#allocation3 + $0x120] sm:$0xff]
        %v689 = vld [vmem:[#allocation3 + $0x128] sm:$0xff]
        %v690 = vld [vmem:[#allocation3 + $0x130] sm:$0xff]
        %v691 = vld [vmem:[#allocation3 + $0x138] sm:$0xff]
        %v692 = vld [vmem:[#allocation3 + $0x140] sm:$0xff]
        %v693 = vld [vmem:[#allocation3 + $0x148] sm:$0xff]
        %v694 = vld [vmem:[#allocation3 + $0x150] sm:$0xff]
        %v695 = vld [vmem:[#allocation3 + $0x158] sm:$0xff]
        %v696 = vld [vmem:[#allocation3 + $0x160] sm:$0xff]
        %v697 = vld [vmem:[#allocation3 + $0x168] sm:$0xff]
        %v698 = vld [vmem:[#allocation3 + $0x170] sm:$0xff]
        %v699 = vld [vmem:[#allocation3 + $0x178] sm:$0xff]
        %v700 = vld [vmem:[#allocation3 + $0x180] sm:$0xff]
        %v701 = vld [vmem:[#allocation3 + $0x188] sm:$0xff]
        %v702 = vld [vmem:[#allocation3 + $0x190] sm:$0xff]
        %v703 = vld [vmem:[#allocation3 + $0x198] sm:$0xff]
        %v704 = vld [vmem:[#allocation3 + $0x1a0] sm:$0xff]
        %v705 = vld [vmem:[#allocation3 + $0x1a8] sm:$0xff]
        %v706 = vld [vmem:[#allocation3 + $0x1b0] sm:$0xff]
        %v707 = vld [vmem:[#allocation3 + $0x1b8] sm:$0xff]
        %v708 = vld [vmem:[#allocation3 + $0x1c0] sm:$0xff]
        %v709 = vld [vmem:[#allocation3 + $0x1c8] sm:$0xff]
        %v710 = vld [vmem:[#allocation3 + $0x1d0] sm:$0xff]
        %v711 = vld [vmem:[#allocation3 + $0x1d8] sm:$0xff]
        %v712 = vld [vmem:[#allocation3 + $0x1e0] sm:$0xff]
        %v713 = vld [vmem:[#allocation3 + $0x1e8] sm:$0xff]
        %v714 = vld [vmem:[#allocation3 + $0x1f0] sm:$0xff]
        %v715 = vld [vmem:[#allocation3 + $0x1f8] sm:$0xff]
        %v716 = vld [vmem:[#allocation3 + $0x200] sm:$0xff]
        %v717 = vld [vmem:[#allocation3 + $0x208] sm:$0xff]
        %v718 = vld [vmem:[#allocation3 + $0x210] sm:$0xff]
        %v719 = vld [vmem:[#allocation3 + $0x218] sm:$0xff]
        %v720 = vld [vmem:[#allocation3 + $0x220] sm:$0xff]
        %v721 = vld [vmem:[#allocation3 + $0x228] sm:$0xff]
        %v722 = vld [vmem:[#allocation3 + $0x230] sm:$0xff]
        %v723 = vld [vmem:[#allocation3 + $0x238] sm:$0xff]
        %v724 = vld [vmem:[#allocation3 + $0x240] sm:$0xff]
        %v725 = vld [vmem:[#allocation3 + $0x248] sm:$0xff]
        %v726 = vld [vmem:[#allocation3 + $0x250] sm:$0xff]
        %v727 = vld [vmem:[#allocation3 + $0x258] sm:$0xff]
        %v728 = vld [vmem:[#allocation3 + $0x260] sm:$0xff]
        %v729 = vld [vmem:[#allocation3 + $0x268] sm:$0xff]
        %v730 = vld [vmem:[#allocation3 + $0x270] sm:$0xff]
        %v731 = vld [vmem:[#allocation3 + $0x278] sm:$0xff]
        %v732 = vld [vmem:[#allocation3 + $0x280] sm:$0xff]
        %v733 = vld [vmem:[#allocation3 + $0x288] sm:$0xff]
        %v734 = vld [vmem:[#allocation3 + $0x290] sm:$0xff]
        %v735 = vld [vmem:[#allocation3 + $0x298] sm:$0xff]
        %v736 = vld [vmem:[#allocation3 + $0x2a0] sm:$0xff]
        %v737 = vld [vmem:[#allocation3 + $0x2a8] sm:$0xff]
        %v738 = vld [vmem:[#allocation3 + $0x2b0] sm:$0xff]
        %v739 = vld [vmem:[#allocation3 + $0x2b8] sm:$0xff]
        %v740 = vld [vmem:[#allocation3 + $0x2c0] sm:$0xff]
        %v741 = vld [vmem:[#allocation3 + $0x2c8] sm:$0xff]
        %v742 = vld [vmem:[#allocation3 + $0x2d0] sm:$0xff]
        %v743 = vld [vmem:[#allocation3 + $0x2d8] sm:$0xff]
        %v744 = vld [vmem:[#allocation3 + $0x2e0] sm:$0xff]
        %v745 = vld [vmem:[#allocation3 + $0x2e8] sm:$0xff]
        %v746 = vld [vmem:[#allocation3 + $0x2f0] sm:$0xff]
        %v747 = vld [vmem:[#allocation3 + $0x2f8] sm:$0xff]
        %v748 = vld [vmem:[#allocation3 + $0x300] sm:$0xff]
        %v749 = vld [vmem:[#allocation3 + $0x308] sm:$0xff]
        %v750 = vld [vmem:[#allocation3 + $0x310] sm:$0xff]
        %v751 = vld [vmem:[#allocation3 + $0x318] sm:$0xff]
        %v752 = vld [vmem:[#allocation3 + $0x320] sm:$0xff]
        %v753 = vld [vmem:[#allocation3 + $0x328] sm:$0xff]
        %v754 = vld [vmem:[#allocation3 + $0x330] sm:$0xff]
        %v755 = vld [vmem:[#allocation3 + $0x338] sm:$0xff]
        %v756 = vld [vmem:[#allocation3 + $0x340] sm:$0xff]
        %v757 = vld [vmem:[#allocation3 + $0x348] sm:$0xff]
        %v758 = vld [vmem:[#allocation3 + $0x350] sm:$0xff]
        %v759 = vld [vmem:[#allocation3 + $0x358] sm:$0xff]
        %v760 = vld [vmem:[#allocation3 + $0x360] sm:$0xff]
        %v761 = vld [vmem:[#allocation3 + $0x368] sm:$0xff]
        %v762 = vld [vmem:[#allocation3 + $0x370] sm:$0xff]
        %v763 = vld [vmem:[#allocation3 + $0x378] sm:$0xff]
        %v764 = vld [vmem:[#allocation3 + $0x380] sm:$0xff]
        %v765 = vld [vmem:[#allocation3 + $0x388] sm:$0xff]
        %v766 = vld [vmem:[#allocation3 + $0x390] sm:$0xff]
        %v767 = vld [vmem:[#allocation3 + $0x398] sm:$0xff]
        %v768 = vld [vmem:[#allocation3 + $0x3a0] sm:$0xff]
        %v769 = vld [vmem:[#allocation3 + $0x3a8] sm:$0xff]
        %v770 = vld [vmem:[#allocation3 + $0x3b0] sm:$0xff]
        %v771 = vld [vmem:[#allocation3 + $0x3b8] sm:$0xff]
        %v772 = vld [vmem:[#allocation3 + $0x3c0] sm:$0xff]
        %v773 = vld [vmem:[#allocation3 + $0x3c8] sm:$0xff]
        %v774 = vld [vmem:[#allocation3 + $0x3d0] sm:$0xff]
        %v775 = vld [vmem:[#allocation3 + $0x3d8] sm:$0xff]
        %v776 = vld [vmem:[#allocation3 + $0x3e0] sm:$0xff]
        %v777 = vld [vmem:[#allocation3 + $0x3e8] sm:$0xff]
        %v778 = vld [vmem:[#allocation3 + $0x3f0] sm:$0xff]
        %v779 = vld [vmem:[#allocation3 + $0x3f8] sm:$0xff]
        %v780 = vld [vmem:[%s227] sm:$0xff]
        %v781 = vld [vmem:[%s227 + $0x8] sm:$0xff]
        %v782 = vld [vmem:[%s227 + $0x10] sm:$0xff]
        %v783 = vld [vmem:[%s227 + $0x18] sm:$0xff]
        %v784 = vld [vmem:[%s227 + $0x20] sm:$0xff]
        %v785 = vld [vmem:[%s227 + $0x28] sm:$0xff]
        %v786 = vld [vmem:[%s227 + $0x30] sm:$0xff]
        %v787 = vld [vmem:[%s227 + $0x38] sm:$0xff]
        %v788 = vld [vmem:[%s227 + $0x40] sm:$0xff]
        %v789 = vld [vmem:[%s227 + $0x48] sm:$0xff]
        %v790 = vld [vmem:[%s227 + $0x50] sm:$0xff]
        %v791 = vld [vmem:[%s227 + $0x58] sm:$0xff]
        %v792 = vld [vmem:[%s227 + $0x60] sm:$0xff]
        %v793 = vld [vmem:[%s227 + $0x68] sm:$0xff]
        %v794 = vld [vmem:[%s227 + $0x70] sm:$0xff]
        %v795 = vld [vmem:[%s227 + $0x78] sm:$0xff]
        %v796 = vld [vmem:[%s227 + $0x80] sm:$0xff]
        %v797 = vld [vmem:[%s227 + $0x88] sm:$0xff]
        %v798 = vld [vmem:[%s227 + $0x90] sm:$0xff]
        %v799 = vld [vmem:[%s227 + $0x98] sm:$0xff]
        %v800 = vld [vmem:[%s227 + $0xa0] sm:$0xff]
        %v801 = vld [vmem:[%s227 + $0xa8] sm:$0xff]
        %v802 = vld [vmem:[%s227 + $0xb0] sm:$0xff]
        %v803 = vld [vmem:[%s227 + $0xb8] sm:$0xff]
        %v804 = vld [vmem:[%s227 + $0xc0] sm:$0xff]
        %v805 = vld [vmem:[%s227 + $0xc8] sm:$0xff]
        %v806 = vld [vmem:[%s227 + $0xd0] sm:$0xff]
        %v807 = vld [vmem:[%s227 + $0xd8] sm:$0xff]
        %v808 = vld [vmem:[%s227 + $0xe0] sm:$0xff]
        %v809 = vld [vmem:[%s227 + $0xe8] sm:$0xff]
        %v810 = vld [vmem:[%s227 + $0xf0] sm:$0xff]
        %v811 = vld [vmem:[%s227 + $0xf8] sm:$0xff]
        %v812 = vld [vmem:[%s227 + $0x100] sm:$0xff]
        %v813 = vld [vmem:[%s227 + $0x108] sm:$0xff]
        %v814 = vld [vmem:[%s227 + $0x110] sm:$0xff]
        %v815 = vld [vmem:[%s227 + $0x118] sm:$0xff]
        %v816 = vld [vmem:[%s227 + $0x120] sm:$0xff]
        %v817 = vld [vmem:[%s227 + $0x128] sm:$0xff]
        %v818 = vld [vmem:[%s227 + $0x130] sm:$0xff]
        %v819 = vld [vmem:[%s227 + $0x138] sm:$0xff]
        %v820 = vld [vmem:[%s227 + $0x140] sm:$0xff]
        %v821 = vld [vmem:[%s227 + $0x148] sm:$0xff]
        %v822 = vld [vmem:[%s227 + $0x150] sm:$0xff]
        %v823 = vld [vmem:[%s227 + $0x158] sm:$0xff]
        %v824 = vld [vmem:[%s227 + $0x160] sm:$0xff]
        %v825 = vld [vmem:[%s227 + $0x168] sm:$0xff]
        %v826 = vld [vmem:[%s227 + $0x170] sm:$0xff]
        %v827 = vld [vmem:[%s227 + $0x178] sm:$0xff]
        %v828 = vld [vmem:[%s227 + $0x180] sm:$0xff]
        %v829 = vld [vmem:[%s227 + $0x188] sm:$0xff]
        %v830 = vld [vmem:[%s227 + $0x190] sm:$0xff]
        %v831 = vld [vmem:[%s227 + $0x198] sm:$0xff]
        %v832 = vld [vmem:[%s227 + $0x1a0] sm:$0xff]
        %v833 = vld [vmem:[%s227 + $0x1a8] sm:$0xff]
        %v834 = vld [vmem:[%s227 + $0x1b0] sm:$0xff]
        %v835 = vld [vmem:[%s227 + $0x1b8] sm:$0xff]
        %v836 = vld [vmem:[%s227 + $0x1c0] sm:$0xff]
        %v837 = vld [vmem:[%s227 + $0x1c8] sm:$0xff]
        %v838 = vld [vmem:[%s227 + $0x1d0] sm:$0xff]
        %v839 = vld [vmem:[%s227 + $0x1d8] sm:$0xff]
        %v840 = vld [vmem:[%s227 + $0x1e0] sm:$0xff]
        %v841 = vld [vmem:[%s227 + $0x1e8] sm:$0xff]
        %v842 = vld [vmem:[%s227 + $0x1f0] sm:$0xff]
        %v843 = vld [vmem:[%s227 + $0x1f8] sm:$0xff]
        %v844 = vld [vmem:[%s227 + $0x200] sm:$0xff]
        %v845 = vld [vmem:[%s227 + $0x208] sm:$0xff]
        %v846 = vld [vmem:[%s227 + $0x210] sm:$0xff]
        %v847 = vld [vmem:[%s227 + $0x218] sm:$0xff]
        %v848 = vld [vmem:[%s227 + $0x220] sm:$0xff]
        %v849 = vld [vmem:[%s227 + $0x228] sm:$0xff]
        %v850 = vld [vmem:[%s227 + $0x230] sm:$0xff]
        %v851 = vld [vmem:[%s227 + $0x238] sm:$0xff]
        %v852 = vld [vmem:[%s227 + $0x240] sm:$0xff]
        %v853 = vld [vmem:[%s227 + $0x248] sm:$0xff]
        %v854 = vld [vmem:[%s227 + $0x250] sm:$0xff]
        %v855 = vld [vmem:[%s227 + $0x258] sm:$0xff]
        %v856 = vld [vmem:[%s227 + $0x260] sm:$0xff]
        %v857 = vld [vmem:[%s227 + $0x268] sm:$0xff]
        %v858 = vld [vmem:[%s227 + $0x270] sm:$0xff]
        %v859 = vld [vmem:[%s227 + $0x278] sm:$0xff]
        %v860 = vld [vmem:[%s227 + $0x280] sm:$0xff]
        %v861 = vld [vmem:[%s227 + $0x288] sm:$0xff]
        %v862 = vld [vmem:[%s227 + $0x290] sm:$0xff]
        %v863 = vld [vmem:[%s227 + $0x298] sm:$0xff]
        %v864 = vld [vmem:[%s227 + $0x2a0] sm:$0xff]
        %v865 = vld [vmem:[%s227 + $0x2a8] sm:$0xff]
        %v866 = vld [vmem:[%s227 + $0x2b0] sm:$0xff]
        %v867 = vld [vmem:[%s227 + $0x2b8] sm:$0xff]
        %v868 = vld [vmem:[%s227 + $0x2c0] sm:$0xff]
        %v869 = vld [vmem:[%s227 + $0x2c8] sm:$0xff]
        %v870 = vld [vmem:[%s227 + $0x2d0] sm:$0xff]
        %v871 = vld [vmem:[%s227 + $0x2d8] sm:$0xff]
        %v872 = vld [vmem:[%s227 + $0x2e0] sm:$0xff]
        %v873 = vld [vmem:[%s227 + $0x2e8] sm:$0xff]
        %v874 = vld [vmem:[%s227 + $0x2f0] sm:$0xff]
        %v875 = vld [vmem:[%s227 + $0x2f8] sm:$0xff]
        %876 = vmatprep.subr.mxu0 %v781
        %877 = vmatpush1.msra.mxu0 %v780
        %878 = vmatprep.subr.mxu0 %v784
        %879 = vmatpush1.msra.mxu0 %v783
        %880 = vmatprep.subr.mxu0 %v787
        %881 = vmatpush1.msra.mxu0 %v786
        %882 = vmatprep.subr.mxu0 %v790
        %883 = vmatpush1.msra.mxu0 %v789
        %884 = vmatprep.subr.mxu0 %v793
        %885 = vmatpush1.msra.mxu0 %v792
        %886 = vmatprep.subr.mxu0 %v796
        %887 = vmatpush1.msra.mxu0 %v795
        %888 = vmatprep.subr.mxu0 %v799
        %889 = vmatpush1.msra.mxu0 %v798
        %890 = vmatprep.subr.mxu0 %v802
        %891 = vmatpush1.msra.mxu0 %v801
        %892 = vmatprep.subr.mxu0 %v805
        %893 = vmatpush1.msra.mxu0 %v804
        %894 = vmatprep.subr.mxu0 %v808
        %895 = vmatpush1.msra.mxu0 %v807
        %896 = vmatprep.subr.mxu0 %v811
        %897 = vmatpush1.msra.mxu0 %v810
        %898 = vmatprep.subr.mxu0 %v814
        %899 = vmatpush1.msra.mxu0 %v813
        %900 = vmatprep.subr.mxu0 %v817
        %901 = vmatpush1.msra.mxu0 %v816
        %902 = vmatprep.subr.mxu0 %v820
        %903 = vmatpush1.msra.mxu0 %v819
        %904 = vmatprep.subr.mxu0 %v823
        %905 = vmatpush1.msra.mxu0 %v822
        %906 = vmatprep.subr.mxu0 %v826
        %907 = vmatpush1.msra.mxu0 %v825
        %908 = vmatprep.subr.mxu0 %v829
        %909 = vmatpush1.msra.mxu0 %v828
        %910 = vmatprep.subr.mxu0 %v832
        %911 = vmatpush1.msra.mxu0 %v831
        %912 = vmatprep.subr.mxu0 %v835
        %913 = vmatpush1.msra.mxu0 %v834
        %914 = vmatprep.subr.mxu0 %v838
        %915 = vmatpush1.msra.mxu0 %v837
        %916 = vmatprep.subr.mxu0 %v841
        %917 = vmatpush1.msra.mxu0 %v840
        %918 = vmatprep.subr.mxu0 %v844
        %919 = vmatpush1.msra.mxu0 %v843
        %920 = vmatprep.subr.mxu0 %v847
        %921 = vmatpush1.msra.mxu0 %v846
        %922 = vmatprep.subr.mxu0 %v850
        %923 = vmatpush1.msra.mxu0 %v849
        %924 = vmatprep.subr.mxu0 %v853
        %925 = vmatpush1.msra.mxu0 %v852
        %926 = vmatprep.subr.mxu0 %v856
        %927 = vmatpush1.msra.mxu0 %v855
        %928 = vmatprep.subr.mxu0 %v859
        %929 = vmatpush1.msra.mxu0 %v858
        %930 = vmatprep.subr.mxu0 %v862
        %931 = vmatpush1.msra.mxu0 %v861
        %932 = vmatprep.subr.mxu0 %v865
        %933 = vmatpush1.msra.mxu0 %v864
        %934 = vmatprep.subr.mxu0 %v868
        %935 = vmatpush1.msra.mxu0 %v867
        %936 = vmatprep.subr.mxu0 %v871
        %937 = vmatpush1.msra.mxu0 %v870
        %938 = vmatprep.subr.mxu0 %v874
        %939 = vmatpush1.msra.mxu0 %v873
        %940 = vmatprep.mubr.f32.mxu0 %v653
        %941 = vmatmul.mubr.f32.gmra.mrb[0].mxu0 %v652
        %v942 = vpop.f32.mrb[0].mxu0
        %v943 = vadd.f32 0.0, %v942
        %v944 = vpop.f32.mrb[0].mxu0
        %v945 = vadd.f32 0.0, %v944
        %946 = vmatprep.mubr.f32.mxu0 %v655
        %947 = vmatmul.mubr.f32.gmra.mrb[0].mxu0 %v654
        %v948 = vpop.f32.mrb[0].mxu0
        %v949 = vadd.f32 0.0, %v948
        %v950 = vpop.f32.mrb[0].mxu0
        %v951 = vadd.f32 0.0, %v950
        %952 = vmatprep.mubr.f32.mxu0 %v657
        %953 = vmatmul.mubr.f32.gmra.mrb[0].mxu0 %v656
        %v954 = vpop.f32.mrb[0].mxu0
        %v955 = vadd.f32 0.0, %v954
        %v956 = vpop.f32.mrb[0].mxu0
        %v957 = vadd.f32 0.0, %v956
        %958 = vmatprep.mubr.f32.mxu0 %v659
        %959 = vmatmul.mubr.f32.gmra.mrb[0].mxu0 %v658
        %v960 = vpop.f32.mrb[0].mxu0
        %v961 = vadd.f32 0.0, %v960
        %v962 = vpop.f32.mrb[0].mxu0
        %v963 = vadd.f32 0.0, %v962
        %964 = vmatprep.mubr.f32.mxu0 %v661
        %965 = vmatmul.mubr.f32.gmra.mrb[0].mxu0 %v660
        %v966 = vpop.f32.mrb[0].mxu0
        %v967 = vadd.f32 0.0, %v966
        %v968 = vpop.f32.mrb[0].mxu0
        %v969 = vadd.f32 0.0, %v968
        %970 = vmatprep.mubr.f32.mxu0 %v663
        %971 = vmatmul.mubr.f32.gmra.mrb[0].mxu0 %v662
        %v972 = vpop.f32.mrb[0].mxu0
        %v973 = vadd.f32 0.0, %v972
        %v974 = vpop.f32.mrb[0].mxu0
        %v975 = vadd.f32 0.0, %v974
        %976 = vmatprep.mubr.f32.mxu0 %v665
        %977 = vmatmul.mubr.f32.gmra.mrb[0].mxu0 %v664
        %v978 = vpop.f32.mrb[0].mxu0
        %v979 = vadd.f32 0.0, %v978
        %v980 = vpop.f32.mrb[0].mxu0
        %v981 = vadd.f32 0.0, %v980
        %982 = vmatprep.mubr.f32.mxu0 %v667
        %983 = vmatmul.mubr.f32.gmra.mrb[0].mxu0 %v666
        %v984 = vpop.f32.mrb[0].mxu0
        %v985 = vadd.f32 0.0, %v984
        %v986 = vpop.f32.mrb[0].mxu0
        %v987 = vadd.f32 0.0, %v986
        %988 = vmatprep.mubr.f32.mxu0 %v669
        %989 = vmatmul.mubr.f32.gmra.mrb[0].mxu0 %v668
        %v990 = vpop.f32.mrb[0].mxu0
        %v991 = vadd.f32 0.0, %v990
        %v992 = vpop.f32.mrb[0].mxu0
        %v993 = vadd.f32 0.0, %v992
        %994 = vmatprep.mubr.f32.mxu0 %v671
        %995 = vmatmul.mubr.f32.gmra.mrb[0].mxu0 %v670
        %v996 = vpop.f32.mrb[0].mxu0
        %v997 = vadd.f32 0.0, %v996
        %v998 = vpop.f32.mrb[0].mxu0
        %v999 = vadd.f32 0.0, %v998
        %1000 = vmatprep.mubr.f32.mxu0 %v673
        %1001 = vmatmul.mubr.f32.gmra.mrb[0].mxu0 %v672
        %v1002 = vpop.f32.mrb[0].mxu0
        %v1003 = vadd.f32 0.0, %v1002
        %v1004 = vpop.f32.mrb[0].mxu0
        %v1005 = vadd.f32 0.0, %v1004
        %1006 = vmatprep.mubr.f32.mxu0 %v675
        %1007 = vmatmul.mubr.f32.gmra.mrb[0].mxu0 %v674
        %v1008 = vpop.f32.mrb[0].mxu0
        %v1009 = vadd.f32 0.0, %v1008
        %v1010 = vpop.f32.mrb[0].mxu0
        %v1011 = vadd.f32 0.0, %v1010
        %1012 = vmatprep.mubr.f32.mxu0 %v677
        %1013 = vmatmul.mubr.f32.gmra.mrb[0].mxu0 %v676
        %v1014 = vpop.f32.mrb[0].mxu0
        %v1015 = vadd.f32 0.0, %v1014
        %v1016 = vpop.f32.mrb[0].mxu0
        %v1017 = vadd.f32 0.0, %v1016
        %1018 = vmatprep.mubr.f32.mxu0 %v679
        %1019 = vmatmul.mubr.f32.gmra.mrb[0].mxu0 %v678
        %v1020 = vpop.f32.mrb[0].mxu0
        %v1021 = vadd.f32 0.0, %v1020
        %v1022 = vpop.f32.mrb[0].mxu0
        %v1023 = vadd.f32 0.0, %v1022
        %1024 = vmatprep.mubr.f32.mxu0 %v681
        %1025 = vmatmul.mubr.f32.gmra.mrb[0].mxu0 %v680
        %v1026 = vpop.f32.mrb[0].mxu0
        %v1027 = vadd.f32 0.0, %v1026
        %v1028 = vpop.f32.mrb[0].mxu0
        %v1029 = vadd.f32 0.0, %v1028
        %1030 = vmatprep.mubr.f32.mxu0 %v683
        %1031 = vmatmul.mubr.f32.gmra.mrb[0].mxu0 %v682
        %v1032 = vpop.f32.mrb[0].mxu0
        %v1033 = vadd.f32 0.0, %v1032
        %v1034 = vpop.f32.mrb[0].mxu0
        %v1035 = vadd.f32 0.0, %v1034
        %1036 = vmatprep.mubr.f32.mxu0 %v685
        %1037 = vmatmul.mubr.f32.gmra.mrb[0].mxu0 %v684
        %v1038 = vpop.f32.mrb[0].mxu0
        %v1039 = vadd.f32 0.0, %v1038
        %v1040 = vpop.f32.mrb[0].mxu0
        %v1041 = vadd.f32 0.0, %v1040
        %1042 = vmatprep.mubr.f32.mxu0 %v687
        %1043 = vmatmul.mubr.f32.gmra.mrb[0].mxu0 %v686
        %v1044 = vpop.f32.mrb[0].mxu0
        %v1045 = vadd.f32 0.0, %v1044
        %v1046 = vpop.f32.mrb[0].mxu0
        %v1047 = vadd.f32 0.0, %v1046
        %1048 = vmatprep.mubr.f32.mxu0 %v689
        %1049 = vmatmul.mubr.f32.gmra.mrb[0].mxu0 %v688
        %v1050 = vpop.f32.mrb[0].mxu0
        %v1051 = vadd.f32 0.0, %v1050
        %v1052 = vpop.f32.mrb[0].mxu0
        %v1053 = vadd.f32 0.0, %v1052
        %1054 = vmatprep.mubr.f32.mxu0 %v691
        %1055 = vmatmul.mubr.f32.gmra.mrb[0].mxu0 %v690
        %v1056 = vpop.f32.mrb[0].mxu0
        %v1057 = vadd.f32 0.0, %v1056
        %v1058 = vpop.f32.mrb[0].mxu0
        %v1059 = vadd.f32 0.0, %v1058
        %1060 = vmatprep.mubr.f32.mxu0 %v693
        %1061 = vmatmul.mubr.f32.gmra.mrb[0].mxu0 %v692
        %v1062 = vpop.f32.mrb[0].mxu0
        %v1063 = vadd.f32 0.0, %v1062
        %v1064 = vpop.f32.mrb[0].mxu0
        %v1065 = vadd.f32 0.0, %v1064
        %1066 = vmatprep.mubr.f32.mxu0 %v695
        %1067 = vmatmul.mubr.f32.gmra.mrb[0].mxu0 %v694
        %v1068 = vpop.f32.mrb[0].mxu0
        %v1069 = vadd.f32 0.0, %v1068
        %v1070 = vpop.f32.mrb[0].mxu0
        %v1071 = vadd.f32 0.0, %v1070
        %1072 = vmatprep.mubr.f32.mxu0 %v697
        %1073 = vmatmul.mubr.f32.gmra.mrb[0].mxu0 %v696
        %v1074 = vpop.f32.mrb[0].mxu0
        %v1075 = vadd.f32 0.0, %v1074
        %v1076 = vpop.f32.mrb[0].mxu0
        %v1077 = vadd.f32 0.0, %v1076
        %1078 = vmatprep.mubr.f32.mxu0 %v699
        %1079 = vmatmul.mubr.f32.gmra.mrb[0].mxu0 %v698
        %v1080 = vpop.f32.mrb[0].mxu0
        %v1081 = vadd.f32 0.0, %v1080
        %v1082 = vpop.f32.mrb[0].mxu0
        %v1083 = vadd.f32 0.0, %v1082
        %1084 = vmatprep.mubr.f32.mxu0 %v701
        %1085 = vmatmul.mubr.f32.gmra.mrb[0].mxu0 %v700
        %v1086 = vpop.f32.mrb[0].mxu0
        %v1087 = vadd.f32 0.0, %v1086
        %v1088 = vpop.f32.mrb[0].mxu0
        %v1089 = vadd.f32 0.0, %v1088
        %1090 = vmatprep.mubr.f32.mxu0 %v703
        %1091 = vmatmul.mubr.f32.gmra.mrb[0].mxu0 %v702
        %v1092 = vpop.f32.mrb[0].mxu0
        %v1093 = vadd.f32 0.0, %v1092
        %v1094 = vpop.f32.mrb[0].mxu0
        %v1095 = vadd.f32 0.0, %v1094
        %1096 = vmatprep.mubr.f32.mxu0 %v705
        %1097 = vmatmul.mubr.f32.gmra.mrb[0].mxu0 %v704
        %v1098 = vpop.f32.mrb[0].mxu0
        %v1099 = vadd.f32 0.0, %v1098
        %v1100 = vpop.f32.mrb[0].mxu0
        %v1101 = vadd.f32 0.0, %v1100
        %1102 = vmatprep.mubr.f32.mxu0 %v707
        %1103 = vmatmul.mubr.f32.gmra.mrb[0].mxu0 %v706
        %v1104 = vpop.f32.mrb[0].mxu0
        %v1105 = vadd.f32 0.0, %v1104
        %v1106 = vpop.f32.mrb[0].mxu0
        %v1107 = vadd.f32 0.0, %v1106
        %1108 = vmatprep.mubr.f32.mxu0 %v709
        %1109 = vmatmul.mubr.f32.gmra.mrb[0].mxu0 %v708
        %v1110 = vpop.f32.mrb[0].mxu0
        %v1111 = vadd.f32 0.0, %v1110
        %v1112 = vpop.f32.mrb[0].mxu0
        %v1113 = vadd.f32 0.0, %v1112
        %1114 = vmatprep.mubr.f32.mxu0 %v711
        %1115 = vmatmul.mubr.f32.gmra.mrb[0].mxu0 %v710
        %v1116 = vpop.f32.mrb[0].mxu0
        %v1117 = vadd.f32 0.0, %v1116
        %v1118 = vpop.f32.mrb[0].mxu0
        %v1119 = vadd.f32 0.0, %v1118
        %1120 = vmatprep.mubr.f32.mxu0 %v713
        %1121 = vmatmul.mubr.f32.gmra.mrb[0].mxu0 %v712
        %v1122 = vpop.f32.mrb[0].mxu0
        %v1123 = vadd.f32 0.0, %v1122
        %v1124 = vpop.f32.mrb[0].mxu0
        %v1125 = vadd.f32 0.0, %v1124
        %1126 = vmatprep.mubr.f32.mxu0 %v715
        %1127 = vmatmul.mubr.f32.gmra.mrb[0].mxu0 %v714
        %v1128 = vpop.f32.mrb[0].mxu0
        %v1129 = vadd.f32 0.0, %v1128
        %v1130 = vpop.f32.mrb[0].mxu0
        %v1131 = vadd.f32 0.0, %v1130
        %1132 = vmatprep.mubr.f32.mxu0 %v717
        %1133 = vmatmul.mubr.f32.gmra.mrb[0].mxu0 %v716
        %v1134 = vpop.f32.mrb[0].mxu0
        %v1135 = vadd.f32 0.0, %v1134
        %v1136 = vpop.f32.mrb[0].mxu0
        %v1137 = vadd.f32 0.0, %v1136
        %1138 = vmatprep.mubr.f32.mxu0 %v719
        %1139 = vmatmul.mubr.f32.gmra.mrb[0].mxu0 %v718
        %v1140 = vpop.f32.mrb[0].mxu0
        %v1141 = vadd.f32 0.0, %v1140
        %v1142 = vpop.f32.mrb[0].mxu0
        %v1143 = vadd.f32 0.0, %v1142
        %1144 = vmatprep.mubr.f32.mxu0 %v721
        %1145 = vmatmul.mubr.f32.gmra.mrb[0].mxu0 %v720
        %v1146 = vpop.f32.mrb[0].mxu0
        %v1147 = vadd.f32 0.0, %v1146
        %v1148 = vpop.f32.mrb[0].mxu0
        %v1149 = vadd.f32 0.0, %v1148
        %1150 = vmatprep.mubr.f32.mxu0 %v723
        %1151 = vmatmul.mubr.f32.gmra.mrb[0].mxu0 %v722
        %v1152 = vpop.f32.mrb[0].mxu0
        %v1153 = vadd.f32 0.0, %v1152
        %v1154 = vpop.f32.mrb[0].mxu0
        %v1155 = vadd.f32 0.0, %v1154
        %1156 = vmatprep.mubr.f32.mxu0 %v725
        %1157 = vmatmul.mubr.f32.gmra.mrb[0].mxu0 %v724
        %v1158 = vpop.f32.mrb[0].mxu0
        %v1159 = vadd.f32 0.0, %v1158
        %v1160 = vpop.f32.mrb[0].mxu0
        %v1161 = vadd.f32 0.0, %v1160
        %1162 = vmatprep.mubr.f32.mxu0 %v727
        %1163 = vmatmul.mubr.f32.gmra.mrb[0].mxu0 %v726
        %v1164 = vpop.f32.mrb[0].mxu0
        %v1165 = vadd.f32 0.0, %v1164
        %v1166 = vpop.f32.mrb[0].mxu0
        %v1167 = vadd.f32 0.0, %v1166
        %1168 = vmatprep.mubr.f32.mxu0 %v729
        %1169 = vmatmul.mubr.f32.gmra.mrb[0].mxu0 %v728
        %v1170 = vpop.f32.mrb[0].mxu0
        %v1171 = vadd.f32 0.0, %v1170
        %v1172 = vpop.f32.mrb[0].mxu0
        %v1173 = vadd.f32 0.0, %v1172
        %1174 = vmatprep.mubr.f32.mxu0 %v731
        %1175 = vmatmul.mubr.f32.gmra.mrb[0].mxu0 %v730
        %v1176 = vpop.f32.mrb[0].mxu0
        %v1177 = vadd.f32 0.0, %v1176
        %v1178 = vpop.f32.mrb[0].mxu0
        %v1179 = vadd.f32 0.0, %v1178
        %1180 = vmatprep.mubr.f32.mxu0 %v733
        %1181 = vmatmul.mubr.f32.gmra.mrb[0].mxu0 %v732
        %v1182 = vpop.f32.mrb[0].mxu0
        %v1183 = vadd.f32 0.0, %v1182
        %v1184 = vpop.f32.mrb[0].mxu0
        %v1185 = vadd.f32 0.0, %v1184
        %1186 = vmatprep.mubr.f32.mxu0 %v735
        %1187 = vmatmul.mubr.f32.gmra.mrb[0].mxu0 %v734
        %v1188 = vpop.f32.mrb[0].mxu0
        %v1189 = vadd.f32 0.0, %v1188
        %v1190 = vpop.f32.mrb[0].mxu0
        %v1191 = vadd.f32 0.0, %v1190
        %1192 = vmatprep.mubr.f32.mxu0 %v737
        %1193 = vmatmul.mubr.f32.gmra.mrb[0].mxu0 %v736
        %v1194 = vpop.f32.mrb[0].mxu0
        %v1195 = vadd.f32 0.0, %v1194
        %v1196 = vpop.f32.mrb[0].mxu0
        %v1197 = vadd.f32 0.0, %v1196
        %1198 = vmatprep.mubr.f32.mxu0 %v739
        %1199 = vmatmul.mubr.f32.gmra.mrb[0].mxu0 %v738
        %v1200 = vpop.f32.mrb[0].mxu0
        %v1201 = vadd.f32 0.0, %v1200
        %v1202 = vpop.f32.mrb[0].mxu0
        %v1203 = vadd.f32 0.0, %v1202
        %1204 = vmatprep.mubr.f32.mxu0 %v741
        %1205 = vmatmul.mubr.f32.gmra.mrb[0].mxu0 %v740
        %v1206 = vpop.f32.mrb[0].mxu0
        %v1207 = vadd.f32 0.0, %v1206
        %v1208 = vpop.f32.mrb[0].mxu0
        %v1209 = vadd.f32 0.0, %v1208
        %1210 = vmatprep.mubr.f32.mxu0 %v743
        %1211 = vmatmul.mubr.f32.gmra.mrb[0].mxu0 %v742
        %v1212 = vpop.f32.mrb[0].mxu0
        %v1213 = vadd.f32 0.0, %v1212
        %v1214 = vpop.f32.mrb[0].mxu0
        %v1215 = vadd.f32 0.0, %v1214
        %1216 = vmatprep.mubr.f32.mxu0 %v745
        %1217 = vmatmul.mubr.f32.gmra.mrb[0].mxu0 %v744
        %v1218 = vpop.f32.mrb[0].mxu0
        %v1219 = vadd.f32 0.0, %v1218
        %v1220 = vpop.f32.mrb[0].mxu0
        %v1221 = vadd.f32 0.0, %v1220
        %1222 = vmatprep.mubr.f32.mxu0 %v747
        %1223 = vmatmul.mubr.f32.gmra.mrb[0].mxu0 %v746
        %v1224 = vpop.f32.mrb[0].mxu0
        %v1225 = vadd.f32 0.0, %v1224
        %v1226 = vpop.f32.mrb[0].mxu0
        %v1227 = vadd.f32 0.0, %v1226
        %1228 = vmatprep.mubr.f32.mxu0 %v749
        %1229 = vmatmul.mubr.f32.gmra.mrb[0].mxu0 %v748
        %v1230 = vpop.f32.mrb[0].mxu0
        %v1231 = vadd.f32 0.0, %v1230
        %v1232 = vpop.f32.mrb[0].mxu0
        %v1233 = vadd.f32 0.0, %v1232
        %1234 = vmatprep.mubr.f32.mxu0 %v751
        %1235 = vmatmul.mubr.f32.gmra.mrb[0].mxu0 %v750
        %v1236 = vpop.f32.mrb[0].mxu0
        %v1237 = vadd.f32 0.0, %v1236
        %v1238 = vpop.f32.mrb[0].mxu0
        %v1239 = vadd.f32 0.0, %v1238
        %1240 = vmatprep.mubr.f32.mxu0 %v753
        %1241 = vmatmul.mubr.f32.gmra.mrb[0].mxu0 %v752
        %v1242 = vpop.f32.mrb[0].mxu0
        %v1243 = vadd.f32 0.0, %v1242
        %v1244 = vpop.f32.mrb[0].mxu0
        %v1245 = vadd.f32 0.0, %v1244
        %1246 = vmatprep.mubr.f32.mxu0 %v755
        %1247 = vmatmul.mubr.f32.gmra.mrb[0].mxu0 %v754
        %v1248 = vpop.f32.mrb[0].mxu0
        %v1249 = vadd.f32 0.0, %v1248
        %v1250 = vpop.f32.mrb[0].mxu0
        %v1251 = vadd.f32 0.0, %v1250
        %1252 = vmatprep.mubr.f32.mxu0 %v757
        %1253 = vmatmul.mubr.f32.gmra.mrb[0].mxu0 %v756
        %v1254 = vpop.f32.mrb[0].mxu0
        %v1255 = vadd.f32 0.0, %v1254
        %v1256 = vpop.f32.mrb[0].mxu0
        %v1257 = vadd.f32 0.0, %v1256
        %1258 = vmatprep.mubr.f32.mxu0 %v759
        %1259 = vmatmul.mubr.f32.gmra.mrb[0].mxu0 %v758
        %v1260 = vpop.f32.mrb[0].mxu0
        %v1261 = vadd.f32 0.0, %v1260
        %v1262 = vpop.f32.mrb[0].mxu0
        %v1263 = vadd.f32 0.0, %v1262
        %1264 = vmatprep.mubr.f32.mxu0 %v761
        %1265 = vmatmul.mubr.f32.gmra.mrb[0].mxu0 %v760
        %v1266 = vpop.f32.mrb[0].mxu0
        %v1267 = vadd.f32 0.0, %v1266
        %v1268 = vpop.f32.mrb[0].mxu0
        %v1269 = vadd.f32 0.0, %v1268
        %1270 = vmatprep.mubr.f32.mxu0 %v763
        %1271 = vmatmul.mubr.f32.gmra.mrb[0].mxu0 %v762
        %v1272 = vpop.f32.mrb[0].mxu0
        %v1273 = vadd.f32 0.0, %v1272
        %v1274 = vpop.f32.mrb[0].mxu0
        %v1275 = vadd.f32 0.0, %v1274
        %1276 = vmatprep.mubr.f32.mxu0 %v765
        %1277 = vmatmul.mubr.f32.gmra.mrb[0].mxu0 %v764
        %v1278 = vpop.f32.mrb[0].mxu0
        %v1279 = vadd.f32 0.0, %v1278
        %v1280 = vpop.f32.mrb[0].mxu0
        %v1281 = vadd.f32 0.0, %v1280
        %1282 = vmatprep.mubr.f32.mxu0 %v767
        %1283 = vmatmul.mubr.f32.gmra.mrb[0].mxu0 %v766
        %v1284 = vpop.f32.mrb[0].mxu0
        %v1285 = vadd.f32 0.0, %v1284
        %v1286 = vpop.f32.mrb[0].mxu0
        %v1287 = vadd.f32 0.0, %v1286
        %1288 = vmatprep.mubr.f32.mxu0 %v769
        %1289 = vmatmul.mubr.f32.gmra.mrb[0].mxu0 %v768
        %v1290 = vpop.f32.mrb[0].mxu0
        %v1291 = vadd.f32 0.0, %v1290
        %v1292 = vpop.f32.mrb[0].mxu0
        %v1293 = vadd.f32 0.0, %v1292
        %1294 = vmatprep.mubr.f32.mxu0 %v771
        %1295 = vmatmul.mubr.f32.gmra.mrb[0].mxu0 %v770
        %v1296 = vpop.f32.mrb[0].mxu0
        %v1297 = vadd.f32 0.0, %v1296
        %v1298 = vpop.f32.mrb[0].mxu0
        %v1299 = vadd.f32 0.0, %v1298
        %1300 = vmatprep.mubr.f32.mxu0 %v773
        %1301 = vmatmul.mubr.f32.gmra.mrb[0].mxu0 %v772
        %v1302 = vpop.f32.mrb[0].mxu0
        %v1303 = vadd.f32 0.0, %v1302
        %v1304 = vpop.f32.mrb[0].mxu0
        %v1305 = vadd.f32 0.0, %v1304
        %1306 = vmatprep.mubr.f32.mxu0 %v775
        %1307 = vmatmul.mubr.f32.gmra.mrb[0].mxu0 %v774
        %v1308 = vpop.f32.mrb[0].mxu0
        %v1309 = vadd.f32 0.0, %v1308
        %v1310 = vpop.f32.mrb[0].mxu0
        %v1311 = vadd.f32 0.0, %v1310
        %1312 = vmatprep.mubr.f32.mxu0 %v777
        %1313 = vmatmul.mubr.f32.gmra.mrb[0].mxu0 %v776
        %v1314 = vpop.f32.mrb[0].mxu0
        %v1315 = vadd.f32 0.0, %v1314
        %v1316 = vpop.f32.mrb[0].mxu0
        %v1317 = vadd.f32 0.0, %v1316
        %1318 = vmatprep.mubr.f32.mxu0 %v779
        %1319 = vmatmul.mubr.f32.gmra.mrb[0].mxu0 %v778
        %v1320 = vpop.f32.mrb[0].mxu0
        %v1321 = vadd.f32 0.0, %v1320
        %v1322 = vpop.f32.mrb[0].mxu0
        %v1323 = vadd.f32 0.0, %v1322
        %1324 = vdwg.mxu0
        %1325 = vmatprep.subr.mxu0 0.0
        %1326 = vmatpush1.msra.mxu0 %v782
        %1327 = vmatprep.subr.mxu0 0.0
        %1328 = vmatpush1.msra.mxu0 %v785
        %1329 = vmatprep.subr.mxu0 0.0
        %1330 = vmatpush1.msra.mxu0 %v788
        %1331 = vmatprep.subr.mxu0 0.0
        %1332 = vmatpush1.msra.mxu0 %v791
        %1333 = vmatprep.subr.mxu0 0.0
        %1334 = vmatpush1.msra.mxu0 %v794
        %1335 = vmatprep.subr.mxu0 0.0
        %1336 = vmatpush1.msra.mxu0 %v797
        %1337 = vmatprep.subr.mxu0 0.0
        %1338 = vmatpush1.msra.mxu0 %v800
        %1339 = vmatprep.subr.mxu0 0.0
        %1340 = vmatpush1.msra.mxu0 %v803
        %1341 = vmatprep.subr.mxu0 0.0
        %1342 = vmatpush1.msra.mxu0 %v806
        %1343 = vmatprep.subr.mxu0 0.0
        %1344 = vmatpush1.msra.mxu0 %v809
        %1345 = vmatprep.subr.mxu0 0.0
        %1346 = vmatpush1.msra.mxu0 %v812
        %1347 = vmatprep.subr.mxu0 0.0
        %1348 = vmatpush1.msra.mxu0 %v815
        %1349 = vmatprep.subr.mxu0 0.0
        %1350 = vmatpush1.msra.mxu0 %v818
        %1351 = vmatprep.subr.mxu0 0.0
        %1352 = vmatpush1.msra.mxu0 %v821
        %1353 = vmatprep.subr.mxu0 0.0
        %1354 = vmatpush1.msra.mxu0 %v824
        %1355 = vmatprep.subr.mxu0 0.0
        %1356 = vmatpush1.msra.mxu0 %v827
        %1357 = vmatprep.subr.mxu0 0.0
        %1358 = vmatpush1.msra.mxu0 %v830
        %1359 = vmatprep.subr.mxu0 0.0
        %1360 = vmatpush1.msra.mxu0 %v833
        %1361 = vmatprep.subr.mxu0 0.0
        %1362 = vmatpush1.msra.mxu0 %v836
        %1363 = vmatprep.subr.mxu0 0.0
        %1364 = vmatpush1.msra.mxu0 %v839
        %1365 = vmatprep.subr.mxu0 0.0
        %1366 = vmatpush1.msra.mxu0 %v842
        %1367 = vmatprep.subr.mxu0 0.0
        %1368 = vmatpush1.msra.mxu0 %v845
        %1369 = vmatprep.subr.mxu0 0.0
        %1370 = vmatpush1.msra.mxu0 %v848
        %1371 = vmatprep.subr.mxu0 0.0
        %1372 = vmatpush1.msra.mxu0 %v851
        %1373 = vmatprep.subr.mxu0 0.0
        %1374 = vmatpush1.msra.mxu0 %v854
        %1375 = vmatprep.subr.mxu0 0.0
        %1376 = vmatpush1.msra.mxu0 %v857
        %1377 = vmatprep.subr.mxu0 0.0
        %1378 = vmatpush1.msra.mxu0 %v860
        %1379 = vmatprep.subr.mxu0 0.0
        %1380 = vmatpush1.msra.mxu0 %v863
        %1381 = vmatprep.subr.mxu0 0.0
        %1382 = vmatpush1.msra.mxu0 %v866
        %1383 = vmatprep.subr.mxu0 0.0
        %1384 = vmatpush1.msra.mxu0 %v869
        %1385 = vmatprep.subr.mxu0 0.0
        %1386 = vmatpush1.msra.mxu0 %v872
        %1387 = vmatprep.subr.mxu0 0.0
        %1388 = vmatpush1.msra.mxu0 %v875
        %1389 = vmatprep.mubr.f32.mxu0 %v653
        %1390 = vmatmul.mubr.f32.gmra.mrb[0].mxu0 %v652
        %v1391 = vpop.f32.mrb[0].mxu0
        %v1392 = vadd.f32 0.0, %v1391
        %v1393 = vpop.f32.mrb[0].mxu0
        %1394 = vmatprep.mubr.f32.mxu0 %v655
        %1395 = vmatmul.mubr.f32.gmra.mrb[0].mxu0 %v654
        %v1396 = vpop.f32.mrb[0].mxu0
        %v1397 = vadd.f32 0.0, %v1396
        %v1398 = vpop.f32.mrb[0].mxu0
        %1399 = vmatprep.mubr.f32.mxu0 %v657
        %1400 = vmatmul.mubr.f32.gmra.mrb[0].mxu0 %v656
        %v1401 = vpop.f32.mrb[0].mxu0
        %v1402 = vadd.f32 0.0, %v1401
        %v1403 = vpop.f32.mrb[0].mxu0
        %1404 = vmatprep.mubr.f32.mxu0 %v659
        %1405 = vmatmul.mubr.f32.gmra.mrb[0].mxu0 %v658
        %v1406 = vpop.f32.mrb[0].mxu0
        %v1407 = vadd.f32 0.0, %v1406
        %v1408 = vpop.f32.mrb[0].mxu0
        %1409 = vmatprep.mubr.f32.mxu0 %v661
        %1410 = vmatmul.mubr.f32.gmra.mrb[0].mxu0 %v660
        %v1411 = vpop.f32.mrb[0].mxu0
        %v1412 = vadd.f32 0.0, %v1411
        %v1413 = vpop.f32.mrb[0].mxu0
        %1414 = vmatprep.mubr.f32.mxu0 %v663
        %1415 = vmatmul.mubr.f32.gmra.mrb[0].mxu0 %v662
        %v1416 = vpop.f32.mrb[0].mxu0
        %v1417 = vadd.f32 0.0, %v1416
        %v1418 = vpop.f32.mrb[0].mxu0
        %1419 = vmatprep.mubr.f32.mxu0 %v665
        %1420 = vmatmul.mubr.f32.gmra.mrb[0].mxu0 %v664
        %v1421 = vpop.f32.mrb[0].mxu0
        %v1422 = vadd.f32 0.0, %v1421
        %v1423 = vpop.f32.mrb[0].mxu0
        %1424 = vmatprep.mubr.f32.mxu0 %v667
        %1425 = vmatmul.mubr.f32.gmra.mrb[0].mxu0 %v666
        %v1426 = vpop.f32.mrb[0].mxu0
        %v1427 = vadd.f32 0.0, %v1426
        %v1428 = vpop.f32.mrb[0].mxu0
        %1429 = vmatprep.mubr.f32.mxu0 %v669
        %1430 = vmatmul.mubr.f32.gmra.mrb[0].mxu0 %v668
        %v1431 = vpop.f32.mrb[0].mxu0
        %v1432 = vadd.f32 0.0, %v1431
        %v1433 = vpop.f32.mrb[0].mxu0
        %1434 = vmatprep.mubr.f32.mxu0 %v671
        %1435 = vmatmul.mubr.f32.gmra.mrb[0].mxu0 %v670
        %v1436 = vpop.f32.mrb[0].mxu0
        %v1437 = vadd.f32 0.0, %v1436
        %v1438 = vpop.f32.mrb[0].mxu0
        %1439 = vmatprep.mubr.f32.mxu0 %v673
        %1440 = vmatmul.mubr.f32.gmra.mrb[0].mxu0 %v672
        %v1441 = vpop.f32.mrb[0].mxu0
        %v1442 = vadd.f32 0.0, %v1441
        %v1443 = vpop.f32.mrb[0].mxu0
        %1444 = vmatprep.mubr.f32.mxu0 %v675
        %1445 = vmatmul.mubr.f32.gmra.mrb[0].mxu0 %v674
        %v1446 = vpop.f32.mrb[0].mxu0
        %v1447 = vadd.f32 0.0, %v1446
        %v1448 = vpop.f32.mrb[0].mxu0
        %1449 = vmatprep.mubr.f32.mxu0 %v677
        %1450 = vmatmul.mubr.f32.gmra.mrb[0].mxu0 %v676
        %v1451 = vpop.f32.mrb[0].mxu0
        %v1452 = vadd.f32 0.0, %v1451
        %v1453 = vpop.f32.mrb[0].mxu0
        %1454 = vmatprep.mubr.f32.mxu0 %v679
        %1455 = vmatmul.mubr.f32.gmra.mrb[0].mxu0 %v678
        %v1456 = vpop.f32.mrb[0].mxu0
        %v1457 = vadd.f32 0.0, %v1456
        %v1458 = vpop.f32.mrb[0].mxu0
        %1459 = vmatprep.mubr.f32.mxu0 %v681
        %1460 = vmatmul.mubr.f32.gmra.mrb[0].mxu0 %v680
        %v1461 = vpop.f32.mrb[0].mxu0
        %v1462 = vadd.f32 0.0, %v1461
        %v1463 = vpop.f32.mrb[0].mxu0
        %1464 = vmatprep.mubr.f32.mxu0 %v683
        %1465 = vmatmul.mubr.f32.gmra.mrb[0].mxu0 %v682
        %v1466 = vpop.f32.mrb[0].mxu0
        %v1467 = vadd.f32 0.0, %v1466
        %v1468 = vpop.f32.mrb[0].mxu0
        %1469 = vmatprep.mubr.f32.mxu0 %v685
        %1470 = vmatmul.mubr.f32.gmra.mrb[0].mxu0 %v684
        %v1471 = vpop.f32.mrb[0].mxu0
        %v1472 = vadd.f32 0.0, %v1471
        %v1473 = vpop.f32.mrb[0].mxu0
        %1474 = vmatprep.mubr.f32.mxu0 %v687
        %1475 = vmatmul.mubr.f32.gmra.mrb[0].mxu0 %v686
        %v1476 = vpop.f32.mrb[0].mxu0
        %v1477 = vadd.f32 0.0, %v1476
        %v1478 = vpop.f32.mrb[0].mxu0
        %1479 = vmatprep.mubr.f32.mxu0 %v689
        %1480 = vmatmul.mubr.f32.gmra.mrb[0].mxu0 %v688
        %v1481 = vpop.f32.mrb[0].mxu0
        %v1482 = vadd.f32 0.0, %v1481
        %v1483 = vpop.f32.mrb[0].mxu0
        %1484 = vmatprep.mubr.f32.mxu0 %v691
        %1485 = vmatmul.mubr.f32.gmra.mrb[0].mxu0 %v690
        %v1486 = vpop.f32.mrb[0].mxu0
        %v1487 = vadd.f32 0.0, %v1486
        %v1488 = vpop.f32.mrb[0].mxu0
        %1489 = vmatprep.mubr.f32.mxu0 %v693
        %1490 = vmatmul.mubr.f32.gmra.mrb[0].mxu0 %v692
        %v1491 = vpop.f32.mrb[0].mxu0
        %v1492 = vadd.f32 0.0, %v1491
        %v1493 = vpop.f32.mrb[0].mxu0
        %1494 = vmatprep.mubr.f32.mxu0 %v695
        %1495 = vmatmul.mubr.f32.gmra.mrb[0].mxu0 %v694
        %v1496 = vpop.f32.mrb[0].mxu0
        %v1497 = vadd.f32 0.0, %v1496
        %v1498 = vpop.f32.mrb[0].mxu0
        %1499 = vmatprep.mubr.f32.mxu0 %v697
        %1500 = vmatmul.mubr.f32.gmra.mrb[0].mxu0 %v696
        %v1501 = vpop.f32.mrb[0].mxu0
        %v1502 = vadd.f32 0.0, %v1501
        %v1503 = vpop.f32.mrb[0].mxu0
        %1504 = vmatprep.mubr.f32.mxu0 %v699
        %1505 = vmatmul.mubr.f32.gmra.mrb[0].mxu0 %v698
        %v1506 = vpop.f32.mrb[0].mxu0
        %v1507 = vadd.f32 0.0, %v1506
        %v1508 = vpop.f32.mrb[0].mxu0
        %1509 = vmatprep.mubr.f32.mxu0 %v701
        %1510 = vmatmul.mubr.f32.gmra.mrb[0].mxu0 %v700
        %v1511 = vpop.f32.mrb[0].mxu0
        %v1512 = vadd.f32 0.0, %v1511
        %v1513 = vpop.f32.mrb[0].mxu0
        %1514 = vmatprep.mubr.f32.mxu0 %v703
        %1515 = vmatmul.mubr.f32.gmra.mrb[0].mxu0 %v702
        %v1516 = vpop.f32.mrb[0].mxu0
        %v1517 = vadd.f32 0.0, %v1516
        %v1518 = vpop.f32.mrb[0].mxu0
        %1519 = vmatprep.mubr.f32.mxu0 %v705
        %1520 = vmatmul.mubr.f32.gmra.mrb[0].mxu0 %v704
        %v1521 = vpop.f32.mrb[0].mxu0
        %v1522 = vadd.f32 0.0, %v1521
        %v1523 = vpop.f32.mrb[0].mxu0
        %1524 = vmatprep.mubr.f32.mxu0 %v707
        %1525 = vmatmul.mubr.f32.gmra.mrb[0].mxu0 %v706
        %v1526 = vpop.f32.mrb[0].mxu0
        %v1527 = vadd.f32 0.0, %v1526
        %v1528 = vpop.f32.mrb[0].mxu0
        %1529 = vmatprep.mubr.f32.mxu0 %v709
        %1530 = vmatmul.mubr.f32.gmra.mrb[0].mxu0 %v708
        %v1531 = vpop.f32.mrb[0].mxu0
        %v1532 = vadd.f32 0.0, %v1531
        %v1533 = vpop.f32.mrb[0].mxu0
        %1534 = vmatprep.mubr.f32.mxu0 %v711
        %1535 = vmatmul.mubr.f32.gmra.mrb[0].mxu0 %v710
        %v1536 = vpop.f32.mrb[0].mxu0
        %v1537 = vadd.f32 0.0, %v1536
        %v1538 = vpop.f32.mrb[0].mxu0
        %1539 = vmatprep.mubr.f32.mxu0 %v713
        %1540 = vmatmul.mubr.f32.gmra.mrb[0].mxu0 %v712
        %v1541 = vpop.f32.mrb[0].mxu0
        %v1542 = vadd.f32 0.0, %v1541
        %v1543 = vpop.f32.mrb[0].mxu0
        %1544 = vmatprep.mubr.f32.mxu0 %v715
        %1545 = vmatmul.mubr.f32.gmra.mrb[0].mxu0 %v714
        %v1546 = vpop.f32.mrb[0].mxu0
        %v1547 = vadd.f32 0.0, %v1546
        %v1548 = vpop.f32.mrb[0].mxu0
        %1549 = vmatprep.mubr.f32.mxu0 %v717
        %1550 = vmatmul.mubr.f32.gmra.mrb[0].mxu0 %v716
        %v1551 = vpop.f32.mrb[0].mxu0
        %v1552 = vadd.f32 0.0, %v1551
        %v1553 = vpop.f32.mrb[0].mxu0
        %1554 = vmatprep.mubr.f32.mxu0 %v719
        %1555 = vmatmul.mubr.f32.gmra.mrb[0].mxu0 %v718
        %v1556 = vpop.f32.mrb[0].mxu0
        %v1557 = vadd.f32 0.0, %v1556
        %v1558 = vpop.f32.mrb[0].mxu0
        %1559 = vmatprep.mubr.f32.mxu0 %v721
        %1560 = vmatmul.mubr.f32.gmra.mrb[0].mxu0 %v720
        %v1561 = vpop.f32.mrb[0].mxu0
        %v1562 = vadd.f32 0.0, %v1561
        %v1563 = vpop.f32.mrb[0].mxu0
        %1564 = vmatprep.mubr.f32.mxu0 %v723
        %1565 = vmatmul.mubr.f32.gmra.mrb[0].mxu0 %v722
        %v1566 = vpop.f32.mrb[0].mxu0
        %v1567 = vadd.f32 0.0, %v1566
        %v1568 = vpop.f32.mrb[0].mxu0
        %1569 = vmatprep.mubr.f32.mxu0 %v725
        %1570 = vmatmul.mubr.f32.gmra.mrb[0].mxu0 %v724
        %v1571 = vpop.f32.mrb[0].mxu0
        %v1572 = vadd.f32 0.0, %v1571
        %v1573 = vpop.f32.mrb[0].mxu0
        %1574 = vmatprep.mubr.f32.mxu0 %v727
        %1575 = vmatmul.mubr.f32.gmra.mrb[0].mxu0 %v726
        %v1576 = vpop.f32.mrb[0].mxu0
        %v1577 = vadd.f32 0.0, %v1576
        %v1578 = vpop.f32.mrb[0].mxu0
        %1579 = vmatprep.mubr.f32.mxu0 %v729
        %1580 = vmatmul.mubr.f32.gmra.mrb[0].mxu0 %v728
        %v1581 = vpop.f32.mrb[0].mxu0
        %v1582 = vadd.f32 0.0, %v1581
        %v1583 = vpop.f32.mrb[0].mxu0
        %1584 = vmatprep.mubr.f32.mxu0 %v731
        %1585 = vmatmul.mubr.f32.gmra.mrb[0].mxu0 %v730
        %v1586 = vpop.f32.mrb[0].mxu0
        %v1587 = vadd.f32 0.0, %v1586
        %v1588 = vpop.f32.mrb[0].mxu0
        %1589 = vmatprep.mubr.f32.mxu0 %v733
        %1590 = vmatmul.mubr.f32.gmra.mrb[0].mxu0 %v732
        %v1591 = vpop.f32.mrb[0].mxu0
        %v1592 = vadd.f32 0.0, %v1591
        %v1593 = vpop.f32.mrb[0].mxu0
        %1594 = vmatprep.mubr.f32.mxu0 %v735
        %1595 = vmatmul.mubr.f32.gmra.mrb[0].mxu0 %v734
        %v1596 = vpop.f32.mrb[0].mxu0
        %v1597 = vadd.f32 0.0, %v1596
        %v1598 = vpop.f32.mrb[0].mxu0
        %1599 = vmatprep.mubr.f32.mxu0 %v737
        %1600 = vmatmul.mubr.f32.gmra.mrb[0].mxu0 %v736
        %v1601 = vpop.f32.mrb[0].mxu0
        %v1602 = vadd.f32 0.0, %v1601
        %v1603 = vpop.f32.mrb[0].mxu0
        %1604 = vmatprep.mubr.f32.mxu0 %v739
        %1605 = vmatmul.mubr.f32.gmra.mrb[0].mxu0 %v738
        %v1606 = vpop.f32.mrb[0].mxu0
        %v1607 = vadd.f32 0.0, %v1606
        %v1608 = vpop.f32.mrb[0].mxu0
        %1609 = vmatprep.mubr.f32.mxu0 %v741
        %1610 = vmatmul.mubr.f32.gmra.mrb[0].mxu0 %v740
        %v1611 = vpop.f32.mrb[0].mxu0
        %v1612 = vadd.f32 0.0, %v1611
        %v1613 = vpop.f32.mrb[0].mxu0
        %1614 = vmatprep.mubr.f32.mxu0 %v743
        %1615 = vmatmul.mubr.f32.gmra.mrb[0].mxu0 %v742
        %v1616 = vpop.f32.mrb[0].mxu0
        %v1617 = vadd.f32 0.0, %v1616
        %v1618 = vpop.f32.mrb[0].mxu0
        %1619 = vmatprep.mubr.f32.mxu0 %v745
        %1620 = vmatmul.mubr.f32.gmra.mrb[0].mxu0 %v744
        %v1621 = vpop.f32.mrb[0].mxu0
        %v1622 = vadd.f32 0.0, %v1621
        %v1623 = vpop.f32.mrb[0].mxu0
        %1624 = vmatprep.mubr.f32.mxu0 %v747
        %1625 = vmatmul.mubr.f32.gmra.mrb[0].mxu0 %v746
        %v1626 = vpop.f32.mrb[0].mxu0
        %v1627 = vadd.f32 0.0, %v1626
        %v1628 = vpop.f32.mrb[0].mxu0
        %1629 = vmatprep.mubr.f32.mxu0 %v749
        %1630 = vmatmul.mubr.f32.gmra.mrb[0].mxu0 %v748
        %v1631 = vpop.f32.mrb[0].mxu0
        %v1632 = vadd.f32 0.0, %v1631
        %v1633 = vpop.f32.mrb[0].mxu0
        %1634 = vmatprep.mubr.f32.mxu0 %v751
        %1635 = vmatmul.mubr.f32.gmra.mrb[0].mxu0 %v750
        %v1636 = vpop.f32.mrb[0].mxu0
        %v1637 = vadd.f32 0.0, %v1636
        %v1638 = vpop.f32.mrb[0].mxu0
        %1639 = vmatprep.mubr.f32.mxu0 %v753
        %1640 = vmatmul.mubr.f32.gmra.mrb[0].mxu0 %v752
        %v1641 = vpop.f32.mrb[0].mxu0
        %v1642 = vadd.f32 0.0, %v1641
        %v1643 = vpop.f32.mrb[0].mxu0
        %1644 = vmatprep.mubr.f32.mxu0 %v755
        %1645 = vmatmul.mubr.f32.gmra.mrb[0].mxu0 %v754
        %v1646 = vpop.f32.mrb[0].mxu0
        %v1647 = vadd.f32 0.0, %v1646
        %v1648 = vpop.f32.mrb[0].mxu0
        %1649 = vmatprep.mubr.f32.mxu0 %v757
        %1650 = vmatmul.mubr.f32.gmra.mrb[0].mxu0 %v756
        %v1651 = vpop.f32.mrb[0].mxu0
        %v1652 = vadd.f32 0.0, %v1651
        %v1653 = vpop.f32.mrb[0].mxu0
        %1654 = vmatprep.mubr.f32.mxu0 %v759
        %1655 = vmatmul.mubr.f32.gmra.mrb[0].mxu0 %v758
        %v1656 = vpop.f32.mrb[0].mxu0
        %v1657 = vadd.f32 0.0, %v1656
        %v1658 = vpop.f32.mrb[0].mxu0
        %1659 = vmatprep.mubr.f32.mxu0 %v761
        %1660 = vmatmul.mubr.f32.gmra.mrb[0].mxu0 %v760
        %v1661 = vpop.f32.mrb[0].mxu0
        %v1662 = vadd.f32 0.0, %v1661
        %v1663 = vpop.f32.mrb[0].mxu0
        %1664 = vmatprep.mubr.f32.mxu0 %v763
        %1665 = vmatmul.mubr.f32.gmra.mrb[0].mxu0 %v762
        %v1666 = vpop.f32.mrb[0].mxu0
        %v1667 = vadd.f32 0.0, %v1666
        %v1668 = vpop.f32.mrb[0].mxu0
        %1669 = vmatprep.mubr.f32.mxu0 %v765
        %1670 = vmatmul.mubr.f32.gmra.mrb[0].mxu0 %v764
        %v1671 = vpop.f32.mrb[0].mxu0
        %v1672 = vadd.f32 0.0, %v1671
        %v1673 = vpop.f32.mrb[0].mxu0
        %1674 = vmatprep.mubr.f32.mxu0 %v767
        %1675 = vmatmul.mubr.f32.gmra.mrb[0].mxu0 %v766
        %v1676 = vpop.f32.mrb[0].mxu0
        %v1677 = vadd.f32 0.0, %v1676
        %v1678 = vpop.f32.mrb[0].mxu0
        %1679 = vmatprep.mubr.f32.mxu0 %v769
        %1680 = vmatmul.mubr.f32.gmra.mrb[0].mxu0 %v768
        %v1681 = vpop.f32.mrb[0].mxu0
        %v1682 = vadd.f32 0.0, %v1681
        %v1683 = vpop.f32.mrb[0].mxu0
        %1684 = vmatprep.mubr.f32.mxu0 %v771
        %1685 = vmatmul.mubr.f32.gmra.mrb[0].mxu0 %v770
        %v1686 = vpop.f32.mrb[0].mxu0
        %v1687 = vadd.f32 0.0, %v1686
        %v1688 = vpop.f32.mrb[0].mxu0
        %1689 = vmatprep.mubr.f32.mxu0 %v773
        %1690 = vmatmul.mubr.f32.gmra.mrb[0].mxu0 %v772
        %v1691 = vpop.f32.mrb[0].mxu0
        %v1692 = vadd.f32 0.0, %v1691
        %v1693 = vpop.f32.mrb[0].mxu0
        %1694 = vmatprep.mubr.f32.mxu0 %v775
        %1695 = vmatmul.mubr.f32.gmra.mrb[0].mxu0 %v774
        %v1696 = vpop.f32.mrb[0].mxu0
        %v1697 = vadd.f32 0.0, %v1696
        %v1698 = vpop.f32.mrb[0].mxu0
        %1699 = vmatprep.mubr.f32.mxu0 %v777
        %1700 = vmatmul.mubr.f32.gmra.mrb[0].mxu0 %v776
        %v1701 = vpop.f32.mrb[0].mxu0
        %v1702 = vadd.f32 0.0, %v1701
        %v1703 = vpop.f32.mrb[0].mxu0
        %1704 = vmatprep.mubr.f32.mxu0 %v779
        %1705 = vmatmul.mubr.f32.gmra.mrb[0].mxu0 %v778
        %v1706 = vpop.f32.mrb[0].mxu0
        %v1707 = vadd.f32 0.0, %v1706
        %v1708 = vpop.f32.mrb[0].mxu0
        %1709 = vdwg.mxu0
        %v1710 = vadd.f32 %v460, %v943
        %v1711 = vadd.f32 %v461, %v945
        %v1712 = vadd.f32 %v462, %v1392
        %v1713 = vadd.f32 %v463, %v949
        %v1714 = vadd.f32 %v464, %v951
        %v1715 = vadd.f32 %v465, %v1397
        %v1716 = vadd.f32 %v466, %v955
        %v1717 = vadd.f32 %v467, %v957
        %v1718 = vadd.f32 %v468, %v1402
        %v1719 = vadd.f32 %v469, %v961
        %v1720 = vadd.f32 %v470, %v963
        %v1721 = vadd.f32 %v471, %v1407
        %v1722 = vadd.f32 %v472, %v967
        %v1723 = vadd.f32 %v473, %v969
        %v1724 = vadd.f32 %v474, %v1412
        %v1725 = vadd.f32 %v475, %v973
        %v1726 = vadd.f32 %v476, %v975
        %v1727 = vadd.f32 %v477, %v1417
        %v1728 = vadd.f32 %v478, %v979
        %v1729 = vadd.f32 %v479, %v981
        %v1730 = vadd.f32 %v480, %v1422
        %v1731 = vadd.f32 %v481, %v985
        %v1732 = vadd.f32 %v482, %v987
        %v1733 = vadd.f32 %v483, %v1427
        %v1734 = vadd.f32 %v484, %v991
        %v1735 = vadd.f32 %v485, %v993
        %v1736 = vadd.f32 %v486, %v1432
        %v1737 = vadd.f32 %v487, %v997
        %v1738 = vadd.f32 %v488, %v999
        %v1739 = vadd.f32 %v489, %v1437
        %v1740 = vadd.f32 %v490, %v1003
        %v1741 = vadd.f32 %v491, %v1005
        %v1742 = vadd.f32 %v492, %v1442
        %v1743 = vadd.f32 %v493, %v1009
        %v1744 = vadd.f32 %v494, %v1011
        %v1745 = vadd.f32 %v495, %v1447
        %v1746 = vadd.f32 %v496, %v1015
        %v1747 = vadd.f32 %v497, %v1017
        %v1748 = vadd.f32 %v498, %v1452
        %v1749 = vadd.f32 %v499, %v1021
        %v1750 = vadd.f32 %v500, %v1023
        %v1751 = vadd.f32 %v501, %v1457
        %v1752 = vadd.f32 %v502, %v1027
        %v1753 = vadd.f32 %v503, %v1029
        %v1754 = vadd.f32 %v504, %v1462
        %v1755 = vadd.f32 %v505, %v1033
        %v1756 = vadd.f32 %v506, %v1035
        %v1757 = vadd.f32 %v507, %v1467
        %v1758 = vadd.f32 %v508, %v1039
        %v1759 = vadd.f32 %v509, %v1041
        %v1760 = vadd.f32 %v510, %v1472
        %v1761 = vadd.f32 %v511, %v1045
        %v1762 = vadd.f32 %v512, %v1047
        %v1763 = vadd.f32 %v513, %v1477
        %v1764 = vadd.f32 %v514, %v1051
        %v1765 = vadd.f32 %v515, %v1053
        %v1766 = vadd.f32 %v516, %v1482
        %v1767 = vadd.f32 %v517, %v1057
        %v1768 = vadd.f32 %v518, %v1059
        %v1769 = vadd.f32 %v519, %v1487
        %v1770 = vadd.f32 %v520, %v1063
        %v1771 = vadd.f32 %v521, %v1065
        %v1772 = vadd.f32 %v522, %v1492
        %v1773 = vadd.f32 %v523, %v1069
        %v1774 = vadd.f32 %v524, %v1071
        %v1775 = vadd.f32 %v525, %v1497
        %v1776 = vadd.f32 %v526, %v1075
        %v1777 = vadd.f32 %v527, %v1077
        %v1778 = vadd.f32 %v528, %v1502
        %v1779 = vadd.f32 %v529, %v1081
        %v1780 = vadd.f32 %v530, %v1083
        %v1781 = vadd.f32 %v531, %v1507
        %v1782 = vadd.f32 %v532, %v1087
        %v1783 = vadd.f32 %v533, %v1089
        %v1784 = vadd.f32 %v534, %v1512
        %v1785 = vadd.f32 %v535, %v1093
        %v1786 = vadd.f32 %v536, %v1095
        %v1787 = vadd.f32 %v537, %v1517
        %v1788 = vadd.f32 %v538, %v1099
        %v1789 = vadd.f32 %v539, %v1101
        %v1790 = vadd.f32 %v540, %v1522
        %v1791 = vadd.f32 %v541, %v1105
        %v1792 = vadd.f32 %v542, %v1107
        %v1793 = vadd.f32 %v543, %v1527
        %v1794 = vadd.f32 %v544, %v1111
        %v1795 = vadd.f32 %v545, %v1113
        %v1796 = vadd.f32 %v546, %v1532
        %v1797 = vadd.f32 %v547, %v1117
        %v1798 = vadd.f32 %v548, %v1119
        %v1799 = vadd.f32 %v549, %v1537
        %v1800 = vadd.f32 %v550, %v1123
        %v1801 = vadd.f32 %v551, %v1125
        %v1802 = vadd.f32 %v552, %v1542
        %v1803 = vadd.f32 %v553, %v1129
        %v1804 = vadd.f32 %v554, %v1131
        %v1805 = vadd.f32 %v555, %v1547
        %v1806 = vadd.f32 %v556, %v1135
        %v1807 = vadd.f32 %v557, %v1137
        %v1808 = vadd.f32 %v558, %v1552
        %v1809 = vadd.f32 %v559, %v1141
        %v1810 = vadd.f32 %v560, %v1143
        %v1811 = vadd.f32 %v561, %v1557
        %v1812 = vadd.f32 %v562, %v1147
        %v1813 = vadd.f32 %v563, %v1149
        %v1814 = vadd.f32 %v564, %v1562
        %v1815 = vadd.f32 %v565, %v1153
        %v1816 = vadd.f32 %v566, %v1155
        %v1817 = vadd.f32 %v567, %v1567
        %v1818 = vadd.f32 %v568, %v1159
        %v1819 = vadd.f32 %v569, %v1161
        %v1820 = vadd.f32 %v570, %v1572
        %v1821 = vadd.f32 %v571, %v1165
        %v1822 = vadd.f32 %v572, %v1167
        %v1823 = vadd.f32 %v573, %v1577
        %v1824 = vadd.f32 %v574, %v1171
        %v1825 = vadd.f32 %v575, %v1173
        %v1826 = vadd.f32 %v576, %v1582
        %v1827 = vadd.f32 %v577, %v1177
        %v1828 = vadd.f32 %v578, %v1179
        %v1829 = vadd.f32 %v579, %v1587
        %v1830 = vadd.f32 %v580, %v1183
        %v1831 = vadd.f32 %v581, %v1185
        %v1832 = vadd.f32 %v582, %v1592
        %v1833 = vadd.f32 %v583, %v1189
        %v1834 = vadd.f32 %v584, %v1191
        %v1835 = vadd.f32 %v585, %v1597
        %v1836 = vadd.f32 %v586, %v1195
        %v1837 = vadd.f32 %v587, %v1197
        %v1838 = vadd.f32 %v588, %v1602
        %v1839 = vadd.f32 %v589, %v1201
        %v1840 = vadd.f32 %v590, %v1203
        %v1841 = vadd.f32 %v591, %v1607
        %v1842 = vadd.f32 %v592, %v1207
        %v1843 = vadd.f32 %v593, %v1209
        %v1844 = vadd.f32 %v594, %v1612
        %v1845 = vadd.f32 %v595, %v1213
        %v1846 = vadd.f32 %v596, %v1215
        %v1847 = vadd.f32 %v597, %v1617
        %v1848 = vadd.f32 %v598, %v1219
        %v1849 = vadd.f32 %v599, %v1221
        %v1850 = vadd.f32 %v600, %v1622
        %v1851 = vadd.f32 %v601, %v1225
        %v1852 = vadd.f32 %v602, %v1227
        %v1853 = vadd.f32 %v603, %v1627
        %v1854 = vadd.f32 %v604, %v1231
        %v1855 = vadd.f32 %v605, %v1233
        %v1856 = vadd.f32 %v606, %v1632
        %v1857 = vadd.f32 %v607, %v1237
        %v1858 = vadd.f32 %v608, %v1239
        %v1859 = vadd.f32 %v609, %v1637
        %v1860 = vadd.f32 %v610, %v1243
        %v1861 = vadd.f32 %v611, %v1245
        %v1862 = vadd.f32 %v612, %v1642
        %v1863 = vadd.f32 %v613, %v1249
        %v1864 = vadd.f32 %v614, %v1251
        %v1865 = vadd.f32 %v615, %v1647
        %v1866 = vadd.f32 %v616, %v1255
        %v1867 = vadd.f32 %v617, %v1257
        %v1868 = vadd.f32 %v618, %v1652
        %v1869 = vadd.f32 %v619, %v1261
        %v1870 = vadd.f32 %v620, %v1263
        %v1871 = vadd.f32 %v621, %v1657
        %v1872 = vadd.f32 %v622, %v1267
        %v1873 = vadd.f32 %v623, %v1269
        %v1874 = vadd.f32 %v624, %v1662
        %v1875 = vadd.f32 %v625, %v1273
        %v1876 = vadd.f32 %v626, %v1275
        %v1877 = vadd.f32 %v627, %v1667
        %v1878 = vadd.f32 %v628, %v1279
        %v1879 = vadd.f32 %v629, %v1281
        %v1880 = vadd.f32 %v630, %v1672
        %v1881 = vadd.f32 %v631, %v1285
        %v1882 = vadd.f32 %v632, %v1287
        %v1883 = vadd.f32 %v633, %v1677
        %v1884 = vadd.f32 %v634, %v1291
        %v1885 = vadd.f32 %v635, %v1293
        %v1886 = vadd.f32 %v636, %v1682
        %v1887 = vadd.f32 %v637, %v1297
        %v1888 = vadd.f32 %v638, %v1299
        %v1889 = vadd.f32 %v639, %v1687
        %v1890 = vadd.f32 %v640, %v1303
        %v1891 = vadd.f32 %v641, %v1305
        %v1892 = vadd.f32 %v642, %v1692
        %v1893 = vadd.f32 %v643, %v1309
        %v1894 = vadd.f32 %v644, %v1311
        %v1895 = vadd.f32 %v645, %v1697
        %v1896 = vadd.f32 %v646, %v1315
        %v1897 = vadd.f32 %v647, %v1317
        %v1898 = vadd.f32 %v648, %v1702
        %v1899 = vadd.f32 %v649, %v1321
        %v1900 = vadd.f32 %v650, %v1323
        %v1901 = vadd.f32 %v651, %v1707
        %1902 = vst [vmem:[#allocation2] sm:$0xff] %v1710
        %1903 = vst [vmem:[#allocation2 + $0x8] sm:$0xff] %v1711
        %1904 = vst [vmem:[#allocation2 + $0x10] sm:$0xff] %v1712
        %1905 = vst [vmem:[#allocation2 + $0x18] sm:$0xff] %v1713
        %1906 = vst [vmem:[#allocation2 + $0x20] sm:$0xff] %v1714
        %1907 = vst [vmem:[#allocation2 + $0x28] sm:$0xff] %v1715
        %1908 = vst [vmem:[#allocation2 + $0x30] sm:$0xff] %v1716
        %1909 = vst [vmem:[#allocation2 + $0x38] sm:$0xff] %v1717
        %1910 = vst [vmem:[#allocation2 + $0x40] sm:$0xff] %v1718
        %1911 = vst [vmem:[#allocation2 + $0x48] sm:$0xff] %v1719
        %1912 = vst [vmem:[#allocation2 + $0x50] sm:$0xff] %v1720
        %1913 = vst [vmem:[#allocation2 + $0x58] sm:$0xff] %v1721
        %1914 = vst [vmem:[#allocation2 + $0x60] sm:$0xff] %v1722
        %1915 = vst [vmem:[#allocation2 + $0x68] sm:$0xff] %v1723
        %1916 = vst [vmem:[#allocation2 + $0x70] sm:$0xff] %v1724
        %1917 = vst [vmem:[#allocation2 + $0x78] sm:$0xff] %v1725
        %1918 = vst [vmem:[#allocation2 + $0x80] sm:$0xff] %v1726
        %1919 = vst [vmem:[#allocation2 + $0x88] sm:$0xff] %v1727
        %1920 = vst [vmem:[#allocation2 + $0x90] sm:$0xff] %v1728
        %1921 = vst [vmem:[#allocation2 + $0x98] sm:$0xff] %v1729
        %1922 = vst [vmem:[#allocation2 + $0xa0] sm:$0xff] %v1730
        %1923 = vst [vmem:[#allocation2 + $0xa8] sm:$0xff] %v1731
        %1924 = vst [vmem:[#allocation2 + $0xb0] sm:$0xff] %v1732
        %1925 = vst [vmem:[#allocation2 + $0xb8] sm:$0xff] %v1733
        %1926 = vst [vmem:[#allocation2 + $0xc0] sm:$0xff] %v1734
        %1927 = vst [vmem:[#allocation2 + $0xc8] sm:$0xff] %v1735
        %1928 = vst [vmem:[#allocation2 + $0xd0] sm:$0xff] %v1736
        %1929 = vst [vmem:[#allocation2 + $0xd8] sm:$0xff] %v1737
        %1930 = vst [vmem:[#allocation2 + $0xe0] sm:$0xff] %v1738
        %1931 = vst [vmem:[#allocation2 + $0xe8] sm:$0xff] %v1739
        %1932 = vst [vmem:[#allocation2 + $0xf0] sm:$0xff] %v1740
        %1933 = vst [vmem:[#allocation2 + $0xf8] sm:$0xff] %v1741
        %1934 = vst [vmem:[#allocation2 + $0x100] sm:$0xff] %v1742
        %1935 = vst [vmem:[#allocation2 + $0x108] sm:$0xff] %v1743
        %1936 = vst [vmem:[#allocation2 + $0x110] sm:$0xff] %v1744
        %1937 = vst [vmem:[#allocation2 + $0x118] sm:$0xff] %v1745
        %1938 = vst [vmem:[#allocation2 + $0x120] sm:$0xff] %v1746
        %1939 = vst [vmem:[#allocation2 + $0x128] sm:$0xff] %v1747
        %1940 = vst [vmem:[#allocation2 + $0x130] sm:$0xff] %v1748
        %1941 = vst [vmem:[#allocation2 + $0x138] sm:$0xff] %v1749
        %1942 = vst [vmem:[#allocation2 + $0x140] sm:$0xff] %v1750
        %1943 = vst [vmem:[#allocation2 + $0x148] sm:$0xff] %v1751
        %1944 = vst [vmem:[#allocation2 + $0x150] sm:$0xff] %v1752
        %1945 = vst [vmem:[#allocation2 + $0x158] sm:$0xff] %v1753
        %1946 = vst [vmem:[#allocation2 + $0x160] sm:$0xff] %v1754
        %1947 = vst [vmem:[#allocation2 + $0x168] sm:$0xff] %v1755
        %1948 = vst [vmem:[#allocation2 + $0x170] sm:$0xff] %v1756
        %1949 = vst [vmem:[#allocation2 + $0x178] sm:$0xff] %v1757
        %1950 = vst [vmem:[#allocation2 + $0x180] sm:$0xff] %v1758
        %1951 = vst [vmem:[#allocation2 + $0x188] sm:$0xff] %v1759
        %1952 = vst [vmem:[#allocation2 + $0x190] sm:$0xff] %v1760
        %1953 = vst [vmem:[#allocation2 + $0x198] sm:$0xff] %v1761
        %1954 = vst [vmem:[#allocation2 + $0x1a0] sm:$0xff] %v1762
        %1955 = vst [vmem:[#allocation2 + $0x1a8] sm:$0xff] %v1763
        %1956 = vst [vmem:[#allocation2 + $0x1b0] sm:$0xff] %v1764
        %1957 = vst [vmem:[#allocation2 + $0x1b8] sm:$0xff] %v1765
        %1958 = vst [vmem:[#allocation2 + $0x1c0] sm:$0xff] %v1766
        %1959 = vst [vmem:[#allocation2 + $0x1c8] sm:$0xff] %v1767
        %1960 = vst [vmem:[#allocation2 + $0x1d0] sm:$0xff] %v1768
        %1961 = vst [vmem:[#allocation2 + $0x1d8] sm:$0xff] %v1769
        %1962 = vst [vmem:[#allocation2 + $0x1e0] sm:$0xff] %v1770
        %1963 = vst [vmem:[#allocation2 + $0x1e8] sm:$0xff] %v1771
        %1964 = vst [vmem:[#allocation2 + $0x1f0] sm:$0xff] %v1772
        %1965 = vst [vmem:[#allocation2 + $0x1f8] sm:$0xff] %v1773
        %1966 = vst [vmem:[#allocation2 + $0x200] sm:$0xff] %v1774
        %1967 = vst [vmem:[#allocation2 + $0x208] sm:$0xff] %v1775
        %1968 = vst [vmem:[#allocation2 + $0x210] sm:$0xff] %v1776
        %1969 = vst [vmem:[#allocation2 + $0x218] sm:$0xff] %v1777
        %1970 = vst [vmem:[#allocation2 + $0x220] sm:$0xff] %v1778
        %1971 = vst [vmem:[#allocation2 + $0x228] sm:$0xff] %v1779
        %1972 = vst [vmem:[#allocation2 + $0x230] sm:$0xff] %v1780
        %1973 = vst [vmem:[#allocation2 + $0x238] sm:$0xff] %v1781
        %1974 = vst [vmem:[#allocation2 + $0x240] sm:$0xff] %v1782
        %1975 = vst [vmem:[#allocation2 + $0x248] sm:$0xff] %v1783
        %1976 = vst [vmem:[#allocation2 + $0x250] sm:$0xff] %v1784
        %1977 = vst [vmem:[#allocation2 + $0x258] sm:$0xff] %v1785
        %1978 = vst [vmem:[#allocation2 + $0x260] sm:$0xff] %v1786
        %1979 = vst [vmem:[#allocation2 + $0x268] sm:$0xff] %v1787
        %1980 = vst [vmem:[#allocation2 + $0x270] sm:$0xff] %v1788
        %1981 = vst [vmem:[#allocation2 + $0x278] sm:$0xff] %v1789
        %1982 = vst [vmem:[#allocation2 + $0x280] sm:$0xff] %v1790
        %1983 = vst [vmem:[#allocation2 + $0x288] sm:$0xff] %v1791
        %1984 = vst [vmem:[#allocation2 + $0x290] sm:$0xff] %v1792
        %1985 = vst [vmem:[#allocation2 + $0x298] sm:$0xff] %v1793
        %1986 = vst [vmem:[#allocation2 + $0x2a0] sm:$0xff] %v1794
        %1987 = vst [vmem:[#allocation2 + $0x2a8] sm:$0xff] %v1795
        %1988 = vst [vmem:[#allocation2 + $0x2b0] sm:$0xff] %v1796
        %1989 = vst [vmem:[#allocation2 + $0x2b8] sm:$0xff] %v1797
        %1990 = vst [vmem:[#allocation2 + $0x2c0] sm:$0xff] %v1798
        %1991 = vst [vmem:[#allocation2 + $0x2c8] sm:$0xff] %v1799
        %1992 = vst [vmem:[#allocation2 + $0x2d0] sm:$0xff] %v1800
        %1993 = vst [vmem:[#allocation2 + $0x2d8] sm:$0xff] %v1801
        %1994 = vst [vmem:[#allocation2 + $0x2e0] sm:$0xff] %v1802
        %1995 = vst [vmem:[#allocation2 + $0x2e8] sm:$0xff] %v1803
        %1996 = vst [vmem:[#allocation2 + $0x2f0] sm:$0xff] %v1804
        %1997 = vst [vmem:[#allocation2 + $0x2f8] sm:$0xff] %v1805
        %1998 = vst [vmem:[#allocation2 + $0x300] sm:$0xff] %v1806
        %1999 = vst [vmem:[#allocation2 + $0x308] sm:$0xff] %v1807
        %2000 = vst [vmem:[#allocation2 + $0x310] sm:$0xff] %v1808
        %2001 = vst [vmem:[#allocation2 + $0x318] sm:$0xff] %v1809
        %2002 = vst [vmem:[#allocation2 + $0x320] sm:$0xff] %v1810
        %2003 = vst [vmem:[#allocation2 + $0x328] sm:$0xff] %v1811
        %2004 = vst [vmem:[#allocation2 + $0x330] sm:$0xff] %v1812
        %2005 = vst [vmem:[#allocation2 + $0x338] sm:$0xff] %v1813
        %2006 = vst [vmem:[#allocation2 + $0x340] sm:$0xff] %v1814
        %2007 = vst [vmem:[#allocation2 + $0x348] sm:$0xff] %v1815
        %2008 = vst [vmem:[#allocation2 + $0x350] sm:$0xff] %v1816
        %2009 = vst [vmem:[#allocation2 + $0x358] sm:$0xff] %v1817
        %2010 = vst [vmem:[#allocation2 + $0x360] sm:$0xff] %v1818
        %2011 = vst [vmem:[#allocation2 + $0x368] sm:$0xff] %v1819
        %2012 = vst [vmem:[#allocation2 + $0x370] sm:$0xff] %v1820
        %2013 = vst [vmem:[#allocation2 + $0x378] sm:$0xff] %v1821
        %2014 = vst [vmem:[#allocation2 + $0x380] sm:$0xff] %v1822
        %2015 = vst [vmem:[#allocation2 + $0x388] sm:$0xff] %v1823
        %2016 = vst [vmem:[#allocation2 + $0x390] sm:$0xff] %v1824
        %2017 = vst [vmem:[#allocation2 + $0x398] sm:$0xff] %v1825
        %2018 = vst [vmem:[#allocation2 + $0x3a0] sm:$0xff] %v1826
        %2019 = vst [vmem:[#allocation2 + $0x3a8] sm:$0xff] %v1827
        %2020 = vst [vmem:[#allocation2 + $0x3b0] sm:$0xff] %v1828
        %2021 = vst [vmem:[#allocation2 + $0x3b8] sm:$0xff] %v1829
        %2022 = vst [vmem:[#allocation2 + $0x3c0] sm:$0xff] %v1830
        %2023 = vst [vmem:[#allocation2 + $0x3c8] sm:$0xff] %v1831
        %2024 = vst [vmem:[#allocation2 + $0x3d0] sm:$0xff] %v1832
        %2025 = vst [vmem:[#allocation2 + $0x3d8] sm:$0xff] %v1833
        %2026 = vst [vmem:[#allocation2 + $0x3e0] sm:$0xff] %v1834
        %2027 = vst [vmem:[#allocation2 + $0x3e8] sm:$0xff] %v1835
        %2028 = vst [vmem:[#allocation2 + $0x3f0] sm:$0xff] %v1836
        %2029 = vst [vmem:[#allocation2 + $0x3f8] sm:$0xff] %v1837
        %2030 = vst [vmem:[#allocation2 + $0x400] sm:$0xff] %v1838
        %2031 = vst [vmem:[#allocation2 + $0x408] sm:$0xff] %v1839
        %2032 = vst [vmem:[#allocation2 + $0x410] sm:$0xff] %v1840
        %2033 = vst [vmem:[#allocation2 + $0x418] sm:$0xff] %v1841
        %2034 = vst [vmem:[#allocation2 + $0x420] sm:$0xff] %v1842
        %2035 = vst [vmem:[#allocation2 + $0x428] sm:$0xff] %v1843
        %2036 = vst [vmem:[#allocation2 + $0x430] sm:$0xff] %v1844
        %2037 = vst [vmem:[#allocation2 + $0x438] sm:$0xff] %v1845
        %2038 = vst [vmem:[#allocation2 + $0x440] sm:$0xff] %v1846
        %2039 = vst [vmem:[#allocation2 + $0x448] sm:$0xff] %v1847
        %2040 = vst [vmem:[#allocation2 + $0x450] sm:$0xff] %v1848
        %2041 = vst [vmem:[#allocation2 + $0x458] sm:$0xff] %v1849
        %2042 = vst [vmem:[#allocation2 + $0x460] sm:$0xff] %v1850
        %2043 = vst [vmem:[#allocation2 + $0x468] sm:$0xff] %v1851
        %2044 = vst [vmem:[#allocation2 + $0x470] sm:$0xff] %v1852
        %2045 = vst [vmem:[#allocation2 + $0x478] sm:$0xff] %v1853
        %2046 = vst [vmem:[#allocation2 + $0x480] sm:$0xff] %v1854
        %2047 = vst [vmem:[#allocation2 + $0x488] sm:$0xff] %v1855
        %2048 = vst [vmem:[#allocation2 + $0x490] sm:$0xff] %v1856
        %2049 = vst [vmem:[#allocation2 + $0x498] sm:$0xff] %v1857
        %2050 = vst [vmem:[#allocation2 + $0x4a0] sm:$0xff] %v1858
        %2051 = vst [vmem:[#allocation2 + $0x4a8] sm:$0xff] %v1859
        %2052 = vst [vmem:[#allocation2 + $0x4b0] sm:$0xff] %v1860
        %2053 = vst [vmem:[#allocation2 + $0x4b8] sm:$0xff] %v1861
        %2054 = vst [vmem:[#allocation2 + $0x4c0] sm:$0xff] %v1862
        %2055 = vst [vmem:[#allocation2 + $0x4c8] sm:$0xff] %v1863
        %2056 = vst [vmem:[#allocation2 + $0x4d0] sm:$0xff] %v1864
        %2057 = vst [vmem:[#allocation2 + $0x4d8] sm:$0xff] %v1865
        %2058 = vst [vmem:[#allocation2 + $0x4e0] sm:$0xff] %v1866
        %2059 = vst [vmem:[#allocation2 + $0x4e8] sm:$0xff] %v1867
        %2060 = vst [vmem:[#allocation2 + $0x4f0] sm:$0xff] %v1868
        %2061 = vst [vmem:[#allocation2 + $0x4f8] sm:$0xff] %v1869
        %2062 = vst [vmem:[#allocation2 + $0x500] sm:$0xff] %v1870
        %2063 = vst [vmem:[#allocation2 + $0x508] sm:$0xff] %v1871
        %2064 = vst [vmem:[#allocation2 + $0x510] sm:$0xff] %v1872
        %2065 = vst [vmem:[#allocation2 + $0x518] sm:$0xff] %v1873
        %2066 = vst [vmem:[#allocation2 + $0x520] sm:$0xff] %v1874
        %2067 = vst [vmem:[#allocation2 + $0x528] sm:$0xff] %v1875
        %2068 = vst [vmem:[#allocation2 + $0x530] sm:$0xff] %v1876
        %2069 = vst [vmem:[#allocation2 + $0x538] sm:$0xff] %v1877
        %2070 = vst [vmem:[#allocation2 + $0x540] sm:$0xff] %v1878
        %2071 = vst [vmem:[#allocation2 + $0x548] sm:$0xff] %v1879
        %2072 = vst [vmem:[#allocation2 + $0x550] sm:$0xff] %v1880
        %2073 = vst [vmem:[#allocation2 + $0x558] sm:$0xff] %v1881
        %2074 = vst [vmem:[#allocation2 + $0x560] sm:$0xff] %v1882
        %2075 = vst [vmem:[#allocation2 + $0x568] sm:$0xff] %v1883
        %2076 = vst [vmem:[#allocation2 + $0x570] sm:$0xff] %v1884
        %2077 = vst [vmem:[#allocation2 + $0x578] sm:$0xff] %v1885
        %2078 = vst [vmem:[#allocation2 + $0x580] sm:$0xff] %v1886
        %2079 = vst [vmem:[#allocation2 + $0x588] sm:$0xff] %v1887
        %2080 = vst [vmem:[#allocation2 + $0x590] sm:$0xff] %v1888
        %2081 = vst [vmem:[#allocation2 + $0x598] sm:$0xff] %v1889
        %2082 = vst [vmem:[#allocation2 + $0x5a0] sm:$0xff] %v1890
        %2083 = vst [vmem:[#allocation2 + $0x5a8] sm:$0xff] %v1891
        %2084 = vst [vmem:[#allocation2 + $0x5b0] sm:$0xff] %v1892
        %2085 = vst [vmem:[#allocation2 + $0x5b8] sm:$0xff] %v1893
        %2086 = vst [vmem:[#allocation2 + $0x5c0] sm:$0xff] %v1894
        %2087 = vst [vmem:[#allocation2 + $0x5c8] sm:$0xff] %v1895
        %2088 = vst [vmem:[#allocation2 + $0x5d0] sm:$0xff] %v1896
        %2089 = vst [vmem:[#allocation2 + $0x5d8] sm:$0xff] %v1897
        %2090 = vst [vmem:[#allocation2 + $0x5e0] sm:$0xff] %v1898
        %2091 = vst [vmem:[#allocation2 + $0x5e8] sm:$0xff] %v1899
        %2092 = vst [vmem:[#allocation2 + $0x5f0] sm:$0xff] %v1900
        %2093 = vst [vmem:[#allocation2 + $0x5f8] sm:$0xff] %v1901
        // Predicated region
        $region45: #{causal_self_attention.3} parent=31 // pred_check
          %p2094 = pneg %p264
        $region46: #{causal_self_attention.3} parent=31 // pred_check_branch
          %2096 = sbr.rel (%p2094) target = $region48
        $region47: #{causal_self_attention.3} parent=31 // pred_region
          %v2097 = vld [vmem:[#allocation2] sm:$0xff]
          %v2098 = vld [vmem:[#allocation2 + $0x8] sm:$0xff]
          %v2099 = vld [vmem:[#allocation2 + $0x10] sm:$0xff]
          %v2100 = vld [vmem:[#allocation2 + $0x18] sm:$0xff]
          %v2101 = vld [vmem:[#allocation2 + $0x20] sm:$0xff]
          %v2102 = vld [vmem:[#allocation2 + $0x28] sm:$0xff]
          %v2103 = vld [vmem:[#allocation2 + $0x30] sm:$0xff]
          %v2104 = vld [vmem:[#allocation2 + $0x38] sm:$0xff]
          %v2105 = vld [vmem:[#allocation2 + $0x40] sm:$0xff]
          %v2106 = vld [vmem:[#allocation2 + $0x48] sm:$0xff]
          %v2107 = vld [vmem:[#allocation2 + $0x50] sm:$0xff]
          %v2108 = vld [vmem:[#allocation2 + $0x58] sm:$0xff]
          %v2109 = vld [vmem:[#allocation2 + $0x60] sm:$0xff]
          %v2110 = vld [vmem:[#allocation2 + $0x68] sm:$0xff]
          %v2111 = vld [vmem:[#allocation2 + $0x70] sm:$0xff]
          %v2112 = vld [vmem:[#allocation2 + $0x78] sm:$0xff]
          %v2113 = vld [vmem:[#allocation2 + $0x80] sm:$0xff]
          %v2114 = vld [vmem:[#allocation2 + $0x88] sm:$0xff]
          %v2115 = vld [vmem:[#allocation2 + $0x90] sm:$0xff]
          %v2116 = vld [vmem:[#allocation2 + $0x98] sm:$0xff]
          %v2117 = vld [vmem:[#allocation2 + $0xa0] sm:$0xff]
          %v2118 = vld [vmem:[#allocation2 + $0xa8] sm:$0xff]
          %v2119 = vld [vmem:[#allocation2 + $0xb0] sm:$0xff]
          %v2120 = vld [vmem:[#allocation2 + $0xb8] sm:$0xff]
          %v2121 = vld [vmem:[#allocation2 + $0xc0] sm:$0xff]
          %v2122 = vld [vmem:[#allocation2 + $0xc8] sm:$0xff]
          %v2123 = vld [vmem:[#allocation2 + $0xd0] sm:$0xff]
          %v2124 = vld [vmem:[#allocation2 + $0xd8] sm:$0xff]
          %v2125 = vld [vmem:[#allocation2 + $0xe0] sm:$0xff]
          %v2126 = vld [vmem:[#allocation2 + $0xe8] sm:$0xff]
          %v2127 = vld [vmem:[#allocation2 + $0xf0] sm:$0xff]
          %v2128 = vld [vmem:[#allocation2 + $0xf8] sm:$0xff]
          %v2129 = vld [vmem:[#allocation2 + $0x100] sm:$0xff]
          %v2130 = vld [vmem:[#allocation2 + $0x108] sm:$0xff]
          %v2131 = vld [vmem:[#allocation2 + $0x110] sm:$0xff]
          %v2132 = vld [vmem:[#allocation2 + $0x118] sm:$0xff]
          %v2133 = vld [vmem:[#allocation2 + $0x120] sm:$0xff]
          %v2134 = vld [vmem:[#allocation2 + $0x128] sm:$0xff]
          %v2135 = vld [vmem:[#allocation2 + $0x130] sm:$0xff]
          %v2136 = vld [vmem:[#allocation2 + $0x138] sm:$0xff]
          %v2137 = vld [vmem:[#allocation2 + $0x140] sm:$0xff]
          %v2138 = vld [vmem:[#allocation2 + $0x148] sm:$0xff]
          %v2139 = vld [vmem:[#allocation2 + $0x150] sm:$0xff]
          %v2140 = vld [vmem:[#allocation2 + $0x158] sm:$0xff]
          %v2141 = vld [vmem:[#allocation2 + $0x160] sm:$0xff]
          %v2142 = vld [vmem:[#allocation2 + $0x168] sm:$0xff]
          %v2143 = vld [vmem:[#allocation2 + $0x170] sm:$0xff]
          %v2144 = vld [vmem:[#allocation2 + $0x178] sm:$0xff]
          %v2145 = vld [vmem:[#allocation2 + $0x180] sm:$0xff]
          %v2146 = vld [vmem:[#allocation2 + $0x188] sm:$0xff]
          %v2147 = vld [vmem:[#allocation2 + $0x190] sm:$0xff]
          %v2148 = vld [vmem:[#allocation2 + $0x198] sm:$0xff]
          %v2149 = vld [vmem:[#allocation2 + $0x1a0] sm:$0xff]
          %v2150 = vld [vmem:[#allocation2 + $0x1a8] sm:$0xff]
          %v2151 = vld [vmem:[#allocation2 + $0x1b0] sm:$0xff]
          %v2152 = vld [vmem:[#allocation2 + $0x1b8] sm:$0xff]
          %v2153 = vld [vmem:[#allocation2 + $0x1c0] sm:$0xff]
          %v2154 = vld [vmem:[#allocation2 + $0x1c8] sm:$0xff]
          %v2155 = vld [vmem:[#allocation2 + $0x1d0] sm:$0xff]
          %v2156 = vld [vmem:[#allocation2 + $0x1d8] sm:$0xff]
          %v2157 = vld [vmem:[#allocation2 + $0x1e0] sm:$0xff]
          %v2158 = vld [vmem:[#allocation2 + $0x1e8] sm:$0xff]
          %v2159 = vld [vmem:[#allocation2 + $0x1f0] sm:$0xff]
          %v2160 = vld [vmem:[#allocation2 + $0x1f8] sm:$0xff]
          %v2161 = vld [vmem:[#allocation2 + $0x200] sm:$0xff]
          %v2162 = vld [vmem:[#allocation2 + $0x208] sm:$0xff]
          %v2163 = vld [vmem:[#allocation2 + $0x210] sm:$0xff]
          %v2164 = vld [vmem:[#allocation2 + $0x218] sm:$0xff]
          %v2165 = vld [vmem:[#allocation2 + $0x220] sm:$0xff]
          %v2166 = vld [vmem:[#allocation2 + $0x228] sm:$0xff]
          %v2167 = vld [vmem:[#allocation2 + $0x230] sm:$0xff]
          %v2168 = vld [vmem:[#allocation2 + $0x238] sm:$0xff]
          %v2169 = vld [vmem:[#allocation2 + $0x240] sm:$0xff]
          %v2170 = vld [vmem:[#allocation2 + $0x248] sm:$0xff]
          %v2171 = vld [vmem:[#allocation2 + $0x250] sm:$0xff]
          %v2172 = vld [vmem:[#allocation2 + $0x258] sm:$0xff]
          %v2173 = vld [vmem:[#allocation2 + $0x260] sm:$0xff]
          %v2174 = vld [vmem:[#allocation2 + $0x268] sm:$0xff]
          %v2175 = vld [vmem:[#allocation2 + $0x270] sm:$0xff]
          %v2176 = vld [vmem:[#allocation2 + $0x278] sm:$0xff]
          %v2177 = vld [vmem:[#allocation2 + $0x280] sm:$0xff]
          %v2178 = vld [vmem:[#allocation2 + $0x288] sm:$0xff]
          %v2179 = vld [vmem:[#allocation2 + $0x290] sm:$0xff]
          %v2180 = vld [vmem:[#allocation2 + $0x298] sm:$0xff]
          %v2181 = vld [vmem:[#allocation2 + $0x2a0] sm:$0xff]
          %v2182 = vld [vmem:[#allocation2 + $0x2a8] sm:$0xff]
          %v2183 = vld [vmem:[#allocation2 + $0x2b0] sm:$0xff]
          %v2184 = vld [vmem:[#allocation2 + $0x2b8] sm:$0xff]
          %v2185 = vld [vmem:[#allocation2 + $0x2c0] sm:$0xff]
          %v2186 = vld [vmem:[#allocation2 + $0x2c8] sm:$0xff]
          %v2187 = vld [vmem:[#allocation2 + $0x2d0] sm:$0xff]
          %v2188 = vld [vmem:[#allocation2 + $0x2d8] sm:$0xff]
          %v2189 = vld [vmem:[#allocation2 + $0x2e0] sm:$0xff]
          %v2190 = vld [vmem:[#allocation2 + $0x2e8] sm:$0xff]
          %v2191 = vld [vmem:[#allocation2 + $0x2f0] sm:$0xff]
          %v2192 = vld [vmem:[#allocation2 + $0x2f8] sm:$0xff]
          %v2193 = vld [vmem:[#allocation2 + $0x300] sm:$0xff]
          %v2194 = vld [vmem:[#allocation2 + $0x308] sm:$0xff]
          %v2195 = vld [vmem:[#allocation2 + $0x310] sm:$0xff]
          %v2196 = vld [vmem:[#allocation2 + $0x318] sm:$0xff]
          %v2197 = vld [vmem:[#allocation2 + $0x320] sm:$0xff]
          %v2198 = vld [vmem:[#allocation2 + $0x328] sm:$0xff]
          %v2199 = vld [vmem:[#allocation2 + $0x330] sm:$0xff]
          %v2200 = vld [vmem:[#allocation2 + $0x338] sm:$0xff]
          %v2201 = vld [vmem:[#allocation2 + $0x340] sm:$0xff]
          %v2202 = vld [vmem:[#allocation2 + $0x348] sm:$0xff]
          %v2203 = vld [vmem:[#allocation2 + $0x350] sm:$0xff]
          %v2204 = vld [vmem:[#allocation2 + $0x358] sm:$0xff]
          %v2205 = vld [vmem:[#allocation2 + $0x360] sm:$0xff]
          %v2206 = vld [vmem:[#allocation2 + $0x368] sm:$0xff]
          %v2207 = vld [vmem:[#allocation2 + $0x370] sm:$0xff]
          %v2208 = vld [vmem:[#allocation2 + $0x378] sm:$0xff]
          %v2209 = vld [vmem:[#allocation2 + $0x380] sm:$0xff]
          %v2210 = vld [vmem:[#allocation2 + $0x388] sm:$0xff]
          %v2211 = vld [vmem:[#allocation2 + $0x390] sm:$0xff]
          %v2212 = vld [vmem:[#allocation2 + $0x398] sm:$0xff]
          %v2213 = vld [vmem:[#allocation2 + $0x3a0] sm:$0xff]
          %v2214 = vld [vmem:[#allocation2 + $0x3a8] sm:$0xff]
          %v2215 = vld [vmem:[#allocation2 + $0x3b0] sm:$0xff]
          %v2216 = vld [vmem:[#allocation2 + $0x3b8] sm:$0xff]
          %v2217 = vld [vmem:[#allocation2 + $0x3c0] sm:$0xff]
          %v2218 = vld [vmem:[#allocation2 + $0x3c8] sm:$0xff]
          %v2219 = vld [vmem:[#allocation2 + $0x3d0] sm:$0xff]
          %v2220 = vld [vmem:[#allocation2 + $0x3d8] sm:$0xff]
          %v2221 = vld [vmem:[#allocation2 + $0x3e0] sm:$0xff]
          %v2222 = vld [vmem:[#allocation2 + $0x3e8] sm:$0xff]
          %v2223 = vld [vmem:[#allocation2 + $0x3f0] sm:$0xff]
          %v2224 = vld [vmem:[#allocation2 + $0x3f8] sm:$0xff]
          %v2225 = vld [vmem:[#allocation2 + $0x400] sm:$0xff]
          %v2226 = vld [vmem:[#allocation2 + $0x408] sm:$0xff]
          %v2227 = vld [vmem:[#allocation2 + $0x410] sm:$0xff]
          %v2228 = vld [vmem:[#allocation2 + $0x418] sm:$0xff]
          %v2229 = vld [vmem:[#allocation2 + $0x420] sm:$0xff]
          %v2230 = vld [vmem:[#allocation2 + $0x428] sm:$0xff]
          %v2231 = vld [vmem:[#allocation2 + $0x430] sm:$0xff]
          %v2232 = vld [vmem:[#allocation2 + $0x438] sm:$0xff]
          %v2233 = vld [vmem:[#allocation2 + $0x440] sm:$0xff]
          %v2234 = vld [vmem:[#allocation2 + $0x448] sm:$0xff]
          %v2235 = vld [vmem:[#allocation2 + $0x450] sm:$0xff]
          %v2236 = vld [vmem:[#allocation2 + $0x458] sm:$0xff]
          %v2237 = vld [vmem:[#allocation2 + $0x460] sm:$0xff]
          %v2238 = vld [vmem:[#allocation2 + $0x468] sm:$0xff]
          %v2239 = vld [vmem:[#allocation2 + $0x470] sm:$0xff]
          %v2240 = vld [vmem:[#allocation2 + $0x478] sm:$0xff]
          %v2241 = vld [vmem:[#allocation2 + $0x480] sm:$0xff]
          %v2242 = vld [vmem:[#allocation2 + $0x488] sm:$0xff]
          %v2243 = vld [vmem:[#allocation2 + $0x490] sm:$0xff]
          %v2244 = vld [vmem:[#allocation2 + $0x498] sm:$0xff]
          %v2245 = vld [vmem:[#allocation2 + $0x4a0] sm:$0xff]
          %v2246 = vld [vmem:[#allocation2 + $0x4a8] sm:$0xff]
          %v2247 = vld [vmem:[#allocation2 + $0x4b0] sm:$0xff]
          %v2248 = vld [vmem:[#allocation2 + $0x4b8] sm:$0xff]
          %v2249 = vld [vmem:[#allocation2 + $0x4c0] sm:$0xff]
          %v2250 = vld [vmem:[#allocation2 + $0x4c8] sm:$0xff]
          %v2251 = vld [vmem:[#allocation2 + $0x4d0] sm:$0xff]
          %v2252 = vld [vmem:[#allocation2 + $0x4d8] sm:$0xff]
          %v2253 = vld [vmem:[#allocation2 + $0x4e0] sm:$0xff]
          %v2254 = vld [vmem:[#allocation2 + $0x4e8] sm:$0xff]
          %v2255 = vld [vmem:[#allocation2 + $0x4f0] sm:$0xff]
          %v2256 = vld [vmem:[#allocation2 + $0x4f8] sm:$0xff]
          %v2257 = vld [vmem:[#allocation2 + $0x500] sm:$0xff]
          %v2258 = vld [vmem:[#allocation2 + $0x508] sm:$0xff]
          %v2259 = vld [vmem:[#allocation2 + $0x510] sm:$0xff]
          %v2260 = vld [vmem:[#allocation2 + $0x518] sm:$0xff]
          %v2261 = vld [vmem:[#allocation2 + $0x520] sm:$0xff]
          %v2262 = vld [vmem:[#allocation2 + $0x528] sm:$0xff]
          %v2263 = vld [vmem:[#allocation2 + $0x530] sm:$0xff]
          %v2264 = vld [vmem:[#allocation2 + $0x538] sm:$0xff]
          %v2265 = vld [vmem:[#allocation2 + $0x540] sm:$0xff]
          %v2266 = vld [vmem:[#allocation2 + $0x548] sm:$0xff]
          %v2267 = vld [vmem:[#allocation2 + $0x550] sm:$0xff]
          %v2268 = vld [vmem:[#allocation2 + $0x558] sm:$0xff]
          %v2269 = vld [vmem:[#allocation2 + $0x560] sm:$0xff]
          %v2270 = vld [vmem:[#allocation2 + $0x568] sm:$0xff]
          %v2271 = vld [vmem:[#allocation2 + $0x570] sm:$0xff]
          %v2272 = vld [vmem:[#allocation2 + $0x578] sm:$0xff]
          %v2273 = vld [vmem:[#allocation2 + $0x580] sm:$0xff]
          %v2274 = vld [vmem:[#allocation2 + $0x588] sm:$0xff]
          %v2275 = vld [vmem:[#allocation2 + $0x590] sm:$0xff]
          %v2276 = vld [vmem:[#allocation2 + $0x598] sm:$0xff]
          %v2277 = vld [vmem:[#allocation2 + $0x5a0] sm:$0xff]
          %v2278 = vld [vmem:[#allocation2 + $0x5a8] sm:$0xff]
          %v2279 = vld [vmem:[#allocation2 + $0x5b0] sm:$0xff]
          %v2280 = vld [vmem:[#allocation2 + $0x5b8] sm:$0xff]
          %v2281 = vld [vmem:[#allocation2 + $0x5c0] sm:$0xff]
          %v2282 = vld [vmem:[#allocation2 + $0x5c8] sm:$0xff]
          %v2283 = vld [vmem:[#allocation2 + $0x5d0] sm:$0xff]
          %v2284 = vld [vmem:[#allocation2 + $0x5d8] sm:$0xff]
          %v2285 = vld [vmem:[#allocation2 + $0x5e0] sm:$0xff]
          %v2286 = vld [vmem:[#allocation2 + $0x5e8] sm:$0xff]
          %v2287 = vld [vmem:[#allocation2 + $0x5f0] sm:$0xff]
          %v2288 = vld [vmem:[#allocation2 + $0x5f8] sm:$0xff]
          %v2289 = vld [vmem:[%s260] sm:$0x7]
          %v2291 = vlaneseq
          %v2292 = vshrl.u32 %v2291, 7
          %v2293 = vsub.s32 0, %v2292
          %v2294 = vrot.slane %v2289, %v2293
          %v2295 = vlaneseq
          %v2296 = vshrl.u32 %v2295, 7
          %v2297 = vsub.s32 1, %v2296
          %v2298 = vrot.slane %v2289, %v2297
          %v2299 = vlaneseq
          %v2300 = vshrl.u32 %v2299, 7
          %v2301 = vsub.s32 2, %v2300
          %v2302 = vrot.slane %v2289, %v2301
          %v2306 = vadd.f32 %v2097, %v2294
          %v2307 = vadd.f32 %v2098, %v2298
          %v2308 = vadd.f32 %v2099, %v2302
          %v2309 = vadd.f32 %v2100, %v2294
          %v2310 = vadd.f32 %v2101, %v2298
          %v2311 = vadd.f32 %v2102, %v2302
          %v2312 = vadd.f32 %v2103, %v2294
          %v2313 = vadd.f32 %v2104, %v2298
          %v2314 = vadd.f32 %v2105, %v2302
          %v2315 = vadd.f32 %v2106, %v2294
          %v2316 = vadd.f32 %v2107, %v2298
          %v2317 = vadd.f32 %v2108, %v2302
          %v2318 = vadd.f32 %v2109, %v2294
          %v2319 = vadd.f32 %v2110, %v2298
          %v2320 = vadd.f32 %v2111, %v2302
          %v2321 = vadd.f32 %v2112, %v2294
          %v2322 = vadd.f32 %v2113, %v2298
          %v2323 = vadd.f32 %v2114, %v2302
          %v2324 = vadd.f32 %v2115, %v2294
          %v2325 = vadd.f32 %v2116, %v2298
          %v2326 = vadd.f32 %v2117, %v2302
          %v2327 = vadd.f32 %v2118, %v2294
          %v2328 = vadd.f32 %v2119, %v2298
          %v2329 = vadd.f32 %v2120, %v2302
          %v2330 = vadd.f32 %v2121, %v2294
          %v2331 = vadd.f32 %v2122, %v2298
          %v2332 = vadd.f32 %v2123, %v2302
          %v2333 = vadd.f32 %v2124, %v2294
          %v2334 = vadd.f32 %v2125, %v2298
          %v2335 = vadd.f32 %v2126, %v2302
          %v2336 = vadd.f32 %v2127, %v2294
          %v2337 = vadd.f32 %v2128, %v2298
          %v2338 = vadd.f32 %v2129, %v2302
          %v2339 = vadd.f32 %v2130, %v2294
          %v2340 = vadd.f32 %v2131, %v2298
          %v2341 = vadd.f32 %v2132, %v2302
          %v2342 = vadd.f32 %v2133, %v2294
          %v2343 = vadd.f32 %v2134, %v2298
          %v2344 = vadd.f32 %v2135, %v2302
          %v2345 = vadd.f32 %v2136, %v2294
          %v2346 = vadd.f32 %v2137, %v2298
          %v2347 = vadd.f32 %v2138, %v2302
          %v2348 = vadd.f32 %v2139, %v2294
          %v2349 = vadd.f32 %v2140, %v2298
          %v2350 = vadd.f32 %v2141, %v2302
          %v2351 = vadd.f32 %v2142, %v2294
          %v2352 = vadd.f32 %v2143, %v2298
          %v2353 = vadd.f32 %v2144, %v2302
          %v2354 = vadd.f32 %v2145, %v2294
          %v2355 = vadd.f32 %v2146, %v2298
          %v2356 = vadd.f32 %v2147, %v2302
          %v2357 = vadd.f32 %v2148, %v2294
          %v2358 = vadd.f32 %v2149, %v2298
          %v2359 = vadd.f32 %v2150, %v2302
          %v2360 = vadd.f32 %v2151, %v2294
          %v2361 = vadd.f32 %v2152, %v2298
          %v2362 = vadd.f32 %v2153, %v2302
          %v2363 = vadd.f32 %v2154, %v2294
          %v2364 = vadd.f32 %v2155, %v2298
          %v2365 = vadd.f32 %v2156, %v2302
          %v2366 = vadd.f32 %v2157, %v2294
          %v2367 = vadd.f32 %v2158, %v2298
          %v2368 = vadd.f32 %v2159, %v2302
          %v2369 = vadd.f32 %v2160, %v2294
          %v2370 = vadd.f32 %v2161, %v2298
          %v2371 = vadd.f32 %v2162, %v2302
          %v2372 = vadd.f32 %v2163, %v2294
          %v2373 = vadd.f32 %v2164, %v2298
          %v2374 = vadd.f32 %v2165, %v2302
          %v2375 = vadd.f32 %v2166, %v2294
          %v2376 = vadd.f32 %v2167, %v2298
          %v2377 = vadd.f32 %v2168, %v2302
          %v2378 = vadd.f32 %v2169, %v2294
          %v2379 = vadd.f32 %v2170, %v2298
          %v2380 = vadd.f32 %v2171, %v2302
          %v2381 = vadd.f32 %v2172, %v2294
          %v2382 = vadd.f32 %v2173, %v2298
          %v2383 = vadd.f32 %v2174, %v2302
          %v2384 = vadd.f32 %v2175, %v2294
          %v2385 = vadd.f32 %v2176, %v2298
          %v2386 = vadd.f32 %v2177, %v2302
          %v2387 = vadd.f32 %v2178, %v2294
          %v2388 = vadd.f32 %v2179, %v2298
          %v2389 = vadd.f32 %v2180, %v2302
          %v2390 = vadd.f32 %v2181, %v2294
          %v2391 = vadd.f32 %v2182, %v2298
          %v2392 = vadd.f32 %v2183, %v2302
          %v2393 = vadd.f32 %v2184, %v2294
          %v2394 = vadd.f32 %v2185, %v2298
          %v2395 = vadd.f32 %v2186, %v2302
          %v2396 = vadd.f32 %v2187, %v2294
          %v2397 = vadd.f32 %v2188, %v2298
          %v2398 = vadd.f32 %v2189, %v2302
          %v2399 = vadd.f32 %v2190, %v2294
          %v2400 = vadd.f32 %v2191, %v2298
          %v2401 = vadd.f32 %v2192, %v2302
          %v2402 = vadd.f32 %v2193, %v2294
          %v2403 = vadd.f32 %v2194, %v2298
          %v2404 = vadd.f32 %v2195, %v2302
          %v2405 = vadd.f32 %v2196, %v2294
          %v2406 = vadd.f32 %v2197, %v2298
          %v2407 = vadd.f32 %v2198, %v2302
          %v2408 = vadd.f32 %v2199, %v2294
          %v2409 = vadd.f32 %v2200, %v2298
          %v2410 = vadd.f32 %v2201, %v2302
          %v2411 = vadd.f32 %v2202, %v2294
          %v2412 = vadd.f32 %v2203, %v2298
          %v2413 = vadd.f32 %v2204, %v2302
          %v2414 = vadd.f32 %v2205, %v2294
          %v2415 = vadd.f32 %v2206, %v2298
          %v2416 = vadd.f32 %v2207, %v2302
          %v2417 = vadd.f32 %v2208, %v2294
          %v2418 = vadd.f32 %v2209, %v2298
          %v2419 = vadd.f32 %v2210, %v2302
          %v2420 = vadd.f32 %v2211, %v2294
          %v2421 = vadd.f32 %v2212, %v2298
          %v2422 = vadd.f32 %v2213, %v2302
          %v2423 = vadd.f32 %v2214, %v2294
          %v2424 = vadd.f32 %v2215, %v2298
          %v2425 = vadd.f32 %v2216, %v2302
          %v2426 = vadd.f32 %v2217, %v2294
          %v2427 = vadd.f32 %v2218, %v2298
          %v2428 = vadd.f32 %v2219, %v2302
          %v2429 = vadd.f32 %v2220, %v2294
          %v2430 = vadd.f32 %v2221, %v2298
          %v2431 = vadd.f32 %v2222, %v2302
          %v2432 = vadd.f32 %v2223, %v2294
          %v2433 = vadd.f32 %v2224, %v2298
          %v2434 = vadd.f32 %v2225, %v2302
          %v2435 = vadd.f32 %v2226, %v2294
          %v2436 = vadd.f32 %v2227, %v2298
          %v2437 = vadd.f32 %v2228, %v2302
          %v2438 = vadd.f32 %v2229, %v2294
          %v2439 = vadd.f32 %v2230, %v2298
          %v2440 = vadd.f32 %v2231, %v2302
          %v2441 = vadd.f32 %v2232, %v2294
          %v2442 = vadd.f32 %v2233, %v2298
          %v2443 = vadd.f32 %v2234, %v2302
          %v2444 = vadd.f32 %v2235, %v2294
          %v2445 = vadd.f32 %v2236, %v2298
          %v2446 = vadd.f32 %v2237, %v2302
          %v2447 = vadd.f32 %v2238, %v2294
          %v2448 = vadd.f32 %v2239, %v2298
          %v2449 = vadd.f32 %v2240, %v2302
          %v2450 = vadd.f32 %v2241, %v2294
          %v2451 = vadd.f32 %v2242, %v2298
          %v2452 = vadd.f32 %v2243, %v2302
          %v2453 = vadd.f32 %v2244, %v2294
          %v2454 = vadd.f32 %v2245, %v2298
          %v2455 = vadd.f32 %v2246, %v2302
          %v2456 = vadd.f32 %v2247, %v2294
          %v2457 = vadd.f32 %v2248, %v2298
          %v2458 = vadd.f32 %v2249, %v2302
          %v2459 = vadd.f32 %v2250, %v2294
          %v2460 = vadd.f32 %v2251, %v2298
          %v2461 = vadd.f32 %v2252, %v2302
          %v2462 = vadd.f32 %v2253, %v2294
          %v2463 = vadd.f32 %v2254, %v2298
          %v2464 = vadd.f32 %v2255, %v2302
          %v2465 = vadd.f32 %v2256, %v2294
          %v2466 = vadd.f32 %v2257, %v2298
          %v2467 = vadd.f32 %v2258, %v2302
          %v2468 = vadd.f32 %v2259, %v2294
          %v2469 = vadd.f32 %v2260, %v2298
          %v2470 = vadd.f32 %v2261, %v2302
          %v2471 = vadd.f32 %v2262, %v2294
          %v2472 = vadd.f32 %v2263, %v2298
          %v2473 = vadd.f32 %v2264, %v2302
          %v2474 = vadd.f32 %v2265, %v2294
          %v2475 = vadd.f32 %v2266, %v2298
          %v2476 = vadd.f32 %v2267, %v2302
          %v2477 = vadd.f32 %v2268, %v2294
          %v2478 = vadd.f32 %v2269, %v2298
          %v2479 = vadd.f32 %v2270, %v2302
          %v2480 = vadd.f32 %v2271, %v2294
          %v2481 = vadd.f32 %v2272, %v2298
          %v2482 = vadd.f32 %v2273, %v2302
          %v2483 = vadd.f32 %v2274, %v2294
          %v2484 = vadd.f32 %v2275, %v2298
          %v2485 = vadd.f32 %v2276, %v2302
          %v2486 = vadd.f32 %v2277, %v2294
          %v2487 = vadd.f32 %v2278, %v2298
          %v2488 = vadd.f32 %v2279, %v2302
          %v2489 = vadd.f32 %v2280, %v2294
          %v2490 = vadd.f32 %v2281, %v2298
          %v2491 = vadd.f32 %v2282, %v2302
          %v2492 = vadd.f32 %v2283, %v2294
          %v2493 = vadd.f32 %v2284, %v2298
          %v2494 = vadd.f32 %v2285, %v2302
          %v2495 = vadd.f32 %v2286, %v2294
          %v2496 = vadd.f32 %v2287, %v2298
          %v2497 = vadd.f32 %v2288, %v2302
          %2498 = vst [vmem:[%s252] sm:$0xff] %v2306
          %2499 = vst [vmem:[%s252 + $0x8] sm:$0xff] %v2307
          %2500 = vst [vmem:[%s252 + $0x10] sm:$0xff] %v2308
          %2501 = vst [vmem:[%s252 + $0x18] sm:$0xff] %v2309
          %2502 = vst [vmem:[%s252 + $0x20] sm:$0xff] %v2310
          %2503 = vst [vmem:[%s252 + $0x28] sm:$0xff] %v2311
          %2504 = vst [vmem:[%s252 + $0x30] sm:$0xff] %v2312
          %2505 = vst [vmem:[%s252 + $0x38] sm:$0xff] %v2313
          %2506 = vst [vmem:[%s252 + $0x40] sm:$0xff] %v2314
          %2507 = vst [vmem:[%s252 + $0x48] sm:$0xff] %v2315
          %2508 = vst [vmem:[%s252 + $0x50] sm:$0xff] %v2316
          %2509 = vst [vmem:[%s252 + $0x58] sm:$0xff] %v2317
          %2510 = vst [vmem:[%s252 + $0x60] sm:$0xff] %v2318
          %2511 = vst [vmem:[%s252 + $0x68] sm:$0xff] %v2319
          %2512 = vst [vmem:[%s252 + $0x70] sm:$0xff] %v2320
          %2513 = vst [vmem:[%s252 + $0x78] sm:$0xff] %v2321
          %2514 = vst [vmem:[%s252 + $0x80] sm:$0xff] %v2322
          %2515 = vst [vmem:[%s252 + $0x88] sm:$0xff] %v2323
          %2516 = vst [vmem:[%s252 + $0x90] sm:$0xff] %v2324
          %2517 = vst [vmem:[%s252 + $0x98] sm:$0xff] %v2325
          %2518 = vst [vmem:[%s252 + $0xa0] sm:$0xff] %v2326
          %2519 = vst [vmem:[%s252 + $0xa8] sm:$0xff] %v2327
          %2520 = vst [vmem:[%s252 + $0xb0] sm:$0xff] %v2328
          %2521 = vst [vmem:[%s252 + $0xb8] sm:$0xff] %v2329
          %2522 = vst [vmem:[%s252 + $0xc0] sm:$0xff] %v2330
          %2523 = vst [vmem:[%s252 + $0xc8] sm:$0xff] %v2331
          %2524 = vst [vmem:[%s252 + $0xd0] sm:$0xff] %v2332
          %2525 = vst [vmem:[%s252 + $0xd8] sm:$0xff] %v2333
          %2526 = vst [vmem:[%s252 + $0xe0] sm:$0xff] %v2334
          %2527 = vst [vmem:[%s252 + $0xe8] sm:$0xff] %v2335
          %2528 = vst [vmem:[%s252 + $0xf0] sm:$0xff] %v2336
          %2529 = vst [vmem:[%s252 + $0xf8] sm:$0xff] %v2337
          %2530 = vst [vmem:[%s252 + $0x100] sm:$0xff] %v2338
          %2531 = vst [vmem:[%s252 + $0x108] sm:$0xff] %v2339
          %2532 = vst [vmem:[%s252 + $0x110] sm:$0xff] %v2340
          %2533 = vst [vmem:[%s252 + $0x118] sm:$0xff] %v2341
          %2534 = vst [vmem:[%s252 + $0x120] sm:$0xff] %v2342
          %2535 = vst [vmem:[%s252 + $0x128] sm:$0xff] %v2343
          %2536 = vst [vmem:[%s252 + $0x130] sm:$0xff] %v2344
          %2537 = vst [vmem:[%s252 + $0x138] sm:$0xff] %v2345
          %2538 = vst [vmem:[%s252 + $0x140] sm:$0xff] %v2346
          %2539 = vst [vmem:[%s252 + $0x148] sm:$0xff] %v2347
          %2540 = vst [vmem:[%s252 + $0x150] sm:$0xff] %v2348
          %2541 = vst [vmem:[%s252 + $0x158] sm:$0xff] %v2349
          %2542 = vst [vmem:[%s252 + $0x160] sm:$0xff] %v2350
          %2543 = vst [vmem:[%s252 + $0x168] sm:$0xff] %v2351
          %2544 = vst [vmem:[%s252 + $0x170] sm:$0xff] %v2352
          %2545 = vst [vmem:[%s252 + $0x178] sm:$0xff] %v2353
          %2546 = vst [vmem:[%s252 + $0x180] sm:$0xff] %v2354
          %2547 = vst [vmem:[%s252 + $0x188] sm:$0xff] %v2355
          %2548 = vst [vmem:[%s252 + $0x190] sm:$0xff] %v2356
          %2549 = vst [vmem:[%s252 + $0x198] sm:$0xff] %v2357
          %2550 = vst [vmem:[%s252 + $0x1a0] sm:$0xff] %v2358
          %2551 = vst [vmem:[%s252 + $0x1a8] sm:$0xff] %v2359
          %2552 = vst [vmem:[%s252 + $0x1b0] sm:$0xff] %v2360
          %2553 = vst [vmem:[%s252 + $0x1b8] sm:$0xff] %v2361
          %2554 = vst [vmem:[%s252 + $0x1c0] sm:$0xff] %v2362
          %2555 = vst [vmem:[%s252 + $0x1c8] sm:$0xff] %v2363
          %2556 = vst [vmem:[%s252 + $0x1d0] sm:$0xff] %v2364
          %2557 = vst [vmem:[%s252 + $0x1d8] sm:$0xff] %v2365
          %2558 = vst [vmem:[%s252 + $0x1e0] sm:$0xff] %v2366
          %2559 = vst [vmem:[%s252 + $0x1e8] sm:$0xff] %v2367
          %2560 = vst [vmem:[%s252 + $0x1f0] sm:$0xff] %v2368
          %2561 = vst [vmem:[%s252 + $0x1f8] sm:$0xff] %v2369
          %2562 = vst [vmem:[%s252 + $0x200] sm:$0xff] %v2370
          %2563 = vst [vmem:[%s252 + $0x208] sm:$0xff] %v2371
          %2564 = vst [vmem:[%s252 + $0x210] sm:$0xff] %v2372
          %2565 = vst [vmem:[%s252 + $0x218] sm:$0xff] %v2373
          %2566 = vst [vmem:[%s252 + $0x220] sm:$0xff] %v2374
          %2567 = vst [vmem:[%s252 + $0x228] sm:$0xff] %v2375
          %2568 = vst [vmem:[%s252 + $0x230] sm:$0xff] %v2376
          %2569 = vst [vmem:[%s252 + $0x238] sm:$0xff] %v2377
          %2570 = vst [vmem:[%s252 + $0x240] sm:$0xff] %v2378
          %2571 = vst [vmem:[%s252 + $0x248] sm:$0xff] %v2379
          %2572 = vst [vmem:[%s252 + $0x250] sm:$0xff] %v2380
          %2573 = vst [vmem:[%s252 + $0x258] sm:$0xff] %v2381
          %2574 = vst [vmem:[%s252 + $0x260] sm:$0xff] %v2382
          %2575 = vst [vmem:[%s252 + $0x268] sm:$0xff] %v2383
          %2576 = vst [vmem:[%s252 + $0x270] sm:$0xff] %v2384
          %2577 = vst [vmem:[%s252 + $0x278] sm:$0xff] %v2385
          %2578 = vst [vmem:[%s252 + $0x280] sm:$0xff] %v2386
          %2579 = vst [vmem:[%s252 + $0x288] sm:$0xff] %v2387
          %2580 = vst [vmem:[%s252 + $0x290] sm:$0xff] %v2388
          %2581 = vst [vmem:[%s252 + $0x298] sm:$0xff] %v2389
          %2582 = vst [vmem:[%s252 + $0x2a0] sm:$0xff] %v2390
          %2583 = vst [vmem:[%s252 + $0x2a8] sm:$0xff] %v2391
          %2584 = vst [vmem:[%s252 + $0x2b0] sm:$0xff] %v2392
          %2585 = vst [vmem:[%s252 + $0x2b8] sm:$0xff] %v2393
          %2586 = vst [vmem:[%s252 + $0x2c0] sm:$0xff] %v2394
          %2587 = vst [vmem:[%s252 + $0x2c8] sm:$0xff] %v2395
          %2588 = vst [vmem:[%s252 + $0x2d0] sm:$0xff] %v2396
          %2589 = vst [vmem:[%s252 + $0x2d8] sm:$0xff] %v2397
          %2590 = vst [vmem:[%s252 + $0x2e0] sm:$0xff] %v2398
          %2591 = vst [vmem:[%s252 + $0x2e8] sm:$0xff] %v2399
          %2592 = vst [vmem:[%s252 + $0x2f0] sm:$0xff] %v2400
          %2593 = vst [vmem:[%s252 + $0x2f8] sm:$0xff] %v2401
          %2594 = vst [vmem:[%s252 + $0x300] sm:$0xff] %v2402
          %2595 = vst [vmem:[%s252 + $0x308] sm:$0xff] %v2403
          %2596 = vst [vmem:[%s252 + $0x310] sm:$0xff] %v2404
          %2597 = vst [vmem:[%s252 + $0x318] sm:$0xff] %v2405
          %2598 = vst [vmem:[%s252 + $0x320] sm:$0xff] %v2406
          %2599 = vst [vmem:[%s252 + $0x328] sm:$0xff] %v2407
          %2600 = vst [vmem:[%s252 + $0x330] sm:$0xff] %v2408
          %2601 = vst [vmem:[%s252 + $0x338] sm:$0xff] %v2409
          %2602 = vst [vmem:[%s252 + $0x340] sm:$0xff] %v2410
          %2603 = vst [vmem:[%s252 + $0x348] sm:$0xff] %v2411
          %2604 = vst [vmem:[%s252 + $0x350] sm:$0xff] %v2412
          %2605 = vst [vmem:[%s252 + $0x358] sm:$0xff] %v2413
          %2606 = vst [vmem:[%s252 + $0x360] sm:$0xff] %v2414
          %2607 = vst [vmem:[%s252 + $0x368] sm:$0xff] %v2415
          %2608 = vst [vmem:[%s252 + $0x370] sm:$0xff] %v2416
          %2609 = vst [vmem:[%s252 + $0x378] sm:$0xff] %v2417
          %2610 = vst [vmem:[%s252 + $0x380] sm:$0xff] %v2418
          %2611 = vst [vmem:[%s252 + $0x388] sm:$0xff] %v2419
          %2612 = vst [vmem:[%s252 + $0x390] sm:$0xff] %v2420
          %2613 = vst [vmem:[%s252 + $0x398] sm:$0xff] %v2421
          %2614 = vst [vmem:[%s252 + $0x3a0] sm:$0xff] %v2422
          %2615 = vst [vmem:[%s252 + $0x3a8] sm:$0xff] %v2423
          %2616 = vst [vmem:[%s252 + $0x3b0] sm:$0xff] %v2424
          %2617 = vst [vmem:[%s252 + $0x3b8] sm:$0xff] %v2425
          %2618 = vst [vmem:[%s252 + $0x3c0] sm:$0xff] %v2426
          %2619 = vst [vmem:[%s252 + $0x3c8] sm:$0xff] %v2427
          %2620 = vst [vmem:[%s252 + $0x3d0] sm:$0xff] %v2428
          %2621 = vst [vmem:[%s252 + $0x3d8] sm:$0xff] %v2429
          %2622 = vst [vmem:[%s252 + $0x3e0] sm:$0xff] %v2430
          %2623 = vst [vmem:[%s252 + $0x3e8] sm:$0xff] %v2431
          %2624 = vst [vmem:[%s252 + $0x3f0] sm:$0xff] %v2432
          %2625 = vst [vmem:[%s252 + $0x3f8] sm:$0xff] %v2433
          %2626 = vst [vmem:[%s252 + $0x400] sm:$0xff] %v2434
          %2627 = vst [vmem:[%s252 + $0x408] sm:$0xff] %v2435
          %2628 = vst [vmem:[%s252 + $0x410] sm:$0xff] %v2436
          %2629 = vst [vmem:[%s252 + $0x418] sm:$0xff] %v2437
          %2630 = vst [vmem:[%s252 + $0x420] sm:$0xff] %v2438
          %2631 = vst [vmem:[%s252 + $0x428] sm:$0xff] %v2439
          %2632 = vst [vmem:[%s252 + $0x430] sm:$0xff] %v2440
          %2633 = vst [vmem:[%s252 + $0x438] sm:$0xff] %v2441
          %2634 = vst [vmem:[%s252 + $0x440] sm:$0xff] %v2442
          %2635 = vst [vmem:[%s252 + $0x448] sm:$0xff] %v2443
          %2636 = vst [vmem:[%s252 + $0x450] sm:$0xff] %v2444
          %2637 = vst [vmem:[%s252 + $0x458] sm:$0xff] %v2445
          %2638 = vst [vmem:[%s252 + $0x460] sm:$0xff] %v2446
          %2639 = vst [vmem:[%s252 + $0x468] sm:$0xff] %v2447
          %2640 = vst [vmem:[%s252 + $0x470] sm:$0xff] %v2448
          %2641 = vst [vmem:[%s252 + $0x478] sm:$0xff] %v2449
          %2642 = vst [vmem:[%s252 + $0x480] sm:$0xff] %v2450
          %2643 = vst [vmem:[%s252 + $0x488] sm:$0xff] %v2451
          %2644 = vst [vmem:[%s252 + $0x490] sm:$0xff] %v2452
          %2645 = vst [vmem:[%s252 + $0x498] sm:$0xff] %v2453
          %2646 = vst [vmem:[%s252 + $0x4a0] sm:$0xff] %v2454
          %2647 = vst [vmem:[%s252 + $0x4a8] sm:$0xff] %v2455
          %2648 = vst [vmem:[%s252 + $0x4b0] sm:$0xff] %v2456
          %2649 = vst [vmem:[%s252 + $0x4b8] sm:$0xff] %v2457
          %2650 = vst [vmem:[%s252 + $0x4c0] sm:$0xff] %v2458
          %2651 = vst [vmem:[%s252 + $0x4c8] sm:$0xff] %v2459
          %2652 = vst [vmem:[%s252 + $0x4d0] sm:$0xff] %v2460
          %2653 = vst [vmem:[%s252 + $0x4d8] sm:$0xff] %v2461
          %2654 = vst [vmem:[%s252 + $0x4e0] sm:$0xff] %v2462
          %2655 = vst [vmem:[%s252 + $0x4e8] sm:$0xff] %v2463
          %2656 = vst [vmem:[%s252 + $0x4f0] sm:$0xff] %v2464
          %2657 = vst [vmem:[%s252 + $0x4f8] sm:$0xff] %v2465
          %2658 = vst [vmem:[%s252 + $0x500] sm:$0xff] %v2466
          %2659 = vst [vmem:[%s252 + $0x508] sm:$0xff] %v2467
          %2660 = vst [vmem:[%s252 + $0x510] sm:$0xff] %v2468
          %2661 = vst [vmem:[%s252 + $0x518] sm:$0xff] %v2469
          %2662 = vst [vmem:[%s252 + $0x520] sm:$0xff] %v2470
          %2663 = vst [vmem:[%s252 + $0x528] sm:$0xff] %v2471
          %2664 = vst [vmem:[%s252 + $0x530] sm:$0xff] %v2472
          %2665 = vst [vmem:[%s252 + $0x538] sm:$0xff] %v2473
          %2666 = vst [vmem:[%s252 + $0x540] sm:$0xff] %v2474
          %2667 = vst [vmem:[%s252 + $0x548] sm:$0xff] %v2475
          %2668 = vst [vmem:[%s252 + $0x550] sm:$0xff] %v2476
          %2669 = vst [vmem:[%s252 + $0x558] sm:$0xff] %v2477
          %2670 = vst [vmem:[%s252 + $0x560] sm:$0xff] %v2478
          %2671 = vst [vmem:[%s252 + $0x568] sm:$0xff] %v2479
          %2672 = vst [vmem:[%s252 + $0x570] sm:$0xff] %v2480
          %2673 = vst [vmem:[%s252 + $0x578] sm:$0xff] %v2481
          %2674 = vst [vmem:[%s252 + $0x580] sm:$0xff] %v2482
          %2675 = vst [vmem:[%s252 + $0x588] sm:$0xff] %v2483
          %2676 = vst [vmem:[%s252 + $0x590] sm:$0xff] %v2484
          %2677 = vst [vmem:[%s252 + $0x598] sm:$0xff] %v2485
          %2678 = vst [vmem:[%s252 + $0x5a0] sm:$0xff] %v2486
          %2679 = vst [vmem:[%s252 + $0x5a8] sm:$0xff] %v2487
          %2680 = vst [vmem:[%s252 + $0x5b0] sm:$0xff] %v2488
          %2681 = vst [vmem:[%s252 + $0x5b8] sm:$0xff] %v2489
          %2682 = vst [vmem:[%s252 + $0x5c0] sm:$0xff] %v2490
          %2683 = vst [vmem:[%s252 + $0x5c8] sm:$0xff] %v2491
          %2684 = vst [vmem:[%s252 + $0x5d0] sm:$0xff] %v2492
          %2685 = vst [vmem:[%s252 + $0x5d8] sm:$0xff] %v2493
          %2686 = vst [vmem:[%s252 + $0x5e0] sm:$0xff] %v2494
          %2687 = vst [vmem:[%s252 + $0x5e8] sm:$0xff] %v2495
          %2688 = vst [vmem:[%s252 + $0x5f0] sm:$0xff] %v2496
          %2689 = vst [vmem:[%s252 + $0x5f8] sm:$0xff] %v2497
        $region48: #{causal_self_attention.3} parent=31 // pred_fallthru
          _
        %s2690 = sand.u32 %s129, 1
        %s2691 = sand.u32 %s129, 1
        %s2692 = smul.addr %s2691, 1536
        %s2693 = scalar_lea.vmem [#allocation7], %s2692
        // Predicated region
        $region49: #{causal_self_attention.3} parent=31 // pred_check
          %p2694 = pneg %p139
        $region50: #{causal_self_attention.3} parent=31 // pred_check_branch
          %2696 = sbr.rel (%p2694) target = $region52
        $region51: #{causal_self_attention.3} parent=31 // pred_region
          %s2697 = smul.u32 64, %s23
          %s2698 = smul.u32 3, %s24
          %s2699 = smul.addr %s2697, 6
          %s2700 = sadd.s32 %s2698, %s2699
          %s2701 = smul.addr %s2700, 8
          %s2702 = scalar_lea.vmem %s3, %s2701
          // Predicated region
          $region53: #{causal_self_attention.3} parent=51 // pred_check
            _
          $region54: #{causal_self_attention.3} parent=51 // pred_check_branch
            %2704 = sbr.rel (0) target = $region56
          $region55: #{causal_self_attention.3} parent=51 // pred_region
            // Predicated region
            $region57: #{causal_self_attention.3} parent=55 // pred_check
              _
            $region58: #{causal_self_attention.3} parent=55 // pred_check_branch
              %2706 = sbr.rel (0) target = $region60
            $region59: #{causal_self_attention.3} parent=55 // pred_region
              loop: start=0, step=1, limit=1
              $region61: #{causal_self_attention.3} parent=59 // loop_pre_header
                _
              $region62: #{causal_self_attention.3} parent=59 // loop_header
                %s2708 = sphi 0, %s2712
                %p2709 = scmp.ge.s32.totalorder %s2708, 1
                %s2713 = sphi %s2693, %s2693
                %s2714 = sphi %s2702, %s2702
              $region63: #{causal_self_attention.3} parent=59 // loop_header_branch
                %2711 = sbr.rel (%p2709) target = $region67
              $region64: #{causal_self_attention.3} parent=59 // loop_body
                %v2715 = vld [vmem:[%s2713] sm:$0xff]
                %2716 = vst [vmem:[%s2714] sm:$0xff] %v2715
                %v2717 = vld [vmem:[%s2713 + $0x8] sm:$0xff]
                %2718 = vst [vmem:[%s2714 + $0x8] sm:$0xff] %v2717
                %v2719 = vld [vmem:[%s2713 + $0x10] sm:$0xff]
                %2720 = vst [vmem:[%s2714 + $0x10] sm:$0xff] %v2719
                %v2721 = vld [vmem:[%s2713 + $0x18] sm:$0xff]
                %2722 = vst [vmem:[%s2714 + $0x30] sm:$0xff] %v2721
                %v2723 = vld [vmem:[%s2713 + $0x20] sm:$0xff]
                %2724 = vst [vmem:[%s2714 + $0x38] sm:$0xff] %v2723
                %v2725 = vld [vmem:[%s2713 + $0x28] sm:$0xff]
                %2726 = vst [vmem:[%s2714 + $0x40] sm:$0xff] %v2725
                %v2727 = vld [vmem:[%s2713 + $0x30] sm:$0xff]
                %2728 = vst [vmem:[%s2714 + $0x60] sm:$0xff] %v2727
                %v2729 = vld [vmem:[%s2713 + $0x38] sm:$0xff]
                %2730 = vst [vmem:[%s2714 + $0x68] sm:$0xff] %v2729
                %v2731 = vld [vmem:[%s2713 + $0x40] sm:$0xff]
                %2732 = vst [vmem:[%s2714 + $0x70] sm:$0xff] %v2731
                %v2733 = vld [vmem:[%s2713 + $0x48] sm:$0xff]
                %2734 = vst [vmem:[%s2714 + $0x90] sm:$0xff] %v2733
                %v2735 = vld [vmem:[%s2713 + $0x50] sm:$0xff]
                %2736 = vst [vmem:[%s2714 + $0x98] sm:$0xff] %v2735
                %v2737 = vld [vmem:[%s2713 + $0x58] sm:$0xff]
                %2738 = vst [vmem:[%s2714 + $0xa0] sm:$0xff] %v2737
                %v2739 = vld [vmem:[%s2713 + $0x60] sm:$0xff]
                %2740 = vst [vmem:[%s2714 + $0xc0] sm:$0xff] %v2739
                %v2741 = vld [vmem:[%s2713 + $0x68] sm:$0xff]
                %2742 = vst [vmem:[%s2714 + $0xc8] sm:$0xff] %v2741
                %v2743 = vld [vmem:[%s2713 + $0x70] sm:$0xff]
                %2744 = vst [vmem:[%s2714 + $0xd0] sm:$0xff] %v2743
                %v2745 = vld [vmem:[%s2713 + $0x78] sm:$0xff]
                %2746 = vst [vmem:[%s2714 + $0xf0] sm:$0xff] %v2745
                %v2747 = vld [vmem:[%s2713 + $0x80] sm:$0xff]
                %2748 = vst [vmem:[%s2714 + $0xf8] sm:$0xff] %v2747
                %v2749 = vld [vmem:[%s2713 + $0x88] sm:$0xff]
                %2750 = vst [vmem:[%s2714 + $0x100] sm:$0xff] %v2749
                %v2751 = vld [vmem:[%s2713 + $0x90] sm:$0xff]
                %2752 = vst [vmem:[%s2714 + $0x120] sm:$0xff] %v2751
                %v2753 = vld [vmem:[%s2713 + $0x98] sm:$0xff]
                %2754 = vst [vmem:[%s2714 + $0x128] sm:$0xff] %v2753
                %v2755 = vld [vmem:[%s2713 + $0xa0] sm:$0xff]
                %2756 = vst [vmem:[%s2714 + $0x130] sm:$0xff] %v2755
                %v2757 = vld [vmem:[%s2713 + $0xa8] sm:$0xff]
                %2758 = vst [vmem:[%s2714 + $0x150] sm:$0xff] %v2757
                %v2759 = vld [vmem:[%s2713 + $0xb0] sm:$0xff]
                %2760 = vst [vmem:[%s2714 + $0x158] sm:$0xff] %v2759
                %v2761 = vld [vmem:[%s2713 + $0xb8] sm:$0xff]
                %2762 = vst [vmem:[%s2714 + $0x160] sm:$0xff] %v2761
                %v2763 = vld [vmem:[%s2713 + $0xc0] sm:$0xff]
                %2764 = vst [vmem:[%s2714 + $0x180] sm:$0xff] %v2763
                %v2765 = vld [vmem:[%s2713 + $0xc8] sm:$0xff]
                %2766 = vst [vmem:[%s2714 + $0x188] sm:$0xff] %v2765
                %v2767 = vld [vmem:[%s2713 + $0xd0] sm:$0xff]
                %2768 = vst [vmem:[%s2714 + $0x190] sm:$0xff] %v2767
                %v2769 = vld [vmem:[%s2713 + $0xd8] sm:$0xff]
                %2770 = vst [vmem:[%s2714 + $0x1b0] sm:$0xff] %v2769
                %v2771 = vld [vmem:[%s2713 + $0xe0] sm:$0xff]
                %2772 = vst [vmem:[%s2714 + $0x1b8] sm:$0xff] %v2771
                %v2773 = vld [vmem:[%s2713 + $0xe8] sm:$0xff]
                %2774 = vst [vmem:[%s2714 + $0x1c0] sm:$0xff] %v2773
                %v2775 = vld [vmem:[%s2713 + $0xf0] sm:$0xff]
                %2776 = vst [vmem:[%s2714 + $0x1e0] sm:$0xff] %v2775
                %v2777 = vld [vmem:[%s2713 + $0xf8] sm:$0xff]
                %2778 = vst [vmem:[%s2714 + $0x1e8] sm:$0xff] %v2777
                %v2779 = vld [vmem:[%s2713 + $0x100] sm:$0xff]
                %2780 = vst [vmem:[%s2714 + $0x1f0] sm:$0xff] %v2779
                %v2781 = vld [vmem:[%s2713 + $0x108] sm:$0xff]
                %2782 = vst [vmem:[%s2714 + $0x210] sm:$0xff] %v2781
                %v2783 = vld [vmem:[%s2713 + $0x110] sm:$0xff]
                %2784 = vst [vmem:[%s2714 + $0x218] sm:$0xff] %v2783
                %v2785 = vld [vmem:[%s2713 + $0x118] sm:$0xff]
                %2786 = vst [vmem:[%s2714 + $0x220] sm:$0xff] %v2785
                %v2787 = vld [vmem:[%s2713 + $0x120] sm:$0xff]
                %2788 = vst [vmem:[%s2714 + $0x240] sm:$0xff] %v2787
                %v2789 = vld [vmem:[%s2713 + $0x128] sm:$0xff]
                %2790 = vst [vmem:[%s2714 + $0x248] sm:$0xff] %v2789
                %v2791 = vld [vmem:[%s2713 + $0x130] sm:$0xff]
                %2792 = vst [vmem:[%s2714 + $0x250] sm:$0xff] %v2791
                %v2793 = vld [vmem:[%s2713 + $0x138] sm:$0xff]
                %2794 = vst [vmem:[%s2714 + $0x270] sm:$0xff] %v2793
                %v2795 = vld [vmem:[%s2713 + $0x140] sm:$0xff]
                %2796 = vst [vmem:[%s2714 + $0x278] sm:$0xff] %v2795
                %v2797 = vld [vmem:[%s2713 + $0x148] sm:$0xff]
                %2798 = vst [vmem:[%s2714 + $0x280] sm:$0xff] %v2797
                %v2799 = vld [vmem:[%s2713 + $0x150] sm:$0xff]
                %2800 = vst [vmem:[%s2714 + $0x2a0] sm:$0xff] %v2799
                %v2801 = vld [vmem:[%s2713 + $0x158] sm:$0xff]
                %2802 = vst [vmem:[%s2714 + $0x2a8] sm:$0xff] %v2801
                %v2803 = vld [vmem:[%s2713 + $0x160] sm:$0xff]
                %2804 = vst [vmem:[%s2714 + $0x2b0] sm:$0xff] %v2803
                %v2805 = vld [vmem:[%s2713 + $0x168] sm:$0xff]
                %2806 = vst [vmem:[%s2714 + $0x2d0] sm:$0xff] %v2805
                %v2807 = vld [vmem:[%s2713 + $0x170] sm:$0xff]
                %2808 = vst [vmem:[%s2714 + $0x2d8] sm:$0xff] %v2807
                %v2809 = vld [vmem:[%s2713 + $0x178] sm:$0xff]
                %2810 = vst [vmem:[%s2714 + $0x2e0] sm:$0xff] %v2809
                %v2811 = vld [vmem:[%s2713 + $0x180] sm:$0xff]
                %2812 = vst [vmem:[%s2714 + $0x300] sm:$0xff] %v2811
                %v2813 = vld [vmem:[%s2713 + $0x188] sm:$0xff]
                %2814 = vst [vmem:[%s2714 + $0x308] sm:$0xff] %v2813
                %v2815 = vld [vmem:[%s2713 + $0x190] sm:$0xff]
                %2816 = vst [vmem:[%s2714 + $0x310] sm:$0xff] %v2815
                %v2817 = vld [vmem:[%s2713 + $0x198] sm:$0xff]
                %2818 = vst [vmem:[%s2714 + $0x330] sm:$0xff] %v2817
                %v2819 = vld [vmem:[%s2713 + $0x1a0] sm:$0xff]
                %2820 = vst [vmem:[%s2714 + $0x338] sm:$0xff] %v2819
                %v2821 = vld [vmem:[%s2713 + $0x1a8] sm:$0xff]
                %2822 = vst [vmem:[%s2714 + $0x340] sm:$0xff] %v2821
                %v2823 = vld [vmem:[%s2713 + $0x1b0] sm:$0xff]
                %2824 = vst [vmem:[%s2714 + $0x360] sm:$0xff] %v2823
                %v2825 = vld [vmem:[%s2713 + $0x1b8] sm:$0xff]
                %2826 = vst [vmem:[%s2714 + $0x368] sm:$0xff] %v2825
                %v2827 = vld [vmem:[%s2713 + $0x1c0] sm:$0xff]
                %2828 = vst [vmem:[%s2714 + $0x370] sm:$0xff] %v2827
                %v2829 = vld [vmem:[%s2713 + $0x1c8] sm:$0xff]
                %2830 = vst [vmem:[%s2714 + $0x390] sm:$0xff] %v2829
                %v2831 = vld [vmem:[%s2713 + $0x1d0] sm:$0xff]
                %2832 = vst [vmem:[%s2714 + $0x398] sm:$0xff] %v2831
                %v2833 = vld [vmem:[%s2713 + $0x1d8] sm:$0xff]
                %2834 = vst [vmem:[%s2714 + $0x3a0] sm:$0xff] %v2833
                %v2835 = vld [vmem:[%s2713 + $0x1e0] sm:$0xff]
                %2836 = vst [vmem:[%s2714 + $0x3c0] sm:$0xff] %v2835
                %v2837 = vld [vmem:[%s2713 + $0x1e8] sm:$0xff]
                %2838 = vst [vmem:[%s2714 + $0x3c8] sm:$0xff] %v2837
                %v2839 = vld [vmem:[%s2713 + $0x1f0] sm:$0xff]
                %2840 = vst [vmem:[%s2714 + $0x3d0] sm:$0xff] %v2839
                %v2841 = vld [vmem:[%s2713 + $0x1f8] sm:$0xff]
                %2842 = vst [vmem:[%s2714 + $0x3f0] sm:$0xff] %v2841
                %v2843 = vld [vmem:[%s2713 + $0x200] sm:$0xff]
                %2844 = vst [vmem:[%s2714 + $0x3f8] sm:$0xff] %v2843
                %v2845 = vld [vmem:[%s2713 + $0x208] sm:$0xff]
                %2846 = vst [vmem:[%s2714 + $0x400] sm:$0xff] %v2845
                %v2847 = vld [vmem:[%s2713 + $0x210] sm:$0xff]
                %2848 = vst [vmem:[%s2714 + $0x420] sm:$0xff] %v2847
                %v2849 = vld [vmem:[%s2713 + $0x218] sm:$0xff]
                %2850 = vst [vmem:[%s2714 + $0x428] sm:$0xff] %v2849
                %v2851 = vld [vmem:[%s2713 + $0x220] sm:$0xff]
                %2852 = vst [vmem:[%s2714 + $0x430] sm:$0xff] %v2851
                %v2853 = vld [vmem:[%s2713 + $0x228] sm:$0xff]
                %2854 = vst [vmem:[%s2714 + $0x450] sm:$0xff] %v2853
                %v2855 = vld [vmem:[%s2713 + $0x230] sm:$0xff]
                %2856 = vst [vmem:[%s2714 + $0x458] sm:$0xff] %v2855
                %v2857 = vld [vmem:[%s2713 + $0x238] sm:$0xff]
                %2858 = vst [vmem:[%s2714 + $0x460] sm:$0xff] %v2857
                %v2859 = vld [vmem:[%s2713 + $0x240] sm:$0xff]
                %2860 = vst [vmem:[%s2714 + $0x480] sm:$0xff] %v2859
                %v2861 = vld [vmem:[%s2713 + $0x248] sm:$0xff]
                %2862 = vst [vmem:[%s2714 + $0x488] sm:$0xff] %v2861
                %v2863 = vld [vmem:[%s2713 + $0x250] sm:$0xff]
                %2864 = vst [vmem:[%s2714 + $0x490] sm:$0xff] %v2863
                %v2865 = vld [vmem:[%s2713 + $0x258] sm:$0xff]
                %2866 = vst [vmem:[%s2714 + $0x4b0] sm:$0xff] %v2865
                %v2867 = vld [vmem:[%s2713 + $0x260] sm:$0xff]
                %2868 = vst [vmem:[%s2714 + $0x4b8] sm:$0xff] %v2867
                %v2869 = vld [vmem:[%s2713 + $0x268] sm:$0xff]
                %2870 = vst [vmem:[%s2714 + $0x4c0] sm:$0xff] %v2869
                %v2871 = vld [vmem:[%s2713 + $0x270] sm:$0xff]
                %2872 = vst [vmem:[%s2714 + $0x4e0] sm:$0xff] %v2871
                %v2873 = vld [vmem:[%s2713 + $0x278] sm:$0xff]
                %2874 = vst [vmem:[%s2714 + $0x4e8] sm:$0xff] %v2873
                %v2875 = vld [vmem:[%s2713 + $0x280] sm:$0xff]
                %2876 = vst [vmem:[%s2714 + $0x4f0] sm:$0xff] %v2875
                %v2877 = vld [vmem:[%s2713 + $0x288] sm:$0xff]
                %2878 = vst [vmem:[%s2714 + $0x510] sm:$0xff] %v2877
                %v2879 = vld [vmem:[%s2713 + $0x290] sm:$0xff]
                %2880 = vst [vmem:[%s2714 + $0x518] sm:$0xff] %v2879
                %v2881 = vld [vmem:[%s2713 + $0x298] sm:$0xff]
                %2882 = vst [vmem:[%s2714 + $0x520] sm:$0xff] %v2881
                %v2883 = vld [vmem:[%s2713 + $0x2a0] sm:$0xff]
                %2884 = vst [vmem:[%s2714 + $0x540] sm:$0xff] %v2883
                %v2885 = vld [vmem:[%s2713 + $0x2a8] sm:$0xff]
                %2886 = vst [vmem:[%s2714 + $0x548] sm:$0xff] %v2885
                %v2887 = vld [vmem:[%s2713 + $0x2b0] sm:$0xff]
                %2888 = vst [vmem:[%s2714 + $0x550] sm:$0xff] %v2887
                %v2889 = vld [vmem:[%s2713 + $0x2b8] sm:$0xff]
                %2890 = vst [vmem:[%s2714 + $0x570] sm:$0xff] %v2889
                %v2891 = vld [vmem:[%s2713 + $0x2c0] sm:$0xff]
                %2892 = vst [vmem:[%s2714 + $0x578] sm:$0xff] %v2891
                %v2893 = vld [vmem:[%s2713 + $0x2c8] sm:$0xff]
                %2894 = vst [vmem:[%s2714 + $0x580] sm:$0xff] %v2893
                %v2895 = vld [vmem:[%s2713 + $0x2d0] sm:$0xff]
                %2896 = vst [vmem:[%s2714 + $0x5a0] sm:$0xff] %v2895
                %v2897 = vld [vmem:[%s2713 + $0x2d8] sm:$0xff]
                %2898 = vst [vmem:[%s2714 + $0x5a8] sm:$0xff] %v2897
                %v2899 = vld [vmem:[%s2713 + $0x2e0] sm:$0xff]
                %2900 = vst [vmem:[%s2714 + $0x5b0] sm:$0xff] %v2899
                %v2901 = vld [vmem:[%s2713 + $0x2e8] sm:$0xff]
                %2902 = vst [vmem:[%s2714 + $0x5d0] sm:$0xff] %v2901
                %v2903 = vld [vmem:[%s2713 + $0x2f0] sm:$0xff]
                %2904 = vst [vmem:[%s2714 + $0x5d8] sm:$0xff] %v2903
                %v2905 = vld [vmem:[%s2713 + $0x2f8] sm:$0xff]
                %2906 = vst [vmem:[%s2714 + $0x5e0] sm:$0xff] %v2905
                %v2907 = vld [vmem:[%s2713 + $0x300] sm:$0xff]
                %2908 = vst [vmem:[%s2714 + $0x600] sm:$0xff] %v2907
                %v2909 = vld [vmem:[%s2713 + $0x308] sm:$0xff]
                %2910 = vst [vmem:[%s2714 + $0x608] sm:$0xff] %v2909
                %v2911 = vld [vmem:[%s2713 + $0x310] sm:$0xff]
                %2912 = vst [vmem:[%s2714 + $0x610] sm:$0xff] %v2911
                %v2913 = vld [vmem:[%s2713 + $0x318] sm:$0xff]
                %2914 = vst [vmem:[%s2714 + $0x630] sm:$0xff] %v2913
                %v2915 = vld [vmem:[%s2713 + $0x320] sm:$0xff]
                %2916 = vst [vmem:[%s2714 + $0x638] sm:$0xff] %v2915
                %v2917 = vld [vmem:[%s2713 + $0x328] sm:$0xff]
                %2918 = vst [vmem:[%s2714 + $0x640] sm:$0xff] %v2917
                %v2919 = vld [vmem:[%s2713 + $0x330] sm:$0xff]
                %2920 = vst [vmem:[%s2714 + $0x660] sm:$0xff] %v2919
                %v2921 = vld [vmem:[%s2713 + $0x338] sm:$0xff]
                %2922 = vst [vmem:[%s2714 + $0x668] sm:$0xff] %v2921
                %v2923 = vld [vmem:[%s2713 + $0x340] sm:$0xff]
                %2924 = vst [vmem:[%s2714 + $0x670] sm:$0xff] %v2923
                %v2925 = vld [vmem:[%s2713 + $0x348] sm:$0xff]
                %2926 = vst [vmem:[%s2714 + $0x690] sm:$0xff] %v2925
                %v2927 = vld [vmem:[%s2713 + $0x350] sm:$0xff]
                %2928 = vst [vmem:[%s2714 + $0x698] sm:$0xff] %v2927
                %v2929 = vld [vmem:[%s2713 + $0x358] sm:$0xff]
                %2930 = vst [vmem:[%s2714 + $0x6a0] sm:$0xff] %v2929
                %v2931 = vld [vmem:[%s2713 + $0x360] sm:$0xff]
                %2932 = vst [vmem:[%s2714 + $0x6c0] sm:$0xff] %v2931
                %v2933 = vld [vmem:[%s2713 + $0x368] sm:$0xff]
                %2934 = vst [vmem:[%s2714 + $0x6c8] sm:$0xff] %v2933
                %v2935 = vld [vmem:[%s2713 + $0x370] sm:$0xff]
                %2936 = vst [vmem:[%s2714 + $0x6d0] sm:$0xff] %v2935
                %v2937 = vld [vmem:[%s2713 + $0x378] sm:$0xff]
                %2938 = vst [vmem:[%s2714 + $0x6f0] sm:$0xff] %v2937
                %v2939 = vld [vmem:[%s2713 + $0x380] sm:$0xff]
                %2940 = vst [vmem:[%s2714 + $0x6f8] sm:$0xff] %v2939
                %v2941 = vld [vmem:[%s2713 + $0x388] sm:$0xff]
                %2942 = vst [vmem:[%s2714 + $0x700] sm:$0xff] %v2941
                %v2943 = vld [vmem:[%s2713 + $0x390] sm:$0xff]
                %2944 = vst [vmem:[%s2714 + $0x720] sm:$0xff] %v2943
                %v2945 = vld [vmem:[%s2713 + $0x398] sm:$0xff]
                %2946 = vst [vmem:[%s2714 + $0x728] sm:$0xff] %v2945
                %v2947 = vld [vmem:[%s2713 + $0x3a0] sm:$0xff]
                %2948 = vst [vmem:[%s2714 + $0x730] sm:$0xff] %v2947
                %v2949 = vld [vmem:[%s2713 + $0x3a8] sm:$0xff]
                %2950 = vst [vmem:[%s2714 + $0x750] sm:$0xff] %v2949
                %v2951 = vld [vmem:[%s2713 + $0x3b0] sm:$0xff]
                %2952 = vst [vmem:[%s2714 + $0x758] sm:$0xff] %v2951
                %v2953 = vld [vmem:[%s2713 + $0x3b8] sm:$0xff]
                %2954 = vst [vmem:[%s2714 + $0x760] sm:$0xff] %v2953
                %v2955 = vld [vmem:[%s2713 + $0x3c0] sm:$0xff]
                %2956 = vst [vmem:[%s2714 + $0x780] sm:$0xff] %v2955
                %v2957 = vld [vmem:[%s2713 + $0x3c8] sm:$0xff]
                %2958 = vst [vmem:[%s2714 + $0x788] sm:$0xff] %v2957
                %v2959 = vld [vmem:[%s2713 + $0x3d0] sm:$0xff]
                %2960 = vst [vmem:[%s2714 + $0x790] sm:$0xff] %v2959
                %v2961 = vld [vmem:[%s2713 + $0x3d8] sm:$0xff]
                %2962 = vst [vmem:[%s2714 + $0x7b0] sm:$0xff] %v2961
                %v2963 = vld [vmem:[%s2713 + $0x3e0] sm:$0xff]
                %2964 = vst [vmem:[%s2714 + $0x7b8] sm:$0xff] %v2963
                %v2965 = vld [vmem:[%s2713 + $0x3e8] sm:$0xff]
                %2966 = vst [vmem:[%s2714 + $0x7c0] sm:$0xff] %v2965
                %v2967 = vld [vmem:[%s2713 + $0x3f0] sm:$0xff]
                %2968 = vst [vmem:[%s2714 + $0x7e0] sm:$0xff] %v2967
                %v2969 = vld [vmem:[%s2713 + $0x3f8] sm:$0xff]
                %2970 = vst [vmem:[%s2714 + $0x7e8] sm:$0xff] %v2969
                %v2971 = vld [vmem:[%s2713 + $0x400] sm:$0xff]
                %2972 = vst [vmem:[%s2714 + $0x7f0] sm:$0xff] %v2971
                %v2973 = vld [vmem:[%s2713 + $0x408] sm:$0xff]
                %2974 = vst [vmem:[%s2714 + $0x810] sm:$0xff] %v2973
                %v2975 = vld [vmem:[%s2713 + $0x410] sm:$0xff]
                %2976 = vst [vmem:[%s2714 + $0x818] sm:$0xff] %v2975
                %v2977 = vld [vmem:[%s2713 + $0x418] sm:$0xff]
                %2978 = vst [vmem:[%s2714 + $0x820] sm:$0xff] %v2977
                %v2979 = vld [vmem:[%s2713 + $0x420] sm:$0xff]
                %2980 = vst [vmem:[%s2714 + $0x840] sm:$0xff] %v2979
                %v2981 = vld [vmem:[%s2713 + $0x428] sm:$0xff]
                %2982 = vst [vmem:[%s2714 + $0x848] sm:$0xff] %v2981
                %v2983 = vld [vmem:[%s2713 + $0x430] sm:$0xff]
                %2984 = vst [vmem:[%s2714 + $0x850] sm:$0xff] %v2983
                %v2985 = vld [vmem:[%s2713 + $0x438] sm:$0xff]
                %2986 = vst [vmem:[%s2714 + $0x870] sm:$0xff] %v2985
                %v2987 = vld [vmem:[%s2713 + $0x440] sm:$0xff]
                %2988 = vst [vmem:[%s2714 + $0x878] sm:$0xff] %v2987
                %v2989 = vld [vmem:[%s2713 + $0x448] sm:$0xff]
                %2990 = vst [vmem:[%s2714 + $0x880] sm:$0xff] %v2989
                %v2991 = vld [vmem:[%s2713 + $0x450] sm:$0xff]
                %2992 = vst [vmem:[%s2714 + $0x8a0] sm:$0xff] %v2991
                %v2993 = vld [vmem:[%s2713 + $0x458] sm:$0xff]
                %2994 = vst [vmem:[%s2714 + $0x8a8] sm:$0xff] %v2993
                %v2995 = vld [vmem:[%s2713 + $0x460] sm:$0xff]
                %2996 = vst [vmem:[%s2714 + $0x8b0] sm:$0xff] %v2995
                %v2997 = vld [vmem:[%s2713 + $0x468] sm:$0xff]
                %2998 = vst [vmem:[%s2714 + $0x8d0] sm:$0xff] %v2997
                %v2999 = vld [vmem:[%s2713 + $0x470] sm:$0xff]
                %3000 = vst [vmem:[%s2714 + $0x8d8] sm:$0xff] %v2999
                %v3001 = vld [vmem:[%s2713 + $0x478] sm:$0xff]
                %3002 = vst [vmem:[%s2714 + $0x8e0] sm:$0xff] %v3001
                %v3003 = vld [vmem:[%s2713 + $0x480] sm:$0xff]
                %3004 = vst [vmem:[%s2714 + $0x900] sm:$0xff] %v3003
                %v3005 = vld [vmem:[%s2713 + $0x488] sm:$0xff]
                %3006 = vst [vmem:[%s2714 + $0x908] sm:$0xff] %v3005
                %v3007 = vld [vmem:[%s2713 + $0x490] sm:$0xff]
                %3008 = vst [vmem:[%s2714 + $0x910] sm:$0xff] %v3007
                %v3009 = vld [vmem:[%s2713 + $0x498] sm:$0xff]
                %3010 = vst [vmem:[%s2714 + $0x930] sm:$0xff] %v3009
                %v3011 = vld [vmem:[%s2713 + $0x4a0] sm:$0xff]
                %3012 = vst [vmem:[%s2714 + $0x938] sm:$0xff] %v3011
                %v3013 = vld [vmem:[%s2713 + $0x4a8] sm:$0xff]
                %3014 = vst [vmem:[%s2714 + $0x940] sm:$0xff] %v3013
                %v3015 = vld [vmem:[%s2713 + $0x4b0] sm:$0xff]
                %3016 = vst [vmem:[%s2714 + $0x960] sm:$0xff] %v3015
                %v3017 = vld [vmem:[%s2713 + $0x4b8] sm:$0xff]
                %3018 = vst [vmem:[%s2714 + $0x968] sm:$0xff] %v3017
                %v3019 = vld [vmem:[%s2713 + $0x4c0] sm:$0xff]
                %3020 = vst [vmem:[%s2714 + $0x970] sm:$0xff] %v3019
                %v3021 = vld [vmem:[%s2713 + $0x4c8] sm:$0xff]
                %3022 = vst [vmem:[%s2714 + $0x990] sm:$0xff] %v3021
                %v3023 = vld [vmem:[%s2713 + $0x4d0] sm:$0xff]
                %3024 = vst [vmem:[%s2714 + $0x998] sm:$0xff] %v3023
                %v3025 = vld [vmem:[%s2713 + $0x4d8] sm:$0xff]
                %3026 = vst [vmem:[%s2714 + $0x9a0] sm:$0xff] %v3025
                %v3027 = vld [vmem:[%s2713 + $0x4e0] sm:$0xff]
                %3028 = vst [vmem:[%s2714 + $0x9c0] sm:$0xff] %v3027
                %v3029 = vld [vmem:[%s2713 + $0x4e8] sm:$0xff]
                %3030 = vst [vmem:[%s2714 + $0x9c8] sm:$0xff] %v3029
                %v3031 = vld [vmem:[%s2713 + $0x4f0] sm:$0xff]
                %3032 = vst [vmem:[%s2714 + $0x9d0] sm:$0xff] %v3031
                %v3033 = vld [vmem:[%s2713 + $0x4f8] sm:$0xff]
                %3034 = vst [vmem:[%s2714 + $0x9f0] sm:$0xff] %v3033
                %v3035 = vld [vmem:[%s2713 + $0x500] sm:$0xff]
                %3036 = vst [vmem:[%s2714 + $0x9f8] sm:$0xff] %v3035
                %v3037 = vld [vmem:[%s2713 + $0x508] sm:$0xff]
                %3038 = vst [vmem:[%s2714 + $0xa00] sm:$0xff] %v3037
                %v3039 = vld [vmem:[%s2713 + $0x510] sm:$0xff]
                %3040 = vst [vmem:[%s2714 + $0xa20] sm:$0xff] %v3039
                %v3041 = vld [vmem:[%s2713 + $0x518] sm:$0xff]
                %3042 = vst [vmem:[%s2714 + $0xa28] sm:$0xff] %v3041
                %v3043 = vld [vmem:[%s2713 + $0x520] sm:$0xff]
                %3044 = vst [vmem:[%s2714 + $0xa30] sm:$0xff] %v3043
                %v3045 = vld [vmem:[%s2713 + $0x528] sm:$0xff]
                %3046 = vst [vmem:[%s2714 + $0xa50] sm:$0xff] %v3045
                %v3047 = vld [vmem:[%s2713 + $0x530] sm:$0xff]
                %3048 = vst [vmem:[%s2714 + $0xa58] sm:$0xff] %v3047
                %v3049 = vld [vmem:[%s2713 + $0x538] sm:$0xff]
                %3050 = vst [vmem:[%s2714 + $0xa60] sm:$0xff] %v3049
                %v3051 = vld [vmem:[%s2713 + $0x540] sm:$0xff]
                %3052 = vst [vmem:[%s2714 + $0xa80] sm:$0xff] %v3051
                %v3053 = vld [vmem:[%s2713 + $0x548] sm:$0xff]
                %3054 = vst [vmem:[%s2714 + $0xa88] sm:$0xff] %v3053
                %v3055 = vld [vmem:[%s2713 + $0x550] sm:$0xff]
                %3056 = vst [vmem:[%s2714 + $0xa90] sm:$0xff] %v3055
                %v3057 = vld [vmem:[%s2713 + $0x558] sm:$0xff]
                %3058 = vst [vmem:[%s2714 + $0xab0] sm:$0xff] %v3057
                %v3059 = vld [vmem:[%s2713 + $0x560] sm:$0xff]
                %3060 = vst [vmem:[%s2714 + $0xab8] sm:$0xff] %v3059
                %v3061 = vld [vmem:[%s2713 + $0x568] sm:$0xff]
                %3062 = vst [vmem:[%s2714 + $0xac0] sm:$0xff] %v3061
                %v3063 = vld [vmem:[%s2713 + $0x570] sm:$0xff]
                %3064 = vst [vmem:[%s2714 + $0xae0] sm:$0xff] %v3063
                %v3065 = vld [vmem:[%s2713 + $0x578] sm:$0xff]
                %3066 = vst [vmem:[%s2714 + $0xae8] sm:$0xff] %v3065
                %v3067 = vld [vmem:[%s2713 + $0x580] sm:$0xff]
                %3068 = vst [vmem:[%s2714 + $0xaf0] sm:$0xff] %v3067
                %v3069 = vld [vmem:[%s2713 + $0x588] sm:$0xff]
                %3070 = vst [vmem:[%s2714 + $0xb10] sm:$0xff] %v3069
                %v3071 = vld [vmem:[%s2713 + $0x590] sm:$0xff]
                %3072 = vst [vmem:[%s2714 + $0xb18] sm:$0xff] %v3071
                %v3073 = vld [vmem:[%s2713 + $0x598] sm:$0xff]
                %3074 = vst [vmem:[%s2714 + $0xb20] sm:$0xff] %v3073
                %v3075 = vld [vmem:[%s2713 + $0x5a0] sm:$0xff]
                %3076 = vst [vmem:[%s2714 + $0xb40] sm:$0xff] %v3075
                %v3077 = vld [vmem:[%s2713 + $0x5a8] sm:$0xff]
                %3078 = vst [vmem:[%s2714 + $0xb48] sm:$0xff] %v3077
                %v3079 = vld [vmem:[%s2713 + $0x5b0] sm:$0xff]
                %3080 = vst [vmem:[%s2714 + $0xb50] sm:$0xff] %v3079
                %v3081 = vld [vmem:[%s2713 + $0x5b8] sm:$0xff]
                %3082 = vst [vmem:[%s2714 + $0xb70] sm:$0xff] %v3081
                %v3083 = vld [vmem:[%s2713 + $0x5c0] sm:$0xff]
                %3084 = vst [vmem:[%s2714 + $0xb78] sm:$0xff] %v3083
                %v3085 = vld [vmem:[%s2713 + $0x5c8] sm:$0xff]
                %3086 = vst [vmem:[%s2714 + $0xb80] sm:$0xff] %v3085
                %v3087 = vld [vmem:[%s2713 + $0x5d0] sm:$0xff]
                %3088 = vst [vmem:[%s2714 + $0xba0] sm:$0xff] %v3087
                %v3089 = vld [vmem:[%s2713 + $0x5d8] sm:$0xff]
                %3090 = vst [vmem:[%s2714 + $0xba8] sm:$0xff] %v3089
                %v3091 = vld [vmem:[%s2713 + $0x5e0] sm:$0xff]
                %3092 = vst [vmem:[%s2714 + $0xbb0] sm:$0xff] %v3091
                %v3093 = vld [vmem:[%s2713 + $0x5e8] sm:$0xff]
                %3094 = vst [vmem:[%s2714 + $0xbd0] sm:$0xff] %v3093
                %v3095 = vld [vmem:[%s2713 + $0x5f0] sm:$0xff]
                %3096 = vst [vmem:[%s2714 + $0xbd8] sm:$0xff] %v3095
                %v3097 = vld [vmem:[%s2713 + $0x5f8] sm:$0xff]
                %3098 = vst [vmem:[%s2714 + $0xbe0] sm:$0xff] %v3097
              $region65: #{causal_self_attention.3} parent=59 // loop_footer
                %s2712 = sadd.s32 1, %s2708
              $region66: #{causal_self_attention.3} parent=59 // loop_footer_branch
                %2707 = sbr.rel target = $region62
              $region67: #{causal_self_attention.3} parent=59 // loop_exit
                _
            $region60: #{causal_self_attention.3} parent=55 // pred_fallthru
              _
            // Predicated region
            $region68: #{causal_self_attention.3} parent=55 // pred_check
              _
            $region69: #{causal_self_attention.3} parent=55 // pred_check_branch
              %3100 = sbr.rel target = $region71
            $region70: #{causal_self_attention.3} parent=55 // pred_region
              _
            $region71: #{causal_self_attention.3} parent=55 // pred_fallthru
              _
          $region56: #{causal_self_attention.3} parent=51 // pred_fallthru
            _
          %3101 = vnop
        $region52: #{causal_self_attention.3} parent=31 // pred_fallthru
          _
      $region32: #{causal_self_attention.3} parent=5 // pred_fallthru
        _
      %p3102 = scmp.le.s32.totalorder 2, %s13
      // Predicated region
      $region72: #{causal_self_attention.3} parent=5 // pred_check
        %p3103 = pneg %p3102
      $region73: #{causal_self_attention.3} parent=5 // pred_check_branch
        %3105 = sbr.rel (%p3103) target = $region75
      $region74: #{causal_self_attention.3} parent=5 // pred_region
        %s3106 = ssub.s32 %s13, 2
        // Predicated region
        $region76: #{causal_self_attention.3} parent=74 // pred_check
          %p3107 = pneg %p145
        $region77: #{causal_self_attention.3} parent=74 // pred_check_branch
          %3109 = sbr.rel (%p3107) target = $region79
        $region78: #{causal_self_attention.3} parent=74 // pred_region
          %s3110 = sand.u32 %s130, 1
          %s3111 = sand.u32 %s130, 1
          %s3112 = smul.addr %s3111, 1536
          %s3113 = scalar_lea.vmem [#allocation7], %s3112
        $region79: #{causal_self_attention.3} parent=74 // pred_fallthru
          _
      $region75: #{causal_self_attention.3} parent=5 // pred_fallthru
        _
    $region6: #{causal_self_attention.3} parent=1 // loop_footer
      %s17 = sadd.s32 1, %s13
    $region7: #{causal_self_attention.3} parent=1 // loop_footer_branch
      %12 = sbr.rel target = $region3
    $region8: #{causal_self_attention.3} parent=1 // loop_exit
      _
    %3114 = vsyncpa [#allocation4], 1
    %s3115 = scalar_lea.sflag [#allocation4], 1
    %3116 = vsyncpa %s3115, 1
    %3117 = vsyncpa [#allocation6], 1
    %s3118 = scalar_lea.sflag [#allocation6], 1
    %3119 = vsyncpa %s3118, 1

</llo_original>
